<compile_context>
chip_gen: v5e
topology: v5e:2x2
jax: 0.10.0
libtpu: 0.0.40
codegen_flags: <defaults>
</compile_context>

<pallas_src>
import functools

import jax
import jax.numpy as jnp
from jax import lax
from jax.experimental import pallas as pl
from jax.experimental.pallas import tpu as pltpu


CP = 128  # lane-dense channel padding (TPU vreg lane width)


# ----------------------------------------------------------------------------
# Fused kernel: one (batch, row-tile) step.
#   layer 1: conv3x3 + folded-BN + LeakyReLU on TH+2 mid rows (1-row halo)
#   layer 2: conv3x3 + folded-BN (+ LeakyReLU) on the TH output rows
# ----------------------------------------------------------------------------
def convblock_kernel(x_hbm, w1_ref, w2_ref, s1_ref, t1_ref, s2_ref, t2_ref,
                     o_ref, slab1, slab2, sem,
                     *, TH, W, IMG_ROWS, last_relu, neg_slope=0.01):
    # x_hbm  : (N*(H+4)*(W+2), CP) HBM, spatially zero-padded, channel-padded
    # w*_ref : (9*CP, CP) VMEM-resident im2col weights (tap-major)
    # s*/t*  : (1, CP)    VMEM-resident BN scale / (BN shift + folded bias)
    # o_ref  : (1, TH*(W+2), CP) output row tile (padded-width rows)
    # slab1  : (2, (TH+6)*(W+2), CP) double-buffered input slab (compute dtype)
    # slab2  : ((TH+4)*(W+2), CP)    mid-activation slab         (compute dtype)
    WP = W + 2
    IN_ROWS = (TH + 4) * WP              # flattened x rows DMA'd per tile
    cdt = slab1.dtype

    n = pl.program_id(0)
    t = pl.program_id(1)
    T = pl.num_programs(1)
    slot = t % 2

    def in_copy(tile, s):
        return pltpu.make_async_copy(
            x_hbm.at[pl.ds(n * IMG_ROWS + tile * TH * WP, IN_ROWS), :],
            slab1.at[s, pl.ds(WP, IN_ROWS), :],
            sem.at[s])

    # Prime the pipeline on the first row-tile of every image (the t axis is
    # "arbitrary", so every core runs t==0 for each image it owns).
    @pl.when(t == 0)
    def _():
        in_copy(0, 0).start()

    # Prefetch the next row-tile of the same image into the other slot.
    @pl.when(t + 1 < T)
    def _():
        in_copy(t + 1, 1 - slot).start()

    # Wait for the current tile's input.
    in_copy(t, slot).wait()

    # Guard rows (never touched by the DMA).  Zeroed every step (cheap) rather
    # than gated on program_id, so per-core scratch is always initialized.
    zrow = jnp.zeros((WP, CP), cdt)
    for s in (0, 1):
        slab1[s, pl.ds(0, WP), :] = zrow
        slab1[s, pl.ds((TH + 5) * WP, WP), :] = zrow

    # --- per-tap static slices of a flattened (rows x (W+2)) slab ------------
    def tap(read, k, out_rows):
        ofs = (1 + k // 3) * WP + (k % 3) - 1          # static
        return read(ofs, out_rows * WP)

    def read1(ofs, L):
        return slab1[slot, pl.ds(ofs, L), :]

    def read2(ofs, L):
        return slab2[pl.ds(ofs, L), :]

    def conv_layer(read, out_rows, w_ref, s_ref, t_ref):
        acc = jnp.zeros((out_rows * WP, CP), jnp.float32)
        # Tap pairs -> K=256 operands: fills the 256-deep MXU on v6e/v7x and is
        # exactly two full passes on v5e's 128-deep MXU.
        for p in range(4):
            op = jnp.concatenate(
                [tap(read, 2 * p, out_rows), tap(read, 2 * p + 1, out_rows)],
                axis=-1)
            acc = acc + jnp.dot(op, w_ref[2 * p * CP:(2 * p + 2) * CP, :],
                                preferred_element_type=jnp.float32)
        acc = acc + jnp.dot(tap(read, 8, out_rows), w_ref[8 * CP:9 * CP, :],
                            preferred_element_type=jnp.float32)
        return acc * s_ref[...] + t_ref[...]           # folded conv-bias + BN

    # ---------------- layer 1: mid rows [r0-1, r0+TH] -----------------------
    mid = conv_layer(read1, TH + 2, w1_ref, s1_ref, t1_ref)
    mid = jnp.where(mid >= 0.0, mid, neg_slope * mid)          # LeakyReLU
    # Zero the two garbage edge columns so they act as conv2's zero padding.
    col = lax.broadcasted_iota(jnp.int32, ((TH + 2) * WP, 1), 0) % WP
    mid = jnp.where(jnp.logical_and(col >= 1, col <= W), mid, 0.0)
    slab2[pl.ds(WP, (TH + 2) * WP), :] = mid.astype(cdt)       # stays in VMEM

    # Guard rows + out-of-image mid halo rows.
    slab2[pl.ds(0, WP), :] = zrow
    slab2[pl.ds((TH + 3) * WP, WP), :] = zrow

    @pl.when(t == 0)
    def _():
        slab2[pl.ds(WP, WP), :] = zrow                 # mid row -1 (above img)

    @pl.when(t == T - 1)
    def _():
        slab2[pl.ds((TH + 2) * WP, WP), :] = zrow      # mid row H (below img)

    # ---------------- layer 2: output rows [r0, r0+TH) ----------------------
    out = conv_layer(read2, TH, w2_ref, s2_ref, t2_ref)
    if last_relu:
        out = jnp.where(out >= 0.0, out, neg_slope * out)
    o_ref[0] = out.astype(o_ref.dtype)                 # lane-dense store


# ----------------------------------------------------------------------------
# Parameter folding + sizing helpers + wrapper.
# ----------------------------------------------------------------------------
def fold_conv_bn(w_oihw, b, g, be, rm, rv, *, eps=1e-5):
    """PyTorch (Cout,Cin,3,3) conv + bias + inference BN -> im2col W, scale, shift."""
    cout, cin = int(w_oihw.shape[0]), int(w_oihw.shape[1])
    assert cin <= CP and cout <= CP
    taps = jnp.transpose(w_oihw, (2, 3, 1, 0)).reshape(9, cin, cout)
    wmat = jnp.zeros((9, CP, CP), jnp.float32).at[:, :cin, :cout].set(taps)
    wmat = wmat.reshape(9 * CP, CP)
    scale = g / jnp.sqrt(rv + eps)
    shift = be - rm * scale + b * scale        # conv bias folded into BN shift
    s = jnp.zeros((1, CP), jnp.float32).at[0, :cout].set(scale)
    t = jnp.zeros((1, CP), jnp.float32).at[0, :cout].set(shift)
    return wmat, s, t


def _vmem_limit_bytes():
    cap = 64 * 1024 * 1024                     # conservative fallback (v7x)
    try:
        cap = int(getattr(pltpu.get_tpu_info(), "vmem_capacity_bytes", cap))
    except Exception:
        pass
    return min(100 * 1024 * 1024, int(cap * 0.8))


def _pick_row_tile(H, W, in_item, out_item, budget):
    """Largest row tile TH (divisor of H) whose VMEM footprint fits the budget."""
    WP = W + 2

    def est(th):
        rows = (th + 6) * WP
        return CP * (2 * rows * in_item            # double-buffered input slab
                     + rows * in_item              # mid slab
                     + 2 * th * WP * out_item      # pipelined output block
                     + rows * (4 + 3 * in_item))   # f32 accumulator + live operands

    cands = [d for d in range(1, H + 1)
             if H % d == 0 and (d == H or (d * WP) % 8 == 0)]
    fitting = [d for d in cands if d <= 512 and est(d) <= budget]
    return max(fitting) if fitting else min(cands)


def conv_block(x_nchw, params, *, out_channels, last_relu=True,
               compute_dtype=jnp.bfloat16):
    N, cin, H, W = x_nchw.shape
    WP = W + 2
    cdt = jnp.dtype(compute_dtype)

    vmem_limit = _vmem_limit_bytes()
    TH = _pick_row_tile(H, W, cdt.itemsize, 4, int(vmem_limit * 0.6))
    T = H // TH
    IMG_ROWS = (H + 4) * WP

    # Boundary glue: NCHW -> NHWC, zero-pad spatial halo (2 rows, 1 col) and
    # channels to CP, flatten to ((N*(H+4)*(W+2)), CP) lane-dense rows.
    x = jnp.transpose(x_nchw, (0, 2, 3, 1))
    x = jnp.pad(x, ((0, 0), (2, 2), (1, 1), (0, CP - cin))).astype(cdt)
    x = x.reshape(N * IMG_ROWS, CP)

    w1 = params["w1"].astype(cdt)
    w2 = params["w2"].astype(cdt)

    kernel = functools.partial(
        convblock_kernel, TH=TH, W=W, IMG_ROWS=IMG_ROWS, last_relu=last_relu)

    out = pl.pallas_call(
        kernel,
        out_shape=jax.ShapeDtypeStruct((N, H * WP, CP), jnp.float32),
        grid=(N, T),
        in_specs=[
            pl.BlockSpec(memory_space=pl.ANY),                  # x (HBM)
            pl.BlockSpec(memory_space=pltpu.MemorySpace.VMEM),  # w1 (resident)
            pl.BlockSpec(memory_space=pltpu.MemorySpace.VMEM),  # w2
            pl.BlockSpec(memory_space=pltpu.MemorySpace.VMEM),  # s1
            pl.BlockSpec(memory_space=pltpu.MemorySpace.VMEM),  # t1
            pl.BlockSpec(memory_space=pltpu.MemorySpace.VMEM),  # s2
            pl.BlockSpec(memory_space=pltpu.MemorySpace.VMEM),  # t2
        ],
        out_specs=pl.BlockSpec((1, TH * WP, CP), lambda n, t: (n, t, 0)),
        scratch_shapes=[
            pltpu.VMEM((2, (TH + 6) * WP, CP), cdt),   # double-buffered x slab
            pltpu.VMEM(((TH + 4) * WP, CP), cdt),      # mid slab
            pltpu.SemaphoreType.DMA((2,)),
        ],
        compiler_params=pltpu.CompilerParams(
            dimension_semantics=("parallel", "arbitrary"),
            vmem_limit_bytes=vmem_limit),
    )(x, w1, w2, params["s1"], params["t1"], params["s2"], params["t2"])

    # Boundary glue back: strip the 2 padded columns / padded lanes -> NCHW.
    y = out.reshape(N, H, WP, CP)[:, :, 1:W + 1, :out_channels]
    return jnp.transpose(y, (0, 3, 1, 2))


# ----------------------------------------------------------------------------
# Pure-JAX reference (XLA conv) for correctness checking.
# ----------------------------------------------------------------------------
def ref_conv_bn_lrelu(x_nchw, w_oihw, b, g, be, rm, rv, apply_relu, eps=1e-5):
    y = lax.conv_general_dilated(x_nchw, w_oihw, (1, 1), ((1, 1), (1, 1)),
                                 dimension_numbers=("NCHW", "OIHW", "NCHW"))
    y = y + b[None, :, None, None]
    y = (y - rm[None, :, None, None]) / jnp.sqrt(rv[None, :, None, None] + eps)
    y = y * g[None, :, None, None] + be[None, :, None, None]
    if apply_relu:
        y = jnp.where(y >= 0, y, 0.01 * y)
    return y


if __name__ == "__main__":
    key = jax.random.PRNGKey(0)
    N, Cin, Cmid, Cout, H, W = 2, 4, 8, 4, 16, 16
    last_relu = True

    ks = jax.random.split(key, 13)
    x = jax.random.normal(ks[0], (N, Cin, H, W), jnp.float32)

    # conv1 / bn1
    w1_oihw = 0.1 * jax.random.normal(ks[1], (Cmid, Cin, 3, 3), jnp.float32)
    b1 = 0.1 * jax.random.normal(ks[2], (Cmid,), jnp.float32)
    g1 = 1.0 + 0.1 * jax.random.normal(ks[3], (Cmid,), jnp.float32)
    be1 = 0.1 * jax.random.normal(ks[4], (Cmid,), jnp.float32)
    rm1 = 0.1 * jax.random.normal(ks[5], (Cmid,), jnp.float32)
    rv1 = jax.random.uniform(ks[6], (Cmid,), jnp.float32, 0.5, 1.5)

    # conv2 / bn2
    w2_oihw = 0.1 * jax.random.normal(ks[7], (Cout, Cmid, 3, 3), jnp.float32)
    b2 = 0.1 * jax.random.normal(ks[8], (Cout,), jnp.float32)
    g2 = 1.0 + 0.1 * jax.random.normal(ks[9], (Cout,), jnp.float32)
    be2 = 0.1 * jax.random.normal(ks[10], (Cout,), jnp.float32)
    rm2 = 0.1 * jax.random.normal(ks[11], (Cout,), jnp.float32)
    rv2 = jax.random.uniform(ks[12], (Cout,), jnp.float32, 0.5, 1.5)

    w1m, s1, t1 = fold_conv_bn(w1_oihw, b1, g1, be1, rm1, rv1)
    w2m, s2, t2 = fold_conv_bn(w2_oihw, b2, g2, be2, rm2, rv2)
    params = dict(w1=w1m, s1=s1, t1=t1, w2=w2m, s2=s2, t2=t2)

    # XLA reference.
    ref = ref_conv_bn_lrelu(x, w1_oihw, b1, g1, be1, rm1, rv1, True)
    ref = ref_conv_bn_lrelu(ref, w2_oihw, b2, g2, be2, rm2, rv2, last_relu)

    # f32 MXU path (matches the PyTorch module's numerics).
    run_f32 = jax.jit(functools.partial(
        conv_block, out_channels=Cout, last_relu=last_relu,
        compute_dtype=jnp.float32))
    out_f32 = jax.block_until_ready(run_f32(x, params))
    assert out_f32.shape == (N, Cout, H, W)
    assert jnp.max(jnp.abs(out_f32 - ref)) < 1e-3

    # bf16 MXU path (default: bf16 operands, f32 accumulate + f32 epilogue).
    run_bf16 = jax.jit(functools.partial(
        conv_block, out_channels=Cout, last_relu=last_relu,
        compute_dtype=jnp.bfloat16))
    out_bf16 = jax.block_until_ready(run_bf16(x, params))
    assert out_bf16.shape == (N, Cout, H, W)
    assert jnp.max(jnp.abs(out_bf16 - ref)) < 1e-1

    print("KERNEL_OK")
</pallas_src>

<mosaic_0001>
module attributes {stable_mosaic.version = 11 : i64} {
  func.func @convblock_kernel(%arg0: i32, %arg1: i32, %arg2: memref<720x128xf32, #tpu.memory_space<any>>, %arg3: memref<1152x128xf32, #tpu.memory_space<vmem>>, %arg4: memref<1152x128xf32, #tpu.memory_space<vmem>>, %arg5: memref<1x128xf32, #tpu.memory_space<vmem>>, %arg6: memref<1x128xf32, #tpu.memory_space<vmem>>, %arg7: memref<1x128xf32, #tpu.memory_space<vmem>>, %arg8: memref<1x128xf32, #tpu.memory_space<vmem>>, %arg9: memref<1x288x128xf32, #tpu.memory_space<vmem>>, %arg10: memref<2x396x128xf32, #tpu.memory_space<vmem>>, %arg11: memref<360x128xf32, #tpu.memory_space<vmem>>, %arg12: memref<2x!tpu.dma_semaphore, #tpu.memory_space<semaphore_mem>>) attributes {dimension_semantics = [#tpu.dimension_semantics<parallel>, #tpu.dimension_semantics<arbitrary>], iteration_bounds = array<i64: 2, 1>, scalar_prefetch = 0 : i64, scratch_operands = 3 : i64, tpu.core_type = #tpu.core_type<tc>, window_params = [{}, {pipeline_mode = #tpu.pipeline_mode<synchronous>, transform_indices = @transform_1, window_bounds = array<i64: 1152, 128>}, {pipeline_mode = #tpu.pipeline_mode<synchronous>, transform_indices = @transform_2, window_bounds = array<i64: 1152, 128>}, {pipeline_mode = #tpu.pipeline_mode<synchronous>, transform_indices = @transform_3, window_bounds = array<i64: 1, 128>}, {pipeline_mode = #tpu.pipeline_mode<synchronous>, transform_indices = @transform_4, window_bounds = array<i64: 1, 128>}, {pipeline_mode = #tpu.pipeline_mode<synchronous>, transform_indices = @transform_5, window_bounds = array<i64: 1, 128>}, {pipeline_mode = #tpu.pipeline_mode<synchronous>, transform_indices = @transform_6, window_bounds = array<i64: 1, 128>}, {transform_indices = @transform_7, window_bounds = array<i64: 1, 288, 128>}]} {
    %c2_i32 = arith.constant 2 : i32
    %c0_i32 = arith.constant 0 : i32
    %0 = arith.cmpi eq, %c2_i32, %c0_i32 : i32
    %c1_i32 = arith.constant 1 : i32
    %1 = arith.select %0, %c1_i32, %c2_i32 : i32
    %2 = arith.remsi %arg1, %1 : i32
    %c0_i32_0 = arith.constant 0 : i32
    %3 = arith.cmpi ne, %2, %c0_i32_0 : i32
    %c0_i32_1 = arith.constant 0 : i32
    %4 = arith.cmpi slt, %2, %c0_i32_1 : i32
    %c0_i32_2 = arith.constant 0 : i32
    %5 = arith.cmpi slt, %1, %c0_i32_2 : i32
    %6 = arith.xori %4, %5 : i1
    %7 = arith.andi %6, %3 : i1
    %8 = arith.addi %2, %1 : i32
    %9 = arith.select %7, %8, %2 : i32
    %c0_i32_3 = arith.constant 0 : i32
    %10 = arith.cmpi eq, %arg1, %c0_i32_3 : i32
    %11 = arith.extui %10 : i1 to i32
    %c0_i32_4 = arith.constant 0 : i32
    %12 = arith.cmpi ne, %11, %c0_i32_4 : i32
    scf.if %12 {
      %c360_i32_108 = arith.constant 360 : i32
      %175 = arith.muli %arg0, %c360_i32_108 : i32
      %c0_i32_109 = arith.constant 0 : i32
      %176 = arith.addi %175, %c0_i32_109 : i32
      %c0_i32_110 = arith.constant 0 : i32
      %c0_i32_111 = arith.constant 0 : i32
      %c0_i32_112 = arith.constant 0 : i32
      %177 = tpu.memref_slice %arg2[%176, %c0_i32_112] : memref<720x128xf32, #tpu.memory_space<any>> -> memref<360x128xf32, #tpu.memory_space<any>>
      %c18_i32_113 = arith.constant 18 : i32
      %c0_i32_114 = arith.constant 0 : i32
      %178 = tpu.memref_slice %arg10[%c0_i32_110, %c18_i32_113, %c0_i32_114] : memref<2x396x128xf32, #tpu.memory_space<vmem>> -> memref<1x360x128xf32, #tpu.memory_space<vmem>>
      %179 = tpu.memref_squeeze %178 : memref<1x360x128xf32, #tpu.memory_space<vmem>> -> memref<360x128xf32, #tpu.memory_space<vmem>>
      %180 = tpu.memref_slice %arg12[%c0_i32_111] : memref<2x!tpu.dma_semaphore, #tpu.memory_space<semaphore_mem>> -> memref<1x!tpu.dma_semaphore, #tpu.memory_space<semaphore_mem>>
      %181 = tpu.memref_squeeze %180 : memref<1x!tpu.dma_semaphore, #tpu.memory_space<semaphore_mem>> -> memref<!tpu.dma_semaphore, #tpu.memory_space<semaphore_mem>>
      tpu.enqueue_dma source(%177 : memref<360x128xf32, #tpu.memory_space<any>>) target(%179 : memref<360x128xf32, #tpu.memory_space<vmem>>) target_semaphore(%181 : memref<!tpu.dma_semaphore, #tpu.memory_space<semaphore_mem>>)
    } else {
    }
    %c1_i32_5 = arith.constant 1 : i32
    %13 = arith.addi %arg1, %c1_i32_5 : i32
    %c1_i32_6 = arith.constant 1 : i32
    %14 = arith.cmpi slt, %13, %c1_i32_6 : i32
    %15 = arith.extui %14 : i1 to i32
    %c0_i32_7 = arith.constant 0 : i32
    %16 = arith.cmpi ne, %15, %c0_i32_7 : i32
    scf.if %16 {
      %c1_i32_108 = arith.constant 1 : i32
      %175 = arith.addi %arg1, %c1_i32_108 : i32
      %c1_i32_109 = arith.constant 1 : i32
      %176 = arith.subi %c1_i32_109, %9 : i32
      %c360_i32_110 = arith.constant 360 : i32
      %177 = arith.muli %arg0, %c360_i32_110 : i32
      %c16_i32_111 = arith.constant 16 : i32
      %178 = arith.muli %175, %c16_i32_111 : i32
      %c18_i32_112 = arith.constant 18 : i32
      %179 = arith.muli %178, %c18_i32_112 : i32
      %180 = arith.addi %177, %179 : i32
      %c0_i32_113 = arith.constant 0 : i32
      %181 = tpu.memref_slice %arg2[%180, %c0_i32_113] : memref<720x128xf32, #tpu.memory_space<any>> -> memref<360x128xf32, #tpu.memory_space<any>>
      %c18_i32_114 = arith.constant 18 : i32
      %c0_i32_115 = arith.constant 0 : i32
      %182 = tpu.memref_slice %arg10[%176, %c18_i32_114, %c0_i32_115] : memref<2x396x128xf32, #tpu.memory_space<vmem>> -> memref<1x360x128xf32, #tpu.memory_space<vmem>>
      %183 = tpu.memref_squeeze %182 : memref<1x360x128xf32, #tpu.memory_space<vmem>> -> memref<360x128xf32, #tpu.memory_space<vmem>>
      %184 = tpu.memref_slice %arg12[%176] : memref<2x!tpu.dma_semaphore, #tpu.memory_space<semaphore_mem>> -> memref<1x!tpu.dma_semaphore, #tpu.memory_space<semaphore_mem>>
      %185 = tpu.memref_squeeze %184 : memref<1x!tpu.dma_semaphore, #tpu.memory_space<semaphore_mem>> -> memref<!tpu.dma_semaphore, #tpu.memory_space<semaphore_mem>>
      tpu.enqueue_dma source(%181 : memref<360x128xf32, #tpu.memory_space<any>>) target(%183 : memref<360x128xf32, #tpu.memory_space<vmem>>) target_semaphore(%185 : memref<!tpu.dma_semaphore, #tpu.memory_space<semaphore_mem>>)
    } else {
    }
    %c360_i32 = arith.constant 360 : i32
    %17 = arith.muli %arg0, %c360_i32 : i32
    %c16_i32 = arith.constant 16 : i32
    %18 = arith.muli %arg1, %c16_i32 : i32
    %c18_i32 = arith.constant 18 : i32
    %19 = arith.muli %18, %c18_i32 : i32
    %20 = arith.addi %17, %19 : i32
    %c0_i32_8 = arith.constant 0 : i32
    %21 = tpu.memref_slice %arg2[%20, %c0_i32_8] : memref<720x128xf32, #tpu.memory_space<any>> -> memref<360x128xf32, #tpu.memory_space<any>>
    %c18_i32_9 = arith.constant 18 : i32
    %c0_i32_10 = arith.constant 0 : i32
    %22 = tpu.memref_slice %arg10[%9, %c18_i32_9, %c0_i32_10] : memref<2x396x128xf32, #tpu.memory_space<vmem>> -> memref<1x360x128xf32, #tpu.memory_space<vmem>>
    %23 = tpu.memref_squeeze %22 : memref<1x360x128xf32, #tpu.memory_space<vmem>> -> memref<360x128xf32, #tpu.memory_space<vmem>>
    %24 = tpu.memref_slice %arg12[%9] : memref<2x!tpu.dma_semaphore, #tpu.memory_space<semaphore_mem>> -> memref<1x!tpu.dma_semaphore, #tpu.memory_space<semaphore_mem>>
    %25 = tpu.memref_squeeze %24 : memref<1x!tpu.dma_semaphore, #tpu.memory_space<semaphore_mem>> -> memref<!tpu.dma_semaphore, #tpu.memory_space<semaphore_mem>>
    tpu.wait_dma2 semaphore(%25 : memref<!tpu.dma_semaphore, #tpu.memory_space<semaphore_mem>>) src(%21 : memref<360x128xf32, #tpu.memory_space<any>>) dst(%23 : memref<360x128xf32, #tpu.memory_space<vmem>>)
    %cst = arith.constant 0.000000e+00 : f32
    %26 = vector.broadcast %cst : f32 to vector<18x128xf32>
    %c0 = arith.constant 0 : index
    %c0_11 = arith.constant 0 : index
    %c0_12 = arith.constant 0 : index
    %27 = vector.load %arg10[%c0, %c0_11, %c0_12] : memref<2x396x128xf32, #tpu.memory_space<vmem>>, vector<1x18x128xf32>
    %28 = vector.shape_cast %27 : vector<1x18x128xf32> to vector<18x128xf32>
    %29 = vector.shape_cast %26 : vector<18x128xf32> to vector<1x18x128xf32>
    tpu.vector_store %arg10[%c0, %c0_11, %c0_12], %29 {strides = array<i32>} : memref<2x396x128xf32, #tpu.memory_space<vmem>>, vector<1x18x128xf32>,
    %c0_13 = arith.constant 0 : index
    %c378 = arith.constant 378 : index
    %c0_14 = arith.constant 0 : index
    %30 = vector.load %arg10[%c0_13, %c378, %c0_14] : memref<2x396x128xf32, #tpu.memory_space<vmem>>, vector<1x18x128xf32>
    %31 = vector.shape_cast %30 : vector<1x18x128xf32> to vector<18x128xf32>
    %32 = vector.shape_cast %26 : vector<18x128xf32> to vector<1x18x128xf32>
    tpu.vector_store %arg10[%c0_13, %c378, %c0_14], %32 {strides = array<i32>} : memref<2x396x128xf32, #tpu.memory_space<vmem>>, vector<1x18x128xf32>,
    %c1 = arith.constant 1 : index
    %c0_15 = arith.constant 0 : index
    %c0_16 = arith.constant 0 : index
    %33 = vector.load %arg10[%c1, %c0_15, %c0_16] : memref<2x396x128xf32, #tpu.memory_space<vmem>>, vector<1x18x128xf32>
    %34 = vector.shape_cast %33 : vector<1x18x128xf32> to vector<18x128xf32>
    %35 = vector.shape_cast %26 : vector<18x128xf32> to vector<1x18x128xf32>
    tpu.vector_store %arg10[%c1, %c0_15, %c0_16], %35 {strides = array<i32>} : memref<2x396x128xf32, #tpu.memory_space<vmem>>, vector<1x18x128xf32>,
    %c1_17 = arith.constant 1 : index
    %c378_18 = arith.constant 378 : index
    %c0_19 = arith.constant 0 : index
    %36 = vector.load %arg10[%c1_17, %c378_18, %c0_19] : memref<2x396x128xf32, #tpu.memory_space<vmem>>, vector<1x18x128xf32>
    %37 = vector.shape_cast %36 : vector<1x18x128xf32> to vector<18x128xf32>
    %38 = vector.shape_cast %26 : vector<18x128xf32> to vector<1x18x128xf32>
    tpu.vector_store %arg10[%c1_17, %c378_18, %c0_19], %38 {strides = array<i32>} : memref<2x396x128xf32, #tpu.memory_space<vmem>>, vector<1x18x128xf32>,
    %cst_20 = arith.constant 0.000000e+00 : f32
    %39 = vector.broadcast %cst_20 : f32 to vector<324x128xf32>
    %40 = arith.index_cast %9 : i32 to index
    %c17 = arith.constant 17 : index
    %c0_21 = arith.constant 0 : index
    %41 = vector.load %arg10[%40, %c17, %c0_21] : memref<2x396x128xf32, #tpu.memory_space<vmem>>, vector<1x324x128xf32>
    %42 = vector.shape_cast %41 : vector<1x324x128xf32> to vector<324x128xf32>
    %43 = arith.index_cast %9 : i32 to index
    %c18 = arith.constant 18 : index
    %c0_22 = arith.constant 0 : index
    %44 = vector.load %arg10[%43, %c18, %c0_22] : memref<2x396x128xf32, #tpu.memory_space<vmem>>, vector<1x324x128xf32>
    %45 = vector.shape_cast %44 : vector<1x324x128xf32> to vector<324x128xf32>
    %46 = tpu.concatenate %42, %45 in 1 : vector<324x128xf32>, vector<324x128xf32> -> vector<324x256xf32>
    %c0_23 = arith.constant 0 : index
    %c0_24 = arith.constant 0 : index
    %47 = vector.load %arg3[%c0_23, %c0_24] : memref<1152x128xf32, #tpu.memory_space<vmem>>, vector<256x128xf32>
    %cst_25 = arith.constant dense<0.000000e+00> : vector<324x128xf32>
    %48 = tpu.matmul %46, %47, %cst_25 {dimension_numbers = #tpu.dot_dimension_numbers<[1], [0], [0], [1], [0, 0, 1, 1], [], []>} : vector<324x256xf32>, vector<256x128xf32>, vector<324x128xf32> -> vector<324x128xf32>
    %49 = arith.addf %39, %48 : vector<324x128xf32>
    %50 = arith.index_cast %9 : i32 to index
    %c19 = arith.constant 19 : index
    %c0_26 = arith.constant 0 : index
    %51 = vector.load %arg10[%50, %c19, %c0_26] : memref<2x396x128xf32, #tpu.memory_space<vmem>>, vector<1x324x128xf32>
    %52 = vector.shape_cast %51 : vector<1x324x128xf32> to vector<324x128xf32>
    %53 = arith.index_cast %9 : i32 to index
    %c35 = arith.constant 35 : index
    %c0_27 = arith.constant 0 : index
    %54 = vector.load %arg10[%53, %c35, %c0_27] : memref<2x396x128xf32, #tpu.memory_space<vmem>>, vector<1x324x128xf32>
    %55 = vector.shape_cast %54 : vector<1x324x128xf32> to vector<324x128xf32>
    %56 = tpu.concatenate %52, %55 in 1 : vector<324x128xf32>, vector<324x128xf32> -> vector<324x256xf32>
    %c256 = arith.constant 256 : index
    %c0_28 = arith.constant 0 : index
    %57 = vector.load %arg3[%c256, %c0_28] : memref<1152x128xf32, #tpu.memory_space<vmem>>, vector<256x128xf32>
    %cst_29 = arith.constant dense<0.000000e+00> : vector<324x128xf32>
    %58 = tpu.matmul %56, %57, %cst_29 {dimension_numbers = #tpu.dot_dimension_numbers<[1], [0], [0], [1], [0, 0, 1, 1], [], []>} : vector<324x256xf32>, vector<256x128xf32>, vector<324x128xf32> -> vector<324x128xf32>
    %59 = arith.addf %49, %58 : vector<324x128xf32>
    %60 = arith.index_cast %9 : i32 to index
    %c36 = arith.constant 36 : index
    %c0_30 = arith.constant 0 : index
    %61 = vector.load %arg10[%60, %c36, %c0_30] : memref<2x396x128xf32, #tpu.memory_space<vmem>>, vector<1x324x128xf32>
    %62 = vector.shape_cast %61 : vector<1x324x128xf32> to vector<324x128xf32>
    %63 = arith.index_cast %9 : i32 to index
    %c37 = arith.constant 37 : index
    %c0_31 = arith.constant 0 : index
    %64 = vector.load %arg10[%63, %c37, %c0_31] : memref<2x396x128xf32, #tpu.memory_space<vmem>>, vector<1x324x128xf32>
    %65 = vector.shape_cast %64 : vector<1x324x128xf32> to vector<324x128xf32>
    %66 = tpu.concatenate %62, %65 in 1 : vector<324x128xf32>, vector<324x128xf32> -> vector<324x256xf32>
    %c512 = arith.constant 512 : index
    %c0_32 = arith.constant 0 : index
    %67 = vector.load %arg3[%c512, %c0_32] : memref<1152x128xf32, #tpu.memory_space<vmem>>, vector<256x128xf32>
    %cst_33 = arith.constant dense<0.000000e+00> : vector<324x128xf32>
    %68 = tpu.matmul %66, %67, %cst_33 {dimension_numbers = #tpu.dot_dimension_numbers<[1], [0], [0], [1], [0, 0, 1, 1], [], []>} : vector<324x256xf32>, vector<256x128xf32>, vector<324x128xf32> -> vector<324x128xf32>
    %69 = arith.addf %59, %68 : vector<324x128xf32>
    %70 = arith.index_cast %9 : i32 to index
    %c53 = arith.constant 53 : index
    %c0_34 = arith.constant 0 : index
    %71 = vector.load %arg10[%70, %c53, %c0_34] : memref<2x396x128xf32, #tpu.memory_space<vmem>>, vector<1x324x128xf32>
    %72 = vector.shape_cast %71 : vector<1x324x128xf32> to vector<324x128xf32>
    %73 = arith.index_cast %9 : i32 to index
    %c54 = arith.constant 54 : index
    %c0_35 = arith.constant 0 : index
    %74 = vector.load %arg10[%73, %c54, %c0_35] : memref<2x396x128xf32, #tpu.memory_space<vmem>>, vector<1x324x128xf32>
    %75 = vector.shape_cast %74 : vector<1x324x128xf32> to vector<324x128xf32>
    %76 = tpu.concatenate %72, %75 in 1 : vector<324x128xf32>, vector<324x128xf32> -> vector<324x256xf32>
    %c768 = arith.constant 768 : index
    %c0_36 = arith.constant 0 : index
    %77 = vector.load %arg3[%c768, %c0_36] : memref<1152x128xf32, #tpu.memory_space<vmem>>, vector<256x128xf32>
    %cst_37 = arith.constant dense<0.000000e+00> : vector<324x128xf32>
    %78 = tpu.matmul %76, %77, %cst_37 {dimension_numbers = #tpu.dot_dimension_numbers<[1], [0], [0], [1], [0, 0, 1, 1], [], []>} : vector<324x256xf32>, vector<256x128xf32>, vector<324x128xf32> -> vector<324x128xf32>
    %79 = arith.addf %69, %78 : vector<324x128xf32>
    %80 = arith.index_cast %9 : i32 to index
    %c55 = arith.constant 55 : index
    %c0_38 = arith.constant 0 : index
    %81 = vector.load %arg10[%80, %c55, %c0_38] : memref<2x396x128xf32, #tpu.memory_space<vmem>>, vector<1x324x128xf32>
    %82 = vector.shape_cast %81 : vector<1x324x128xf32> to vector<324x128xf32>
    %c1024 = arith.constant 1024 : index
    %c0_39 = arith.constant 0 : index
    %83 = vector.load %arg3[%c1024, %c0_39] : memref<1152x128xf32, #tpu.memory_space<vmem>>, vector<128x128xf32>
    %cst_40 = arith.constant dense<0.000000e+00> : vector<324x128xf32>
    %84 = tpu.matmul %82, %83, %cst_40 {dimension_numbers = #tpu.dot_dimension_numbers<[1], [0], [0], [1], [0, 0, 1, 1], [], []>} : vector<324x128xf32>, vector<128x128xf32>, vector<324x128xf32> -> vector<324x128xf32>
    %85 = arith.addf %79, %84 : vector<324x128xf32>
    %c0_41 = arith.constant 0 : index
    %c0_42 = arith.constant 0 : index
    %86 = vector.load %arg5[%c0_41, %c0_42] : memref<1x128xf32, #tpu.memory_space<vmem>>, vector<1x128xf32>
    %87 = vector.broadcast %86 : vector<1x128xf32> to vector<324x128xf32>
    %88 = arith.mulf %85, %87 : vector<324x128xf32>
    %c0_43 = arith.constant 0 : index
    %c0_44 = arith.constant 0 : index
    %89 = vector.load %arg6[%c0_43, %c0_44] : memref<1x128xf32, #tpu.memory_space<vmem>>, vector<1x128xf32>
    %90 = vector.broadcast %89 : vector<1x128xf32> to vector<324x128xf32>
    %91 = arith.addf %88, %90 : vector<324x128xf32>
    %cst_45 = arith.constant 0.000000e+00 : f32
    %92 = vector.broadcast %cst_45 : f32 to vector<324x128xf32>
    %93 = arith.cmpf oge, %91, %92 : vector<324x128xf32>
    %cst_46 = arith.constant 0.00999999977 : f32
    %94 = vector.broadcast %cst_46 : f32 to vector<324x128xf32>
    %95 = arith.mulf %94, %91 : vector<324x128xf32>
    %96 = arith.select %93, %91, %95 : vector<324x128xi1>, vector<324x128xf32>
    %97 = tpu.iota {dimensions = array<i32: 0>} : vector<324x1xi32>
    %c18_i32_47 = arith.constant 18 : i32
    %c0_i32_48 = arith.constant 0 : i32
    %98 = arith.cmpi eq, %c18_i32_47, %c0_i32_48 : i32
    %c1_i32_49 = arith.constant 1 : i32
    %99 = arith.select %98, %c1_i32_49, %c18_i32_47 : i32
    %100 = vector.broadcast %99 : i32 to vector<324x1xi32>
    %101 = arith.remsi %97, %100 : vector<324x1xi32>
    %c0_i32_50 = arith.constant 0 : i32
    %102 = vector.broadcast %c0_i32_50 : i32 to vector<324x1xi32>
    %103 = arith.cmpi ne, %101, %102 : vector<324x1xi32>
    %c0_i32_51 = arith.constant 0 : i32
    %104 = vector.broadcast %c0_i32_51 : i32 to vector<324x1xi32>
    %105 = arith.cmpi slt, %101, %104 : vector<324x1xi32>
    %c0_i32_52 = arith.constant 0 : i32
    %106 = arith.cmpi slt, %99, %c0_i32_52 : i32
    %107 = vector.broadcast %106 : i1 to vector<324x1xi1>
    %108 = vector.broadcast %107 : vector<324x1xi1> to vector<324x1xi1>
    %109 = arith.xori %105, %108 : vector<324x1xi1>
    %110 = arith.andi %109, %103 : vector<324x1xi1>
    %111 = vector.broadcast %99 : i32 to vector<324x1xi32>
    %112 = arith.addi %101, %111 : vector<324x1xi32>
    %113 = arith.select %110, %112, %101 : vector<324x1xi1>, vector<324x1xi32>
    %c1_i32_53 = arith.constant 1 : i32
    %114 = vector.broadcast %c1_i32_53 : i32 to vector<324x1xi32>
    %115 = arith.cmpi sge, %113, %114 : vector<324x1xi32>
    %c16_i32_54 = arith.constant 16 : i32
    %116 = vector.broadcast %c16_i32_54 : i32 to vector<324x1xi32>
    %117 = arith.cmpi sle, %113, %116 : vector<324x1xi32>
    %118 = arith.andi %115, %117 : vector<324x1xi1>
    %cst_55 = arith.constant 0.000000e+00 : f32
    %119 = vector.shape_cast %118 : vector<324x1xi1> to vector<324x1xi1>
    %120 = vector.broadcast %119 : vector<324x1xi1> to vector<324x128xi1>
    %121 = vector.broadcast %cst_55 : f32 to vector<324x128xf32>
    %122 = arith.select %120, %96, %121 : vector<324x128xi1>, vector<324x128xf32>
    %c18_56 = arith.constant 18 : index
    %c0_57 = arith.constant 0 : index
    %123 = vector.load %arg11[%c18_56, %c0_57] : memref<360x128xf32, #tpu.memory_space<vmem>>, vector<324x128xf32>
    tpu.vector_store %arg11[%c18_56, %c0_57], %122 {strides = array<i32>} : memref<360x128xf32, #tpu.memory_space<vmem>>, vector<324x128xf32>,
    %c0_58 = arith.constant 0 : index
    %c0_59 = arith.constant 0 : index
    %124 = vector.load %arg11[%c0_58, %c0_59] : memref<360x128xf32, #tpu.memory_space<vmem>>, vector<18x128xf32>
    tpu.vector_store %arg11[%c0_58, %c0_59], %26 {strides = array<i32>} : memref<360x128xf32, #tpu.memory_space<vmem>>, vector<18x128xf32>,
    %c342 = arith.constant 342 : index
    %c0_60 = arith.constant 0 : index
    %125 = vector.load %arg11[%c342, %c0_60] : memref<360x128xf32, #tpu.memory_space<vmem>>, vector<18x128xf32>
    tpu.vector_store %arg11[%c342, %c0_60], %26 {strides = array<i32>} : memref<360x128xf32, #tpu.memory_space<vmem>>, vector<18x128xf32>,
    %c0_i32_61 = arith.constant 0 : i32
    %126 = arith.cmpi eq, %arg1, %c0_i32_61 : i32
    %127 = arith.extui %126 : i1 to i32
    %c0_i32_62 = arith.constant 0 : i32
    %128 = arith.cmpi ne, %127, %c0_i32_62 : i32
    scf.if %128 {
      %c18_108 = arith.constant 18 : index
      %c0_109 = arith.constant 0 : index
      %175 = vector.load %arg11[%c18_108, %c0_109] : memref<360x128xf32, #tpu.memory_space<vmem>>, vector<18x128xf32>
      tpu.vector_store %arg11[%c18_108, %c0_109], %26 {strides = array<i32>} : memref<360x128xf32, #tpu.memory_space<vmem>>, vector<18x128xf32>,
    } else {
    }
    %c0_i32_63 = arith.constant 0 : i32
    %129 = arith.cmpi eq, %arg1, %c0_i32_63 : i32
    %130 = arith.extui %129 : i1 to i32
    %c0_i32_64 = arith.constant 0 : i32
    %131 = arith.cmpi ne, %130, %c0_i32_64 : i32
    scf.if %131 {
      %c324 = arith.constant 324 : index
      %c0_108 = arith.constant 0 : index
      %175 = vector.load %arg11[%c324, %c0_108] : memref<360x128xf32, #tpu.memory_space<vmem>>, vector<18x128xf32>
      tpu.vector_store %arg11[%c324, %c0_108], %26 {strides = array<i32>} : memref<360x128xf32, #tpu.memory_space<vmem>>, vector<18x128xf32>,
    } else {
    }
    %cst_65 = arith.constant 0.000000e+00 : f32
    %132 = vector.broadcast %cst_65 : f32 to vector<288x128xf32>
    %c17_66 = arith.constant 17 : index
    %c0_67 = arith.constant 0 : index
    %133 = vector.load %arg11[%c17_66, %c0_67] : memref<360x128xf32, #tpu.memory_space<vmem>>, vector<288x128xf32>
    %c18_68 = arith.constant 18 : index
    %c0_69 = arith.constant 0 : index
    %134 = vector.load %arg11[%c18_68, %c0_69] : memref<360x128xf32, #tpu.memory_space<vmem>>, vector<288x128xf32>
    %135 = tpu.concatenate %133, %134 in 1 : vector<288x128xf32>, vector<288x128xf32> -> vector<288x256xf32>
    %c0_70 = arith.constant 0 : index
    %c0_71 = arith.constant 0 : index
    %136 = vector.load %arg4[%c0_70, %c0_71] : memref<1152x128xf32, #tpu.memory_space<vmem>>, vector<256x128xf32>
    %cst_72 = arith.constant dense<0.000000e+00> : vector<288x128xf32>
    %137 = tpu.matmul %135, %136, %cst_72 {dimension_numbers = #tpu.dot_dimension_numbers<[1], [0], [0], [1], [0, 0, 1, 1], [], []>} : vector<288x256xf32>, vector<256x128xf32>, vector<288x128xf32> -> vector<288x128xf32>
    %138 = arith.addf %132, %137 : vector<288x128xf32>
    %c19_73 = arith.constant 19 : index
    %c0_74 = arith.constant 0 : index
    %139 = vector.load %arg11[%c19_73, %c0_74] : memref<360x128xf32, #tpu.memory_space<vmem>>, vector<288x128xf32>
    %c35_75 = arith.constant 35 : index
    %c0_76 = arith.constant 0 : index
    %140 = vector.load %arg11[%c35_75, %c0_76] : memref<360x128xf32, #tpu.memory_space<vmem>>, vector<288x128xf32>
    %141 = tpu.concatenate %139, %140 in 1 : vector<288x128xf32>, vector<288x128xf32> -> vector<288x256xf32>
    %c256_77 = arith.constant 256 : index
    %c0_78 = arith.constant 0 : index
    %142 = vector.load %arg4[%c256_77, %c0_78] : memref<1152x128xf32, #tpu.memory_space<vmem>>, vector<256x128xf32>
    %cst_79 = arith.constant dense<0.000000e+00> : vector<288x128xf32>
    %143 = tpu.matmul %141, %142, %cst_79 {dimension_numbers = #tpu.dot_dimension_numbers<[1], [0], [0], [1], [0, 0, 1, 1], [], []>} : vector<288x256xf32>, vector<256x128xf32>, vector<288x128xf32> -> vector<288x128xf32>
    %144 = arith.addf %138, %143 : vector<288x128xf32>
    %c36_80 = arith.constant 36 : index
    %c0_81 = arith.constant 0 : index
    %145 = vector.load %arg11[%c36_80, %c0_81] : memref<360x128xf32, #tpu.memory_space<vmem>>, vector<288x128xf32>
    %c37_82 = arith.constant 37 : index
    %c0_83 = arith.constant 0 : index
    %146 = vector.load %arg11[%c37_82, %c0_83] : memref<360x128xf32, #tpu.memory_space<vmem>>, vector<288x128xf32>
    %147 = tpu.concatenate %145, %146 in 1 : vector<288x128xf32>, vector<288x128xf32> -> vector<288x256xf32>
    %c512_84 = arith.constant 512 : index
    %c0_85 = arith.constant 0 : index
    %148 = vector.load %arg4[%c512_84, %c0_85] : memref<1152x128xf32, #tpu.memory_space<vmem>>, vector<256x128xf32>
    %cst_86 = arith.constant dense<0.000000e+00> : vector<288x128xf32>
    %149 = tpu.matmul %147, %148, %cst_86 {dimension_numbers = #tpu.dot_dimension_numbers<[1], [0], [0], [1], [0, 0, 1, 1], [], []>} : vector<288x256xf32>, vector<256x128xf32>, vector<288x128xf32> -> vector<288x128xf32>
    %150 = arith.addf %144, %149 : vector<288x128xf32>
    %c53_87 = arith.constant 53 : index
    %c0_88 = arith.constant 0 : index
    %151 = vector.load %arg11[%c53_87, %c0_88] : memref<360x128xf32, #tpu.memory_space<vmem>>, vector<288x128xf32>
    %c54_89 = arith.constant 54 : index
    %c0_90 = arith.constant 0 : index
    %152 = vector.load %arg11[%c54_89, %c0_90] : memref<360x128xf32, #tpu.memory_space<vmem>>, vector<288x128xf32>
    %153 = tpu.concatenate %151, %152 in 1 : vector<288x128xf32>, vector<288x128xf32> -> vector<288x256xf32>
    %c768_91 = arith.constant 768 : index
    %c0_92 = arith.constant 0 : index
    %154 = vector.load %arg4[%c768_91, %c0_92] : memref<1152x128xf32, #tpu.memory_space<vmem>>, vector<256x128xf32>
    %cst_93 = arith.constant dense<0.000000e+00> : vector<288x128xf32>
    %155 = tpu.matmul %153, %154, %cst_93 {dimension_numbers = #tpu.dot_dimension_numbers<[1], [0], [0], [1], [0, 0, 1, 1], [], []>} : vector<288x256xf32>, vector<256x128xf32>, vector<288x128xf32> -> vector<288x128xf32>
    %156 = arith.addf %150, %155 : vector<288x128xf32>
    %c55_94 = arith.constant 55 : index
    %c0_95 = arith.constant 0 : index
    %157 = vector.load %arg11[%c55_94, %c0_95] : memref<360x128xf32, #tpu.memory_space<vmem>>, vector<288x128xf32>
    %c1024_96 = arith.constant 1024 : index
    %c0_97 = arith.constant 0 : index
    %158 = vector.load %arg4[%c1024_96, %c0_97] : memref<1152x128xf32, #tpu.memory_space<vmem>>, vector<128x128xf32>
    %cst_98 = arith.constant dense<0.000000e+00> : vector<288x128xf32>
    %159 = tpu.matmul %157, %158, %cst_98 {dimension_numbers = #tpu.dot_dimension_numbers<[1], [0], [0], [1], [0, 0, 1, 1], [], []>} : vector<288x128xf32>, vector<128x128xf32>, vector<288x128xf32> -> vector<288x128xf32>
    %160 = arith.addf %156, %159 : vector<288x128xf32>
    %c0_99 = arith.constant 0 : index
    %c0_100 = arith.constant 0 : index
    %161 = vector.load %arg7[%c0_99, %c0_100] : memref<1x128xf32, #tpu.memory_space<vmem>>, vector<1x128xf32>
    %162 = vector.broadcast %161 : vector<1x128xf32> to vector<288x128xf32>
    %163 = arith.mulf %160, %162 : vector<288x128xf32>
    %c0_101 = arith.constant 0 : index
    %c0_102 = arith.constant 0 : index
    %164 = vector.load %arg8[%c0_101, %c0_102] : memref<1x128xf32, #tpu.memory_space<vmem>>, vector<1x128xf32>
    %165 = vector.broadcast %164 : vector<1x128xf32> to vector<288x128xf32>
    %166 = arith.addf %163, %165 : vector<288x128xf32>
    %cst_103 = arith.constant 0.000000e+00 : f32
    %167 = vector.broadcast %cst_103 : f32 to vector<288x128xf32>
    %168 = arith.cmpf oge, %166, %167 : vector<288x128xf32>
    %cst_104 = arith.constant 0.00999999977 : f32
    %169 = vector.broadcast %cst_104 : f32 to vector<288x128xf32>
    %170 = arith.mulf %169, %166 : vector<288x128xf32>
    %171 = arith.select %168, %166, %170 : vector<288x128xi1>, vector<288x128xf32>
    %c0_105 = arith.constant 0 : index
    %c0_106 = arith.constant 0 : index
    %c0_107 = arith.constant 0 : index
    %172 = vector.load %arg9[%c0_105, %c0_106, %c0_107] : memref<1x288x128xf32, #tpu.memory_space<vmem>>, vector<1x288x128xf32>
    %173 = vector.shape_cast %172 : vector<1x288x128xf32> to vector<288x128xf32>
    %174 = vector.shape_cast %171 : vector<288x128xf32> to vector<1x288x128xf32>
    tpu.vector_store %arg9[%c0_105, %c0_106, %c0_107], %174 {strides = array<i32>} : memref<1x288x128xf32, #tpu.memory_space<vmem>>, vector<1x288x128xf32>,
    return
  }
  func.func @transform_1(%arg0: i32, %arg1: i32) -> (i32, i32) {
    %c0_i32 = arith.constant 0 : i32
    %c0_i32_0 = arith.constant 0 : i32
    %c0_i32_1 = arith.constant 0 : i32
    return %c0_i32, %c0_i32_0 : i32, i32
  }
  func.func @transform_2(%arg0: i32, %arg1: i32) -> (i32, i32) {
    %c0_i32 = arith.constant 0 : i32
    %c0_i32_0 = arith.constant 0 : i32
    %c0_i32_1 = arith.constant 0 : i32
    return %c0_i32, %c0_i32_0 : i32, i32
  }
  func.func @transform_3(%arg0: i32, %arg1: i32) -> (i32, i32) {
    %c0_i32 = arith.constant 0 : i32
    %c0_i32_0 = arith.constant 0 : i32
    %c0_i32_1 = arith.constant 0 : i32
    return %c0_i32, %c0_i32_0 : i32, i32
  }
  func.func @transform_4(%arg0: i32, %arg1: i32) -> (i32, i32) {
    %c0_i32 = arith.constant 0 : i32
    %c0_i32_0 = arith.constant 0 : i32
    %c0_i32_1 = arith.constant 0 : i32
    return %c0_i32, %c0_i32_0 : i32, i32
  }
  func.func @transform_5(%arg0: i32, %arg1: i32) -> (i32, i32) {
    %c0_i32 = arith.constant 0 : i32
    %c0_i32_0 = arith.constant 0 : i32
    %c0_i32_1 = arith.constant 0 : i32
    return %c0_i32, %c0_i32_0 : i32, i32
  }
  func.func @transform_6(%arg0: i32, %arg1: i32) -> (i32, i32) {
    %c0_i32 = arith.constant 0 : i32
    %c0_i32_0 = arith.constant 0 : i32
    %c0_i32_1 = arith.constant 0 : i32
    return %c0_i32, %c0_i32_0 : i32, i32
  }
  func.func @transform_7(%arg0: i32, %arg1: i32) -> (i32, i32, i32) {
    %c0_i32 = arith.constant 0 : i32
    %c0_i32_0 = arith.constant 0 : i32
    return %arg0, %arg1, %c0_i32 : i32, i32, i32
  }
}

</mosaic_0001>

<llo_original>
// kernel: conv_block.1
$region0: #{conv_block.1}
  #allocation0 [shape = 'u32[]', space=smem, size = 0x4, offset = 0x4, fixed_abs, tag = 'smem constant byte address 0x4 - core index']
  #allocation1 [shape = 'u32[72,128]{1,0:T(1,128)}', space=vmem, size = 0x9000, scoped, tag = 'internal scratch']
  #allocation2 [shape = 'f32[2,396,128]{2,1,0:T(8,128)}', space=vmem, size = 0x64000, scoped, tag = 'scratch operand']
  #allocation3 [shape = 'f32[360,128]{1,0:T(8,128)}', space=vmem, size = 0x2d000, scoped, tag = 'scratch operand']
  #allocation4 [shape = 's32[2]{0}', space=sflag, size = 0x8, scoped, tag = 'scratch operand']
  #allocation5 [shape = 's32[]', space=sflag, size = 0x4, offset = 0, fixed_abs, tag = 'sflag constant byte address 0x0 - dummy sync flag']
  #allocation6 [shape = 's32[]', space=sflag, size = 0x4, offset = 0, fixed_abs, tag = 'sflag constant byte address 0x0 - dummy sync flag']
  %s0 = inlined_call_operand.vmem [shape: f32[720,128], index: 0, kind: input, shape index: {}]
  %s1 = inlined_call_operand.vmem [shape: f32[1152,128], index: 1, kind: input, shape index: {}]
  %s2 = inlined_call_operand.vmem [shape: f32[1152,128], index: 2, kind: input, shape index: {}]
  %s3 = inlined_call_operand.vmem [shape: f32[1,128], index: 3, kind: input, shape index: {}]
  %s4 = inlined_call_operand.vmem [shape: f32[1,128], index: 4, kind: input, shape index: {}]
  %s5 = inlined_call_operand.vmem [shape: f32[1,128], index: 5, kind: input, shape index: {}]
  %s6 = inlined_call_operand.vmem [shape: f32[1,128], index: 6, kind: input, shape index: {}]
  %s7 = inlined_call_operand.vmem [shape: f32[2,288,128], index: 7, kind: output, shape index: {}]
  %s8 = sld [smem:[#allocation0]]
  $region107: #{conv_block.1} parent=0
    _
  %s10 = ssub.s32 1, %s8
  %s11 = scalar_select 0, %s10, %s8
  loop: start=0, step=1, limit=4
  $region2: #{conv_block.1} parent=0 // loop_pre_header
    _
  $region3: #{conv_block.1} parent=0 // loop_header
    %s13 = sphi 0, %s17
    %p14 = scmp.ge.s32.totalorder %s13, 4
    %s20 = sphi 0, %s32
    %s21 = sphi 0, %s28
    %s22 = sphi 0, %s20
    %s23 = sphi 0, %s21
    %s24 = sphi 0, %s22
    %s25 = sphi 0, %s23
    %s33 = sphi 0, %s33
    %s35 = sphi 0, %s33
    %s36 = sphi 0, %s35
    %s50 = sphi 0, %s36
    %s54 = sphi 0, %s54
    %s56 = sphi 0, %s54
    %s57 = sphi 0, %s56
    %s71 = sphi 0, %s57
    %s75 = sphi 0, %s75
    %s77 = sphi 0, %s75
    %s78 = sphi 0, %s77
    %s92 = sphi 0, %s78
    %s96 = sphi 0, %s96
    %s98 = sphi 0, %s96
    %s99 = sphi 0, %s98
    %s113 = sphi 0, %s99
    %s117 = sphi 0, %s117
    %s119 = sphi 0, %s117
    %s120 = sphi 0, %s119
    %s134 = sphi 0, %s120
    %s138 = sphi 0, %s138
    %s140 = sphi 0, %s138
    %s141 = sphi 0, %s140
    %s155 = sphi 0, %s141
    %s163 = sphi 0, %s165
    %s166 = sphi 0, %s163
    %s167 = sphi 0, %s166
    %s183 = sphi 0, %s167
  $region4: #{conv_block.1} parent=0 // loop_header_branch
    %16 = sbr.rel (%p14) target = $region8
  $region5: #{conv_block.1} parent=0 // loop_body
    %s18 = ssub.s32 %s13, 1
    %s19 = ssub.s32 %s13, 2
    %s26 = sadd.s32 1, %s21
    %p27 = scmp.ge.s32.totalorder %s26, 1
    %s28 = scalar_select %p27, 0, %s26
    %s29 = sadd.s32 1, %s20
    %s30 = scalar_select %p27, %s29, %s20
    %p31 = scmp.ge.s32.totalorder %s30, 2
    %s32 = scalar_select %p31, 0, %s30
    %s34 = sadd.s32 %s33, 1
    %p37 = scmp.eq.s32.totalorder %s13, 1
    %p38 = scmp.ne.s32.totalorder %s33, %s35
    %p39 = scmp.eq.s32.totalorder %s13, 0
    %p40 = por %p38, %p39
    %p41 = scmp.ne.s32.totalorder %s33, %s35
    %p42 = scmp.eq.s32.totalorder %s18, 1
    %p43 = por %p41, %p42
    %p44 = scmp.ne.s32.totalorder %s35, %s36
    %p45 = scmp.eq.s32.totalorder %s18, 0
    %p46 = por %p44, %p45
    %p47 = scmp.ne.s32.totalorder %s35, %s36
    %p48 = scmp.eq.s32.totalorder %s19, 1
    %p49 = por %p47, %p48
    %p51 = scmp.ne.s32.totalorder %s36, %s50
    %p52 = scmp.eq.s32.totalorder %s19, 0
    %p53 = por %p51, %p52
    %s55 = sadd.s32 %s54, 1
    %p58 = scmp.eq.s32.totalorder %s13, 1
    %p59 = scmp.ne.s32.totalorder %s54, %s56
    %p60 = scmp.eq.s32.totalorder %s13, 0
    %p61 = por %p59, %p60
    %p62 = scmp.ne.s32.totalorder %s54, %s56
    %p63 = scmp.eq.s32.totalorder %s18, 1
    %p64 = por %p62, %p63
    %p65 = scmp.ne.s32.totalorder %s56, %s57
    %p66 = scmp.eq.s32.totalorder %s18, 0
    %p67 = por %p65, %p66
    %p68 = scmp.ne.s32.totalorder %s56, %s57
    %p69 = scmp.eq.s32.totalorder %s19, 1
    %p70 = por %p68, %p69
    %p72 = scmp.ne.s32.totalorder %s57, %s71
    %p73 = scmp.eq.s32.totalorder %s19, 0
    %p74 = por %p72, %p73
    %s76 = sadd.s32 %s75, 1
    %p79 = scmp.eq.s32.totalorder %s13, 1
    %p80 = scmp.ne.s32.totalorder %s75, %s77
    %p81 = scmp.eq.s32.totalorder %s13, 0
    %p82 = por %p80, %p81
    %p83 = scmp.ne.s32.totalorder %s75, %s77
    %p84 = scmp.eq.s32.totalorder %s18, 1
    %p85 = por %p83, %p84
    %p86 = scmp.ne.s32.totalorder %s77, %s78
    %p87 = scmp.eq.s32.totalorder %s18, 0
    %p88 = por %p86, %p87
    %p89 = scmp.ne.s32.totalorder %s77, %s78
    %p90 = scmp.eq.s32.totalorder %s19, 1
    %p91 = por %p89, %p90
    %p93 = scmp.ne.s32.totalorder %s78, %s92
    %p94 = scmp.eq.s32.totalorder %s19, 0
    %p95 = por %p93, %p94
    %s97 = sadd.s32 %s96, 1
    %p100 = scmp.eq.s32.totalorder %s13, 1
    %p101 = scmp.ne.s32.totalorder %s96, %s98
    %p102 = scmp.eq.s32.totalorder %s13, 0
    %p103 = por %p101, %p102
    %p104 = scmp.ne.s32.totalorder %s96, %s98
    %p105 = scmp.eq.s32.totalorder %s18, 1
    %p106 = por %p104, %p105
    %p107 = scmp.ne.s32.totalorder %s98, %s99
    %p108 = scmp.eq.s32.totalorder %s18, 0
    %p109 = por %p107, %p108
    %p110 = scmp.ne.s32.totalorder %s98, %s99
    %p111 = scmp.eq.s32.totalorder %s19, 1
    %p112 = por %p110, %p111
    %p114 = scmp.ne.s32.totalorder %s99, %s113
    %p115 = scmp.eq.s32.totalorder %s19, 0
    %p116 = por %p114, %p115
    %s118 = sadd.s32 %s117, 1
    %p121 = scmp.eq.s32.totalorder %s13, 1
    %p122 = scmp.ne.s32.totalorder %s117, %s119
    %p123 = scmp.eq.s32.totalorder %s13, 0
    %p124 = por %p122, %p123
    %p125 = scmp.ne.s32.totalorder %s117, %s119
    %p126 = scmp.eq.s32.totalorder %s18, 1
    %p127 = por %p125, %p126
    %p128 = scmp.ne.s32.totalorder %s119, %s120
    %p129 = scmp.eq.s32.totalorder %s18, 0
    %p130 = por %p128, %p129
    %p131 = scmp.ne.s32.totalorder %s119, %s120
    %p132 = scmp.eq.s32.totalorder %s19, 1
    %p133 = por %p131, %p132
    %p135 = scmp.ne.s32.totalorder %s120, %s134
    %p136 = scmp.eq.s32.totalorder %s19, 0
    %p137 = por %p135, %p136
    %s139 = sadd.s32 %s138, 1
    %p142 = scmp.eq.s32.totalorder %s13, 1
    %p143 = scmp.ne.s32.totalorder %s138, %s140
    %p144 = scmp.eq.s32.totalorder %s13, 0
    %p145 = por %p143, %p144
    %p146 = scmp.ne.s32.totalorder %s138, %s140
    %p147 = scmp.eq.s32.totalorder %s18, 1
    %p148 = por %p146, %p147
    %p149 = scmp.ne.s32.totalorder %s140, %s141
    %p150 = scmp.eq.s32.totalorder %s18, 0
    %p151 = por %p149, %p150
    %p152 = scmp.ne.s32.totalorder %s140, %s141
    %p153 = scmp.eq.s32.totalorder %s19, 1
    %p154 = por %p152, %p153
    %p156 = scmp.ne.s32.totalorder %s141, %s155
    %p157 = scmp.eq.s32.totalorder %s19, 0
    %p158 = por %p156, %p157
    %s159 = ssub.s32 %s20, %s32
    %s160 = ssub.s32 %s21, %s28
    %s161 = sor.u32 %s159, %s160
    %p162 = scmp.eq.s32.totalorder %s161, 0
    %s164 = sadd.s32 %s163, 1
    %s165 = scalar_select %p162, %s163, %s164
    %p168 = pneg %p162
    %p169 = scmp.eq.s32.totalorder %s13, 1
    %p170 = por %p168, %p169
    %p171 = scmp.ne.s32.totalorder %s163, %s166
    %p172 = scmp.eq.s32.totalorder %s13, 0
    %p173 = por %p171, %p172
    %p174 = scmp.ne.s32.totalorder %s163, %s166
    %p175 = scmp.eq.s32.totalorder %s18, 1
    %p176 = por %p174, %p175
    %p177 = scmp.ne.s32.totalorder %s166, %s167
    %p178 = scmp.eq.s32.totalorder %s18, 0
    %p179 = por %p177, %p178
    %p180 = scmp.ne.s32.totalorder %s166, %s167
    %p181 = scmp.eq.s32.totalorder %s19, 1
    %p182 = por %p180, %p181
    %p184 = scmp.ne.s32.totalorder %s167, %s183
    %p185 = scmp.eq.s32.totalorder %s19, 0
    %p186 = por %p184, %p185
    %p187 = scmp.le.s32.totalorder 1, %s13
    %p188 = scmp.lt.s32.totalorder %s13, 3
    %p189 = pnand %p187, %p188
    %p190 = pneg %p189
    // Predicated region
    $region9: #{conv_block.1} parent=5 // pred_check
      _
    $region10: #{conv_block.1} parent=5 // pred_check_branch
      %192 = sbr.rel (%p189) target = $region12
    $region11: #{conv_block.1} parent=5 // pred_region
      %s193 = ssub.s32 %s13, 1
      // Predicated region
      $region13: #{conv_block.1} parent=11 // pred_check
        %p194 = pneg %p46
      $region14: #{conv_block.1} parent=11 // pred_check_branch
        %196 = sbr.rel (%p194) target = $region16
      $region15: #{conv_block.1} parent=11 // pred_region
        _
      $region16: #{conv_block.1} parent=11 // pred_fallthru
        _
      // Predicated region
      $region17: #{conv_block.1} parent=11 // pred_check
        %p197 = pneg %p67
      $region18: #{conv_block.1} parent=11 // pred_check_branch
        %199 = sbr.rel (%p197) target = $region20
      $region19: #{conv_block.1} parent=11 // pred_region
        _
      $region20: #{conv_block.1} parent=11 // pred_fallthru
        _
      // Predicated region
      $region21: #{conv_block.1} parent=11 // pred_check
        %p200 = pneg %p88
      $region22: #{conv_block.1} parent=11 // pred_check_branch
        %202 = sbr.rel (%p200) target = $region24
      $region23: #{conv_block.1} parent=11 // pred_region
        _
      $region24: #{conv_block.1} parent=11 // pred_fallthru
        _
      // Predicated region
      $region25: #{conv_block.1} parent=11 // pred_check
        %p203 = pneg %p109
      $region26: #{conv_block.1} parent=11 // pred_check_branch
        %205 = sbr.rel (%p203) target = $region28
      $region27: #{conv_block.1} parent=11 // pred_region
        _
      $region28: #{conv_block.1} parent=11 // pred_fallthru
        _
      // Predicated region
      $region29: #{conv_block.1} parent=11 // pred_check
        %p206 = pneg %p130
      $region30: #{conv_block.1} parent=11 // pred_check_branch
        %208 = sbr.rel (%p206) target = $region32
      $region31: #{conv_block.1} parent=11 // pred_region
        _
      $region32: #{conv_block.1} parent=11 // pred_fallthru
        _
      // Predicated region
      $region33: #{conv_block.1} parent=11 // pred_check
        %p209 = pneg %p151
      $region34: #{conv_block.1} parent=11 // pred_check_branch
        %211 = sbr.rel (%p209) target = $region36
      $region35: #{conv_block.1} parent=11 // pred_region
        _
      $region36: #{conv_block.1} parent=11 // pred_fallthru
        _
    $region12: #{conv_block.1} parent=5 // pred_fallthru
      _
    %p212 = scmp.lt.s32.totalorder %s13, 2
    // Predicated region
    $region37: #{conv_block.1} parent=5 // pred_check
      %p213 = pneg %p212
    $region38: #{conv_block.1} parent=5 // pred_check_branch
      %215 = sbr.rel (%p213) target = $region40
    $region39: #{conv_block.1} parent=5 // pred_region
      _
    $region40: #{conv_block.1} parent=5 // pred_fallthru
      _
    %p216 = scmp.le.s32.totalorder 1, %s13
    %p217 = scmp.lt.s32.totalorder %s13, 3
    %p218 = pnand %p216, %p217
    %p219 = pneg %p218
    // Predicated region
    $region41: #{conv_block.1} parent=5 // pred_check
      _
    $region42: #{conv_block.1} parent=5 // pred_check_branch
      %221 = sbr.rel (%p218) target = $region44
    $region43: #{conv_block.1} parent=5 // pred_region
      %s222 = ssub.s32 %s13, 1
      %p223 = pneg %p46
      %p224 = pneg %p43
      %p225 = pneg %p67
      %p226 = pneg %p64
      %p227 = pneg %p88
      %p228 = pneg %p85
      %p229 = pneg %p109
      %p230 = pneg %p106
      %p231 = pneg %p130
      %p232 = pneg %p127
      %p233 = pneg %p151
      %p234 = pneg %p148
      %p235 = pneg %p179
      %p236 = pneg %p176
      %s237 = smul.u32 36, %s23
      %p238 = scmp.lt.s32.totalorder %s22, 1
      %s239 = scalar_select %p238, %s22, 1
      %p240 = scmp.lt.s32.totalorder %s237, 35
      %s241 = scalar_select %p240, %s237, 35
      %s242 = smul.addr %s239, 36
      %s243 = sadd.s32 %s241, %s242
      %s244 = smul.addr %s243, 8
      %s245 = scalar_lea.vmem %s7, %s244
      %s246 = smul.u32 36, %s23
      %p247 = scmp.lt.s32.totalorder %s22, 1
      %s248 = scalar_select %p247, %s22, 1
      %p249 = scmp.lt.s32.totalorder %s246, 35
      %s250 = scalar_select %p249, %s246, 35
      %s251 = smul.addr %s248, 36
      %s252 = sadd.s32 %s250, %s251
      %s253 = smul.addr %s252, 8
      %s254 = scalar_lea.vmem %s7, %s253
      %s255 = smul.u32 36, %s23
      %p256 = scmp.lt.s32.totalorder %s23, 0
      %s257 = ssub.s32 0, %s23
      %s258 = scalar_select %p256, %s257, %s23
      %s259 = sand.u32 %s258, 1
      %s260 = ssub.s32 0, %s259
      %s261 = scalar_select %p256, %s260, %s259
      %p262 = scmp.ne.s32.totalorder %s261, 0
      %p263 = scmp.lt.s32.totalorder %s261, 0
      %p264 = pnand %p263, %p262
      %p265 = pneg %p264
      %s266 = sadd.s32 %s261, 2
      %s267 = scalar_select %p265, %s266, %s261
      %p268 = scmp.eq.s32.totalorder %s23, 0
      // Predicated region
      $region45: #{conv_block.1} parent=43 // pred_check
        %p269 = pneg %p268
      $region46: #{conv_block.1} parent=43 // pred_check_branch
        %271 = sbr.rel (%p269) target = $region48
      $region47: #{conv_block.1} parent=43 // pred_region
        %s272 = smul.u32 %s22, 360
        %s273 = scalar_lea.vmem %s0, %s272
        %s274 = scalar_lea.vmem [#allocation2], 18
        // Predicated region
        $region49: #{conv_block.1} parent=47 // pred_check
          _
        $region50: #{conv_block.1} parent=47 // pred_check_branch
          %276 = sbr.rel (0) target = $region52
        $region51: #{conv_block.1} parent=47 // pred_region
          loop: start=0, step=1, limit=1
          $region53: #{conv_block.1} parent=51 // loop_pre_header
            _
          $region54: #{conv_block.1} parent=51 // loop_header
            %s278 = sphi 0, %s282
            %p279 = scmp.ge.s32.totalorder %s278, 1
            %s283 = sphi %s273, %s273
            %s284 = sphi %s274, %s274
          $region55: #{conv_block.1} parent=51 // loop_header_branch
            %281 = sbr.rel (%p279) target = $region59
          $region56: #{conv_block.1} parent=51 // loop_body
            %v285 = vld [vmem:[%s283] sm:$0xff]
            %286 = vst [vmem:[%s284] sm:$0xff] %v285
            %v287 = vld [vmem:[%s283 + $0x8] sm:$0xff]
            %288 = vst [vmem:[%s284 + $0x8] sm:$0xff] %v287
            %v289 = vld [vmem:[%s283 + $0x10] sm:$0xff]
            %290 = vst [vmem:[%s284 + $0x10] sm:$0xff] %v289
            %v291 = vld [vmem:[%s283 + $0x18] sm:$0xff]
            %292 = vst [vmem:[%s284 + $0x18] sm:$0xff] %v291
            %v293 = vld [vmem:[%s283 + $0x20] sm:$0xff]
            %294 = vst [vmem:[%s284 + $0x20] sm:$0xff] %v293
            %v295 = vld [vmem:[%s283 + $0x28] sm:$0xff]
            %296 = vst [vmem:[%s284 + $0x28] sm:$0xff] %v295
            %v297 = vld [vmem:[%s283 + $0x30] sm:$0xff]
            %298 = vst [vmem:[%s284 + $0x30] sm:$0xff] %v297
            %v299 = vld [vmem:[%s283 + $0x38] sm:$0xff]
            %300 = vst [vmem:[%s284 + $0x38] sm:$0xff] %v299
            %v301 = vld [vmem:[%s283 + $0x40] sm:$0xff]
            %302 = vst [vmem:[%s284 + $0x40] sm:$0xff] %v301
            %v303 = vld [vmem:[%s283 + $0x48] sm:$0xff]
            %304 = vst [vmem:[%s284 + $0x48] sm:$0xff] %v303
            %v305 = vld [vmem:[%s283 + $0x50] sm:$0xff]
            %306 = vst [vmem:[%s284 + $0x50] sm:$0xff] %v305
            %v307 = vld [vmem:[%s283 + $0x58] sm:$0xff]
            %308 = vst [vmem:[%s284 + $0x58] sm:$0xff] %v307
            %v309 = vld [vmem:[%s283 + $0x60] sm:$0xff]
            %310 = vst [vmem:[%s284 + $0x60] sm:$0xff] %v309
            %v311 = vld [vmem:[%s283 + $0x68] sm:$0xff]
            %312 = vst [vmem:[%s284 + $0x68] sm:$0xff] %v311
            %v313 = vld [vmem:[%s283 + $0x70] sm:$0xff]
            %314 = vst [vmem:[%s284 + $0x70] sm:$0xff] %v313
            %v315 = vld [vmem:[%s283 + $0x78] sm:$0xff]
            %316 = vst [vmem:[%s284 + $0x78] sm:$0xff] %v315
            %v317 = vld [vmem:[%s283 + $0x80] sm:$0xff]
            %318 = vst [vmem:[%s284 + $0x80] sm:$0xff] %v317
            %v319 = vld [vmem:[%s283 + $0x88] sm:$0xff]
            %320 = vst [vmem:[%s284 + $0x88] sm:$0xff] %v319
            %v321 = vld [vmem:[%s283 + $0x90] sm:$0xff]
            %322 = vst [vmem:[%s284 + $0x90] sm:$0xff] %v321
            %v323 = vld [vmem:[%s283 + $0x98] sm:$0xff]
            %324 = vst [vmem:[%s284 + $0x98] sm:$0xff] %v323
            %v325 = vld [vmem:[%s283 + $0xa0] sm:$0xff]
            %326 = vst [vmem:[%s284 + $0xa0] sm:$0xff] %v325
            %v327 = vld [vmem:[%s283 + $0xa8] sm:$0xff]
            %328 = vst [vmem:[%s284 + $0xa8] sm:$0xff] %v327
            %v329 = vld [vmem:[%s283 + $0xb0] sm:$0xff]
            %330 = vst [vmem:[%s284 + $0xb0] sm:$0xff] %v329
            %v331 = vld [vmem:[%s283 + $0xb8] sm:$0xff]
            %332 = vst [vmem:[%s284 + $0xb8] sm:$0xff] %v331
            %v333 = vld [vmem:[%s283 + $0xc0] sm:$0xff]
            %334 = vst [vmem:[%s284 + $0xc0] sm:$0xff] %v333
            %v335 = vld [vmem:[%s283 + $0xc8] sm:$0xff]
            %336 = vst [vmem:[%s284 + $0xc8] sm:$0xff] %v335
            %v337 = vld [vmem:[%s283 + $0xd0] sm:$0xff]
            %338 = vst [vmem:[%s284 + $0xd0] sm:$0xff] %v337
            %v339 = vld [vmem:[%s283 + $0xd8] sm:$0xff]
            %340 = vst [vmem:[%s284 + $0xd8] sm:$0xff] %v339
            %v341 = vld [vmem:[%s283 + $0xe0] sm:$0xff]
            %342 = vst [vmem:[%s284 + $0xe0] sm:$0xff] %v341
            %v343 = vld [vmem:[%s283 + $0xe8] sm:$0xff]
            %344 = vst [vmem:[%s284 + $0xe8] sm:$0xff] %v343
            %v345 = vld [vmem:[%s283 + $0xf0] sm:$0xff]
            %346 = vst [vmem:[%s284 + $0xf0] sm:$0xff] %v345
            %v347 = vld [vmem:[%s283 + $0xf8] sm:$0xff]
            %348 = vst [vmem:[%s284 + $0xf8] sm:$0xff] %v347
            %v349 = vld [vmem:[%s283 + $0x100] sm:$0xff]
            %350 = vst [vmem:[%s284 + $0x100] sm:$0xff] %v349
            %v351 = vld [vmem:[%s283 + $0x108] sm:$0xff]
            %352 = vst [vmem:[%s284 + $0x108] sm:$0xff] %v351
            %v353 = vld [vmem:[%s283 + $0x110] sm:$0xff]
            %354 = vst [vmem:[%s284 + $0x110] sm:$0xff] %v353
            %v355 = vld [vmem:[%s283 + $0x118] sm:$0xff]
            %356 = vst [vmem:[%s284 + $0x118] sm:$0xff] %v355
            %v357 = vld [vmem:[%s283 + $0x120] sm:$0xff]
            %358 = vst [vmem:[%s284 + $0x120] sm:$0xff] %v357
            %v359 = vld [vmem:[%s283 + $0x128] sm:$0xff]
            %360 = vst [vmem:[%s284 + $0x128] sm:$0xff] %v359
            %v361 = vld [vmem:[%s283 + $0x130] sm:$0xff]
            %362 = vst [vmem:[%s284 + $0x130] sm:$0xff] %v361
            %v363 = vld [vmem:[%s283 + $0x138] sm:$0xff]
            %364 = vst [vmem:[%s284 + $0x138] sm:$0xff] %v363
            %v365 = vld [vmem:[%s283 + $0x140] sm:$0xff]
            %366 = vst [vmem:[%s284 + $0x140] sm:$0xff] %v365
            %v367 = vld [vmem:[%s283 + $0x148] sm:$0xff]
            %368 = vst [vmem:[%s284 + $0x148] sm:$0xff] %v367
            %v369 = vld [vmem:[%s283 + $0x150] sm:$0xff]
            %370 = vst [vmem:[%s284 + $0x150] sm:$0xff] %v369
            %v371 = vld [vmem:[%s283 + $0x158] sm:$0xff]
            %372 = vst [vmem:[%s284 + $0x158] sm:$0xff] %v371
            %v373 = vld [vmem:[%s283 + $0x160] sm:$0xff]
            %374 = vst [vmem:[%s284 + $0x160] sm:$0xff] %v373
          $region57: #{conv_block.1} parent=51 // loop_footer
            %s282 = sadd.s32 1, %s278
          $region58: #{conv_block.1} parent=51 // loop_footer_branch
            %277 = sbr.rel target = $region54
          $region59: #{conv_block.1} parent=51 // loop_exit
            _
        $region52: #{conv_block.1} parent=47 // pred_fallthru
          _
        // Predicated region
        $region60: #{conv_block.1} parent=47 // pred_check
          _
        $region61: #{conv_block.1} parent=47 // pred_check_branch
          %376 = sbr.rel target = $region63
        $region62: #{conv_block.1} parent=47 // pred_region
          _
        $region63: #{conv_block.1} parent=47 // pred_fallthru
          _
        // Predicated region
        $region64: #{conv_block.1} parent=47 // pred_check
          _
        $region65: #{conv_block.1} parent=47 // pred_check_branch
          %379 = sbr.rel (0) target = $region67
        $region66: #{conv_block.1} parent=47 // pred_region
          %380 = vsyncadd [#allocation4], 5760
        $region67: #{conv_block.1} parent=47 // pred_fallthru
          _
      $region48: #{conv_block.1} parent=43 // pred_fallthru
        _
      %s381 = sadd.s32 %s23, 1
      %p382 = scmp.lt.s32.totalorder %s381, 1
      // Predicated region
      $region68: #{conv_block.1} parent=43 // pred_check
        %p383 = pneg %p382
      $region69: #{conv_block.1} parent=43 // pred_check_branch
        %385 = sbr.rel (%p383) target = $region71
      $region70: #{conv_block.1} parent=43 // pred_region
        %s386 = ssub.s32 1, %s267
        %s387 = smul.u32 %s22, 360
        %s388 = smul.u32 %s381, 288
        %s389 = sadd.s32 %s387, %s388
        %s390 = scalar_lea.vmem %s0, %s389
        %s391 = smul.u32 %s386, 400
        %s392 = sadd.s32 18, %s391
        %s393 = scalar_lea.vmem [#allocation2], %s392
        %s394 = scalar_lea.sflag [#allocation4], %s386
        // Predicated region
        $region72: #{conv_block.1} parent=70 // pred_check
          _
        $region73: #{conv_block.1} parent=70 // pred_check_branch
          %396 = sbr.rel (0) target = $region75
        $region74: #{conv_block.1} parent=70 // pred_region
          loop: start=0, step=1, limit=1
          $region76: #{conv_block.1} parent=74 // loop_pre_header
            _
          $region77: #{conv_block.1} parent=74 // loop_header
            %s398 = sphi 0, %s402
            %p399 = scmp.ge.s32.totalorder %s398, 1
            %s403 = sphi %s390, %s390
            %s404 = sphi %s393, %s393
          $region78: #{conv_block.1} parent=74 // loop_header_branch
            %401 = sbr.rel (%p399) target = $region82
          $region79: #{conv_block.1} parent=74 // loop_body
            %v405 = vld [vmem:[%s403] sm:$0xff]
            %406 = vst [vmem:[%s404] sm:$0xff] %v405
            %v407 = vld [vmem:[%s403 + $0x8] sm:$0xff]
            %408 = vst [vmem:[%s404 + $0x8] sm:$0xff] %v407
            %v409 = vld [vmem:[%s403 + $0x10] sm:$0xff]
            %410 = vst [vmem:[%s404 + $0x10] sm:$0xff] %v409
            %v411 = vld [vmem:[%s403 + $0x18] sm:$0xff]
            %412 = vst [vmem:[%s404 + $0x18] sm:$0xff] %v411
            %v413 = vld [vmem:[%s403 + $0x20] sm:$0xff]
            %414 = vst [vmem:[%s404 + $0x20] sm:$0xff] %v413
            %v415 = vld [vmem:[%s403 + $0x28] sm:$0xff]
            %416 = vst [vmem:[%s404 + $0x28] sm:$0xff] %v415
            %v417 = vld [vmem:[%s403 + $0x30] sm:$0xff]
            %418 = vst [vmem:[%s404 + $0x30] sm:$0xff] %v417
            %v419 = vld [vmem:[%s403 + $0x38] sm:$0xff]
            %420 = vst [vmem:[%s404 + $0x38] sm:$0xff] %v419
            %v421 = vld [vmem:[%s403 + $0x40] sm:$0xff]
            %422 = vst [vmem:[%s404 + $0x40] sm:$0xff] %v421
            %v423 = vld [vmem:[%s403 + $0x48] sm:$0xff]
            %424 = vst [vmem:[%s404 + $0x48] sm:$0xff] %v423
            %v425 = vld [vmem:[%s403 + $0x50] sm:$0xff]
            %426 = vst [vmem:[%s404 + $0x50] sm:$0xff] %v425
            %v427 = vld [vmem:[%s403 + $0x58] sm:$0xff]
            %428 = vst [vmem:[%s404 + $0x58] sm:$0xff] %v427
            %v429 = vld [vmem:[%s403 + $0x60] sm:$0xff]
            %430 = vst [vmem:[%s404 + $0x60] sm:$0xff] %v429
            %v431 = vld [vmem:[%s403 + $0x68] sm:$0xff]
            %432 = vst [vmem:[%s404 + $0x68] sm:$0xff] %v431
            %v433 = vld [vmem:[%s403 + $0x70] sm:$0xff]
            %434 = vst [vmem:[%s404 + $0x70] sm:$0xff] %v433
            %v435 = vld [vmem:[%s403 + $0x78] sm:$0xff]
            %436 = vst [vmem:[%s404 + $0x78] sm:$0xff] %v435
            %v437 = vld [vmem:[%s403 + $0x80] sm:$0xff]
            %438 = vst [vmem:[%s404 + $0x80] sm:$0xff] %v437
            %v439 = vld [vmem:[%s403 + $0x88] sm:$0xff]
            %440 = vst [vmem:[%s404 + $0x88] sm:$0xff] %v439
            %v441 = vld [vmem:[%s403 + $0x90] sm:$0xff]
            %442 = vst [vmem:[%s404 + $0x90] sm:$0xff] %v441
            %v443 = vld [vmem:[%s403 + $0x98] sm:$0xff]
            %444 = vst [vmem:[%s404 + $0x98] sm:$0xff] %v443
            %v445 = vld [vmem:[%s403 + $0xa0] sm:$0xff]
            %446 = vst [vmem:[%s404 + $0xa0] sm:$0xff] %v445
            %v447 = vld [vmem:[%s403 + $0xa8] sm:$0xff]
            %448 = vst [vmem:[%s404 + $0xa8] sm:$0xff] %v447
            %v449 = vld [vmem:[%s403 + $0xb0] sm:$0xff]
            %450 = vst [vmem:[%s404 + $0xb0] sm:$0xff] %v449
            %v451 = vld [vmem:[%s403 + $0xb8] sm:$0xff]
            %452 = vst [vmem:[%s404 + $0xb8] sm:$0xff] %v451
            %v453 = vld [vmem:[%s403 + $0xc0] sm:$0xff]
            %454 = vst [vmem:[%s404 + $0xc0] sm:$0xff] %v453
            %v455 = vld [vmem:[%s403 + $0xc8] sm:$0xff]
            %456 = vst [vmem:[%s404 + $0xc8] sm:$0xff] %v455
            %v457 = vld [vmem:[%s403 + $0xd0] sm:$0xff]
            %458 = vst [vmem:[%s404 + $0xd0] sm:$0xff] %v457
            %v459 = vld [vmem:[%s403 + $0xd8] sm:$0xff]
            %460 = vst [vmem:[%s404 + $0xd8] sm:$0xff] %v459
            %v461 = vld [vmem:[%s403 + $0xe0] sm:$0xff]
            %462 = vst [vmem:[%s404 + $0xe0] sm:$0xff] %v461
            %v463 = vld [vmem:[%s403 + $0xe8] sm:$0xff]
            %464 = vst [vmem:[%s404 + $0xe8] sm:$0xff] %v463
            %v465 = vld [vmem:[%s403 + $0xf0] sm:$0xff]
            %466 = vst [vmem:[%s404 + $0xf0] sm:$0xff] %v465
            %v467 = vld [vmem:[%s403 + $0xf8] sm:$0xff]
            %468 = vst [vmem:[%s404 + $0xf8] sm:$0xff] %v467
            %v469 = vld [vmem:[%s403 + $0x100] sm:$0xff]
            %470 = vst [vmem:[%s404 + $0x100] sm:$0xff] %v469
            %v471 = vld [vmem:[%s403 + $0x108] sm:$0xff]
            %472 = vst [vmem:[%s404 + $0x108] sm:$0xff] %v471
            %v473 = vld [vmem:[%s403 + $0x110] sm:$0xff]
            %474 = vst [vmem:[%s404 + $0x110] sm:$0xff] %v473
            %v475 = vld [vmem:[%s403 + $0x118] sm:$0xff]
            %476 = vst [vmem:[%s404 + $0x118] sm:$0xff] %v475
            %v477 = vld [vmem:[%s403 + $0x120] sm:$0xff]
            %478 = vst [vmem:[%s404 + $0x120] sm:$0xff] %v477
            %v479 = vld [vmem:[%s403 + $0x128] sm:$0xff]
            %480 = vst [vmem:[%s404 + $0x128] sm:$0xff] %v479
            %v481 = vld [vmem:[%s403 + $0x130] sm:$0xff]
            %482 = vst [vmem:[%s404 + $0x130] sm:$0xff] %v481
            %v483 = vld [vmem:[%s403 + $0x138] sm:$0xff]
            %484 = vst [vmem:[%s404 + $0x138] sm:$0xff] %v483
            %v485 = vld [vmem:[%s403 + $0x140] sm:$0xff]
            %486 = vst [vmem:[%s404 + $0x140] sm:$0xff] %v485
            %v487 = vld [vmem:[%s403 + $0x148] sm:$0xff]
            %488 = vst [vmem:[%s404 + $0x148] sm:$0xff] %v487
            %v489 = vld [vmem:[%s403 + $0x150] sm:$0xff]
            %490 = vst [vmem:[%s404 + $0x150] sm:$0xff] %v489
            %v491 = vld [vmem:[%s403 + $0x158] sm:$0xff]
            %492 = vst [vmem:[%s404 + $0x158] sm:$0xff] %v491
            %v493 = vld [vmem:[%s403 + $0x160] sm:$0xff]
            %494 = vst [vmem:[%s404 + $0x160] sm:$0xff] %v493
          $region80: #{conv_block.1} parent=74 // loop_footer
            %s402 = sadd.s32 1, %s398
          $region81: #{conv_block.1} parent=74 // loop_footer_branch
            %397 = sbr.rel target = $region77
          $region82: #{conv_block.1} parent=74 // loop_exit
            _
        $region75: #{conv_block.1} parent=70 // pred_fallthru
          _
        // Predicated region
        $region83: #{conv_block.1} parent=70 // pred_check
          _
        $region84: #{conv_block.1} parent=70 // pred_check_branch
          %496 = sbr.rel target = $region86
        $region85: #{conv_block.1} parent=70 // pred_region
          _
        $region86: #{conv_block.1} parent=70 // pred_fallthru
          _
        // Predicated region
        $region87: #{conv_block.1} parent=70 // pred_check
          _
        $region88: #{conv_block.1} parent=70 // pred_check_branch
          %499 = sbr.rel (0) target = $region90
        $region89: #{conv_block.1} parent=70 // pred_region
          %500 = vsyncadd %s394, 5760
        $region90: #{conv_block.1} parent=70 // pred_fallthru
          _
      $region71: #{conv_block.1} parent=43 // pred_fallthru
        _
      %s501 = scalar_lea.sflag [#allocation4], %s267
      %s502 = smul.u32 360, 1
      %s503 = sshll.u32 %s502, 4
      %504 = dma.done %s501, %s503
      %505 = vst [vmem:[#allocation2] sm:$0xff] 0.0
      %506 = vst [vmem:[#allocation2 + $0x8] sm:$0xff] 0.0
      %507 = vst [vmem:[#allocation2 + $0x10] sm:$0x3] 0.0
      %508 = vst [vmem:[#allocation2 + $0x17a] sm:$0xff] 0.0
      %509 = vst [vmem:[#allocation2 + $0x182] sm:$0xff] 0.0
      %510 = vst [vmem:[#allocation2 + $0x18a] sm:$0x3] 0.0
      %s511 = scalar_lea.vmem [#allocation2], 400
      %512 = vst [vmem:[%s511] sm:$0xff] 0.0
      %513 = vst [vmem:[%s511 + $0x8] sm:$0xff] 0.0
      %514 = vst [vmem:[%s511 + $0x10] sm:$0x3] 0.0
      %515 = vst [vmem:[%s511 + $0x17a] sm:$0xff] 0.0
      %516 = vst [vmem:[%s511 + $0x182] sm:$0xff] 0.0
      %517 = vst [vmem:[%s511 + $0x18a] sm:$0x3] 0.0
      %s518 = smul.u32 %s267, 400
      %s519 = scalar_lea.vmem [#allocation2], %s518
      %v520 = vld [vmem:[%s519 + $0x11] sm:$0xff]
      %v521 = vld [vmem:[%s519 + $0x19] sm:$0xff]
      %v522 = vld [vmem:[%s519 + $0x21] sm:$0xff]
      %v523 = vld [vmem:[%s519 + $0x29] sm:$0xff]
      %v524 = vld [vmem:[%s519 + $0x31] sm:$0xff]
      %v525 = vld [vmem:[%s519 + $0x39] sm:$0xff]
      %v526 = vld [vmem:[%s519 + $0x41] sm:$0xff]
      %v527 = vld [vmem:[%s519 + $0x49] sm:$0xff]
      %v528 = vld [vmem:[%s519 + $0x51] sm:$0xff]
      %v529 = vld [vmem:[%s519 + $0x59] sm:$0xff]
      %v530 = vld [vmem:[%s519 + $0x61] sm:$0xff]
      %v531 = vld [vmem:[%s519 + $0x69] sm:$0xff]
      %v532 = vld [vmem:[%s519 + $0x71] sm:$0xff]
      %v533 = vld [vmem:[%s519 + $0x79] sm:$0xff]
      %v534 = vld [vmem:[%s519 + $0x81] sm:$0xff]
      %v535 = vld [vmem:[%s519 + $0x89] sm:$0xff]
      %v536 = vld [vmem:[%s519 + $0x91] sm:$0xff]
      %v537 = vld [vmem:[%s519 + $0x99] sm:$0xff]
      %v538 = vld [vmem:[%s519 + $0xa1] sm:$0xff]
      %v539 = vld [vmem:[%s519 + $0xa9] sm:$0xff]
      %v540 = vld [vmem:[%s519 + $0xb1] sm:$0xff]
      %v541 = vld [vmem:[%s519 + $0xb9] sm:$0xff]
      %v542 = vld [vmem:[%s519 + $0xc1] sm:$0xff]
      %v543 = vld [vmem:[%s519 + $0xc9] sm:$0xff]
      %v544 = vld [vmem:[%s519 + $0xd1] sm:$0xff]
      %v545 = vld [vmem:[%s519 + $0xd9] sm:$0xff]
      %v546 = vld [vmem:[%s519 + $0xe1] sm:$0xff]
      %v547 = vld [vmem:[%s519 + $0xe9] sm:$0xff]
      %v548 = vld [vmem:[%s519 + $0xf1] sm:$0xff]
      %v549 = vld [vmem:[%s519 + $0xf9] sm:$0xff]
      %v550 = vld [vmem:[%s519 + $0x101] sm:$0xff]
      %v551 = vld [vmem:[%s519 + $0x109] sm:$0xff]
      %v552 = vld [vmem:[%s519 + $0x111] sm:$0xff]
      %v553 = vld [vmem:[%s519 + $0x119] sm:$0xff]
      %v554 = vld [vmem:[%s519 + $0x121] sm:$0xff]
      %v555 = vld [vmem:[%s519 + $0x129] sm:$0xff]
      %v556 = vld [vmem:[%s519 + $0x131] sm:$0xff]
      %v557 = vld [vmem:[%s519 + $0x139] sm:$0xff]
      %v558 = vld [vmem:[%s519 + $0x141] sm:$0xff]
      %v559 = vld [vmem:[%s519 + $0x149] sm:$0xff]
      %v560 = vld [vmem:[%s519 + $0x151] sm:$0xf]
      %v561 = vld [vmem:[%s519 + $0x12] sm:$0xff]
      %v562 = vld [vmem:[%s519 + $0x1a] sm:$0xff]
      %v563 = vld [vmem:[%s519 + $0x22] sm:$0xff]
      %v564 = vld [vmem:[%s519 + $0x2a] sm:$0xff]
      %v565 = vld [vmem:[%s519 + $0x32] sm:$0xff]
      %v566 = vld [vmem:[%s519 + $0x3a] sm:$0xff]
      %v567 = vld [vmem:[%s519 + $0x42] sm:$0xff]
      %v568 = vld [vmem:[%s519 + $0x4a] sm:$0xff]
      %v569 = vld [vmem:[%s519 + $0x52] sm:$0xff]
      %v570 = vld [vmem:[%s519 + $0x5a] sm:$0xff]
      %v571 = vld [vmem:[%s519 + $0x62] sm:$0xff]
      %v572 = vld [vmem:[%s519 + $0x6a] sm:$0xff]
      %v573 = vld [vmem:[%s519 + $0x72] sm:$0xff]
      %v574 = vld [vmem:[%s519 + $0x7a] sm:$0xff]
      %v575 = vld [vmem:[%s519 + $0x82] sm:$0xff]
      %v576 = vld [vmem:[%s519 + $0x8a] sm:$0xff]
      %v577 = vld [vmem:[%s519 + $0x92] sm:$0xff]
      %v578 = vld [vmem:[%s519 + $0x9a] sm:$0xff]
      %v579 = vld [vmem:[%s519 + $0xa2] sm:$0xff]
      %v580 = vld [vmem:[%s519 + $0xaa] sm:$0xff]
      %v581 = vld [vmem:[%s519 + $0xb2] sm:$0xff]
      %v582 = vld [vmem:[%s519 + $0xba] sm:$0xff]
      %v583 = vld [vmem:[%s519 + $0xc2] sm:$0xff]
      %v584 = vld [vmem:[%s519 + $0xca] sm:$0xff]
      %v585 = vld [vmem:[%s519 + $0xd2] sm:$0xff]
      %v586 = vld [vmem:[%s519 + $0xda] sm:$0xff]
      %v587 = vld [vmem:[%s519 + $0xe2] sm:$0xff]
      %v588 = vld [vmem:[%s519 + $0xea] sm:$0xff]
      %v589 = vld [vmem:[%s519 + $0xf2] sm:$0xff]
      %v590 = vld [vmem:[%s519 + $0xfa] sm:$0xff]
      %v591 = vld [vmem:[%s519 + $0x102] sm:$0xff]
      %v592 = vld [vmem:[%s519 + $0x10a] sm:$0xff]
      %v593 = vld [vmem:[%s519 + $0x112] sm:$0xff]
      %v594 = vld [vmem:[%s519 + $0x11a] sm:$0xff]
      %v595 = vld [vmem:[%s519 + $0x122] sm:$0xff]
      %v596 = vld [vmem:[%s519 + $0x12a] sm:$0xff]
      %v597 = vld [vmem:[%s519 + $0x132] sm:$0xff]
      %v598 = vld [vmem:[%s519 + $0x13a] sm:$0xff]
      %v599 = vld [vmem:[%s519 + $0x142] sm:$0xff]
      %v600 = vld [vmem:[%s519 + $0x14a] sm:$0xff]
      %v601 = vld [vmem:[%s519 + $0x152] sm:$0xf]
      %v602 = vld [vmem:[%s1] sm:$0xff]
      %v603 = vld [vmem:[%s1 + $0x8] sm:$0xff]
      %v604 = vld [vmem:[%s1 + $0x10] sm:$0xff]
      %v605 = vld [vmem:[%s1 + $0x18] sm:$0xff]
      %v606 = vld [vmem:[%s1 + $0x20] sm:$0xff]
      %v607 = vld [vmem:[%s1 + $0x28] sm:$0xff]
      %v608 = vld [vmem:[%s1 + $0x30] sm:$0xff]
      %v609 = vld [vmem:[%s1 + $0x38] sm:$0xff]
      %v610 = vld [vmem:[%s1 + $0x40] sm:$0xff]
      %v611 = vld [vmem:[%s1 + $0x48] sm:$0xff]
      %v612 = vld [vmem:[%s1 + $0x50] sm:$0xff]
      %v613 = vld [vmem:[%s1 + $0x58] sm:$0xff]
      %v614 = vld [vmem:[%s1 + $0x60] sm:$0xff]
      %v615 = vld [vmem:[%s1 + $0x68] sm:$0xff]
      %v616 = vld [vmem:[%s1 + $0x70] sm:$0xff]
      %v617 = vld [vmem:[%s1 + $0x78] sm:$0xff]
      %v618 = vld [vmem:[%s1 + $0x80] sm:$0xff]
      %v619 = vld [vmem:[%s1 + $0x88] sm:$0xff]
      %v620 = vld [vmem:[%s1 + $0x90] sm:$0xff]
      %v621 = vld [vmem:[%s1 + $0x98] sm:$0xff]
      %v622 = vld [vmem:[%s1 + $0xa0] sm:$0xff]
      %v623 = vld [vmem:[%s1 + $0xa8] sm:$0xff]
      %v624 = vld [vmem:[%s1 + $0xb0] sm:$0xff]
      %v625 = vld [vmem:[%s1 + $0xb8] sm:$0xff]
      %v626 = vld [vmem:[%s1 + $0xc0] sm:$0xff]
      %v627 = vld [vmem:[%s1 + $0xc8] sm:$0xff]
      %v628 = vld [vmem:[%s1 + $0xd0] sm:$0xff]
      %v629 = vld [vmem:[%s1 + $0xd8] sm:$0xff]
      %v630 = vld [vmem:[%s1 + $0xe0] sm:$0xff]
      %v631 = vld [vmem:[%s1 + $0xe8] sm:$0xff]
      %v632 = vld [vmem:[%s1 + $0xf0] sm:$0xff]
      %v633 = vld [vmem:[%s1 + $0xf8] sm:$0xff]
      %v634 = vld [vmem:[%s519 + $0x13] sm:$0xff]
      %v635 = vld [vmem:[%s519 + $0x1b] sm:$0xff]
      %v636 = vld [vmem:[%s519 + $0x23] sm:$0xff]
      %v637 = vld [vmem:[%s519 + $0x2b] sm:$0xff]
      %v638 = vld [vmem:[%s519 + $0x33] sm:$0xff]
      %v639 = vld [vmem:[%s519 + $0x3b] sm:$0xff]
      %v640 = vld [vmem:[%s519 + $0x43] sm:$0xff]
      %v641 = vld [vmem:[%s519 + $0x4b] sm:$0xff]
      %v642 = vld [vmem:[%s519 + $0x53] sm:$0xff]
      %v643 = vld [vmem:[%s519 + $0x5b] sm:$0xff]
      %v644 = vld [vmem:[%s519 + $0x63] sm:$0xff]
      %v645 = vld [vmem:[%s519 + $0x6b] sm:$0xff]
      %v646 = vld [vmem:[%s519 + $0x73] sm:$0xff]
      %v647 = vld [vmem:[%s519 + $0x7b] sm:$0xff]
      %v648 = vld [vmem:[%s519 + $0x83] sm:$0xff]
      %v649 = vld [vmem:[%s519 + $0x8b] sm:$0xff]
      %v650 = vld [vmem:[%s519 + $0x93] sm:$0xff]
      %v651 = vld [vmem:[%s519 + $0x9b] sm:$0xff]
      %v652 = vld [vmem:[%s519 + $0xa3] sm:$0xff]
      %v653 = vld [vmem:[%s519 + $0xab] sm:$0xff]
      %v654 = vld [vmem:[%s519 + $0xb3] sm:$0xff]
      %v655 = vld [vmem:[%s519 + $0xbb] sm:$0xff]
      %v656 = vld [vmem:[%s519 + $0xc3] sm:$0xff]
      %v657 = vld [vmem:[%s519 + $0xcb] sm:$0xff]
      %v658 = vld [vmem:[%s519 + $0xd3] sm:$0xff]
      %v659 = vld [vmem:[%s519 + $0xdb] sm:$0xff]
      %v660 = vld [vmem:[%s519 + $0xe3] sm:$0xff]
      %v661 = vld [vmem:[%s519 + $0xeb] sm:$0xff]
      %v662 = vld [vmem:[%s519 + $0xf3] sm:$0xff]
      %v663 = vld [vmem:[%s519 + $0xfb] sm:$0xff]
      %v664 = vld [vmem:[%s519 + $0x103] sm:$0xff]
      %v665 = vld [vmem:[%s519 + $0x10b] sm:$0xff]
      %v666 = vld [vmem:[%s519 + $0x113] sm:$0xff]
      %v667 = vld [vmem:[%s519 + $0x11b] sm:$0xff]
      %v668 = vld [vmem:[%s519 + $0x123] sm:$0xff]
      %v669 = vld [vmem:[%s519 + $0x12b] sm:$0xff]
      %v670 = vld [vmem:[%s519 + $0x133] sm:$0xff]
      %v671 = vld [vmem:[%s519 + $0x13b] sm:$0xff]
      %v672 = vld [vmem:[%s519 + $0x143] sm:$0xff]
      %v673 = vld [vmem:[%s519 + $0x14b] sm:$0xff]
      %v674 = vld [vmem:[%s519 + $0x153] sm:$0xf]
      %v675 = vld [vmem:[%s519 + $0x153] sm:$0xff]
      %v676 = vld [vmem:[%s519 + $0x15b] sm:$0xff]
      %v677 = vld [vmem:[%s519 + $0x163] sm:$0xf]
      %v678 = vld [vmem:[%s1 + $0x100] sm:$0xff]
      %v679 = vld [vmem:[%s1 + $0x108] sm:$0xff]
      %v680 = vld [vmem:[%s1 + $0x110] sm:$0xff]
      %v681 = vld [vmem:[%s1 + $0x118] sm:$0xff]
      %v682 = vld [vmem:[%s1 + $0x120] sm:$0xff]
      %v683 = vld [vmem:[%s1 + $0x128] sm:$0xff]
      %v684 = vld [vmem:[%s1 + $0x130] sm:$0xff]
      %v685 = vld [vmem:[%s1 + $0x138] sm:$0xff]
      %v686 = vld [vmem:[%s1 + $0x140] sm:$0xff]
      %v687 = vld [vmem:[%s1 + $0x148] sm:$0xff]
      %v688 = vld [vmem:[%s1 + $0x150] sm:$0xff]
      %v689 = vld [vmem:[%s1 + $0x158] sm:$0xff]
      %v690 = vld [vmem:[%s1 + $0x160] sm:$0xff]
      %v691 = vld [vmem:[%s1 + $0x168] sm:$0xff]
      %v692 = vld [vmem:[%s1 + $0x170] sm:$0xff]
      %v693 = vld [vmem:[%s1 + $0x178] sm:$0xff]
      %v694 = vld [vmem:[%s1 + $0x180] sm:$0xff]
      %v695 = vld [vmem:[%s1 + $0x188] sm:$0xff]
      %v696 = vld [vmem:[%s1 + $0x190] sm:$0xff]
      %v697 = vld [vmem:[%s1 + $0x198] sm:$0xff]
      %v698 = vld [vmem:[%s1 + $0x1a0] sm:$0xff]
      %v699 = vld [vmem:[%s1 + $0x1a8] sm:$0xff]
      %v700 = vld [vmem:[%s1 + $0x1b0] sm:$0xff]
      %v701 = vld [vmem:[%s1 + $0x1b8] sm:$0xff]
      %v702 = vld [vmem:[%s1 + $0x1c0] sm:$0xff]
      %v703 = vld [vmem:[%s1 + $0x1c8] sm:$0xff]
      %v704 = vld [vmem:[%s1 + $0x1d0] sm:$0xff]
      %v705 = vld [vmem:[%s1 + $0x1d8] sm:$0xff]
      %v706 = vld [vmem:[%s1 + $0x1e0] sm:$0xff]
      %v707 = vld [vmem:[%s1 + $0x1e8] sm:$0xff]
      %v708 = vld [vmem:[%s1 + $0x1f0] sm:$0xff]
      %v709 = vld [vmem:[%s1 + $0x1f8] sm:$0xff]
      %710 = vmatpush.msra.mxu0 %v693
      %711 = vmatpush.msra.mxu0 %v692
      %712 = vmatpush.msra.mxu0 %v691
      %713 = vmatpush.msra.mxu0 %v690
      %714 = vmatpush.msra.mxu0 %v689
      %715 = vmatpush.msra.mxu0 %v688
      %716 = vmatpush.msra.mxu0 %v687
      %717 = vmatpush.msra.mxu0 %v686
      %718 = vmatpush.msra.mxu0 %v685
      %719 = vmatpush.msra.mxu0 %v684
      %720 = vmatpush.msra.mxu0 %v683
      %721 = vmatpush.msra.mxu0 %v682
      %722 = vmatpush.msra.mxu0 %v681
      %723 = vmatpush.msra.mxu0 %v680
      %724 = vmatpush.msra.mxu0 %v679
      %725 = vmatpush.msra.mxu0 %v678
      %726 = vmatmul.f32.gmra.mxu0 %v634
      %v727 = vpop.f32.mrf.mxu0
      %v728 = vadd.f32 0.0, %v727
      %729 = vmatmul.f32.gmra.mxu0 %v635
      %v730 = vpop.f32.mrf.mxu0
      %v731 = vadd.f32 0.0, %v730
      %732 = vmatmul.f32.gmra.mxu0 %v636
      %v733 = vpop.f32.mrf.mxu0
      %v734 = vadd.f32 0.0, %v733
      %735 = vmatmul.f32.gmra.mxu0 %v637
      %v736 = vpop.f32.mrf.mxu0
      %v737 = vadd.f32 0.0, %v736
      %738 = vmatmul.f32.gmra.mxu0 %v638
      %v739 = vpop.f32.mrf.mxu0
      %v740 = vadd.f32 0.0, %v739
      %741 = vmatmul.f32.gmra.mxu0 %v639
      %v742 = vpop.f32.mrf.mxu0
      %v743 = vadd.f32 0.0, %v742
      %744 = vmatmul.f32.gmra.mxu0 %v640
      %v745 = vpop.f32.mrf.mxu0
      %v746 = vadd.f32 0.0, %v745
      %747 = vmatmul.f32.gmra.mxu0 %v641
      %v748 = vpop.f32.mrf.mxu0
      %v749 = vadd.f32 0.0, %v748
      %750 = vmatmul.f32.gmra.mxu0 %v642
      %v751 = vpop.f32.mrf.mxu0
      %v752 = vadd.f32 0.0, %v751
      %753 = vmatmul.f32.gmra.mxu0 %v643
      %v754 = vpop.f32.mrf.mxu0
      %v755 = vadd.f32 0.0, %v754
      %756 = vmatmul.f32.gmra.mxu0 %v644
      %v757 = vpop.f32.mrf.mxu0
      %v758 = vadd.f32 0.0, %v757
      %759 = vmatmul.f32.gmra.mxu0 %v645
      %v760 = vpop.f32.mrf.mxu0
      %v761 = vadd.f32 0.0, %v760
      %762 = vmatmul.f32.gmra.mxu0 %v646
      %v763 = vpop.f32.mrf.mxu0
      %v764 = vadd.f32 0.0, %v763
      %765 = vmatmul.f32.gmra.mxu0 %v647
      %v766 = vpop.f32.mrf.mxu0
      %v767 = vadd.f32 0.0, %v766
      %768 = vmatmul.f32.gmra.mxu0 %v648
      %v769 = vpop.f32.mrf.mxu0
      %v770 = vadd.f32 0.0, %v769
      %771 = vmatmul.f32.gmra.mxu0 %v649
      %v772 = vpop.f32.mrf.mxu0
      %v773 = vadd.f32 0.0, %v772
      %774 = vmatmul.f32.gmra.mxu0 %v650
      %v775 = vpop.f32.mrf.mxu0
      %v776 = vadd.f32 0.0, %v775
      %777 = vmatmul.f32.gmra.mxu0 %v651
      %v778 = vpop.f32.mrf.mxu0
      %v779 = vadd.f32 0.0, %v778
      %780 = vmatmul.f32.gmra.mxu0 %v652
      %v781 = vpop.f32.mrf.mxu0
      %v782 = vadd.f32 0.0, %v781
      %783 = vmatmul.f32.gmra.mxu0 %v653
      %v784 = vpop.f32.mrf.mxu0
      %v785 = vadd.f32 0.0, %v784
      %786 = vmatmul.f32.gmra.mxu0 %v654
      %v787 = vpop.f32.mrf.mxu0
      %v788 = vadd.f32 0.0, %v787
      %789 = vmatmul.f32.gmra.mxu0 %v655
      %v790 = vpop.f32.mrf.mxu0
      %v791 = vadd.f32 0.0, %v790
      %792 = vmatmul.f32.gmra.mxu0 %v656
      %v793 = vpop.f32.mrf.mxu0
      %v794 = vadd.f32 0.0, %v793
      %795 = vmatmul.f32.gmra.mxu0 %v657
      %v796 = vpop.f32.mrf.mxu0
      %v797 = vadd.f32 0.0, %v796
      %798 = vmatmul.f32.gmra.mxu0 %v658
      %v799 = vpop.f32.mrf.mxu0
      %v800 = vadd.f32 0.0, %v799
      %801 = vmatmul.f32.gmra.mxu0 %v659
      %v802 = vpop.f32.mrf.mxu0
      %v803 = vadd.f32 0.0, %v802
      %804 = vmatmul.f32.gmra.mxu0 %v660
      %v805 = vpop.f32.mrf.mxu0
      %v806 = vadd.f32 0.0, %v805
      %807 = vmatmul.f32.gmra.mxu0 %v661
      %v808 = vpop.f32.mrf.mxu0
      %v809 = vadd.f32 0.0, %v808
      %810 = vmatmul.f32.gmra.mxu0 %v662
      %v811 = vpop.f32.mrf.mxu0
      %v812 = vadd.f32 0.0, %v811
      %813 = vmatmul.f32.gmra.mxu0 %v663
      %v814 = vpop.f32.mrf.mxu0
      %v815 = vadd.f32 0.0, %v814
      %816 = vmatmul.f32.gmra.mxu0 %v664
      %v817 = vpop.f32.mrf.mxu0
      %v818 = vadd.f32 0.0, %v817
      %819 = vmatmul.f32.gmra.mxu0 %v665
      %v820 = vpop.f32.mrf.mxu0
      %v821 = vadd.f32 0.0, %v820
      %822 = vmatmul.f32.gmra.mxu0 %v666
      %v823 = vpop.f32.mrf.mxu0
      %v824 = vadd.f32 0.0, %v823
      %825 = vmatmul.f32.gmra.mxu0 %v667
      %v826 = vpop.f32.mrf.mxu0
      %v827 = vadd.f32 0.0, %v826
      %828 = vmatmul.f32.gmra.mxu0 %v668
      %v829 = vpop.f32.mrf.mxu0
      %v830 = vadd.f32 0.0, %v829
      %831 = vmatmul.f32.gmra.mxu0 %v669
      %v832 = vpop.f32.mrf.mxu0
      %v833 = vadd.f32 0.0, %v832
      %834 = vmatmul.f32.gmra.mxu0 %v670
      %v835 = vpop.f32.mrf.mxu0
      %v836 = vadd.f32 0.0, %v835
      %837 = vmatmul.f32.gmra.mxu0 %v671
      %v838 = vpop.f32.mrf.mxu0
      %v839 = vadd.f32 0.0, %v838
      %840 = vmatmul.f32.gmra.mxu0 %v672
      %v841 = vpop.f32.mrf.mxu0
      %v842 = vadd.f32 0.0, %v841
      %843 = vmatmul.f32.gmra.mxu0 %v673
      %v844 = vpop.f32.mrf.mxu0
      %v845 = vadd.f32 0.0, %v844
      %846 = vmatmul.f32.gmra.mxu0 %v674
      %v847 = vpop.f32.mrf.mxu0
      %v848 = vadd.f32 0.0, %v847
      %849 = vdwg.mxu0
      %850 = vmatpush.msra.mxu0 %v709
      %851 = vmatpush.msra.mxu0 %v708
      %852 = vmatpush.msra.mxu0 %v707
      %853 = vmatpush.msra.mxu0 %v706
      %854 = vmatpush.msra.mxu0 %v705
      %855 = vmatpush.msra.mxu0 %v704
      %856 = vmatpush.msra.mxu0 %v703
      %857 = vmatpush.msra.mxu0 %v702
      %858 = vmatpush.msra.mxu0 %v701
      %859 = vmatpush.msra.mxu0 %v700
      %860 = vmatpush.msra.mxu0 %v699
      %861 = vmatpush.msra.mxu0 %v698
      %862 = vmatpush.msra.mxu0 %v697
      %863 = vmatpush.msra.mxu0 %v696
      %864 = vmatpush.msra.mxu0 %v695
      %865 = vmatpush.msra.mxu0 %v694
      %866 = vmatmul.f32.gmra.mxu0 %v636
      %v867 = vpop.f32.mrf.mxu0
      %v868 = vadd.f32 %v728, %v867
      %869 = vmatmul.f32.gmra.mxu0 %v637
      %v870 = vpop.f32.mrf.mxu0
      %v871 = vadd.f32 %v731, %v870
      %872 = vmatmul.f32.gmra.mxu0 %v638
      %v873 = vpop.f32.mrf.mxu0
      %v874 = vadd.f32 %v734, %v873
      %875 = vmatmul.f32.gmra.mxu0 %v639
      %v876 = vpop.f32.mrf.mxu0
      %v877 = vadd.f32 %v737, %v876
      %878 = vmatmul.f32.gmra.mxu0 %v640
      %v879 = vpop.f32.mrf.mxu0
      %v880 = vadd.f32 %v740, %v879
      %881 = vmatmul.f32.gmra.mxu0 %v641
      %v882 = vpop.f32.mrf.mxu0
      %v883 = vadd.f32 %v743, %v882
      %884 = vmatmul.f32.gmra.mxu0 %v642
      %v885 = vpop.f32.mrf.mxu0
      %v886 = vadd.f32 %v746, %v885
      %887 = vmatmul.f32.gmra.mxu0 %v643
      %v888 = vpop.f32.mrf.mxu0
      %v889 = vadd.f32 %v749, %v888
      %890 = vmatmul.f32.gmra.mxu0 %v644
      %v891 = vpop.f32.mrf.mxu0
      %v892 = vadd.f32 %v752, %v891
      %893 = vmatmul.f32.gmra.mxu0 %v645
      %v894 = vpop.f32.mrf.mxu0
      %v895 = vadd.f32 %v755, %v894
      %896 = vmatmul.f32.gmra.mxu0 %v646
      %v897 = vpop.f32.mrf.mxu0
      %v898 = vadd.f32 %v758, %v897
      %899 = vmatmul.f32.gmra.mxu0 %v647
      %v900 = vpop.f32.mrf.mxu0
      %v901 = vadd.f32 %v761, %v900
      %902 = vmatmul.f32.gmra.mxu0 %v648
      %v903 = vpop.f32.mrf.mxu0
      %v904 = vadd.f32 %v764, %v903
      %905 = vmatmul.f32.gmra.mxu0 %v649
      %v906 = vpop.f32.mrf.mxu0
      %v907 = vadd.f32 %v767, %v906
      %908 = vmatmul.f32.gmra.mxu0 %v650
      %v909 = vpop.f32.mrf.mxu0
      %v910 = vadd.f32 %v770, %v909
      %911 = vmatmul.f32.gmra.mxu0 %v651
      %v912 = vpop.f32.mrf.mxu0
      %v913 = vadd.f32 %v773, %v912
      %914 = vmatmul.f32.gmra.mxu0 %v652
      %v915 = vpop.f32.mrf.mxu0
      %v916 = vadd.f32 %v776, %v915
      %917 = vmatmul.f32.gmra.mxu0 %v653
      %v918 = vpop.f32.mrf.mxu0
      %v919 = vadd.f32 %v779, %v918
      %920 = vmatmul.f32.gmra.mxu0 %v654
      %v921 = vpop.f32.mrf.mxu0
      %v922 = vadd.f32 %v782, %v921
      %923 = vmatmul.f32.gmra.mxu0 %v655
      %v924 = vpop.f32.mrf.mxu0
      %v925 = vadd.f32 %v785, %v924
      %926 = vmatmul.f32.gmra.mxu0 %v656
      %v927 = vpop.f32.mrf.mxu0
      %v928 = vadd.f32 %v788, %v927
      %929 = vmatmul.f32.gmra.mxu0 %v657
      %v930 = vpop.f32.mrf.mxu0
      %v931 = vadd.f32 %v791, %v930
      %932 = vmatmul.f32.gmra.mxu0 %v658
      %v933 = vpop.f32.mrf.mxu0
      %v934 = vadd.f32 %v794, %v933
      %935 = vmatmul.f32.gmra.mxu0 %v659
      %v936 = vpop.f32.mrf.mxu0
      %v937 = vadd.f32 %v797, %v936
      %938 = vmatmul.f32.gmra.mxu0 %v660
      %v939 = vpop.f32.mrf.mxu0
      %v940 = vadd.f32 %v800, %v939
      %941 = vmatmul.f32.gmra.mxu0 %v661
      %v942 = vpop.f32.mrf.mxu0
      %v943 = vadd.f32 %v803, %v942
      %944 = vmatmul.f32.gmra.mxu0 %v662
      %v945 = vpop.f32.mrf.mxu0
      %v946 = vadd.f32 %v806, %v945
      %947 = vmatmul.f32.gmra.mxu0 %v663
      %v948 = vpop.f32.mrf.mxu0
      %v949 = vadd.f32 %v809, %v948
      %950 = vmatmul.f32.gmra.mxu0 %v664
      %v951 = vpop.f32.mrf.mxu0
      %v952 = vadd.f32 %v812, %v951
      %953 = vmatmul.f32.gmra.mxu0 %v665
      %v954 = vpop.f32.mrf.mxu0
      %v955 = vadd.f32 %v815, %v954
      %956 = vmatmul.f32.gmra.mxu0 %v666
      %v957 = vpop.f32.mrf.mxu0
      %v958 = vadd.f32 %v818, %v957
      %959 = vmatmul.f32.gmra.mxu0 %v667
      %v960 = vpop.f32.mrf.mxu0
      %v961 = vadd.f32 %v821, %v960
      %962 = vmatmul.f32.gmra.mxu0 %v668
      %v963 = vpop.f32.mrf.mxu0
      %v964 = vadd.f32 %v824, %v963
      %965 = vmatmul.f32.gmra.mxu0 %v669
      %v966 = vpop.f32.mrf.mxu0
      %v967 = vadd.f32 %v827, %v966
      %968 = vmatmul.f32.gmra.mxu0 %v670
      %v969 = vpop.f32.mrf.mxu0
      %v970 = vadd.f32 %v830, %v969
      %971 = vmatmul.f32.gmra.mxu0 %v671
      %v972 = vpop.f32.mrf.mxu0
      %v973 = vadd.f32 %v833, %v972
      %974 = vmatmul.f32.gmra.mxu0 %v672
      %v975 = vpop.f32.mrf.mxu0
      %v976 = vadd.f32 %v836, %v975
      %977 = vmatmul.f32.gmra.mxu0 %v673
      %v978 = vpop.f32.mrf.mxu0
      %v979 = vadd.f32 %v839, %v978
      %980 = vmatmul.f32.gmra.mxu0 %v675
      %v981 = vpop.f32.mrf.mxu0
      %v982 = vadd.f32 %v842, %v981
      %983 = vmatmul.f32.gmra.mxu0 %v676
      %v984 = vpop.f32.mrf.mxu0
      %v985 = vadd.f32 %v845, %v984
      %986 = vmatmul.f32.gmra.mxu0 %v677
      %v987 = vpop.f32.mrf.mxu0
      %v988 = vadd.f32 %v848, %v987
      %989 = vdwg.mxu0
      %990 = vmatpush.msra.mxu0 %v617
      %991 = vmatpush.msra.mxu0 %v616
      %992 = vmatpush.msra.mxu0 %v615
      %993 = vmatpush.msra.mxu0 %v614
      %994 = vmatpush.msra.mxu0 %v613
      %995 = vmatpush.msra.mxu0 %v612
      %996 = vmatpush.msra.mxu0 %v611
      %997 = vmatpush.msra.mxu0 %v610
      %998 = vmatpush.msra.mxu0 %v609
      %999 = vmatpush.msra.mxu0 %v608
      %1000 = vmatpush.msra.mxu0 %v607
      %1001 = vmatpush.msra.mxu0 %v606
      %1002 = vmatpush.msra.mxu0 %v605
      %1003 = vmatpush.msra.mxu0 %v604
      %1004 = vmatpush.msra.mxu0 %v603
      %1005 = vmatpush.msra.mxu0 %v602
      %1006 = vmatmul.f32.gmra.mxu0 %v520
      %v1007 = vpop.f32.mrf.mxu0
      %v1008 = vadd.f32 %v868, %v1007
      %1009 = vmatmul.f32.gmra.mxu0 %v521
      %v1010 = vpop.f32.mrf.mxu0
      %v1011 = vadd.f32 %v871, %v1010
      %1012 = vmatmul.f32.gmra.mxu0 %v522
      %v1013 = vpop.f32.mrf.mxu0
      %v1014 = vadd.f32 %v874, %v1013
      %1015 = vmatmul.f32.gmra.mxu0 %v523
      %v1016 = vpop.f32.mrf.mxu0
      %v1017 = vadd.f32 %v877, %v1016
      %1018 = vmatmul.f32.gmra.mxu0 %v524
      %v1019 = vpop.f32.mrf.mxu0
      %v1020 = vadd.f32 %v880, %v1019
      %1021 = vmatmul.f32.gmra.mxu0 %v525
      %v1022 = vpop.f32.mrf.mxu0
      %v1023 = vadd.f32 %v883, %v1022
      %1024 = vmatmul.f32.gmra.mxu0 %v526
      %v1025 = vpop.f32.mrf.mxu0
      %v1026 = vadd.f32 %v886, %v1025
      %1027 = vmatmul.f32.gmra.mxu0 %v527
      %v1028 = vpop.f32.mrf.mxu0
      %v1029 = vadd.f32 %v889, %v1028
      %1030 = vmatmul.f32.gmra.mxu0 %v528
      %v1031 = vpop.f32.mrf.mxu0
      %v1032 = vadd.f32 %v892, %v1031
      %1033 = vmatmul.f32.gmra.mxu0 %v529
      %v1034 = vpop.f32.mrf.mxu0
      %v1035 = vadd.f32 %v895, %v1034
      %1036 = vmatmul.f32.gmra.mxu0 %v530
      %v1037 = vpop.f32.mrf.mxu0
      %v1038 = vadd.f32 %v898, %v1037
      %1039 = vmatmul.f32.gmra.mxu0 %v531
      %v1040 = vpop.f32.mrf.mxu0
      %v1041 = vadd.f32 %v901, %v1040
      %1042 = vmatmul.f32.gmra.mxu0 %v532
      %v1043 = vpop.f32.mrf.mxu0
      %v1044 = vadd.f32 %v904, %v1043
      %1045 = vmatmul.f32.gmra.mxu0 %v533
      %v1046 = vpop.f32.mrf.mxu0
      %v1047 = vadd.f32 %v907, %v1046
      %1048 = vmatmul.f32.gmra.mxu0 %v534
      %v1049 = vpop.f32.mrf.mxu0
      %v1050 = vadd.f32 %v910, %v1049
      %1051 = vmatmul.f32.gmra.mxu0 %v535
      %v1052 = vpop.f32.mrf.mxu0
      %v1053 = vadd.f32 %v913, %v1052
      %1054 = vmatmul.f32.gmra.mxu0 %v536
      %v1055 = vpop.f32.mrf.mxu0
      %v1056 = vadd.f32 %v916, %v1055
      %1057 = vmatmul.f32.gmra.mxu0 %v537
      %v1058 = vpop.f32.mrf.mxu0
      %v1059 = vadd.f32 %v919, %v1058
      %1060 = vmatmul.f32.gmra.mxu0 %v538
      %v1061 = vpop.f32.mrf.mxu0
      %v1062 = vadd.f32 %v922, %v1061
      %1063 = vmatmul.f32.gmra.mxu0 %v539
      %v1064 = vpop.f32.mrf.mxu0
      %v1065 = vadd.f32 %v925, %v1064
      %1066 = vmatmul.f32.gmra.mxu0 %v540
      %v1067 = vpop.f32.mrf.mxu0
      %v1068 = vadd.f32 %v928, %v1067
      %1069 = vmatmul.f32.gmra.mxu0 %v541
      %v1070 = vpop.f32.mrf.mxu0
      %v1071 = vadd.f32 %v931, %v1070
      %1072 = vmatmul.f32.gmra.mxu0 %v542
      %v1073 = vpop.f32.mrf.mxu0
      %v1074 = vadd.f32 %v934, %v1073
      %1075 = vmatmul.f32.gmra.mxu0 %v543
      %v1076 = vpop.f32.mrf.mxu0
      %v1077 = vadd.f32 %v937, %v1076
      %1078 = vmatmul.f32.gmra.mxu0 %v544
      %v1079 = vpop.f32.mrf.mxu0
      %v1080 = vadd.f32 %v940, %v1079
      %1081 = vmatmul.f32.gmra.mxu0 %v545
      %v1082 = vpop.f32.mrf.mxu0
      %v1083 = vadd.f32 %v943, %v1082
      %1084 = vmatmul.f32.gmra.mxu0 %v546
      %v1085 = vpop.f32.mrf.mxu0
      %v1086 = vadd.f32 %v946, %v1085
      %1087 = vmatmul.f32.gmra.mxu0 %v547
      %v1088 = vpop.f32.mrf.mxu0
      %v1089 = vadd.f32 %v949, %v1088
      %1090 = vmatmul.f32.gmra.mxu0 %v548
      %v1091 = vpop.f32.mrf.mxu0
      %v1092 = vadd.f32 %v952, %v1091
      %1093 = vmatmul.f32.gmra.mxu0 %v549
      %v1094 = vpop.f32.mrf.mxu0
      %v1095 = vadd.f32 %v955, %v1094
      %1096 = vmatmul.f32.gmra.mxu0 %v550
      %v1097 = vpop.f32.mrf.mxu0
      %v1098 = vadd.f32 %v958, %v1097
      %1099 = vmatmul.f32.gmra.mxu0 %v551
      %v1100 = vpop.f32.mrf.mxu0
      %v1101 = vadd.f32 %v961, %v1100
      %1102 = vmatmul.f32.gmra.mxu0 %v552
      %v1103 = vpop.f32.mrf.mxu0
      %v1104 = vadd.f32 %v964, %v1103
      %1105 = vmatmul.f32.gmra.mxu0 %v553
      %v1106 = vpop.f32.mrf.mxu0
      %v1107 = vadd.f32 %v967, %v1106
      %1108 = vmatmul.f32.gmra.mxu0 %v554
      %v1109 = vpop.f32.mrf.mxu0
      %v1110 = vadd.f32 %v970, %v1109
      %1111 = vmatmul.f32.gmra.mxu0 %v555
      %v1112 = vpop.f32.mrf.mxu0
      %v1113 = vadd.f32 %v973, %v1112
      %1114 = vmatmul.f32.gmra.mxu0 %v556
      %v1115 = vpop.f32.mrf.mxu0
      %v1116 = vadd.f32 %v976, %v1115
      %1117 = vmatmul.f32.gmra.mxu0 %v557
      %v1118 = vpop.f32.mrf.mxu0
      %v1119 = vadd.f32 %v979, %v1118
      %1120 = vmatmul.f32.gmra.mxu0 %v558
      %v1121 = vpop.f32.mrf.mxu0
      %v1122 = vadd.f32 %v982, %v1121
      %1123 = vmatmul.f32.gmra.mxu0 %v559
      %v1124 = vpop.f32.mrf.mxu0
      %v1125 = vadd.f32 %v985, %v1124
      %1126 = vmatmul.f32.gmra.mxu0 %v560
      %v1127 = vpop.f32.mrf.mxu0
      %v1128 = vadd.f32 %v988, %v1127
      %1129 = vdwg.mxu0
      %1130 = vmatpush.msra.mxu0 %v633
      %1131 = vmatpush.msra.mxu0 %v632
      %1132 = vmatpush.msra.mxu0 %v631
      %1133 = vmatpush.msra.mxu0 %v630
      %1134 = vmatpush.msra.mxu0 %v629
      %1135 = vmatpush.msra.mxu0 %v628
      %1136 = vmatpush.msra.mxu0 %v627
      %1137 = vmatpush.msra.mxu0 %v626
      %1138 = vmatpush.msra.mxu0 %v625
      %1139 = vmatpush.msra.mxu0 %v624
      %1140 = vmatpush.msra.mxu0 %v623
      %1141 = vmatpush.msra.mxu0 %v622
      %1142 = vmatpush.msra.mxu0 %v621
      %1143 = vmatpush.msra.mxu0 %v620
      %1144 = vmatpush.msra.mxu0 %v619
      %1145 = vmatpush.msra.mxu0 %v618
      %1146 = vmatmul.f32.gmra.mxu0 %v561
      %v1147 = vpop.f32.mrf.mxu0
      %v1148 = vadd.f32 %v1008, %v1147
      %1149 = vmatmul.f32.gmra.mxu0 %v562
      %v1150 = vpop.f32.mrf.mxu0
      %v1151 = vadd.f32 %v1011, %v1150
      %1152 = vmatmul.f32.gmra.mxu0 %v563
      %v1153 = vpop.f32.mrf.mxu0
      %v1154 = vadd.f32 %v1014, %v1153
      %1155 = vmatmul.f32.gmra.mxu0 %v564
      %v1156 = vpop.f32.mrf.mxu0
      %v1157 = vadd.f32 %v1017, %v1156
      %1158 = vmatmul.f32.gmra.mxu0 %v565
      %v1159 = vpop.f32.mrf.mxu0
      %v1160 = vadd.f32 %v1020, %v1159
      %1161 = vmatmul.f32.gmra.mxu0 %v566
      %v1162 = vpop.f32.mrf.mxu0
      %v1163 = vadd.f32 %v1023, %v1162
      %1164 = vmatmul.f32.gmra.mxu0 %v567
      %v1165 = vpop.f32.mrf.mxu0
      %v1166 = vadd.f32 %v1026, %v1165
      %1167 = vmatmul.f32.gmra.mxu0 %v568
      %v1168 = vpop.f32.mrf.mxu0
      %v1169 = vadd.f32 %v1029, %v1168
      %1170 = vmatmul.f32.gmra.mxu0 %v569
      %v1171 = vpop.f32.mrf.mxu0
      %v1172 = vadd.f32 %v1032, %v1171
      %1173 = vmatmul.f32.gmra.mxu0 %v570
      %v1174 = vpop.f32.mrf.mxu0
      %v1175 = vadd.f32 %v1035, %v1174
      %1176 = vmatmul.f32.gmra.mxu0 %v571
      %v1177 = vpop.f32.mrf.mxu0
      %v1178 = vadd.f32 %v1038, %v1177
      %1179 = vmatmul.f32.gmra.mxu0 %v572
      %v1180 = vpop.f32.mrf.mxu0
      %v1181 = vadd.f32 %v1041, %v1180
      %1182 = vmatmul.f32.gmra.mxu0 %v573
      %v1183 = vpop.f32.mrf.mxu0
      %v1184 = vadd.f32 %v1044, %v1183
      %1185 = vmatmul.f32.gmra.mxu0 %v574
      %v1186 = vpop.f32.mrf.mxu0
      %v1187 = vadd.f32 %v1047, %v1186
      %1188 = vmatmul.f32.gmra.mxu0 %v575
      %v1189 = vpop.f32.mrf.mxu0
      %v1190 = vadd.f32 %v1050, %v1189
      %1191 = vmatmul.f32.gmra.mxu0 %v576
      %v1192 = vpop.f32.mrf.mxu0
      %v1193 = vadd.f32 %v1053, %v1192
      %1194 = vmatmul.f32.gmra.mxu0 %v577
      %v1195 = vpop.f32.mrf.mxu0
      %v1196 = vadd.f32 %v1056, %v1195
      %1197 = vmatmul.f32.gmra.mxu0 %v578
      %v1198 = vpop.f32.mrf.mxu0
      %v1199 = vadd.f32 %v1059, %v1198
      %1200 = vmatmul.f32.gmra.mxu0 %v579
      %v1201 = vpop.f32.mrf.mxu0
      %v1202 = vadd.f32 %v1062, %v1201
      %1203 = vmatmul.f32.gmra.mxu0 %v580
      %v1204 = vpop.f32.mrf.mxu0
      %v1205 = vadd.f32 %v1065, %v1204
      %1206 = vmatmul.f32.gmra.mxu0 %v581
      %v1207 = vpop.f32.mrf.mxu0
      %v1208 = vadd.f32 %v1068, %v1207
      %1209 = vmatmul.f32.gmra.mxu0 %v582
      %v1210 = vpop.f32.mrf.mxu0
      %v1211 = vadd.f32 %v1071, %v1210
      %1212 = vmatmul.f32.gmra.mxu0 %v583
      %v1213 = vpop.f32.mrf.mxu0
      %v1214 = vadd.f32 %v1074, %v1213
      %1215 = vmatmul.f32.gmra.mxu0 %v584
      %v1216 = vpop.f32.mrf.mxu0
      %v1217 = vadd.f32 %v1077, %v1216
      %1218 = vmatmul.f32.gmra.mxu0 %v585
      %v1219 = vpop.f32.mrf.mxu0
      %v1220 = vadd.f32 %v1080, %v1219
      %1221 = vmatmul.f32.gmra.mxu0 %v586
      %v1222 = vpop.f32.mrf.mxu0
      %v1223 = vadd.f32 %v1083, %v1222
      %1224 = vmatmul.f32.gmra.mxu0 %v587
      %v1225 = vpop.f32.mrf.mxu0
      %v1226 = vadd.f32 %v1086, %v1225
      %1227 = vmatmul.f32.gmra.mxu0 %v588
      %v1228 = vpop.f32.mrf.mxu0
      %v1229 = vadd.f32 %v1089, %v1228
      %1230 = vmatmul.f32.gmra.mxu0 %v589
      %v1231 = vpop.f32.mrf.mxu0
      %v1232 = vadd.f32 %v1092, %v1231
      %1233 = vmatmul.f32.gmra.mxu0 %v590
      %v1234 = vpop.f32.mrf.mxu0
      %v1235 = vadd.f32 %v1095, %v1234
      %1236 = vmatmul.f32.gmra.mxu0 %v591
      %v1237 = vpop.f32.mrf.mxu0
      %v1238 = vadd.f32 %v1098, %v1237
      %1239 = vmatmul.f32.gmra.mxu0 %v592
      %v1240 = vpop.f32.mrf.mxu0
      %v1241 = vadd.f32 %v1101, %v1240
      %1242 = vmatmul.f32.gmra.mxu0 %v593
      %v1243 = vpop.f32.mrf.mxu0
      %v1244 = vadd.f32 %v1104, %v1243
      %1245 = vmatmul.f32.gmra.mxu0 %v594
      %v1246 = vpop.f32.mrf.mxu0
      %v1247 = vadd.f32 %v1107, %v1246
      %1248 = vmatmul.f32.gmra.mxu0 %v595
      %v1249 = vpop.f32.mrf.mxu0
      %v1250 = vadd.f32 %v1110, %v1249
      %1251 = vmatmul.f32.gmra.mxu0 %v596
      %v1252 = vpop.f32.mrf.mxu0
      %v1253 = vadd.f32 %v1113, %v1252
      %1254 = vmatmul.f32.gmra.mxu0 %v597
      %v1255 = vpop.f32.mrf.mxu0
      %v1256 = vadd.f32 %v1116, %v1255
      %1257 = vmatmul.f32.gmra.mxu0 %v598
      %v1258 = vpop.f32.mrf.mxu0
      %v1259 = vadd.f32 %v1119, %v1258
      %1260 = vmatmul.f32.gmra.mxu0 %v599
      %v1261 = vpop.f32.mrf.mxu0
      %v1262 = vadd.f32 %v1122, %v1261
      %1263 = vmatmul.f32.gmra.mxu0 %v600
      %v1264 = vpop.f32.mrf.mxu0
      %v1265 = vadd.f32 %v1125, %v1264
      %1266 = vmatmul.f32.gmra.mxu0 %v601
      %v1267 = vpop.f32.mrf.mxu0
      %v1268 = vadd.f32 %v1128, %v1267
      %1269 = vdwg.mxu0
      %v1270 = vld [vmem:[%s519 + $0x24] sm:$0xff]
      %v1271 = vld [vmem:[%s519 + $0x2c] sm:$0xff]
      %v1272 = vld [vmem:[%s519 + $0x34] sm:$0xff]
      %v1273 = vld [vmem:[%s519 + $0x3c] sm:$0xff]
      %v1274 = vld [vmem:[%s519 + $0x44] sm:$0xff]
      %v1275 = vld [vmem:[%s519 + $0x4c] sm:$0xff]
      %v1276 = vld [vmem:[%s519 + $0x54] sm:$0xff]
      %v1277 = vld [vmem:[%s519 + $0x5c] sm:$0xff]
      %v1278 = vld [vmem:[%s519 + $0x64] sm:$0xff]
      %v1279 = vld [vmem:[%s519 + $0x6c] sm:$0xff]
      %v1280 = vld [vmem:[%s519 + $0x74] sm:$0xff]
      %v1281 = vld [vmem:[%s519 + $0x7c] sm:$0xff]
      %v1282 = vld [vmem:[%s519 + $0x84] sm:$0xff]
      %v1283 = vld [vmem:[%s519 + $0x8c] sm:$0xff]
      %v1284 = vld [vmem:[%s519 + $0x94] sm:$0xff]
      %v1285 = vld [vmem:[%s519 + $0x9c] sm:$0xff]
      %v1286 = vld [vmem:[%s519 + $0xa4] sm:$0xff]
      %v1287 = vld [vmem:[%s519 + $0xac] sm:$0xff]
      %v1288 = vld [vmem:[%s519 + $0xb4] sm:$0xff]
      %v1289 = vld [vmem:[%s519 + $0xbc] sm:$0xff]
      %v1290 = vld [vmem:[%s519 + $0xc4] sm:$0xff]
      %v1291 = vld [vmem:[%s519 + $0xcc] sm:$0xff]
      %v1292 = vld [vmem:[%s519 + $0xd4] sm:$0xff]
      %v1293 = vld [vmem:[%s519 + $0xdc] sm:$0xff]
      %v1294 = vld [vmem:[%s519 + $0xe4] sm:$0xff]
      %v1295 = vld [vmem:[%s519 + $0xec] sm:$0xff]
      %v1296 = vld [vmem:[%s519 + $0xf4] sm:$0xff]
      %v1297 = vld [vmem:[%s519 + $0xfc] sm:$0xff]
      %v1298 = vld [vmem:[%s519 + $0x104] sm:$0xff]
      %v1299 = vld [vmem:[%s519 + $0x10c] sm:$0xff]
      %v1300 = vld [vmem:[%s519 + $0x114] sm:$0xff]
      %v1301 = vld [vmem:[%s519 + $0x11c] sm:$0xff]
      %v1302 = vld [vmem:[%s519 + $0x124] sm:$0xff]
      %v1303 = vld [vmem:[%s519 + $0x12c] sm:$0xff]
      %v1304 = vld [vmem:[%s519 + $0x134] sm:$0xff]
      %v1305 = vld [vmem:[%s519 + $0x13c] sm:$0xff]
      %v1306 = vld [vmem:[%s519 + $0x144] sm:$0xff]
      %v1307 = vld [vmem:[%s519 + $0x14c] sm:$0xff]
      %v1308 = vld [vmem:[%s519 + $0x154] sm:$0xff]
      %v1309 = vld [vmem:[%s519 + $0x15c] sm:$0xff]
      %v1310 = vld [vmem:[%s519 + $0x164] sm:$0xf]
      %v1311 = vld [vmem:[%s519 + $0x25] sm:$0xff]
      %v1312 = vld [vmem:[%s519 + $0x2d] sm:$0xff]
      %v1313 = vld [vmem:[%s519 + $0x35] sm:$0xff]
      %v1314 = vld [vmem:[%s519 + $0x3d] sm:$0xff]
      %v1315 = vld [vmem:[%s519 + $0x45] sm:$0xff]
      %v1316 = vld [vmem:[%s519 + $0x4d] sm:$0xff]
      %v1317 = vld [vmem:[%s519 + $0x55] sm:$0xff]
      %v1318 = vld [vmem:[%s519 + $0x5d] sm:$0xff]
      %v1319 = vld [vmem:[%s519 + $0x65] sm:$0xff]
      %v1320 = vld [vmem:[%s519 + $0x6d] sm:$0xff]
      %v1321 = vld [vmem:[%s519 + $0x75] sm:$0xff]
      %v1322 = vld [vmem:[%s519 + $0x7d] sm:$0xff]
      %v1323 = vld [vmem:[%s519 + $0x85] sm:$0xff]
      %v1324 = vld [vmem:[%s519 + $0x8d] sm:$0xff]
      %v1325 = vld [vmem:[%s519 + $0x95] sm:$0xff]
      %v1326 = vld [vmem:[%s519 + $0x9d] sm:$0xff]
      %v1327 = vld [vmem:[%s519 + $0xa5] sm:$0xff]
      %v1328 = vld [vmem:[%s519 + $0xad] sm:$0xff]
      %v1329 = vld [vmem:[%s519 + $0xb5] sm:$0xff]
      %v1330 = vld [vmem:[%s519 + $0xbd] sm:$0xff]
      %v1331 = vld [vmem:[%s519 + $0xc5] sm:$0xff]
      %v1332 = vld [vmem:[%s519 + $0xcd] sm:$0xff]
      %v1333 = vld [vmem:[%s519 + $0xd5] sm:$0xff]
      %v1334 = vld [vmem:[%s519 + $0xdd] sm:$0xff]
      %v1335 = vld [vmem:[%s519 + $0xe5] sm:$0xff]
      %v1336 = vld [vmem:[%s519 + $0xed] sm:$0xff]
      %v1337 = vld [vmem:[%s519 + $0xf5] sm:$0xff]
      %v1338 = vld [vmem:[%s519 + $0xfd] sm:$0xff]
      %v1339 = vld [vmem:[%s519 + $0x105] sm:$0xff]
      %v1340 = vld [vmem:[%s519 + $0x10d] sm:$0xff]
      %v1341 = vld [vmem:[%s519 + $0x115] sm:$0xff]
      %v1342 = vld [vmem:[%s519 + $0x11d] sm:$0xff]
      %v1343 = vld [vmem:[%s519 + $0x125] sm:$0xff]
      %v1344 = vld [vmem:[%s519 + $0x12d] sm:$0xff]
      %v1345 = vld [vmem:[%s519 + $0x135] sm:$0xff]
      %v1346 = vld [vmem:[%s519 + $0x13d] sm:$0xff]
      %v1347 = vld [vmem:[%s519 + $0x145] sm:$0xff]
      %v1348 = vld [vmem:[%s519 + $0x14d] sm:$0xff]
      %v1349 = vld [vmem:[%s519 + $0x155] sm:$0xff]
      %v1350 = vld [vmem:[%s519 + $0x15d] sm:$0xff]
      %v1351 = vld [vmem:[%s519 + $0x165] sm:$0xf]
      %v1352 = vld [vmem:[%s1 + $0x200] sm:$0xff]
      %v1353 = vld [vmem:[%s1 + $0x208] sm:$0xff]
      %v1354 = vld [vmem:[%s1 + $0x210] sm:$0xff]
      %v1355 = vld [vmem:[%s1 + $0x218] sm:$0xff]
      %v1356 = vld [vmem:[%s1 + $0x220] sm:$0xff]
      %v1357 = vld [vmem:[%s1 + $0x228] sm:$0xff]
      %v1358 = vld [vmem:[%s1 + $0x230] sm:$0xff]
      %v1359 = vld [vmem:[%s1 + $0x238] sm:$0xff]
      %v1360 = vld [vmem:[%s1 + $0x240] sm:$0xff]
      %v1361 = vld [vmem:[%s1 + $0x248] sm:$0xff]
      %v1362 = vld [vmem:[%s1 + $0x250] sm:$0xff]
      %v1363 = vld [vmem:[%s1 + $0x258] sm:$0xff]
      %v1364 = vld [vmem:[%s1 + $0x260] sm:$0xff]
      %v1365 = vld [vmem:[%s1 + $0x268] sm:$0xff]
      %v1366 = vld [vmem:[%s1 + $0x270] sm:$0xff]
      %v1367 = vld [vmem:[%s1 + $0x278] sm:$0xff]
      %v1368 = vld [vmem:[%s1 + $0x280] sm:$0xff]
      %v1369 = vld [vmem:[%s1 + $0x288] sm:$0xff]
      %v1370 = vld [vmem:[%s1 + $0x290] sm:$0xff]
      %v1371 = vld [vmem:[%s1 + $0x298] sm:$0xff]
      %v1372 = vld [vmem:[%s1 + $0x2a0] sm:$0xff]
      %v1373 = vld [vmem:[%s1 + $0x2a8] sm:$0xff]
      %v1374 = vld [vmem:[%s1 + $0x2b0] sm:$0xff]
      %v1375 = vld [vmem:[%s1 + $0x2b8] sm:$0xff]
      %v1376 = vld [vmem:[%s1 + $0x2c0] sm:$0xff]
      %v1377 = vld [vmem:[%s1 + $0x2c8] sm:$0xff]
      %v1378 = vld [vmem:[%s1 + $0x2d0] sm:$0xff]
      %v1379 = vld [vmem:[%s1 + $0x2d8] sm:$0xff]
      %v1380 = vld [vmem:[%s1 + $0x2e0] sm:$0xff]
      %v1381 = vld [vmem:[%s1 + $0x2e8] sm:$0xff]
      %v1382 = vld [vmem:[%s1 + $0x2f0] sm:$0xff]
      %v1383 = vld [vmem:[%s1 + $0x2f8] sm:$0xff]
      %1384 = vmatpush.msra.mxu0 %v1367
      %1385 = vmatpush.msra.mxu0 %v1366
      %1386 = vmatpush.msra.mxu0 %v1365
      %1387 = vmatpush.msra.mxu0 %v1364
      %1388 = vmatpush.msra.mxu0 %v1363
      %1389 = vmatpush.msra.mxu0 %v1362
      %1390 = vmatpush.msra.mxu0 %v1361
      %1391 = vmatpush.msra.mxu0 %v1360
      %1392 = vmatpush.msra.mxu0 %v1359
      %1393 = vmatpush.msra.mxu0 %v1358
      %1394 = vmatpush.msra.mxu0 %v1357
      %1395 = vmatpush.msra.mxu0 %v1356
      %1396 = vmatpush.msra.mxu0 %v1355
      %1397 = vmatpush.msra.mxu0 %v1354
      %1398 = vmatpush.msra.mxu0 %v1353
      %1399 = vmatpush.msra.mxu0 %v1352
      %1400 = vmatmul.f32.gmra.mxu0 %v1270
      %v1401 = vpop.f32.mrf.mxu0
      %v1402 = vadd.f32 0.0, %v1401
      %1403 = vmatmul.f32.gmra.mxu0 %v1271
      %v1404 = vpop.f32.mrf.mxu0
      %v1405 = vadd.f32 0.0, %v1404
      %1406 = vmatmul.f32.gmra.mxu0 %v1272
      %v1407 = vpop.f32.mrf.mxu0
      %v1408 = vadd.f32 0.0, %v1407
      %1409 = vmatmul.f32.gmra.mxu0 %v1273
      %v1410 = vpop.f32.mrf.mxu0
      %v1411 = vadd.f32 0.0, %v1410
      %1412 = vmatmul.f32.gmra.mxu0 %v1274
      %v1413 = vpop.f32.mrf.mxu0
      %v1414 = vadd.f32 0.0, %v1413
      %1415 = vmatmul.f32.gmra.mxu0 %v1275
      %v1416 = vpop.f32.mrf.mxu0
      %v1417 = vadd.f32 0.0, %v1416
      %1418 = vmatmul.f32.gmra.mxu0 %v1276
      %v1419 = vpop.f32.mrf.mxu0
      %v1420 = vadd.f32 0.0, %v1419
      %1421 = vmatmul.f32.gmra.mxu0 %v1277
      %v1422 = vpop.f32.mrf.mxu0
      %v1423 = vadd.f32 0.0, %v1422
      %1424 = vmatmul.f32.gmra.mxu0 %v1278
      %v1425 = vpop.f32.mrf.mxu0
      %v1426 = vadd.f32 0.0, %v1425
      %1427 = vmatmul.f32.gmra.mxu0 %v1279
      %v1428 = vpop.f32.mrf.mxu0
      %v1429 = vadd.f32 0.0, %v1428
      %1430 = vmatmul.f32.gmra.mxu0 %v1280
      %v1431 = vpop.f32.mrf.mxu0
      %v1432 = vadd.f32 0.0, %v1431
      %1433 = vmatmul.f32.gmra.mxu0 %v1281
      %v1434 = vpop.f32.mrf.mxu0
      %v1435 = vadd.f32 0.0, %v1434
      %1436 = vmatmul.f32.gmra.mxu0 %v1282
      %v1437 = vpop.f32.mrf.mxu0
      %v1438 = vadd.f32 0.0, %v1437
      %1439 = vmatmul.f32.gmra.mxu0 %v1283
      %v1440 = vpop.f32.mrf.mxu0
      %v1441 = vadd.f32 0.0, %v1440
      %1442 = vmatmul.f32.gmra.mxu0 %v1284
      %v1443 = vpop.f32.mrf.mxu0
      %v1444 = vadd.f32 0.0, %v1443
      %1445 = vmatmul.f32.gmra.mxu0 %v1285
      %v1446 = vpop.f32.mrf.mxu0
      %v1447 = vadd.f32 0.0, %v1446
      %1448 = vmatmul.f32.gmra.mxu0 %v1286
      %v1449 = vpop.f32.mrf.mxu0
      %v1450 = vadd.f32 0.0, %v1449
      %1451 = vmatmul.f32.gmra.mxu0 %v1287
      %v1452 = vpop.f32.mrf.mxu0
      %v1453 = vadd.f32 0.0, %v1452
      %1454 = vmatmul.f32.gmra.mxu0 %v1288
      %v1455 = vpop.f32.mrf.mxu0
      %v1456 = vadd.f32 0.0, %v1455
      %1457 = vmatmul.f32.gmra.mxu0 %v1289
      %v1458 = vpop.f32.mrf.mxu0
      %v1459 = vadd.f32 0.0, %v1458
      %1460 = vmatmul.f32.gmra.mxu0 %v1290
      %v1461 = vpop.f32.mrf.mxu0
      %v1462 = vadd.f32 0.0, %v1461
      %1463 = vmatmul.f32.gmra.mxu0 %v1291
      %v1464 = vpop.f32.mrf.mxu0
      %v1465 = vadd.f32 0.0, %v1464
      %1466 = vmatmul.f32.gmra.mxu0 %v1292
      %v1467 = vpop.f32.mrf.mxu0
      %v1468 = vadd.f32 0.0, %v1467
      %1469 = vmatmul.f32.gmra.mxu0 %v1293
      %v1470 = vpop.f32.mrf.mxu0
      %v1471 = vadd.f32 0.0, %v1470
      %1472 = vmatmul.f32.gmra.mxu0 %v1294
      %v1473 = vpop.f32.mrf.mxu0
      %v1474 = vadd.f32 0.0, %v1473
      %1475 = vmatmul.f32.gmra.mxu0 %v1295
      %v1476 = vpop.f32.mrf.mxu0
      %v1477 = vadd.f32 0.0, %v1476
      %1478 = vmatmul.f32.gmra.mxu0 %v1296
      %v1479 = vpop.f32.mrf.mxu0
      %v1480 = vadd.f32 0.0, %v1479
      %1481 = vmatmul.f32.gmra.mxu0 %v1297
      %v1482 = vpop.f32.mrf.mxu0
      %v1483 = vadd.f32 0.0, %v1482
      %1484 = vmatmul.f32.gmra.mxu0 %v1298
      %v1485 = vpop.f32.mrf.mxu0
      %v1486 = vadd.f32 0.0, %v1485
      %1487 = vmatmul.f32.gmra.mxu0 %v1299
      %v1488 = vpop.f32.mrf.mxu0
      %v1489 = vadd.f32 0.0, %v1488
      %1490 = vmatmul.f32.gmra.mxu0 %v1300
      %v1491 = vpop.f32.mrf.mxu0
      %v1492 = vadd.f32 0.0, %v1491
      %1493 = vmatmul.f32.gmra.mxu0 %v1301
      %v1494 = vpop.f32.mrf.mxu0
      %v1495 = vadd.f32 0.0, %v1494
      %1496 = vmatmul.f32.gmra.mxu0 %v1302
      %v1497 = vpop.f32.mrf.mxu0
      %v1498 = vadd.f32 0.0, %v1497
      %1499 = vmatmul.f32.gmra.mxu0 %v1303
      %v1500 = vpop.f32.mrf.mxu0
      %v1501 = vadd.f32 0.0, %v1500
      %1502 = vmatmul.f32.gmra.mxu0 %v1304
      %v1503 = vpop.f32.mrf.mxu0
      %v1504 = vadd.f32 0.0, %v1503
      %1505 = vmatmul.f32.gmra.mxu0 %v1305
      %v1506 = vpop.f32.mrf.mxu0
      %v1507 = vadd.f32 0.0, %v1506
      %1508 = vmatmul.f32.gmra.mxu0 %v1306
      %v1509 = vpop.f32.mrf.mxu0
      %v1510 = vadd.f32 0.0, %v1509
      %1511 = vmatmul.f32.gmra.mxu0 %v1307
      %v1512 = vpop.f32.mrf.mxu0
      %v1513 = vadd.f32 0.0, %v1512
      %1514 = vmatmul.f32.gmra.mxu0 %v1308
      %v1515 = vpop.f32.mrf.mxu0
      %v1516 = vadd.f32 0.0, %v1515
      %1517 = vmatmul.f32.gmra.mxu0 %v1309
      %v1518 = vpop.f32.mrf.mxu0
      %v1519 = vadd.f32 0.0, %v1518
      %1520 = vmatmul.f32.gmra.mxu0 %v1310
      %v1521 = vpop.f32.mrf.mxu0
      %v1522 = vadd.f32 0.0, %v1521
      %1523 = vdwg.mxu0
      %1524 = vmatpush.msra.mxu0 %v1383
      %1525 = vmatpush.msra.mxu0 %v1382
      %1526 = vmatpush.msra.mxu0 %v1381
      %1527 = vmatpush.msra.mxu0 %v1380
      %1528 = vmatpush.msra.mxu0 %v1379
      %1529 = vmatpush.msra.mxu0 %v1378
      %1530 = vmatpush.msra.mxu0 %v1377
      %1531 = vmatpush.msra.mxu0 %v1376
      %1532 = vmatpush.msra.mxu0 %v1375
      %1533 = vmatpush.msra.mxu0 %v1374
      %1534 = vmatpush.msra.mxu0 %v1373
      %1535 = vmatpush.msra.mxu0 %v1372
      %1536 = vmatpush.msra.mxu0 %v1371
      %1537 = vmatpush.msra.mxu0 %v1370
      %1538 = vmatpush.msra.mxu0 %v1369
      %1539 = vmatpush.msra.mxu0 %v1368
      %1540 = vmatmul.f32.gmra.mxu0 %v1311
      %v1541 = vpop.f32.mrf.mxu0
      %v1542 = vadd.f32 %v1402, %v1541
      %1543 = vmatmul.f32.gmra.mxu0 %v1312
      %v1544 = vpop.f32.mrf.mxu0
      %v1545 = vadd.f32 %v1405, %v1544
      %1546 = vmatmul.f32.gmra.mxu0 %v1313
      %v1547 = vpop.f32.mrf.mxu0
      %v1548 = vadd.f32 %v1408, %v1547
      %1549 = vmatmul.f32.gmra.mxu0 %v1314
      %v1550 = vpop.f32.mrf.mxu0
      %v1551 = vadd.f32 %v1411, %v1550
      %1552 = vmatmul.f32.gmra.mxu0 %v1315
      %v1553 = vpop.f32.mrf.mxu0
      %v1554 = vadd.f32 %v1414, %v1553
      %1555 = vmatmul.f32.gmra.mxu0 %v1316
      %v1556 = vpop.f32.mrf.mxu0
      %v1557 = vadd.f32 %v1417, %v1556
      %1558 = vmatmul.f32.gmra.mxu0 %v1317
      %v1559 = vpop.f32.mrf.mxu0
      %v1560 = vadd.f32 %v1420, %v1559
      %1561 = vmatmul.f32.gmra.mxu0 %v1318
      %v1562 = vpop.f32.mrf.mxu0
      %v1563 = vadd.f32 %v1423, %v1562
      %1564 = vmatmul.f32.gmra.mxu0 %v1319
      %v1565 = vpop.f32.mrf.mxu0
      %v1566 = vadd.f32 %v1426, %v1565
      %1567 = vmatmul.f32.gmra.mxu0 %v1320
      %v1568 = vpop.f32.mrf.mxu0
      %v1569 = vadd.f32 %v1429, %v1568
      %1570 = vmatmul.f32.gmra.mxu0 %v1321
      %v1571 = vpop.f32.mrf.mxu0
      %v1572 = vadd.f32 %v1432, %v1571
      %1573 = vmatmul.f32.gmra.mxu0 %v1322
      %v1574 = vpop.f32.mrf.mxu0
      %v1575 = vadd.f32 %v1435, %v1574
      %1576 = vmatmul.f32.gmra.mxu0 %v1323
      %v1577 = vpop.f32.mrf.mxu0
      %v1578 = vadd.f32 %v1438, %v1577
      %1579 = vmatmul.f32.gmra.mxu0 %v1324
      %v1580 = vpop.f32.mrf.mxu0
      %v1581 = vadd.f32 %v1441, %v1580
      %1582 = vmatmul.f32.gmra.mxu0 %v1325
      %v1583 = vpop.f32.mrf.mxu0
      %v1584 = vadd.f32 %v1444, %v1583
      %1585 = vmatmul.f32.gmra.mxu0 %v1326
      %v1586 = vpop.f32.mrf.mxu0
      %v1587 = vadd.f32 %v1447, %v1586
      %1588 = vmatmul.f32.gmra.mxu0 %v1327
      %v1589 = vpop.f32.mrf.mxu0
      %v1590 = vadd.f32 %v1450, %v1589
      %1591 = vmatmul.f32.gmra.mxu0 %v1328
      %v1592 = vpop.f32.mrf.mxu0
      %v1593 = vadd.f32 %v1453, %v1592
      %1594 = vmatmul.f32.gmra.mxu0 %v1329
      %v1595 = vpop.f32.mrf.mxu0
      %v1596 = vadd.f32 %v1456, %v1595
      %1597 = vmatmul.f32.gmra.mxu0 %v1330
      %v1598 = vpop.f32.mrf.mxu0
      %v1599 = vadd.f32 %v1459, %v1598
      %1600 = vmatmul.f32.gmra.mxu0 %v1331
      %v1601 = vpop.f32.mrf.mxu0
      %v1602 = vadd.f32 %v1462, %v1601
      %1603 = vmatmul.f32.gmra.mxu0 %v1332
      %v1604 = vpop.f32.mrf.mxu0
      %v1605 = vadd.f32 %v1465, %v1604
      %1606 = vmatmul.f32.gmra.mxu0 %v1333
      %v1607 = vpop.f32.mrf.mxu0
      %v1608 = vadd.f32 %v1468, %v1607
      %1609 = vmatmul.f32.gmra.mxu0 %v1334
      %v1610 = vpop.f32.mrf.mxu0
      %v1611 = vadd.f32 %v1471, %v1610
      %1612 = vmatmul.f32.gmra.mxu0 %v1335
      %v1613 = vpop.f32.mrf.mxu0
      %v1614 = vadd.f32 %v1474, %v1613
      %1615 = vmatmul.f32.gmra.mxu0 %v1336
      %v1616 = vpop.f32.mrf.mxu0
      %v1617 = vadd.f32 %v1477, %v1616
      %1618 = vmatmul.f32.gmra.mxu0 %v1337
      %v1619 = vpop.f32.mrf.mxu0
      %v1620 = vadd.f32 %v1480, %v1619
      %1621 = vmatmul.f32.gmra.mxu0 %v1338
      %v1622 = vpop.f32.mrf.mxu0
      %v1623 = vadd.f32 %v1483, %v1622
      %1624 = vmatmul.f32.gmra.mxu0 %v1339
      %v1625 = vpop.f32.mrf.mxu0
      %v1626 = vadd.f32 %v1486, %v1625
      %1627 = vmatmul.f32.gmra.mxu0 %v1340
      %v1628 = vpop.f32.mrf.mxu0
      %v1629 = vadd.f32 %v1489, %v1628
      %1630 = vmatmul.f32.gmra.mxu0 %v1341
      %v1631 = vpop.f32.mrf.mxu0
      %v1632 = vadd.f32 %v1492, %v1631
      %1633 = vmatmul.f32.gmra.mxu0 %v1342
      %v1634 = vpop.f32.mrf.mxu0
      %v1635 = vadd.f32 %v1495, %v1634
      %1636 = vmatmul.f32.gmra.mxu0 %v1343
      %v1637 = vpop.f32.mrf.mxu0
      %v1638 = vadd.f32 %v1498, %v1637
      %1639 = vmatmul.f32.gmra.mxu0 %v1344
      %v1640 = vpop.f32.mrf.mxu0
      %v1641 = vadd.f32 %v1501, %v1640
      %1642 = vmatmul.f32.gmra.mxu0 %v1345
      %v1643 = vpop.f32.mrf.mxu0
      %v1644 = vadd.f32 %v1504, %v1643
      %1645 = vmatmul.f32.gmra.mxu0 %v1346
      %v1646 = vpop.f32.mrf.mxu0
      %v1647 = vadd.f32 %v1507, %v1646
      %1648 = vmatmul.f32.gmra.mxu0 %v1347
      %v1649 = vpop.f32.mrf.mxu0
      %v1650 = vadd.f32 %v1510, %v1649
      %1651 = vmatmul.f32.gmra.mxu0 %v1348
      %v1652 = vpop.f32.mrf.mxu0
      %v1653 = vadd.f32 %v1513, %v1652
      %1654 = vmatmul.f32.gmra.mxu0 %v1349
      %v1655 = vpop.f32.mrf.mxu0
      %v1656 = vadd.f32 %v1516, %v1655
      %1657 = vmatmul.f32.gmra.mxu0 %v1350
      %v1658 = vpop.f32.mrf.mxu0
      %v1659 = vadd.f32 %v1519, %v1658
      %1660 = vmatmul.f32.gmra.mxu0 %v1351
      %v1661 = vpop.f32.mrf.mxu0
      %v1662 = vadd.f32 %v1522, %v1661
      %1663 = vdwg.mxu0
      %v1664 = vadd.f32 %v1148, %v1542
      %v1665 = vadd.f32 %v1151, %v1545
      %v1666 = vadd.f32 %v1154, %v1548
      %v1667 = vadd.f32 %v1157, %v1551
      %v1668 = vadd.f32 %v1160, %v1554
      %v1669 = vadd.f32 %v1163, %v1557
      %v1670 = vadd.f32 %v1166, %v1560
      %v1671 = vadd.f32 %v1169, %v1563
      %v1672 = vadd.f32 %v1172, %v1566
      %v1673 = vadd.f32 %v1175, %v1569
      %v1674 = vadd.f32 %v1178, %v1572
      %v1675 = vadd.f32 %v1181, %v1575
      %v1676 = vadd.f32 %v1184, %v1578
      %v1677 = vadd.f32 %v1187, %v1581
      %v1678 = vadd.f32 %v1190, %v1584
      %v1679 = vadd.f32 %v1193, %v1587
      %v1680 = vadd.f32 %v1196, %v1590
      %v1681 = vadd.f32 %v1199, %v1593
      %v1682 = vadd.f32 %v1202, %v1596
      %v1683 = vadd.f32 %v1205, %v1599
      %v1684 = vadd.f32 %v1208, %v1602
      %v1685 = vadd.f32 %v1211, %v1605
      %v1686 = vadd.f32 %v1214, %v1608
      %v1687 = vadd.f32 %v1217, %v1611
      %v1688 = vadd.f32 %v1220, %v1614
      %v1689 = vadd.f32 %v1223, %v1617
      %v1690 = vadd.f32 %v1226, %v1620
      %v1691 = vadd.f32 %v1229, %v1623
      %v1692 = vadd.f32 %v1232, %v1626
      %v1693 = vadd.f32 %v1235, %v1629
      %v1694 = vadd.f32 %v1238, %v1632
      %v1695 = vadd.f32 %v1241, %v1635
      %v1696 = vadd.f32 %v1244, %v1638
      %v1697 = vadd.f32 %v1247, %v1641
      %v1698 = vadd.f32 %v1250, %v1644
      %v1699 = vadd.f32 %v1253, %v1647
      %v1700 = vadd.f32 %v1256, %v1650
      %v1701 = vadd.f32 %v1259, %v1653
      %v1702 = vadd.f32 %v1262, %v1656
      %v1703 = vadd.f32 %v1265, %v1659
      %v1704 = vadd.f32 %v1268, %v1662
      %v1705 = vld [vmem:[%s519 + $0x35] sm:$0xff]
      %v1706 = vld [vmem:[%s519 + $0x3d] sm:$0xff]
      %v1707 = vld [vmem:[%s519 + $0x45] sm:$0xff]
      %v1708 = vld [vmem:[%s519 + $0x4d] sm:$0xff]
      %v1709 = vld [vmem:[%s519 + $0x55] sm:$0xff]
      %v1710 = vld [vmem:[%s519 + $0x5d] sm:$0xff]
      %v1711 = vld [vmem:[%s519 + $0x65] sm:$0xff]
      %v1712 = vld [vmem:[%s519 + $0x6d] sm:$0xff]
      %v1713 = vld [vmem:[%s519 + $0x75] sm:$0xff]
      %v1714 = vld [vmem:[%s519 + $0x7d] sm:$0xff]
      %v1715 = vld [vmem:[%s519 + $0x85] sm:$0xff]
      %v1716 = vld [vmem:[%s519 + $0x8d] sm:$0xff]
      %v1717 = vld [vmem:[%s519 + $0x95] sm:$0xff]
      %v1718 = vld [vmem:[%s519 + $0x9d] sm:$0xff]
      %v1719 = vld [vmem:[%s519 + $0xa5] sm:$0xff]
      %v1720 = vld [vmem:[%s519 + $0xad] sm:$0xff]
      %v1721 = vld [vmem:[%s519 + $0xb5] sm:$0xff]
      %v1722 = vld [vmem:[%s519 + $0xbd] sm:$0xff]
      %v1723 = vld [vmem:[%s519 + $0xc5] sm:$0xff]
      %v1724 = vld [vmem:[%s519 + $0xcd] sm:$0xff]
      %v1725 = vld [vmem:[%s519 + $0xd5] sm:$0xff]
      %v1726 = vld [vmem:[%s519 + $0xdd] sm:$0xff]
      %v1727 = vld [vmem:[%s519 + $0xe5] sm:$0xff]
      %v1728 = vld [vmem:[%s519 + $0xed] sm:$0xff]
      %v1729 = vld [vmem:[%s519 + $0xf5] sm:$0xff]
      %v1730 = vld [vmem:[%s519 + $0xfd] sm:$0xff]
      %v1731 = vld [vmem:[%s519 + $0x105] sm:$0xff]
      %v1732 = vld [vmem:[%s519 + $0x10d] sm:$0xff]
      %v1733 = vld [vmem:[%s519 + $0x115] sm:$0xff]
      %v1734 = vld [vmem:[%s519 + $0x11d] sm:$0xff]
      %v1735 = vld [vmem:[%s519 + $0x125] sm:$0xff]
      %v1736 = vld [vmem:[%s519 + $0x12d] sm:$0xff]
      %v1737 = vld [vmem:[%s519 + $0x135] sm:$0xff]
      %v1738 = vld [vmem:[%s519 + $0x13d] sm:$0xff]
      %v1739 = vld [vmem:[%s519 + $0x145] sm:$0xff]
      %v1740 = vld [vmem:[%s519 + $0x14d] sm:$0xff]
      %v1741 = vld [vmem:[%s519 + $0x155] sm:$0xff]
      %v1742 = vld [vmem:[%s519 + $0x15d] sm:$0xff]
      %v1743 = vld [vmem:[%s519 + $0x165] sm:$0xff]
      %v1744 = vld [vmem:[%s519 + $0x16d] sm:$0xff]
      %v1745 = vld [vmem:[%s519 + $0x175] sm:$0xf]
      %v1746 = vld [vmem:[%s519 + $0x36] sm:$0xff]
      %v1747 = vld [vmem:[%s519 + $0x3e] sm:$0xff]
      %v1748 = vld [vmem:[%s519 + $0x46] sm:$0xff]
      %v1749 = vld [vmem:[%s519 + $0x4e] sm:$0xff]
      %v1750 = vld [vmem:[%s519 + $0x56] sm:$0xff]
      %v1751 = vld [vmem:[%s519 + $0x5e] sm:$0xff]
      %v1752 = vld [vmem:[%s519 + $0x66] sm:$0xff]
      %v1753 = vld [vmem:[%s519 + $0x6e] sm:$0xff]
      %v1754 = vld [vmem:[%s519 + $0x76] sm:$0xff]
      %v1755 = vld [vmem:[%s519 + $0x7e] sm:$0xff]
      %v1756 = vld [vmem:[%s519 + $0x86] sm:$0xff]
      %v1757 = vld [vmem:[%s519 + $0x8e] sm:$0xff]
      %v1758 = vld [vmem:[%s519 + $0x96] sm:$0xff]
      %v1759 = vld [vmem:[%s519 + $0x9e] sm:$0xff]
      %v1760 = vld [vmem:[%s519 + $0xa6] sm:$0xff]
      %v1761 = vld [vmem:[%s519 + $0xae] sm:$0xff]
      %v1762 = vld [vmem:[%s519 + $0xb6] sm:$0xff]
      %v1763 = vld [vmem:[%s519 + $0xbe] sm:$0xff]
      %v1764 = vld [vmem:[%s519 + $0xc6] sm:$0xff]
      %v1765 = vld [vmem:[%s519 + $0xce] sm:$0xff]
      %v1766 = vld [vmem:[%s519 + $0xd6] sm:$0xff]
      %v1767 = vld [vmem:[%s519 + $0xde] sm:$0xff]
      %v1768 = vld [vmem:[%s519 + $0xe6] sm:$0xff]
      %v1769 = vld [vmem:[%s519 + $0xee] sm:$0xff]
      %v1770 = vld [vmem:[%s519 + $0xf6] sm:$0xff]
      %v1771 = vld [vmem:[%s519 + $0xfe] sm:$0xff]
      %v1772 = vld [vmem:[%s519 + $0x106] sm:$0xff]
      %v1773 = vld [vmem:[%s519 + $0x10e] sm:$0xff]
      %v1774 = vld [vmem:[%s519 + $0x116] sm:$0xff]
      %v1775 = vld [vmem:[%s519 + $0x11e] sm:$0xff]
      %v1776 = vld [vmem:[%s519 + $0x126] sm:$0xff]
      %v1777 = vld [vmem:[%s519 + $0x12e] sm:$0xff]
      %v1778 = vld [vmem:[%s519 + $0x136] sm:$0xff]
      %v1779 = vld [vmem:[%s519 + $0x13e] sm:$0xff]
      %v1780 = vld [vmem:[%s519 + $0x146] sm:$0xff]
      %v1781 = vld [vmem:[%s519 + $0x14e] sm:$0xff]
      %v1782 = vld [vmem:[%s519 + $0x156] sm:$0xff]
      %v1783 = vld [vmem:[%s519 + $0x15e] sm:$0xff]
      %v1784 = vld [vmem:[%s519 + $0x166] sm:$0xff]
      %v1785 = vld [vmem:[%s519 + $0x16e] sm:$0xff]
      %v1786 = vld [vmem:[%s519 + $0x176] sm:$0xf]
      %v1787 = vld [vmem:[%s1 + $0x300] sm:$0xff]
      %v1788 = vld [vmem:[%s1 + $0x308] sm:$0xff]
      %v1789 = vld [vmem:[%s1 + $0x310] sm:$0xff]
      %v1790 = vld [vmem:[%s1 + $0x318] sm:$0xff]
      %v1791 = vld [vmem:[%s1 + $0x320] sm:$0xff]
      %v1792 = vld [vmem:[%s1 + $0x328] sm:$0xff]
      %v1793 = vld [vmem:[%s1 + $0x330] sm:$0xff]
      %v1794 = vld [vmem:[%s1 + $0x338] sm:$0xff]
      %v1795 = vld [vmem:[%s1 + $0x340] sm:$0xff]
      %v1796 = vld [vmem:[%s1 + $0x348] sm:$0xff]
      %v1797 = vld [vmem:[%s1 + $0x350] sm:$0xff]
      %v1798 = vld [vmem:[%s1 + $0x358] sm:$0xff]
      %v1799 = vld [vmem:[%s1 + $0x360] sm:$0xff]
      %v1800 = vld [vmem:[%s1 + $0x368] sm:$0xff]
      %v1801 = vld [vmem:[%s1 + $0x370] sm:$0xff]
      %v1802 = vld [vmem:[%s1 + $0x378] sm:$0xff]
      %v1803 = vld [vmem:[%s1 + $0x380] sm:$0xff]
      %v1804 = vld [vmem:[%s1 + $0x388] sm:$0xff]
      %v1805 = vld [vmem:[%s1 + $0x390] sm:$0xff]
      %v1806 = vld [vmem:[%s1 + $0x398] sm:$0xff]
      %v1807 = vld [vmem:[%s1 + $0x3a0] sm:$0xff]
      %v1808 = vld [vmem:[%s1 + $0x3a8] sm:$0xff]
      %v1809 = vld [vmem:[%s1 + $0x3b0] sm:$0xff]
      %v1810 = vld [vmem:[%s1 + $0x3b8] sm:$0xff]
      %v1811 = vld [vmem:[%s1 + $0x3c0] sm:$0xff]
      %v1812 = vld [vmem:[%s1 + $0x3c8] sm:$0xff]
      %v1813 = vld [vmem:[%s1 + $0x3d0] sm:$0xff]
      %v1814 = vld [vmem:[%s1 + $0x3d8] sm:$0xff]
      %v1815 = vld [vmem:[%s1 + $0x3e0] sm:$0xff]
      %v1816 = vld [vmem:[%s1 + $0x3e8] sm:$0xff]
      %v1817 = vld [vmem:[%s1 + $0x3f0] sm:$0xff]
      %v1818 = vld [vmem:[%s1 + $0x3f8] sm:$0xff]
      %1819 = vmatpush.msra.mxu0 %v1802
      %1820 = vmatpush.msra.mxu0 %v1801
      %1821 = vmatpush.msra.mxu0 %v1800
      %1822 = vmatpush.msra.mxu0 %v1799
      %1823 = vmatpush.msra.mxu0 %v1798
      %1824 = vmatpush.msra.mxu0 %v1797
      %1825 = vmatpush.msra.mxu0 %v1796
      %1826 = vmatpush.msra.mxu0 %v1795
      %1827 = vmatpush.msra.mxu0 %v1794
      %1828 = vmatpush.msra.mxu0 %v1793
      %1829 = vmatpush.msra.mxu0 %v1792
      %1830 = vmatpush.msra.mxu0 %v1791
      %1831 = vmatpush.msra.mxu0 %v1790
      %1832 = vmatpush.msra.mxu0 %v1789
      %1833 = vmatpush.msra.mxu0 %v1788
      %1834 = vmatpush.msra.mxu0 %v1787
      %1835 = vmatmul.f32.gmra.mxu0 %v1705
      %v1836 = vpop.f32.mrf.mxu0
      %v1837 = vadd.f32 0.0, %v1836
      %1838 = vmatmul.f32.gmra.mxu0 %v1706
      %v1839 = vpop.f32.mrf.mxu0
      %v1840 = vadd.f32 0.0, %v1839
      %1841 = vmatmul.f32.gmra.mxu0 %v1707
      %v1842 = vpop.f32.mrf.mxu0
      %v1843 = vadd.f32 0.0, %v1842
      %1844 = vmatmul.f32.gmra.mxu0 %v1708
      %v1845 = vpop.f32.mrf.mxu0
      %v1846 = vadd.f32 0.0, %v1845
      %1847 = vmatmul.f32.gmra.mxu0 %v1709
      %v1848 = vpop.f32.mrf.mxu0
      %v1849 = vadd.f32 0.0, %v1848
      %1850 = vmatmul.f32.gmra.mxu0 %v1710
      %v1851 = vpop.f32.mrf.mxu0
      %v1852 = vadd.f32 0.0, %v1851
      %1853 = vmatmul.f32.gmra.mxu0 %v1711
      %v1854 = vpop.f32.mrf.mxu0
      %v1855 = vadd.f32 0.0, %v1854
      %1856 = vmatmul.f32.gmra.mxu0 %v1712
      %v1857 = vpop.f32.mrf.mxu0
      %v1858 = vadd.f32 0.0, %v1857
      %1859 = vmatmul.f32.gmra.mxu0 %v1713
      %v1860 = vpop.f32.mrf.mxu0
      %v1861 = vadd.f32 0.0, %v1860
      %1862 = vmatmul.f32.gmra.mxu0 %v1714
      %v1863 = vpop.f32.mrf.mxu0
      %v1864 = vadd.f32 0.0, %v1863
      %1865 = vmatmul.f32.gmra.mxu0 %v1715
      %v1866 = vpop.f32.mrf.mxu0
      %v1867 = vadd.f32 0.0, %v1866
      %1868 = vmatmul.f32.gmra.mxu0 %v1716
      %v1869 = vpop.f32.mrf.mxu0
      %v1870 = vadd.f32 0.0, %v1869
      %1871 = vmatmul.f32.gmra.mxu0 %v1717
      %v1872 = vpop.f32.mrf.mxu0
      %v1873 = vadd.f32 0.0, %v1872
      %1874 = vmatmul.f32.gmra.mxu0 %v1718
      %v1875 = vpop.f32.mrf.mxu0
      %v1876 = vadd.f32 0.0, %v1875
      %1877 = vmatmul.f32.gmra.mxu0 %v1719
      %v1878 = vpop.f32.mrf.mxu0
      %v1879 = vadd.f32 0.0, %v1878
      %1880 = vmatmul.f32.gmra.mxu0 %v1720
      %v1881 = vpop.f32.mrf.mxu0
      %v1882 = vadd.f32 0.0, %v1881
      %1883 = vmatmul.f32.gmra.mxu0 %v1721
      %v1884 = vpop.f32.mrf.mxu0
      %v1885 = vadd.f32 0.0, %v1884
      %1886 = vmatmul.f32.gmra.mxu0 %v1722
      %v1887 = vpop.f32.mrf.mxu0
      %v1888 = vadd.f32 0.0, %v1887
      %1889 = vmatmul.f32.gmra.mxu0 %v1723
      %v1890 = vpop.f32.mrf.mxu0
      %v1891 = vadd.f32 0.0, %v1890
      %1892 = vmatmul.f32.gmra.mxu0 %v1724
      %v1893 = vpop.f32.mrf.mxu0
      %v1894 = vadd.f32 0.0, %v1893
      %1895 = vmatmul.f32.gmra.mxu0 %v1725
      %v1896 = vpop.f32.mrf.mxu0
      %v1897 = vadd.f32 0.0, %v1896
      %1898 = vmatmul.f32.gmra.mxu0 %v1726
      %v1899 = vpop.f32.mrf.mxu0
      %v1900 = vadd.f32 0.0, %v1899
      %1901 = vmatmul.f32.gmra.mxu0 %v1727
      %v1902 = vpop.f32.mrf.mxu0
      %v1903 = vadd.f32 0.0, %v1902
      %1904 = vmatmul.f32.gmra.mxu0 %v1728
      %v1905 = vpop.f32.mrf.mxu0
      %v1906 = vadd.f32 0.0, %v1905
      %1907 = vmatmul.f32.gmra.mxu0 %v1729
      %v1908 = vpop.f32.mrf.mxu0
      %v1909 = vadd.f32 0.0, %v1908
      %1910 = vmatmul.f32.gmra.mxu0 %v1730
      %v1911 = vpop.f32.mrf.mxu0
      %v1912 = vadd.f32 0.0, %v1911
      %1913 = vmatmul.f32.gmra.mxu0 %v1731
      %v1914 = vpop.f32.mrf.mxu0
      %v1915 = vadd.f32 0.0, %v1914
      %1916 = vmatmul.f32.gmra.mxu0 %v1732
      %v1917 = vpop.f32.mrf.mxu0
      %v1918 = vadd.f32 0.0, %v1917
      %1919 = vmatmul.f32.gmra.mxu0 %v1733
      %v1920 = vpop.f32.mrf.mxu0
      %v1921 = vadd.f32 0.0, %v1920
      %1922 = vmatmul.f32.gmra.mxu0 %v1734
      %v1923 = vpop.f32.mrf.mxu0
      %v1924 = vadd.f32 0.0, %v1923
      %1925 = vmatmul.f32.gmra.mxu0 %v1735
      %v1926 = vpop.f32.mrf.mxu0
      %v1927 = vadd.f32 0.0, %v1926
      %1928 = vmatmul.f32.gmra.mxu0 %v1736
      %v1929 = vpop.f32.mrf.mxu0
      %v1930 = vadd.f32 0.0, %v1929
      %1931 = vmatmul.f32.gmra.mxu0 %v1737
      %v1932 = vpop.f32.mrf.mxu0
      %v1933 = vadd.f32 0.0, %v1932
      %1934 = vmatmul.f32.gmra.mxu0 %v1738
      %v1935 = vpop.f32.mrf.mxu0
      %v1936 = vadd.f32 0.0, %v1935
      %1937 = vmatmul.f32.gmra.mxu0 %v1739
      %v1938 = vpop.f32.mrf.mxu0
      %v1939 = vadd.f32 0.0, %v1938
      %1940 = vmatmul.f32.gmra.mxu0 %v1740
      %v1941 = vpop.f32.mrf.mxu0
      %v1942 = vadd.f32 0.0, %v1941
      %1943 = vmatmul.f32.gmra.mxu0 %v1741
      %v1944 = vpop.f32.mrf.mxu0
      %v1945 = vadd.f32 0.0, %v1944
      %1946 = vmatmul.f32.gmra.mxu0 %v1742
      %v1947 = vpop.f32.mrf.mxu0
      %v1948 = vadd.f32 0.0, %v1947
      %1949 = vmatmul.f32.gmra.mxu0 %v1743
      %v1950 = vpop.f32.mrf.mxu0
      %v1951 = vadd.f32 0.0, %v1950
      %1952 = vmatmul.f32.gmra.mxu0 %v1744
      %v1953 = vpop.f32.mrf.mxu0
      %v1954 = vadd.f32 0.0, %v1953
      %1955 = vmatmul.f32.gmra.mxu0 %v1745
      %v1956 = vpop.f32.mrf.mxu0
      %v1957 = vadd.f32 0.0, %v1956
      %1958 = vdwg.mxu0
      %1959 = vmatpush.msra.mxu0 %v1818
      %1960 = vmatpush.msra.mxu0 %v1817
      %1961 = vmatpush.msra.mxu0 %v1816
      %1962 = vmatpush.msra.mxu0 %v1815
      %1963 = vmatpush.msra.mxu0 %v1814
      %1964 = vmatpush.msra.mxu0 %v1813
      %1965 = vmatpush.msra.mxu0 %v1812
      %1966 = vmatpush.msra.mxu0 %v1811
      %1967 = vmatpush.msra.mxu0 %v1810
      %1968 = vmatpush.msra.mxu0 %v1809
      %1969 = vmatpush.msra.mxu0 %v1808
      %1970 = vmatpush.msra.mxu0 %v1807
      %1971 = vmatpush.msra.mxu0 %v1806
      %1972 = vmatpush.msra.mxu0 %v1805
      %1973 = vmatpush.msra.mxu0 %v1804
      %1974 = vmatpush.msra.mxu0 %v1803
      %1975 = vmatmul.f32.gmra.mxu0 %v1746
      %v1976 = vpop.f32.mrf.mxu0
      %v1977 = vadd.f32 %v1837, %v1976
      %1978 = vmatmul.f32.gmra.mxu0 %v1747
      %v1979 = vpop.f32.mrf.mxu0
      %v1980 = vadd.f32 %v1840, %v1979
      %1981 = vmatmul.f32.gmra.mxu0 %v1748
      %v1982 = vpop.f32.mrf.mxu0
      %v1983 = vadd.f32 %v1843, %v1982
      %1984 = vmatmul.f32.gmra.mxu0 %v1749
      %v1985 = vpop.f32.mrf.mxu0
      %v1986 = vadd.f32 %v1846, %v1985
      %1987 = vmatmul.f32.gmra.mxu0 %v1750
      %v1988 = vpop.f32.mrf.mxu0
      %v1989 = vadd.f32 %v1849, %v1988
      %1990 = vmatmul.f32.gmra.mxu0 %v1751
      %v1991 = vpop.f32.mrf.mxu0
      %v1992 = vadd.f32 %v1852, %v1991
      %1993 = vmatmul.f32.gmra.mxu0 %v1752
      %v1994 = vpop.f32.mrf.mxu0
      %v1995 = vadd.f32 %v1855, %v1994
      %1996 = vmatmul.f32.gmra.mxu0 %v1753
      %v1997 = vpop.f32.mrf.mxu0
      %v1998 = vadd.f32 %v1858, %v1997
      %1999 = vmatmul.f32.gmra.mxu0 %v1754
      %v2000 = vpop.f32.mrf.mxu0
      %v2001 = vadd.f32 %v1861, %v2000
      %2002 = vmatmul.f32.gmra.mxu0 %v1755
      %v2003 = vpop.f32.mrf.mxu0
      %v2004 = vadd.f32 %v1864, %v2003
      %2005 = vmatmul.f32.gmra.mxu0 %v1756
      %v2006 = vpop.f32.mrf.mxu0
      %v2007 = vadd.f32 %v1867, %v2006
      %2008 = vmatmul.f32.gmra.mxu0 %v1757
      %v2009 = vpop.f32.mrf.mxu0
      %v2010 = vadd.f32 %v1870, %v2009
      %2011 = vmatmul.f32.gmra.mxu0 %v1758
      %v2012 = vpop.f32.mrf.mxu0
      %v2013 = vadd.f32 %v1873, %v2012
      %2014 = vmatmul.f32.gmra.mxu0 %v1759
      %v2015 = vpop.f32.mrf.mxu0
      %v2016 = vadd.f32 %v1876, %v2015
      %2017 = vmatmul.f32.gmra.mxu0 %v1760
      %v2018 = vpop.f32.mrf.mxu0
      %v2019 = vadd.f32 %v1879, %v2018
      %2020 = vmatmul.f32.gmra.mxu0 %v1761
      %v2021 = vpop.f32.mrf.mxu0
      %v2022 = vadd.f32 %v1882, %v2021
      %2023 = vmatmul.f32.gmra.mxu0 %v1762
      %v2024 = vpop.f32.mrf.mxu0
      %v2025 = vadd.f32 %v1885, %v2024
      %2026 = vmatmul.f32.gmra.mxu0 %v1763
      %v2027 = vpop.f32.mrf.mxu0
      %v2028 = vadd.f32 %v1888, %v2027
      %2029 = vmatmul.f32.gmra.mxu0 %v1764
      %v2030 = vpop.f32.mrf.mxu0
      %v2031 = vadd.f32 %v1891, %v2030
      %2032 = vmatmul.f32.gmra.mxu0 %v1765
      %v2033 = vpop.f32.mrf.mxu0
      %v2034 = vadd.f32 %v1894, %v2033
      %2035 = vmatmul.f32.gmra.mxu0 %v1766
      %v2036 = vpop.f32.mrf.mxu0
      %v2037 = vadd.f32 %v1897, %v2036
      %2038 = vmatmul.f32.gmra.mxu0 %v1767
      %v2039 = vpop.f32.mrf.mxu0
      %v2040 = vadd.f32 %v1900, %v2039
      %2041 = vmatmul.f32.gmra.mxu0 %v1768
      %v2042 = vpop.f32.mrf.mxu0
      %v2043 = vadd.f32 %v1903, %v2042
      %2044 = vmatmul.f32.gmra.mxu0 %v1769
      %v2045 = vpop.f32.mrf.mxu0
      %v2046 = vadd.f32 %v1906, %v2045
      %2047 = vmatmul.f32.gmra.mxu0 %v1770
      %v2048 = vpop.f32.mrf.mxu0
      %v2049 = vadd.f32 %v1909, %v2048
      %2050 = vmatmul.f32.gmra.mxu0 %v1771
      %v2051 = vpop.f32.mrf.mxu0
      %v2052 = vadd.f32 %v1912, %v2051
      %2053 = vmatmul.f32.gmra.mxu0 %v1772
      %v2054 = vpop.f32.mrf.mxu0
      %v2055 = vadd.f32 %v1915, %v2054
      %2056 = vmatmul.f32.gmra.mxu0 %v1773
      %v2057 = vpop.f32.mrf.mxu0
      %v2058 = vadd.f32 %v1918, %v2057
      %2059 = vmatmul.f32.gmra.mxu0 %v1774
      %v2060 = vpop.f32.mrf.mxu0
      %v2061 = vadd.f32 %v1921, %v2060
      %2062 = vmatmul.f32.gmra.mxu0 %v1775
      %v2063 = vpop.f32.mrf.mxu0
      %v2064 = vadd.f32 %v1924, %v2063
      %2065 = vmatmul.f32.gmra.mxu0 %v1776
      %v2066 = vpop.f32.mrf.mxu0
      %v2067 = vadd.f32 %v1927, %v2066
      %2068 = vmatmul.f32.gmra.mxu0 %v1777
      %v2069 = vpop.f32.mrf.mxu0
      %v2070 = vadd.f32 %v1930, %v2069
      %2071 = vmatmul.f32.gmra.mxu0 %v1778
      %v2072 = vpop.f32.mrf.mxu0
      %v2073 = vadd.f32 %v1933, %v2072
      %2074 = vmatmul.f32.gmra.mxu0 %v1779
      %v2075 = vpop.f32.mrf.mxu0
      %v2076 = vadd.f32 %v1936, %v2075
      %2077 = vmatmul.f32.gmra.mxu0 %v1780
      %v2078 = vpop.f32.mrf.mxu0
      %v2079 = vadd.f32 %v1939, %v2078
      %2080 = vmatmul.f32.gmra.mxu0 %v1781
      %v2081 = vpop.f32.mrf.mxu0
      %v2082 = vadd.f32 %v1942, %v2081
      %2083 = vmatmul.f32.gmra.mxu0 %v1782
      %v2084 = vpop.f32.mrf.mxu0
      %v2085 = vadd.f32 %v1945, %v2084
      %2086 = vmatmul.f32.gmra.mxu0 %v1783
      %v2087 = vpop.f32.mrf.mxu0
      %v2088 = vadd.f32 %v1948, %v2087
      %2089 = vmatmul.f32.gmra.mxu0 %v1784
      %v2090 = vpop.f32.mrf.mxu0
      %v2091 = vadd.f32 %v1951, %v2090
      %2092 = vmatmul.f32.gmra.mxu0 %v1785
      %v2093 = vpop.f32.mrf.mxu0
      %v2094 = vadd.f32 %v1954, %v2093
      %2095 = vmatmul.f32.gmra.mxu0 %v1786
      %v2096 = vpop.f32.mrf.mxu0
      %v2097 = vadd.f32 %v1957, %v2096
      %2098 = vdwg.mxu0
      %v2099 = vadd.f32 %v1664, %v1977
      %v2100 = vadd.f32 %v1665, %v1980
      %v2101 = vadd.f32 %v1666, %v1983
      %v2102 = vadd.f32 %v1667, %v1986
      %v2103 = vadd.f32 %v1668, %v1989
      %v2104 = vadd.f32 %v1669, %v1992
      %v2105 = vadd.f32 %v1670, %v1995
      %v2106 = vadd.f32 %v1671, %v1998
      %v2107 = vadd.f32 %v1672, %v2001
      %v2108 = vadd.f32 %v1673, %v2004
      %v2109 = vadd.f32 %v1674, %v2007
      %v2110 = vadd.f32 %v1675, %v2010
      %v2111 = vadd.f32 %v1676, %v2013
      %v2112 = vadd.f32 %v1677, %v2016
      %v2113 = vadd.f32 %v1678, %v2019
      %v2114 = vadd.f32 %v1679, %v2022
      %v2115 = vadd.f32 %v1680, %v2025
      %v2116 = vadd.f32 %v1681, %v2028
      %v2117 = vadd.f32 %v1682, %v2031
      %v2118 = vadd.f32 %v1683, %v2034
      %v2119 = vadd.f32 %v1684, %v2037
      %v2120 = vadd.f32 %v1685, %v2040
      %v2121 = vadd.f32 %v1686, %v2043
      %v2122 = vadd.f32 %v1687, %v2046
      %v2123 = vadd.f32 %v1688, %v2049
      %v2124 = vadd.f32 %v1689, %v2052
      %v2125 = vadd.f32 %v1690, %v2055
      %v2126 = vadd.f32 %v1691, %v2058
      %v2127 = vadd.f32 %v1692, %v2061
      %v2128 = vadd.f32 %v1693, %v2064
      %v2129 = vadd.f32 %v1694, %v2067
      %v2130 = vadd.f32 %v1695, %v2070
      %v2131 = vadd.f32 %v1696, %v2073
      %v2132 = vadd.f32 %v1697, %v2076
      %v2133 = vadd.f32 %v1698, %v2079
      %v2134 = vadd.f32 %v1699, %v2082
      %v2135 = vadd.f32 %v1700, %v2085
      %v2136 = vadd.f32 %v1701, %v2088
      %v2137 = vadd.f32 %v1702, %v2091
      %v2138 = vadd.f32 %v1703, %v2094
      %v2139 = vadd.f32 %v1704, %v2097
      %v2140 = vld [vmem:[%s519 + $0x37] sm:$0xff]
      %v2141 = vld [vmem:[%s519 + $0x3f] sm:$0xff]
      %v2142 = vld [vmem:[%s519 + $0x47] sm:$0xff]
      %v2143 = vld [vmem:[%s519 + $0x4f] sm:$0xff]
      %v2144 = vld [vmem:[%s519 + $0x57] sm:$0xff]
      %v2145 = vld [vmem:[%s519 + $0x5f] sm:$0xff]
      %v2146 = vld [vmem:[%s519 + $0x67] sm:$0xff]
      %v2147 = vld [vmem:[%s519 + $0x6f] sm:$0xff]
      %v2148 = vld [vmem:[%s519 + $0x77] sm:$0xff]
      %v2149 = vld [vmem:[%s519 + $0x7f] sm:$0xff]
      %v2150 = vld [vmem:[%s519 + $0x87] sm:$0xff]
      %v2151 = vld [vmem:[%s519 + $0x8f] sm:$0xff]
      %v2152 = vld [vmem:[%s519 + $0x97] sm:$0xff]
      %v2153 = vld [vmem:[%s519 + $0x9f] sm:$0xff]
      %v2154 = vld [vmem:[%s519 + $0xa7] sm:$0xff]
      %v2155 = vld [vmem:[%s519 + $0xaf] sm:$0xff]
      %v2156 = vld [vmem:[%s519 + $0xb7] sm:$0xff]
      %v2157 = vld [vmem:[%s519 + $0xbf] sm:$0xff]
      %v2158 = vld [vmem:[%s519 + $0xc7] sm:$0xff]
      %v2159 = vld [vmem:[%s519 + $0xcf] sm:$0xff]
      %v2160 = vld [vmem:[%s519 + $0xd7] sm:$0xff]
      %v2161 = vld [vmem:[%s519 + $0xdf] sm:$0xff]
      %v2162 = vld [vmem:[%s519 + $0xe7] sm:$0xff]
      %v2163 = vld [vmem:[%s519 + $0xef] sm:$0xff]
      %v2164 = vld [vmem:[%s519 + $0xf7] sm:$0xff]
      %v2165 = vld [vmem:[%s519 + $0xff] sm:$0xff]
      %v2166 = vld [vmem:[%s519 + $0x107] sm:$0xff]
      %v2167 = vld [vmem:[%s519 + $0x10f] sm:$0xff]
      %v2168 = vld [vmem:[%s519 + $0x117] sm:$0xff]
      %v2169 = vld [vmem:[%s519 + $0x11f] sm:$0xff]
      %v2170 = vld [vmem:[%s519 + $0x127] sm:$0xff]
      %v2171 = vld [vmem:[%s519 + $0x12f] sm:$0xff]
      %v2172 = vld [vmem:[%s519 + $0x137] sm:$0xff]
      %v2173 = vld [vmem:[%s519 + $0x13f] sm:$0xff]
      %v2174 = vld [vmem:[%s519 + $0x147] sm:$0xff]
      %v2175 = vld [vmem:[%s519 + $0x14f] sm:$0xff]
      %v2176 = vld [vmem:[%s519 + $0x157] sm:$0xff]
      %v2177 = vld [vmem:[%s519 + $0x15f] sm:$0xff]
      %v2178 = vld [vmem:[%s519 + $0x167] sm:$0xff]
      %v2179 = vld [vmem:[%s519 + $0x16f] sm:$0xff]
      %v2180 = vld [vmem:[%s519 + $0x177] sm:$0xf]
      %v2181 = vld [vmem:[%s1 + $0x400] sm:$0xff]
      %v2182 = vld [vmem:[%s1 + $0x408] sm:$0xff]
      %v2183 = vld [vmem:[%s1 + $0x410] sm:$0xff]
      %v2184 = vld [vmem:[%s1 + $0x418] sm:$0xff]
      %v2185 = vld [vmem:[%s1 + $0x420] sm:$0xff]
      %v2186 = vld [vmem:[%s1 + $0x428] sm:$0xff]
      %v2187 = vld [vmem:[%s1 + $0x430] sm:$0xff]
      %v2188 = vld [vmem:[%s1 + $0x438] sm:$0xff]
      %v2189 = vld [vmem:[%s1 + $0x440] sm:$0xff]
      %v2190 = vld [vmem:[%s1 + $0x448] sm:$0xff]
      %v2191 = vld [vmem:[%s1 + $0x450] sm:$0xff]
      %v2192 = vld [vmem:[%s1 + $0x458] sm:$0xff]
      %v2193 = vld [vmem:[%s1 + $0x460] sm:$0xff]
      %v2194 = vld [vmem:[%s1 + $0x468] sm:$0xff]
      %v2195 = vld [vmem:[%s1 + $0x470] sm:$0xff]
      %v2196 = vld [vmem:[%s1 + $0x478] sm:$0xff]
      %2197 = vmatpush.msra.mxu0 %v2196
      %2198 = vmatpush.msra.mxu0 %v2195
      %2199 = vmatpush.msra.mxu0 %v2194
      %2200 = vmatpush.msra.mxu0 %v2193
      %2201 = vmatpush.msra.mxu0 %v2192
      %2202 = vmatpush.msra.mxu0 %v2191
      %2203 = vmatpush.msra.mxu0 %v2190
      %2204 = vmatpush.msra.mxu0 %v2189
      %2205 = vmatpush.msra.mxu0 %v2188
      %2206 = vmatpush.msra.mxu0 %v2187
      %2207 = vmatpush.msra.mxu0 %v2186
      %2208 = vmatpush.msra.mxu0 %v2185
      %2209 = vmatpush.msra.mxu0 %v2184
      %2210 = vmatpush.msra.mxu0 %v2183
      %2211 = vmatpush.msra.mxu0 %v2182
      %2212 = vmatpush.msra.mxu0 %v2181
      %2213 = vmatmul.f32.gmra.mxu0 %v2140
      %v2214 = vpop.f32.mrf.mxu0
      %v2215 = vadd.f32 0.0, %v2214
      %2216 = vmatmul.f32.gmra.mxu0 %v2141
      %v2217 = vpop.f32.mrf.mxu0
      %v2218 = vadd.f32 0.0, %v2217
      %2219 = vmatmul.f32.gmra.mxu0 %v2142
      %v2220 = vpop.f32.mrf.mxu0
      %v2221 = vadd.f32 0.0, %v2220
      %2222 = vmatmul.f32.gmra.mxu0 %v2143
      %v2223 = vpop.f32.mrf.mxu0
      %v2224 = vadd.f32 0.0, %v2223
      %2225 = vmatmul.f32.gmra.mxu0 %v2144
      %v2226 = vpop.f32.mrf.mxu0
      %v2227 = vadd.f32 0.0, %v2226
      %2228 = vmatmul.f32.gmra.mxu0 %v2145
      %v2229 = vpop.f32.mrf.mxu0
      %v2230 = vadd.f32 0.0, %v2229
      %2231 = vmatmul.f32.gmra.mxu0 %v2146
      %v2232 = vpop.f32.mrf.mxu0
      %v2233 = vadd.f32 0.0, %v2232
      %2234 = vmatmul.f32.gmra.mxu0 %v2147
      %v2235 = vpop.f32.mrf.mxu0
      %v2236 = vadd.f32 0.0, %v2235
      %2237 = vmatmul.f32.gmra.mxu0 %v2148
      %v2238 = vpop.f32.mrf.mxu0
      %v2239 = vadd.f32 0.0, %v2238
      %2240 = vmatmul.f32.gmra.mxu0 %v2149
      %v2241 = vpop.f32.mrf.mxu0
      %v2242 = vadd.f32 0.0, %v2241
      %2243 = vmatmul.f32.gmra.mxu0 %v2150
      %v2244 = vpop.f32.mrf.mxu0
      %v2245 = vadd.f32 0.0, %v2244
      %2246 = vmatmul.f32.gmra.mxu0 %v2151
      %v2247 = vpop.f32.mrf.mxu0
      %v2248 = vadd.f32 0.0, %v2247
      %2249 = vmatmul.f32.gmra.mxu0 %v2152
      %v2250 = vpop.f32.mrf.mxu0
      %v2251 = vadd.f32 0.0, %v2250
      %2252 = vmatmul.f32.gmra.mxu0 %v2153
      %v2253 = vpop.f32.mrf.mxu0
      %v2254 = vadd.f32 0.0, %v2253
      %2255 = vmatmul.f32.gmra.mxu0 %v2154
      %v2256 = vpop.f32.mrf.mxu0
      %v2257 = vadd.f32 0.0, %v2256
      %2258 = vmatmul.f32.gmra.mxu0 %v2155
      %v2259 = vpop.f32.mrf.mxu0
      %v2260 = vadd.f32 0.0, %v2259
      %2261 = vmatmul.f32.gmra.mxu0 %v2156
      %v2262 = vpop.f32.mrf.mxu0
      %v2263 = vadd.f32 0.0, %v2262
      %2264 = vmatmul.f32.gmra.mxu0 %v2157
      %v2265 = vpop.f32.mrf.mxu0
      %v2266 = vadd.f32 0.0, %v2265
      %2267 = vmatmul.f32.gmra.mxu0 %v2158
      %v2268 = vpop.f32.mrf.mxu0
      %v2269 = vadd.f32 0.0, %v2268
      %2270 = vmatmul.f32.gmra.mxu0 %v2159
      %v2271 = vpop.f32.mrf.mxu0
      %v2272 = vadd.f32 0.0, %v2271
      %2273 = vmatmul.f32.gmra.mxu0 %v2160
      %v2274 = vpop.f32.mrf.mxu0
      %v2275 = vadd.f32 0.0, %v2274
      %2276 = vmatmul.f32.gmra.mxu0 %v2161
      %v2277 = vpop.f32.mrf.mxu0
      %v2278 = vadd.f32 0.0, %v2277
      %2279 = vmatmul.f32.gmra.mxu0 %v2162
      %v2280 = vpop.f32.mrf.mxu0
      %v2281 = vadd.f32 0.0, %v2280
      %2282 = vmatmul.f32.gmra.mxu0 %v2163
      %v2283 = vpop.f32.mrf.mxu0
      %v2284 = vadd.f32 0.0, %v2283
      %2285 = vmatmul.f32.gmra.mxu0 %v2164
      %v2286 = vpop.f32.mrf.mxu0
      %v2287 = vadd.f32 0.0, %v2286
      %2288 = vmatmul.f32.gmra.mxu0 %v2165
      %v2289 = vpop.f32.mrf.mxu0
      %v2290 = vadd.f32 0.0, %v2289
      %2291 = vmatmul.f32.gmra.mxu0 %v2166
      %v2292 = vpop.f32.mrf.mxu0
      %v2293 = vadd.f32 0.0, %v2292
      %2294 = vmatmul.f32.gmra.mxu0 %v2167
      %v2295 = vpop.f32.mrf.mxu0
      %v2296 = vadd.f32 0.0, %v2295
      %2297 = vmatmul.f32.gmra.mxu0 %v2168
      %v2298 = vpop.f32.mrf.mxu0
      %v2299 = vadd.f32 0.0, %v2298
      %2300 = vmatmul.f32.gmra.mxu0 %v2169
      %v2301 = vpop.f32.mrf.mxu0
      %v2302 = vadd.f32 0.0, %v2301
      %2303 = vmatmul.f32.gmra.mxu0 %v2170
      %v2304 = vpop.f32.mrf.mxu0
      %v2305 = vadd.f32 0.0, %v2304
      %2306 = vmatmul.f32.gmra.mxu0 %v2171
      %v2307 = vpop.f32.mrf.mxu0
      %v2308 = vadd.f32 0.0, %v2307
      %2309 = vmatmul.f32.gmra.mxu0 %v2172
      %v2310 = vpop.f32.mrf.mxu0
      %v2311 = vadd.f32 0.0, %v2310
      %2312 = vmatmul.f32.gmra.mxu0 %v2173
      %v2313 = vpop.f32.mrf.mxu0
      %v2314 = vadd.f32 0.0, %v2313
      %2315 = vmatmul.f32.gmra.mxu0 %v2174
      %v2316 = vpop.f32.mrf.mxu0
      %v2317 = vadd.f32 0.0, %v2316
      %2318 = vmatmul.f32.gmra.mxu0 %v2175
      %v2319 = vpop.f32.mrf.mxu0
      %v2320 = vadd.f32 0.0, %v2319
      %2321 = vmatmul.f32.gmra.mxu0 %v2176
      %v2322 = vpop.f32.mrf.mxu0
      %v2323 = vadd.f32 0.0, %v2322
      %2324 = vmatmul.f32.gmra.mxu0 %v2177
      %v2325 = vpop.f32.mrf.mxu0
      %v2326 = vadd.f32 0.0, %v2325
      %2327 = vmatmul.f32.gmra.mxu0 %v2178
      %v2328 = vpop.f32.mrf.mxu0
      %v2329 = vadd.f32 0.0, %v2328
      %2330 = vmatmul.f32.gmra.mxu0 %v2179
      %v2331 = vpop.f32.mrf.mxu0
      %v2332 = vadd.f32 0.0, %v2331
      %2333 = vmatmul.f32.gmra.mxu0 %v2180
      %v2334 = vpop.f32.mrf.mxu0
      %v2335 = vadd.f32 0.0, %v2334
      %2336 = vdwg.mxu0
      %v2337 = vadd.f32 %v2099, %v2215
      %v2338 = vadd.f32 %v2100, %v2218
      %v2339 = vadd.f32 %v2101, %v2221
      %v2340 = vadd.f32 %v2102, %v2224
      %v2341 = vadd.f32 %v2103, %v2227
      %v2342 = vadd.f32 %v2104, %v2230
      %v2343 = vadd.f32 %v2105, %v2233
      %v2344 = vadd.f32 %v2106, %v2236
      %v2345 = vadd.f32 %v2107, %v2239
      %v2346 = vadd.f32 %v2108, %v2242
      %v2347 = vadd.f32 %v2109, %v2245
      %v2348 = vadd.f32 %v2110, %v2248
      %v2349 = vadd.f32 %v2111, %v2251
      %v2350 = vadd.f32 %v2112, %v2254
      %v2351 = vadd.f32 %v2113, %v2257
      %v2352 = vadd.f32 %v2114, %v2260
      %v2353 = vadd.f32 %v2115, %v2263
      %v2354 = vadd.f32 %v2116, %v2266
      %v2355 = vadd.f32 %v2117, %v2269
      %v2356 = vadd.f32 %v2118, %v2272
      %v2357 = vadd.f32 %v2119, %v2275
      %v2358 = vadd.f32 %v2120, %v2278
      %v2359 = vadd.f32 %v2121, %v2281
      %v2360 = vadd.f32 %v2122, %v2284
      %v2361 = vadd.f32 %v2123, %v2287
      %v2362 = vadd.f32 %v2124, %v2290
      %v2363 = vadd.f32 %v2125, %v2293
      %v2364 = vadd.f32 %v2126, %v2296
      %v2365 = vadd.f32 %v2127, %v2299
      %v2366 = vadd.f32 %v2128, %v2302
      %v2367 = vadd.f32 %v2129, %v2305
      %v2368 = vadd.f32 %v2130, %v2308
      %v2369 = vadd.f32 %v2131, %v2311
      %v2370 = vadd.f32 %v2132, %v2314
      %v2371 = vadd.f32 %v2133, %v2317
      %v2372 = vadd.f32 %v2134, %v2320
      %v2373 = vadd.f32 %v2135, %v2323
      %v2374 = vadd.f32 %v2136, %v2326
      %v2375 = vadd.f32 %v2137, %v2329
      %v2376 = vadd.f32 %v2138, %v2332
      %v2377 = vadd.f32 %v2139, %v2335
      %v2378 = vld [vmem:[%s3] sm:$0x1]
      %v2380 = vperm.slane %v2378, 0
      %v2382 = vmul.f32 %v2337, %v2380
      %v2383 = vmul.f32 %v2338, %v2380
      %v2384 = vmul.f32 %v2339, %v2380
      %v2385 = vmul.f32 %v2340, %v2380
      %v2386 = vmul.f32 %v2341, %v2380
      %v2387 = vmul.f32 %v2342, %v2380
      %v2388 = vmul.f32 %v2343, %v2380
      %v2389 = vmul.f32 %v2344, %v2380
      %v2390 = vmul.f32 %v2345, %v2380
      %v2391 = vmul.f32 %v2346, %v2380
      %v2392 = vmul.f32 %v2347, %v2380
      %v2393 = vmul.f32 %v2348, %v2380
      %v2394 = vmul.f32 %v2349, %v2380
      %v2395 = vmul.f32 %v2350, %v2380
      %v2396 = vmul.f32 %v2351, %v2380
      %v2397 = vmul.f32 %v2352, %v2380
      %v2398 = vmul.f32 %v2353, %v2380
      %v2399 = vmul.f32 %v2354, %v2380
      %v2400 = vmul.f32 %v2355, %v2380
      %v2401 = vmul.f32 %v2356, %v2380
      %v2402 = vmul.f32 %v2357, %v2380
      %v2403 = vmul.f32 %v2358, %v2380
      %v2404 = vmul.f32 %v2359, %v2380
      %v2405 = vmul.f32 %v2360, %v2380
      %v2406 = vmul.f32 %v2361, %v2380
      %v2407 = vmul.f32 %v2362, %v2380
      %v2408 = vmul.f32 %v2363, %v2380
      %v2409 = vmul.f32 %v2364, %v2380
      %v2410 = vmul.f32 %v2365, %v2380
      %v2411 = vmul.f32 %v2366, %v2380
      %v2412 = vmul.f32 %v2367, %v2380
      %v2413 = vmul.f32 %v2368, %v2380
      %v2414 = vmul.f32 %v2369, %v2380
      %v2415 = vmul.f32 %v2370, %v2380
      %v2416 = vmul.f32 %v2371, %v2380
      %v2417 = vmul.f32 %v2372, %v2380
      %v2418 = vmul.f32 %v2373, %v2380
      %v2419 = vmul.f32 %v2374, %v2380
      %v2420 = vmul.f32 %v2375, %v2380
      %v2421 = vmul.f32 %v2376, %v2380
      %v2422 = vmul.f32 %v2377, %v2380
      %v2423 = vld [vmem:[%s4] sm:$0x1]
      %v2425 = vperm.slane %v2423, 0
      %v2427 = vadd.f32 %v2382, %v2425
      %v2428 = vadd.f32 %v2383, %v2425
      %v2429 = vadd.f32 %v2384, %v2425
      %v2430 = vadd.f32 %v2385, %v2425
      %v2431 = vadd.f32 %v2386, %v2425
      %v2432 = vadd.f32 %v2387, %v2425
      %v2433 = vadd.f32 %v2388, %v2425
      %v2434 = vadd.f32 %v2389, %v2425
      %v2435 = vadd.f32 %v2390, %v2425
      %v2436 = vadd.f32 %v2391, %v2425
      %v2437 = vadd.f32 %v2392, %v2425
      %v2438 = vadd.f32 %v2393, %v2425
      %v2439 = vadd.f32 %v2394, %v2425
      %v2440 = vadd.f32 %v2395, %v2425
      %v2441 = vadd.f32 %v2396, %v2425
      %v2442 = vadd.f32 %v2397, %v2425
      %v2443 = vadd.f32 %v2398, %v2425
      %v2444 = vadd.f32 %v2399, %v2425
      %v2445 = vadd.f32 %v2400, %v2425
      %v2446 = vadd.f32 %v2401, %v2425
      %v2447 = vadd.f32 %v2402, %v2425
      %v2448 = vadd.f32 %v2403, %v2425
      %v2449 = vadd.f32 %v2404, %v2425
      %v2450 = vadd.f32 %v2405, %v2425
      %v2451 = vadd.f32 %v2406, %v2425
      %v2452 = vadd.f32 %v2407, %v2425
      %v2453 = vadd.f32 %v2408, %v2425
      %v2454 = vadd.f32 %v2409, %v2425
      %v2455 = vadd.f32 %v2410, %v2425
      %v2456 = vadd.f32 %v2411, %v2425
      %v2457 = vadd.f32 %v2412, %v2425
      %v2458 = vadd.f32 %v2413, %v2425
      %v2459 = vadd.f32 %v2414, %v2425
      %v2460 = vadd.f32 %v2415, %v2425
      %v2461 = vadd.f32 %v2416, %v2425
      %v2462 = vadd.f32 %v2417, %v2425
      %v2463 = vadd.f32 %v2418, %v2425
      %v2464 = vadd.f32 %v2419, %v2425
      %v2465 = vadd.f32 %v2420, %v2425
      %v2466 = vadd.f32 %v2421, %v2425
      %v2467 = vadd.f32 %v2422, %v2425
      %vm2468 = vcmp.ge.f32.partialorder %v2427, 0.0
      %vm2469 = vcmp.ge.f32.partialorder %v2428, 0.0
      %vm2470 = vcmp.ge.f32.partialorder %v2429, 0.0
      %vm2471 = vcmp.ge.f32.partialorder %v2430, 0.0
      %vm2472 = vcmp.ge.f32.partialorder %v2431, 0.0
      %vm2473 = vcmp.ge.f32.partialorder %v2432, 0.0
      %vm2474 = vcmp.ge.f32.partialorder %v2433, 0.0
      %vm2475 = vcmp.ge.f32.partialorder %v2434, 0.0
      %vm2476 = vcmp.ge.f32.partialorder %v2435, 0.0
      %vm2477 = vcmp.ge.f32.partialorder %v2436, 0.0
      %vm2478 = vcmp.ge.f32.partialorder %v2437, 0.0
      %vm2479 = vcmp.ge.f32.partialorder %v2438, 0.0
      %vm2480 = vcmp.ge.f32.partialorder %v2439, 0.0
      %vm2481 = vcmp.ge.f32.partialorder %v2440, 0.0
      %vm2482 = vcmp.ge.f32.partialorder %v2441, 0.0
      %vm2483 = vcmp.ge.f32.partialorder %v2442, 0.0
      %vm2484 = vcmp.ge.f32.partialorder %v2443, 0.0
      %vm2485 = vcmp.ge.f32.partialorder %v2444, 0.0
      %vm2486 = vcmp.ge.f32.partialorder %v2445, 0.0
      %vm2487 = vcmp.ge.f32.partialorder %v2446, 0.0
      %vm2488 = vcmp.ge.f32.partialorder %v2447, 0.0
      %vm2489 = vcmp.ge.f32.partialorder %v2448, 0.0
      %vm2490 = vcmp.ge.f32.partialorder %v2449, 0.0
      %vm2491 = vcmp.ge.f32.partialorder %v2450, 0.0
      %vm2492 = vcmp.ge.f32.partialorder %v2451, 0.0
      %vm2493 = vcmp.ge.f32.partialorder %v2452, 0.0
      %vm2494 = vcmp.ge.f32.partialorder %v2453, 0.0
      %vm2495 = vcmp.ge.f32.partialorder %v2454, 0.0
      %vm2496 = vcmp.ge.f32.partialorder %v2455, 0.0
      %vm2497 = vcmp.ge.f32.partialorder %v2456, 0.0
      %vm2498 = vcmp.ge.f32.partialorder %v2457, 0.0
      %vm2499 = vcmp.ge.f32.partialorder %v2458, 0.0
      %vm2500 = vcmp.ge.f32.partialorder %v2459, 0.0
      %vm2501 = vcmp.ge.f32.partialorder %v2460, 0.0
      %vm2502 = vcmp.ge.f32.partialorder %v2461, 0.0
      %vm2503 = vcmp.ge.f32.partialorder %v2462, 0.0
      %vm2504 = vcmp.ge.f32.partialorder %v2463, 0.0
      %vm2505 = vcmp.ge.f32.partialorder %v2464, 0.0
      %vm2506 = vcmp.ge.f32.partialorder %v2465, 0.0
      %vm2507 = vcmp.ge.f32.partialorder %v2466, 0.0
      %vm2508 = vcmp.ge.f32.partialorder %v2467, 0.0
      %v2509 = vmul.f32 %v2427, 0.01
      %v2510 = vmul.f32 %v2428, 0.01
      %v2511 = vmul.f32 %v2429, 0.01
      %v2512 = vmul.f32 %v2430, 0.01
      %v2513 = vmul.f32 %v2431, 0.01
      %v2514 = vmul.f32 %v2432, 0.01
      %v2515 = vmul.f32 %v2433, 0.01
      %v2516 = vmul.f32 %v2434, 0.01
      %v2517 = vmul.f32 %v2435, 0.01
      %v2518 = vmul.f32 %v2436, 0.01
      %v2519 = vmul.f32 %v2437, 0.01
      %v2520 = vmul.f32 %v2438, 0.01
      %v2521 = vmul.f32 %v2439, 0.01
      %v2522 = vmul.f32 %v2440, 0.01
      %v2523 = vmul.f32 %v2441, 0.01
      %v2524 = vmul.f32 %v2442, 0.01
      %v2525 = vmul.f32 %v2443, 0.01
      %v2526 = vmul.f32 %v2444, 0.01
      %v2527 = vmul.f32 %v2445, 0.01
      %v2528 = vmul.f32 %v2446, 0.01
      %v2529 = vmul.f32 %v2447, 0.01
      %v2530 = vmul.f32 %v2448, 0.01
      %v2531 = vmul.f32 %v2449, 0.01
      %v2532 = vmul.f32 %v2450, 0.01
      %v2533 = vmul.f32 %v2451, 0.01
      %v2534 = vmul.f32 %v2452, 0.01
      %v2535 = vmul.f32 %v2453, 0.01
      %v2536 = vmul.f32 %v2454, 0.01
      %v2537 = vmul.f32 %v2455, 0.01
      %v2538 = vmul.f32 %v2456, 0.01
      %v2539 = vmul.f32 %v2457, 0.01
      %v2540 = vmul.f32 %v2458, 0.01
      %v2541 = vmul.f32 %v2459, 0.01
      %v2542 = vmul.f32 %v2460, 0.01
      %v2543 = vmul.f32 %v2461, 0.01
      %v2544 = vmul.f32 %v2462, 0.01
      %v2545 = vmul.f32 %v2463, 0.01
      %v2546 = vmul.f32 %v2464, 0.01
      %v2547 = vmul.f32 %v2465, 0.01
      %v2548 = vmul.f32 %v2466, 0.01
      %v2549 = vmul.f32 %v2467, 0.01
      %v2550 = vsel %vm2468, %v2427, %v2509
      %v2551 = vsel %vm2469, %v2428, %v2510
      %v2552 = vsel %vm2470, %v2429, %v2511
      %v2553 = vsel %vm2471, %v2430, %v2512
      %v2554 = vsel %vm2472, %v2431, %v2513
      %v2555 = vsel %vm2473, %v2432, %v2514
      %v2556 = vsel %vm2474, %v2433, %v2515
      %v2557 = vsel %vm2475, %v2434, %v2516
      %v2558 = vsel %vm2476, %v2435, %v2517
      %v2559 = vsel %vm2477, %v2436, %v2518
      %v2560 = vsel %vm2478, %v2437, %v2519
      %v2561 = vsel %vm2479, %v2438, %v2520
      %v2562 = vsel %vm2480, %v2439, %v2521
      %v2563 = vsel %vm2481, %v2440, %v2522
      %v2564 = vsel %vm2482, %v2441, %v2523
      %v2565 = vsel %vm2483, %v2442, %v2524
      %v2566 = vsel %vm2484, %v2443, %v2525
      %v2567 = vsel %vm2485, %v2444, %v2526
      %v2568 = vsel %vm2486, %v2445, %v2527
      %v2569 = vsel %vm2487, %v2446, %v2528
      %v2570 = vsel %vm2488, %v2447, %v2529
      %v2571 = vsel %vm2489, %v2448, %v2530
      %v2572 = vsel %vm2490, %v2449, %v2531
      %v2573 = vsel %vm2491, %v2450, %v2532
      %v2574 = vsel %vm2492, %v2451, %v2533
      %v2575 = vsel %vm2493, %v2452, %v2534
      %v2576 = vsel %vm2494, %v2453, %v2535
      %v2577 = vsel %vm2495, %v2454, %v2536
      %v2578 = vsel %vm2496, %v2455, %v2537
      %v2579 = vsel %vm2497, %v2456, %v2538
      %v2580 = vsel %vm2498, %v2457, %v2539
      %v2581 = vsel %vm2499, %v2458, %v2540
      %v2582 = vsel %vm2500, %v2459, %v2541
      %v2583 = vsel %vm2501, %v2460, %v2542
      %v2584 = vsel %vm2502, %v2461, %v2543
      %v2585 = vsel %vm2503, %v2462, %v2544
      %v2586 = vsel %vm2504, %v2463, %v2545
      %v2587 = vsel %vm2505, %v2464, %v2546
      %v2588 = vsel %vm2506, %v2465, %v2547
      %v2589 = vsel %vm2507, %v2466, %v2548
      %v2590 = vsel %vm2508, %v2467, %v2549
      %v2591 = vlaneseq
      %v2592 = vshrl.u32 %v2591, 7
      %v2593 = vadd.s32 %v2592, 8
      %v2594 = vadd.s32 %v2592, 16
      %v2595 = vadd.s32 %v2592, 24
      %v2596 = vadd.s32 %v2592, 32
      %v2597 = vadd.s32 %v2592, 40
      %v2598 = vadd.s32 %v2592, 48
      %v2599 = vadd.s32 %v2592, 56
      %v2600 = vadd.s32 %v2592, 64
      %v2601 = vadd.s32 %v2592, 72
      %v2602 = vadd.s32 %v2592, 80
      %v2603 = vadd.s32 %v2592, 88
      %v2604 = vadd.s32 %v2592, 96
      %v2605 = vadd.s32 %v2592, 104
      %v2606 = vadd.s32 %v2592, 112
      %v2607 = vadd.s32 %v2592, 120
      %v2608 = vadd.s32 %v2592, 128
      %v2609 = vadd.s32 %v2592, 136
      %v2610 = vadd.s32 %v2592, 144
      %v2611 = vadd.s32 %v2592, 152
      %v2612 = vadd.s32 %v2592, 160
      %v2613 = vadd.s32 %v2592, 168
      %v2614 = vadd.s32 %v2592, 176
      %v2615 = vadd.s32 %v2592, 184
      %v2616 = vadd.s32 %v2592, 192
      %v2617 = vadd.s32 %v2592, 200
      %v2618 = vadd.s32 %v2592, 208
      %v2619 = vadd.s32 %v2592, 216
      %v2620 = vadd.s32 %v2592, 224
      %v2621 = vadd.s32 %v2592, 232
      %v2622 = vadd.s32 %v2592, 240
      %v2623 = vadd.s32 %v2592, 248
      %v2624 = vadd.s32 %v2592, 256
      %v2625 = vadd.s32 %v2592, 264
      %v2626 = vadd.s32 %v2592, 272
      %v2627 = vadd.s32 %v2592, 280
      %v2628 = vadd.s32 %v2592, 288
      %v2629 = vadd.s32 %v2592, 296
      %v2630 = vadd.s32 %v2592, 304
      %v2631 = vadd.s32 %v2592, 312
      %v2632 = vadd.s32 %v2592, 320
      %vm2633 = vcmp.lt.s32.totalorder %v2592, 0
      %v2634 = vsub.s32 0, %v2592
      %v2635 = vsel %vm2633, %v2634, %v2592
      %v2636 = vand.u32 %v2635, 65535
      %v2637 = vshrl.u32 %v2635, 16
      %v2639 = vmul.u32 %v2636, 14564
      %v2640 = vmul.u32 %v2636, 58254
      %v2641 = vmul.u32 %v2637, 14564
      %v2642 = vmul.u32 %v2637, 58254
      %v2643 = vshll.u32 %v2640, 16
      %v2644 = vshrl.u32 %v2640, 16
      %v2645 = vshll.u32 %v2641, 16
      %v2646 = vshrl.u32 %v2641, 16
      %vm2647 = vc.u32 %v2639, %v2643
      %v2648 = vsel %vm2647, 1, 0
      %v2649 = vadd.s32 %v2639, %v2643
      %v2650 = vadd.s32 %v2642, %v2648
      %vm2651 = vc.u32 %v2649, %v2645
      %v2652 = vsel %vm2651, 1, 0
      %v2653 = vadd.s32 %v2649, %v2645
      %v2654 = vadd.s32 %v2650, %v2652
      %v2655 = vadd.s32 %v2654, %v2644
      %v2656 = vadd.s32 %v2655, %v2646
      %v2657 = vshrl.u32 %v2656, 4
      %v2658 = vmul.u32 %v2657, 18
      %v2659 = vsub.s32 %v2635, %v2658
      %v2660 = vsub.s32 0, %v2659
      %v2661 = vsel %vm2633, %v2660, %v2659
      %vm2662 = vcmp.lt.s32.totalorder %v2593, 0
      %v2663 = vsub.s32 0, %v2593
      %v2664 = vsel %vm2662, %v2663, %v2593
      %v2665 = vand.u32 %v2664, 65535
      %v2666 = vshrl.u32 %v2664, 16
      %v2668 = vmul.u32 %v2665, 14564
      %v2669 = vmul.u32 %v2665, 58254
      %v2670 = vmul.u32 %v2666, 14564
      %v2671 = vmul.u32 %v2666, 58254
      %v2672 = vshll.u32 %v2669, 16
      %v2673 = vshrl.u32 %v2669, 16
      %v2674 = vshll.u32 %v2670, 16
      %v2675 = vshrl.u32 %v2670, 16
      %vm2676 = vc.u32 %v2668, %v2672
      %v2677 = vsel %vm2676, 1, 0
      %v2678 = vadd.s32 %v2668, %v2672
      %v2679 = vadd.s32 %v2671, %v2677
      %vm2680 = vc.u32 %v2678, %v2674
      %v2681 = vsel %vm2680, 1, 0
      %v2682 = vadd.s32 %v2678, %v2674
      %v2683 = vadd.s32 %v2679, %v2681
      %v2684 = vadd.s32 %v2683, %v2673
      %v2685 = vadd.s32 %v2684, %v2675
      %v2686 = vshrl.u32 %v2685, 4
      %v2687 = vmul.u32 %v2686, 18
      %v2688 = vsub.s32 %v2664, %v2687
      %v2689 = vsub.s32 0, %v2688
      %v2690 = vsel %vm2662, %v2689, %v2688
      %vm2691 = vcmp.lt.s32.totalorder %v2594, 0
      %v2692 = vsub.s32 0, %v2594
      %v2693 = vsel %vm2691, %v2692, %v2594
      %v2694 = vand.u32 %v2693, 65535
      %v2695 = vshrl.u32 %v2693, 16
      %v2697 = vmul.u32 %v2694, 14564
      %v2698 = vmul.u32 %v2694, 58254
      %v2699 = vmul.u32 %v2695, 14564
      %v2700 = vmul.u32 %v2695, 58254
      %v2701 = vshll.u32 %v2698, 16
      %v2702 = vshrl.u32 %v2698, 16
      %v2703 = vshll.u32 %v2699, 16
      %v2704 = vshrl.u32 %v2699, 16
      %vm2705 = vc.u32 %v2697, %v2701
      %v2706 = vsel %vm2705, 1, 0
      %v2707 = vadd.s32 %v2697, %v2701
      %v2708 = vadd.s32 %v2700, %v2706
      %vm2709 = vc.u32 %v2707, %v2703
      %v2710 = vsel %vm2709, 1, 0
      %v2711 = vadd.s32 %v2707, %v2703
      %v2712 = vadd.s32 %v2708, %v2710
      %v2713 = vadd.s32 %v2712, %v2702
      %v2714 = vadd.s32 %v2713, %v2704
      %v2715 = vshrl.u32 %v2714, 4
      %v2716 = vmul.u32 %v2715, 18
      %v2717 = vsub.s32 %v2693, %v2716
      %v2718 = vsub.s32 0, %v2717
      %v2719 = vsel %vm2691, %v2718, %v2717
      %vm2720 = vcmp.lt.s32.totalorder %v2595, 0
      %v2721 = vsub.s32 0, %v2595
      %v2722 = vsel %vm2720, %v2721, %v2595
      %v2723 = vand.u32 %v2722, 65535
      %v2724 = vshrl.u32 %v2722, 16
      %v2726 = vmul.u32 %v2723, 14564
      %v2727 = vmul.u32 %v2723, 58254
      %v2728 = vmul.u32 %v2724, 14564
      %v2729 = vmul.u32 %v2724, 58254
      %v2730 = vshll.u32 %v2727, 16
      %v2731 = vshrl.u32 %v2727, 16
      %v2732 = vshll.u32 %v2728, 16
      %v2733 = vshrl.u32 %v2728, 16
      %vm2734 = vc.u32 %v2726, %v2730
      %v2735 = vsel %vm2734, 1, 0
      %v2736 = vadd.s32 %v2726, %v2730
      %v2737 = vadd.s32 %v2729, %v2735
      %vm2738 = vc.u32 %v2736, %v2732
      %v2739 = vsel %vm2738, 1, 0
      %v2740 = vadd.s32 %v2736, %v2732
      %v2741 = vadd.s32 %v2737, %v2739
      %v2742 = vadd.s32 %v2741, %v2731
      %v2743 = vadd.s32 %v2742, %v2733
      %v2744 = vshrl.u32 %v2743, 4
      %v2745 = vmul.u32 %v2744, 18
      %v2746 = vsub.s32 %v2722, %v2745
      %v2747 = vsub.s32 0, %v2746
      %v2748 = vsel %vm2720, %v2747, %v2746
      %vm2749 = vcmp.lt.s32.totalorder %v2596, 0
      %v2750 = vsub.s32 0, %v2596
      %v2751 = vsel %vm2749, %v2750, %v2596
      %v2752 = vand.u32 %v2751, 65535
      %v2753 = vshrl.u32 %v2751, 16
      %v2755 = vmul.u32 %v2752, 14564
      %v2756 = vmul.u32 %v2752, 58254
      %v2757 = vmul.u32 %v2753, 14564
      %v2758 = vmul.u32 %v2753, 58254
      %v2759 = vshll.u32 %v2756, 16
      %v2760 = vshrl.u32 %v2756, 16
      %v2761 = vshll.u32 %v2757, 16
      %v2762 = vshrl.u32 %v2757, 16
      %vm2763 = vc.u32 %v2755, %v2759
      %v2764 = vsel %vm2763, 1, 0
      %v2765 = vadd.s32 %v2755, %v2759
      %v2766 = vadd.s32 %v2758, %v2764
      %vm2767 = vc.u32 %v2765, %v2761
      %v2768 = vsel %vm2767, 1, 0
      %v2769 = vadd.s32 %v2765, %v2761
      %v2770 = vadd.s32 %v2766, %v2768
      %v2771 = vadd.s32 %v2770, %v2760
      %v2772 = vadd.s32 %v2771, %v2762
      %v2773 = vshrl.u32 %v2772, 4
      %v2774 = vmul.u32 %v2773, 18
      %v2775 = vsub.s32 %v2751, %v2774
      %v2776 = vsub.s32 0, %v2775
      %v2777 = vsel %vm2749, %v2776, %v2775
      %vm2778 = vcmp.lt.s32.totalorder %v2597, 0
      %v2779 = vsub.s32 0, %v2597
      %v2780 = vsel %vm2778, %v2779, %v2597
      %v2781 = vand.u32 %v2780, 65535
      %v2782 = vshrl.u32 %v2780, 16
      %v2784 = vmul.u32 %v2781, 14564
      %v2785 = vmul.u32 %v2781, 58254
      %v2786 = vmul.u32 %v2782, 14564
      %v2787 = vmul.u32 %v2782, 58254
      %v2788 = vshll.u32 %v2785, 16
      %v2789 = vshrl.u32 %v2785, 16
      %v2790 = vshll.u32 %v2786, 16
      %v2791 = vshrl.u32 %v2786, 16
      %vm2792 = vc.u32 %v2784, %v2788
      %v2793 = vsel %vm2792, 1, 0
      %v2794 = vadd.s32 %v2784, %v2788
      %v2795 = vadd.s32 %v2787, %v2793
      %vm2796 = vc.u32 %v2794, %v2790
      %v2797 = vsel %vm2796, 1, 0
      %v2798 = vadd.s32 %v2794, %v2790
      %v2799 = vadd.s32 %v2795, %v2797
      %v2800 = vadd.s32 %v2799, %v2789
      %v2801 = vadd.s32 %v2800, %v2791
      %v2802 = vshrl.u32 %v2801, 4
      %v2803 = vmul.u32 %v2802, 18
      %v2804 = vsub.s32 %v2780, %v2803
      %v2805 = vsub.s32 0, %v2804
      %v2806 = vsel %vm2778, %v2805, %v2804
      %vm2807 = vcmp.lt.s32.totalorder %v2598, 0
      %v2808 = vsub.s32 0, %v2598
      %v2809 = vsel %vm2807, %v2808, %v2598
      %v2810 = vand.u32 %v2809, 65535
      %v2811 = vshrl.u32 %v2809, 16
      %v2813 = vmul.u32 %v2810, 14564
      %v2814 = vmul.u32 %v2810, 58254
      %v2815 = vmul.u32 %v2811, 14564
      %v2816 = vmul.u32 %v2811, 58254
      %v2817 = vshll.u32 %v2814, 16
      %v2818 = vshrl.u32 %v2814, 16
      %v2819 = vshll.u32 %v2815, 16
      %v2820 = vshrl.u32 %v2815, 16
      %vm2821 = vc.u32 %v2813, %v2817
      %v2822 = vsel %vm2821, 1, 0
      %v2823 = vadd.s32 %v2813, %v2817
      %v2824 = vadd.s32 %v2816, %v2822
      %vm2825 = vc.u32 %v2823, %v2819
      %v2826 = vsel %vm2825, 1, 0
      %v2827 = vadd.s32 %v2823, %v2819
      %v2828 = vadd.s32 %v2824, %v2826
      %v2829 = vadd.s32 %v2828, %v2818
      %v2830 = vadd.s32 %v2829, %v2820
      %v2831 = vshrl.u32 %v2830, 4
      %v2832 = vmul.u32 %v2831, 18
      %v2833 = vsub.s32 %v2809, %v2832
      %v2834 = vsub.s32 0, %v2833
      %v2835 = vsel %vm2807, %v2834, %v2833
      %vm2836 = vcmp.lt.s32.totalorder %v2599, 0
      %v2837 = vsub.s32 0, %v2599
      %v2838 = vsel %vm2836, %v2837, %v2599
      %v2839 = vand.u32 %v2838, 65535
      %v2840 = vshrl.u32 %v2838, 16
      %v2842 = vmul.u32 %v2839, 14564
      %v2843 = vmul.u32 %v2839, 58254
      %v2844 = vmul.u32 %v2840, 14564
      %v2845 = vmul.u32 %v2840, 58254
      %v2846 = vshll.u32 %v2843, 16
      %v2847 = vshrl.u32 %v2843, 16
      %v2848 = vshll.u32 %v2844, 16
      %v2849 = vshrl.u32 %v2844, 16
      %vm2850 = vc.u32 %v2842, %v2846
      %v2851 = vsel %vm2850, 1, 0
      %v2852 = vadd.s32 %v2842, %v2846
      %v2853 = vadd.s32 %v2845, %v2851
      %vm2854 = vc.u32 %v2852, %v2848
      %v2855 = vsel %vm2854, 1, 0
      %v2856 = vadd.s32 %v2852, %v2848
      %v2857 = vadd.s32 %v2853, %v2855
      %v2858 = vadd.s32 %v2857, %v2847
      %v2859 = vadd.s32 %v2858, %v2849
      %v2860 = vshrl.u32 %v2859, 4
      %v2861 = vmul.u32 %v2860, 18
      %v2862 = vsub.s32 %v2838, %v2861
      %v2863 = vsub.s32 0, %v2862
      %v2864 = vsel %vm2836, %v2863, %v2862
      %vm2865 = vcmp.lt.s32.totalorder %v2600, 0
      %v2866 = vsub.s32 0, %v2600
      %v2867 = vsel %vm2865, %v2866, %v2600
      %v2868 = vand.u32 %v2867, 65535
      %v2869 = vshrl.u32 %v2867, 16
      %v2871 = vmul.u32 %v2868, 14564
      %v2872 = vmul.u32 %v2868, 58254
      %v2873 = vmul.u32 %v2869, 14564
      %v2874 = vmul.u32 %v2869, 58254
      %v2875 = vshll.u32 %v2872, 16
      %v2876 = vshrl.u32 %v2872, 16
      %v2877 = vshll.u32 %v2873, 16
      %v2878 = vshrl.u32 %v2873, 16
      %vm2879 = vc.u32 %v2871, %v2875
      %v2880 = vsel %vm2879, 1, 0
      %v2881 = vadd.s32 %v2871, %v2875
      %v2882 = vadd.s32 %v2874, %v2880
      %vm2883 = vc.u32 %v2881, %v2877
      %v2884 = vsel %vm2883, 1, 0
      %v2885 = vadd.s32 %v2881, %v2877
      %v2886 = vadd.s32 %v2882, %v2884
      %v2887 = vadd.s32 %v2886, %v2876
      %v2888 = vadd.s32 %v2887, %v2878
      %v2889 = vshrl.u32 %v2888, 4
      %v2890 = vmul.u32 %v2889, 18
      %v2891 = vsub.s32 %v2867, %v2890
      %v2892 = vsub.s32 0, %v2891
      %v2893 = vsel %vm2865, %v2892, %v2891
      %vm2894 = vcmp.lt.s32.totalorder %v2601, 0
      %v2895 = vsub.s32 0, %v2601
      %v2896 = vsel %vm2894, %v2895, %v2601
      %v2897 = vand.u32 %v2896, 65535
      %v2898 = vshrl.u32 %v2896, 16
      %v2900 = vmul.u32 %v2897, 14564
      %v2901 = vmul.u32 %v2897, 58254
      %v2902 = vmul.u32 %v2898, 14564
      %v2903 = vmul.u32 %v2898, 58254
      %v2904 = vshll.u32 %v2901, 16
      %v2905 = vshrl.u32 %v2901, 16
      %v2906 = vshll.u32 %v2902, 16
      %v2907 = vshrl.u32 %v2902, 16
      %vm2908 = vc.u32 %v2900, %v2904
      %v2909 = vsel %vm2908, 1, 0
      %v2910 = vadd.s32 %v2900, %v2904
      %v2911 = vadd.s32 %v2903, %v2909
      %vm2912 = vc.u32 %v2910, %v2906
      %v2913 = vsel %vm2912, 1, 0
      %v2914 = vadd.s32 %v2910, %v2906
      %v2915 = vadd.s32 %v2911, %v2913
      %v2916 = vadd.s32 %v2915, %v2905
      %v2917 = vadd.s32 %v2916, %v2907
      %v2918 = vshrl.u32 %v2917, 4
      %v2919 = vmul.u32 %v2918, 18
      %v2920 = vsub.s32 %v2896, %v2919
      %v2921 = vsub.s32 0, %v2920
      %v2922 = vsel %vm2894, %v2921, %v2920
      %vm2923 = vcmp.lt.s32.totalorder %v2602, 0
      %v2924 = vsub.s32 0, %v2602
      %v2925 = vsel %vm2923, %v2924, %v2602
      %v2926 = vand.u32 %v2925, 65535
      %v2927 = vshrl.u32 %v2925, 16
      %v2929 = vmul.u32 %v2926, 14564
      %v2930 = vmul.u32 %v2926, 58254
      %v2931 = vmul.u32 %v2927, 14564
      %v2932 = vmul.u32 %v2927, 58254
      %v2933 = vshll.u32 %v2930, 16
      %v2934 = vshrl.u32 %v2930, 16
      %v2935 = vshll.u32 %v2931, 16
      %v2936 = vshrl.u32 %v2931, 16
      %vm2937 = vc.u32 %v2929, %v2933
      %v2938 = vsel %vm2937, 1, 0
      %v2939 = vadd.s32 %v2929, %v2933
      %v2940 = vadd.s32 %v2932, %v2938
      %vm2941 = vc.u32 %v2939, %v2935
      %v2942 = vsel %vm2941, 1, 0
      %v2943 = vadd.s32 %v2939, %v2935
      %v2944 = vadd.s32 %v2940, %v2942
      %v2945 = vadd.s32 %v2944, %v2934
      %v2946 = vadd.s32 %v2945, %v2936
      %v2947 = vshrl.u32 %v2946, 4
      %v2948 = vmul.u32 %v2947, 18
      %v2949 = vsub.s32 %v2925, %v2948
      %v2950 = vsub.s32 0, %v2949
      %v2951 = vsel %vm2923, %v2950, %v2949
      %vm2952 = vcmp.lt.s32.totalorder %v2603, 0
      %v2953 = vsub.s32 0, %v2603
      %v2954 = vsel %vm2952, %v2953, %v2603
      %v2955 = vand.u32 %v2954, 65535
      %v2956 = vshrl.u32 %v2954, 16
      %v2958 = vmul.u32 %v2955, 14564
      %v2959 = vmul.u32 %v2955, 58254
      %v2960 = vmul.u32 %v2956, 14564
      %v2961 = vmul.u32 %v2956, 58254
      %v2962 = vshll.u32 %v2959, 16
      %v2963 = vshrl.u32 %v2959, 16
      %v2964 = vshll.u32 %v2960, 16
      %v2965 = vshrl.u32 %v2960, 16
      %vm2966 = vc.u32 %v2958, %v2962
      %v2967 = vsel %vm2966, 1, 0
      %v2968 = vadd.s32 %v2958, %v2962
      %v2969 = vadd.s32 %v2961, %v2967
      %vm2970 = vc.u32 %v2968, %v2964
      %v2971 = vsel %vm2970, 1, 0
      %v2972 = vadd.s32 %v2968, %v2964
      %v2973 = vadd.s32 %v2969, %v2971
      %v2974 = vadd.s32 %v2973, %v2963
      %v2975 = vadd.s32 %v2974, %v2965
      %v2976 = vshrl.u32 %v2975, 4
      %v2977 = vmul.u32 %v2976, 18
      %v2978 = vsub.s32 %v2954, %v2977
      %v2979 = vsub.s32 0, %v2978
      %v2980 = vsel %vm2952, %v2979, %v2978
      %vm2981 = vcmp.lt.s32.totalorder %v2604, 0
      %v2982 = vsub.s32 0, %v2604
      %v2983 = vsel %vm2981, %v2982, %v2604
      %v2984 = vand.u32 %v2983, 65535
      %v2985 = vshrl.u32 %v2983, 16
      %v2987 = vmul.u32 %v2984, 14564
      %v2988 = vmul.u32 %v2984, 58254
      %v2989 = vmul.u32 %v2985, 14564
      %v2990 = vmul.u32 %v2985, 58254
      %v2991 = vshll.u32 %v2988, 16
      %v2992 = vshrl.u32 %v2988, 16
      %v2993 = vshll.u32 %v2989, 16
      %v2994 = vshrl.u32 %v2989, 16
      %vm2995 = vc.u32 %v2987, %v2991
      %v2996 = vsel %vm2995, 1, 0
      %v2997 = vadd.s32 %v2987, %v2991
      %v2998 = vadd.s32 %v2990, %v2996
      %vm2999 = vc.u32 %v2997, %v2993
      %v3000 = vsel %vm2999, 1, 0
      %v3001 = vadd.s32 %v2997, %v2993
      %v3002 = vadd.s32 %v2998, %v3000
      %v3003 = vadd.s32 %v3002, %v2992
      %v3004 = vadd.s32 %v3003, %v2994
      %v3005 = vshrl.u32 %v3004, 4
      %v3006 = vmul.u32 %v3005, 18
      %v3007 = vsub.s32 %v2983, %v3006
      %v3008 = vsub.s32 0, %v3007
      %v3009 = vsel %vm2981, %v3008, %v3007
      %vm3010 = vcmp.lt.s32.totalorder %v2605, 0
      %v3011 = vsub.s32 0, %v2605
      %v3012 = vsel %vm3010, %v3011, %v2605
      %v3013 = vand.u32 %v3012, 65535
      %v3014 = vshrl.u32 %v3012, 16
      %v3016 = vmul.u32 %v3013, 14564
      %v3017 = vmul.u32 %v3013, 58254
      %v3018 = vmul.u32 %v3014, 14564
      %v3019 = vmul.u32 %v3014, 58254
      %v3020 = vshll.u32 %v3017, 16
      %v3021 = vshrl.u32 %v3017, 16
      %v3022 = vshll.u32 %v3018, 16
      %v3023 = vshrl.u32 %v3018, 16
      %vm3024 = vc.u32 %v3016, %v3020
      %v3025 = vsel %vm3024, 1, 0
      %v3026 = vadd.s32 %v3016, %v3020
      %v3027 = vadd.s32 %v3019, %v3025
      %vm3028 = vc.u32 %v3026, %v3022
      %v3029 = vsel %vm3028, 1, 0
      %v3030 = vadd.s32 %v3026, %v3022
      %v3031 = vadd.s32 %v3027, %v3029
      %v3032 = vadd.s32 %v3031, %v3021
      %v3033 = vadd.s32 %v3032, %v3023
      %v3034 = vshrl.u32 %v3033, 4
      %v3035 = vmul.u32 %v3034, 18
      %v3036 = vsub.s32 %v3012, %v3035
      %v3037 = vsub.s32 0, %v3036
      %v3038 = vsel %vm3010, %v3037, %v3036
      %vm3039 = vcmp.lt.s32.totalorder %v2606, 0
      %v3040 = vsub.s32 0, %v2606
      %v3041 = vsel %vm3039, %v3040, %v2606
      %v3042 = vand.u32 %v3041, 65535
      %v3043 = vshrl.u32 %v3041, 16
      %v3045 = vmul.u32 %v3042, 14564
      %v3046 = vmul.u32 %v3042, 58254
      %v3047 = vmul.u32 %v3043, 14564
      %v3048 = vmul.u32 %v3043, 58254
      %v3049 = vshll.u32 %v3046, 16
      %v3050 = vshrl.u32 %v3046, 16
      %v3051 = vshll.u32 %v3047, 16
      %v3052 = vshrl.u32 %v3047, 16
      %vm3053 = vc.u32 %v3045, %v3049
      %v3054 = vsel %vm3053, 1, 0
      %v3055 = vadd.s32 %v3045, %v3049
      %v3056 = vadd.s32 %v3048, %v3054
      %vm3057 = vc.u32 %v3055, %v3051
      %v3058 = vsel %vm3057, 1, 0
      %v3059 = vadd.s32 %v3055, %v3051
      %v3060 = vadd.s32 %v3056, %v3058
      %v3061 = vadd.s32 %v3060, %v3050
      %v3062 = vadd.s32 %v3061, %v3052
      %v3063 = vshrl.u32 %v3062, 4
      %v3064 = vmul.u32 %v3063, 18
      %v3065 = vsub.s32 %v3041, %v3064
      %v3066 = vsub.s32 0, %v3065
      %v3067 = vsel %vm3039, %v3066, %v3065
      %vm3068 = vcmp.lt.s32.totalorder %v2607, 0
      %v3069 = vsub.s32 0, %v2607
      %v3070 = vsel %vm3068, %v3069, %v2607
      %v3071 = vand.u32 %v3070, 65535
      %v3072 = vshrl.u32 %v3070, 16
      %v3074 = vmul.u32 %v3071, 14564
      %v3075 = vmul.u32 %v3071, 58254
      %v3076 = vmul.u32 %v3072, 14564
      %v3077 = vmul.u32 %v3072, 58254
      %v3078 = vshll.u32 %v3075, 16
      %v3079 = vshrl.u32 %v3075, 16
      %v3080 = vshll.u32 %v3076, 16
      %v3081 = vshrl.u32 %v3076, 16
      %vm3082 = vc.u32 %v3074, %v3078
      %v3083 = vsel %vm3082, 1, 0
      %v3084 = vadd.s32 %v3074, %v3078
      %v3085 = vadd.s32 %v3077, %v3083
      %vm3086 = vc.u32 %v3084, %v3080
      %v3087 = vsel %vm3086, 1, 0
      %v3088 = vadd.s32 %v3084, %v3080
      %v3089 = vadd.s32 %v3085, %v3087
      %v3090 = vadd.s32 %v3089, %v3079
      %v3091 = vadd.s32 %v3090, %v3081
      %v3092 = vshrl.u32 %v3091, 4
      %v3093 = vmul.u32 %v3092, 18
      %v3094 = vsub.s32 %v3070, %v3093
      %v3095 = vsub.s32 0, %v3094
      %v3096 = vsel %vm3068, %v3095, %v3094
      %vm3097 = vcmp.lt.s32.totalorder %v2608, 0
      %v3098 = vsub.s32 0, %v2608
      %v3099 = vsel %vm3097, %v3098, %v2608
      %v3100 = vand.u32 %v3099, 65535
      %v3101 = vshrl.u32 %v3099, 16
      %v3103 = vmul.u32 %v3100, 14564
      %v3104 = vmul.u32 %v3100, 58254
      %v3105 = vmul.u32 %v3101, 14564
      %v3106 = vmul.u32 %v3101, 58254
      %v3107 = vshll.u32 %v3104, 16
      %v3108 = vshrl.u32 %v3104, 16
      %v3109 = vshll.u32 %v3105, 16
      %v3110 = vshrl.u32 %v3105, 16
      %vm3111 = vc.u32 %v3103, %v3107
      %v3112 = vsel %vm3111, 1, 0
      %v3113 = vadd.s32 %v3103, %v3107
      %v3114 = vadd.s32 %v3106, %v3112
      %vm3115 = vc.u32 %v3113, %v3109
      %v3116 = vsel %vm3115, 1, 0
      %v3117 = vadd.s32 %v3113, %v3109
      %v3118 = vadd.s32 %v3114, %v3116
      %v3119 = vadd.s32 %v3118, %v3108
      %v3120 = vadd.s32 %v3119, %v3110
      %v3121 = vshrl.u32 %v3120, 4
      %v3122 = vmul.u32 %v3121, 18
      %v3123 = vsub.s32 %v3099, %v3122
      %v3124 = vsub.s32 0, %v3123
      %v3125 = vsel %vm3097, %v3124, %v3123
      %vm3126 = vcmp.lt.s32.totalorder %v2609, 0
      %v3127 = vsub.s32 0, %v2609
      %v3128 = vsel %vm3126, %v3127, %v2609
      %v3129 = vand.u32 %v3128, 65535
      %v3130 = vshrl.u32 %v3128, 16
      %v3132 = vmul.u32 %v3129, 14564
      %v3133 = vmul.u32 %v3129, 58254
      %v3134 = vmul.u32 %v3130, 14564
      %v3135 = vmul.u32 %v3130, 58254
      %v3136 = vshll.u32 %v3133, 16
      %v3137 = vshrl.u32 %v3133, 16
      %v3138 = vshll.u32 %v3134, 16
      %v3139 = vshrl.u32 %v3134, 16
      %vm3140 = vc.u32 %v3132, %v3136
      %v3141 = vsel %vm3140, 1, 0
      %v3142 = vadd.s32 %v3132, %v3136
      %v3143 = vadd.s32 %v3135, %v3141
      %vm3144 = vc.u32 %v3142, %v3138
      %v3145 = vsel %vm3144, 1, 0
      %v3146 = vadd.s32 %v3142, %v3138
      %v3147 = vadd.s32 %v3143, %v3145
      %v3148 = vadd.s32 %v3147, %v3137
      %v3149 = vadd.s32 %v3148, %v3139
      %v3150 = vshrl.u32 %v3149, 4
      %v3151 = vmul.u32 %v3150, 18
      %v3152 = vsub.s32 %v3128, %v3151
      %v3153 = vsub.s32 0, %v3152
      %v3154 = vsel %vm3126, %v3153, %v3152
      %vm3155 = vcmp.lt.s32.totalorder %v2610, 0
      %v3156 = vsub.s32 0, %v2610
      %v3157 = vsel %vm3155, %v3156, %v2610
      %v3158 = vand.u32 %v3157, 65535
      %v3159 = vshrl.u32 %v3157, 16
      %v3161 = vmul.u32 %v3158, 14564
      %v3162 = vmul.u32 %v3158, 58254
      %v3163 = vmul.u32 %v3159, 14564
      %v3164 = vmul.u32 %v3159, 58254
      %v3165 = vshll.u32 %v3162, 16
      %v3166 = vshrl.u32 %v3162, 16
      %v3167 = vshll.u32 %v3163, 16
      %v3168 = vshrl.u32 %v3163, 16
      %vm3169 = vc.u32 %v3161, %v3165
      %v3170 = vsel %vm3169, 1, 0
      %v3171 = vadd.s32 %v3161, %v3165
      %v3172 = vadd.s32 %v3164, %v3170
      %vm3173 = vc.u32 %v3171, %v3167
      %v3174 = vsel %vm3173, 1, 0
      %v3175 = vadd.s32 %v3171, %v3167
      %v3176 = vadd.s32 %v3172, %v3174
      %v3177 = vadd.s32 %v3176, %v3166
      %v3178 = vadd.s32 %v3177, %v3168
      %v3179 = vshrl.u32 %v3178, 4
      %v3180 = vmul.u32 %v3179, 18
      %v3181 = vsub.s32 %v3157, %v3180
      %v3182 = vsub.s32 0, %v3181
      %v3183 = vsel %vm3155, %v3182, %v3181
      %vm3184 = vcmp.lt.s32.totalorder %v2611, 0
      %v3185 = vsub.s32 0, %v2611
      %v3186 = vsel %vm3184, %v3185, %v2611
      %v3187 = vand.u32 %v3186, 65535
      %v3188 = vshrl.u32 %v3186, 16
      %v3190 = vmul.u32 %v3187, 14564
      %v3191 = vmul.u32 %v3187, 58254
      %v3192 = vmul.u32 %v3188, 14564
      %v3193 = vmul.u32 %v3188, 58254
      %v3194 = vshll.u32 %v3191, 16
      %v3195 = vshrl.u32 %v3191, 16
      %v3196 = vshll.u32 %v3192, 16
      %v3197 = vshrl.u32 %v3192, 16
      %vm3198 = vc.u32 %v3190, %v3194
      %v3199 = vsel %vm3198, 1, 0
      %v3200 = vadd.s32 %v3190, %v3194
      %v3201 = vadd.s32 %v3193, %v3199
      %vm3202 = vc.u32 %v3200, %v3196
      %v3203 = vsel %vm3202, 1, 0
      %v3204 = vadd.s32 %v3200, %v3196
      %v3205 = vadd.s32 %v3201, %v3203
      %v3206 = vadd.s32 %v3205, %v3195
      %v3207 = vadd.s32 %v3206, %v3197
      %v3208 = vshrl.u32 %v3207, 4
      %v3209 = vmul.u32 %v3208, 18
      %v3210 = vsub.s32 %v3186, %v3209
      %v3211 = vsub.s32 0, %v3210
      %v3212 = vsel %vm3184, %v3211, %v3210
      %vm3213 = vcmp.lt.s32.totalorder %v2612, 0
      %v3214 = vsub.s32 0, %v2612
      %v3215 = vsel %vm3213, %v3214, %v2612
      %v3216 = vand.u32 %v3215, 65535
      %v3217 = vshrl.u32 %v3215, 16
      %v3219 = vmul.u32 %v3216, 14564
      %v3220 = vmul.u32 %v3216, 58254
      %v3221 = vmul.u32 %v3217, 14564
      %v3222 = vmul.u32 %v3217, 58254
      %v3223 = vshll.u32 %v3220, 16
      %v3224 = vshrl.u32 %v3220, 16
      %v3225 = vshll.u32 %v3221, 16
      %v3226 = vshrl.u32 %v3221, 16
      %vm3227 = vc.u32 %v3219, %v3223
      %v3228 = vsel %vm3227, 1, 0
      %v3229 = vadd.s32 %v3219, %v3223
      %v3230 = vadd.s32 %v3222, %v3228
      %vm3231 = vc.u32 %v3229, %v3225
      %v3232 = vsel %vm3231, 1, 0
      %v3233 = vadd.s32 %v3229, %v3225
      %v3234 = vadd.s32 %v3230, %v3232
      %v3235 = vadd.s32 %v3234, %v3224
      %v3236 = vadd.s32 %v3235, %v3226
      %v3237 = vshrl.u32 %v3236, 4
      %v3238 = vmul.u32 %v3237, 18
      %v3239 = vsub.s32 %v3215, %v3238
      %v3240 = vsub.s32 0, %v3239
      %v3241 = vsel %vm3213, %v3240, %v3239
      %vm3242 = vcmp.lt.s32.totalorder %v2613, 0
      %v3243 = vsub.s32 0, %v2613
      %v3244 = vsel %vm3242, %v3243, %v2613
      %v3245 = vand.u32 %v3244, 65535
      %v3246 = vshrl.u32 %v3244, 16
      %v3248 = vmul.u32 %v3245, 14564
      %v3249 = vmul.u32 %v3245, 58254
      %v3250 = vmul.u32 %v3246, 14564
      %v3251 = vmul.u32 %v3246, 58254
      %v3252 = vshll.u32 %v3249, 16
      %v3253 = vshrl.u32 %v3249, 16
      %v3254 = vshll.u32 %v3250, 16
      %v3255 = vshrl.u32 %v3250, 16
      %vm3256 = vc.u32 %v3248, %v3252
      %v3257 = vsel %vm3256, 1, 0
      %v3258 = vadd.s32 %v3248, %v3252
      %v3259 = vadd.s32 %v3251, %v3257
      %vm3260 = vc.u32 %v3258, %v3254
      %v3261 = vsel %vm3260, 1, 0
      %v3262 = vadd.s32 %v3258, %v3254
      %v3263 = vadd.s32 %v3259, %v3261
      %v3264 = vadd.s32 %v3263, %v3253
      %v3265 = vadd.s32 %v3264, %v3255
      %v3266 = vshrl.u32 %v3265, 4
      %v3267 = vmul.u32 %v3266, 18
      %v3268 = vsub.s32 %v3244, %v3267
      %v3269 = vsub.s32 0, %v3268
      %v3270 = vsel %vm3242, %v3269, %v3268
      %vm3271 = vcmp.lt.s32.totalorder %v2614, 0
      %v3272 = vsub.s32 0, %v2614
      %v3273 = vsel %vm3271, %v3272, %v2614
      %v3274 = vand.u32 %v3273, 65535
      %v3275 = vshrl.u32 %v3273, 16
      %v3277 = vmul.u32 %v3274, 14564
      %v3278 = vmul.u32 %v3274, 58254
      %v3279 = vmul.u32 %v3275, 14564
      %v3280 = vmul.u32 %v3275, 58254
      %v3281 = vshll.u32 %v3278, 16
      %v3282 = vshrl.u32 %v3278, 16
      %v3283 = vshll.u32 %v3279, 16
      %v3284 = vshrl.u32 %v3279, 16
      %vm3285 = vc.u32 %v3277, %v3281
      %v3286 = vsel %vm3285, 1, 0
      %v3287 = vadd.s32 %v3277, %v3281
      %v3288 = vadd.s32 %v3280, %v3286
      %vm3289 = vc.u32 %v3287, %v3283
      %v3290 = vsel %vm3289, 1, 0
      %v3291 = vadd.s32 %v3287, %v3283
      %v3292 = vadd.s32 %v3288, %v3290
      %v3293 = vadd.s32 %v3292, %v3282
      %v3294 = vadd.s32 %v3293, %v3284
      %v3295 = vshrl.u32 %v3294, 4
      %v3296 = vmul.u32 %v3295, 18
      %v3297 = vsub.s32 %v3273, %v3296
      %v3298 = vsub.s32 0, %v3297
      %v3299 = vsel %vm3271, %v3298, %v3297
      %vm3300 = vcmp.lt.s32.totalorder %v2615, 0
      %v3301 = vsub.s32 0, %v2615
      %v3302 = vsel %vm3300, %v3301, %v2615
      %v3303 = vand.u32 %v3302, 65535
      %v3304 = vshrl.u32 %v3302, 16
      %v3306 = vmul.u32 %v3303, 14564
      %v3307 = vmul.u32 %v3303, 58254
      %v3308 = vmul.u32 %v3304, 14564
      %v3309 = vmul.u32 %v3304, 58254
      %v3310 = vshll.u32 %v3307, 16
      %v3311 = vshrl.u32 %v3307, 16
      %v3312 = vshll.u32 %v3308, 16
      %v3313 = vshrl.u32 %v3308, 16
      %vm3314 = vc.u32 %v3306, %v3310
      %v3315 = vsel %vm3314, 1, 0
      %v3316 = vadd.s32 %v3306, %v3310
      %v3317 = vadd.s32 %v3309, %v3315
      %vm3318 = vc.u32 %v3316, %v3312
      %v3319 = vsel %vm3318, 1, 0
      %v3320 = vadd.s32 %v3316, %v3312
      %v3321 = vadd.s32 %v3317, %v3319
      %v3322 = vadd.s32 %v3321, %v3311
      %v3323 = vadd.s32 %v3322, %v3313
      %v3324 = vshrl.u32 %v3323, 4
      %v3325 = vmul.u32 %v3324, 18
      %v3326 = vsub.s32 %v3302, %v3325
      %v3327 = vsub.s32 0, %v3326
      %v3328 = vsel %vm3300, %v3327, %v3326
      %vm3329 = vcmp.lt.s32.totalorder %v2616, 0
      %v3330 = vsub.s32 0, %v2616
      %v3331 = vsel %vm3329, %v3330, %v2616
      %v3332 = vand.u32 %v3331, 65535
      %v3333 = vshrl.u32 %v3331, 16
      %v3335 = vmul.u32 %v3332, 14564
      %v3336 = vmul.u32 %v3332, 58254
      %v3337 = vmul.u32 %v3333, 14564
      %v3338 = vmul.u32 %v3333, 58254
      %v3339 = vshll.u32 %v3336, 16
      %v3340 = vshrl.u32 %v3336, 16
      %v3341 = vshll.u32 %v3337, 16
      %v3342 = vshrl.u32 %v3337, 16
      %vm3343 = vc.u32 %v3335, %v3339
      %v3344 = vsel %vm3343, 1, 0
      %v3345 = vadd.s32 %v3335, %v3339
      %v3346 = vadd.s32 %v3338, %v3344
      %vm3347 = vc.u32 %v3345, %v3341
      %v3348 = vsel %vm3347, 1, 0
      %v3349 = vadd.s32 %v3345, %v3341
      %v3350 = vadd.s32 %v3346, %v3348
      %v3351 = vadd.s32 %v3350, %v3340
      %v3352 = vadd.s32 %v3351, %v3342
      %v3353 = vshrl.u32 %v3352, 4
      %v3354 = vmul.u32 %v3353, 18
      %v3355 = vsub.s32 %v3331, %v3354
      %v3356 = vsub.s32 0, %v3355
      %v3357 = vsel %vm3329, %v3356, %v3355
      %vm3358 = vcmp.lt.s32.totalorder %v2617, 0
      %v3359 = vsub.s32 0, %v2617
      %v3360 = vsel %vm3358, %v3359, %v2617
      %v3361 = vand.u32 %v3360, 65535
      %v3362 = vshrl.u32 %v3360, 16
      %v3364 = vmul.u32 %v3361, 14564
      %v3365 = vmul.u32 %v3361, 58254
      %v3366 = vmul.u32 %v3362, 14564
      %v3367 = vmul.u32 %v3362, 58254
      %v3368 = vshll.u32 %v3365, 16
      %v3369 = vshrl.u32 %v3365, 16
      %v3370 = vshll.u32 %v3366, 16
      %v3371 = vshrl.u32 %v3366, 16
      %vm3372 = vc.u32 %v3364, %v3368
      %v3373 = vsel %vm3372, 1, 0
      %v3374 = vadd.s32 %v3364, %v3368
      %v3375 = vadd.s32 %v3367, %v3373
      %vm3376 = vc.u32 %v3374, %v3370
      %v3377 = vsel %vm3376, 1, 0
      %v3378 = vadd.s32 %v3374, %v3370
      %v3379 = vadd.s32 %v3375, %v3377
      %v3380 = vadd.s32 %v3379, %v3369
      %v3381 = vadd.s32 %v3380, %v3371
      %v3382 = vshrl.u32 %v3381, 4
      %v3383 = vmul.u32 %v3382, 18
      %v3384 = vsub.s32 %v3360, %v3383
      %v3385 = vsub.s32 0, %v3384
      %v3386 = vsel %vm3358, %v3385, %v3384
      %vm3387 = vcmp.lt.s32.totalorder %v2618, 0
      %v3388 = vsub.s32 0, %v2618
      %v3389 = vsel %vm3387, %v3388, %v2618
      %v3390 = vand.u32 %v3389, 65535
      %v3391 = vshrl.u32 %v3389, 16
      %v3393 = vmul.u32 %v3390, 14564
      %v3394 = vmul.u32 %v3390, 58254
      %v3395 = vmul.u32 %v3391, 14564
      %v3396 = vmul.u32 %v3391, 58254
      %v3397 = vshll.u32 %v3394, 16
      %v3398 = vshrl.u32 %v3394, 16
      %v3399 = vshll.u32 %v3395, 16
      %v3400 = vshrl.u32 %v3395, 16
      %vm3401 = vc.u32 %v3393, %v3397
      %v3402 = vsel %vm3401, 1, 0
      %v3403 = vadd.s32 %v3393, %v3397
      %v3404 = vadd.s32 %v3396, %v3402
      %vm3405 = vc.u32 %v3403, %v3399
      %v3406 = vsel %vm3405, 1, 0
      %v3407 = vadd.s32 %v3403, %v3399
      %v3408 = vadd.s32 %v3404, %v3406
      %v3409 = vadd.s32 %v3408, %v3398
      %v3410 = vadd.s32 %v3409, %v3400
      %v3411 = vshrl.u32 %v3410, 4
      %v3412 = vmul.u32 %v3411, 18
      %v3413 = vsub.s32 %v3389, %v3412
      %v3414 = vsub.s32 0, %v3413
      %v3415 = vsel %vm3387, %v3414, %v3413
      %vm3416 = vcmp.lt.s32.totalorder %v2619, 0
      %v3417 = vsub.s32 0, %v2619
      %v3418 = vsel %vm3416, %v3417, %v2619
      %v3419 = vand.u32 %v3418, 65535
      %v3420 = vshrl.u32 %v3418, 16
      %v3422 = vmul.u32 %v3419, 14564
      %v3423 = vmul.u32 %v3419, 58254
      %v3424 = vmul.u32 %v3420, 14564
      %v3425 = vmul.u32 %v3420, 58254
      %v3426 = vshll.u32 %v3423, 16
      %v3427 = vshrl.u32 %v3423, 16
      %v3428 = vshll.u32 %v3424, 16
      %v3429 = vshrl.u32 %v3424, 16
      %vm3430 = vc.u32 %v3422, %v3426
      %v3431 = vsel %vm3430, 1, 0
      %v3432 = vadd.s32 %v3422, %v3426
      %v3433 = vadd.s32 %v3425, %v3431
      %vm3434 = vc.u32 %v3432, %v3428
      %v3435 = vsel %vm3434, 1, 0
      %v3436 = vadd.s32 %v3432, %v3428
      %v3437 = vadd.s32 %v3433, %v3435
      %v3438 = vadd.s32 %v3437, %v3427
      %v3439 = vadd.s32 %v3438, %v3429
      %v3440 = vshrl.u32 %v3439, 4
      %v3441 = vmul.u32 %v3440, 18
      %v3442 = vsub.s32 %v3418, %v3441
      %v3443 = vsub.s32 0, %v3442
      %v3444 = vsel %vm3416, %v3443, %v3442
      %vm3445 = vcmp.lt.s32.totalorder %v2620, 0
      %v3446 = vsub.s32 0, %v2620
      %v3447 = vsel %vm3445, %v3446, %v2620
      %v3448 = vand.u32 %v3447, 65535
      %v3449 = vshrl.u32 %v3447, 16
      %v3451 = vmul.u32 %v3448, 14564
      %v3452 = vmul.u32 %v3448, 58254
      %v3453 = vmul.u32 %v3449, 14564
      %v3454 = vmul.u32 %v3449, 58254
      %v3455 = vshll.u32 %v3452, 16
      %v3456 = vshrl.u32 %v3452, 16
      %v3457 = vshll.u32 %v3453, 16
      %v3458 = vshrl.u32 %v3453, 16
      %vm3459 = vc.u32 %v3451, %v3455
      %v3460 = vsel %vm3459, 1, 0
      %v3461 = vadd.s32 %v3451, %v3455
      %v3462 = vadd.s32 %v3454, %v3460
      %vm3463 = vc.u32 %v3461, %v3457
      %v3464 = vsel %vm3463, 1, 0
      %v3465 = vadd.s32 %v3461, %v3457
      %v3466 = vadd.s32 %v3462, %v3464
      %v3467 = vadd.s32 %v3466, %v3456
      %v3468 = vadd.s32 %v3467, %v3458
      %v3469 = vshrl.u32 %v3468, 4
      %v3470 = vmul.u32 %v3469, 18
      %v3471 = vsub.s32 %v3447, %v3470
      %v3472 = vsub.s32 0, %v3471
      %v3473 = vsel %vm3445, %v3472, %v3471
      %vm3474 = vcmp.lt.s32.totalorder %v2621, 0
      %v3475 = vsub.s32 0, %v2621
      %v3476 = vsel %vm3474, %v3475, %v2621
      %v3477 = vand.u32 %v3476, 65535
      %v3478 = vshrl.u32 %v3476, 16
      %v3480 = vmul.u32 %v3477, 14564
      %v3481 = vmul.u32 %v3477, 58254
      %v3482 = vmul.u32 %v3478, 14564
      %v3483 = vmul.u32 %v3478, 58254
      %v3484 = vshll.u32 %v3481, 16
      %v3485 = vshrl.u32 %v3481, 16
      %v3486 = vshll.u32 %v3482, 16
      %v3487 = vshrl.u32 %v3482, 16
      %vm3488 = vc.u32 %v3480, %v3484
      %v3489 = vsel %vm3488, 1, 0
      %v3490 = vadd.s32 %v3480, %v3484
      %v3491 = vadd.s32 %v3483, %v3489
      %vm3492 = vc.u32 %v3490, %v3486
      %v3493 = vsel %vm3492, 1, 0
      %v3494 = vadd.s32 %v3490, %v3486
      %v3495 = vadd.s32 %v3491, %v3493
      %v3496 = vadd.s32 %v3495, %v3485
      %v3497 = vadd.s32 %v3496, %v3487
      %v3498 = vshrl.u32 %v3497, 4
      %v3499 = vmul.u32 %v3498, 18
      %v3500 = vsub.s32 %v3476, %v3499
      %v3501 = vsub.s32 0, %v3500
      %v3502 = vsel %vm3474, %v3501, %v3500
      %vm3503 = vcmp.lt.s32.totalorder %v2622, 0
      %v3504 = vsub.s32 0, %v2622
      %v3505 = vsel %vm3503, %v3504, %v2622
      %v3506 = vand.u32 %v3505, 65535
      %v3507 = vshrl.u32 %v3505, 16
      %v3509 = vmul.u32 %v3506, 14564
      %v3510 = vmul.u32 %v3506, 58254
      %v3511 = vmul.u32 %v3507, 14564
      %v3512 = vmul.u32 %v3507, 58254
      %v3513 = vshll.u32 %v3510, 16
      %v3514 = vshrl.u32 %v3510, 16
      %v3515 = vshll.u32 %v3511, 16
      %v3516 = vshrl.u32 %v3511, 16
      %vm3517 = vc.u32 %v3509, %v3513
      %v3518 = vsel %vm3517, 1, 0
      %v3519 = vadd.s32 %v3509, %v3513
      %v3520 = vadd.s32 %v3512, %v3518
      %vm3521 = vc.u32 %v3519, %v3515
      %v3522 = vsel %vm3521, 1, 0
      %v3523 = vadd.s32 %v3519, %v3515
      %v3524 = vadd.s32 %v3520, %v3522
      %v3525 = vadd.s32 %v3524, %v3514
      %v3526 = vadd.s32 %v3525, %v3516
      %v3527 = vshrl.u32 %v3526, 4
      %v3528 = vmul.u32 %v3527, 18
      %v3529 = vsub.s32 %v3505, %v3528
      %v3530 = vsub.s32 0, %v3529
      %v3531 = vsel %vm3503, %v3530, %v3529
      %vm3532 = vcmp.lt.s32.totalorder %v2623, 0
      %v3533 = vsub.s32 0, %v2623
      %v3534 = vsel %vm3532, %v3533, %v2623
      %v3535 = vand.u32 %v3534, 65535
      %v3536 = vshrl.u32 %v3534, 16
      %v3538 = vmul.u32 %v3535, 14564
      %v3539 = vmul.u32 %v3535, 58254
      %v3540 = vmul.u32 %v3536, 14564
      %v3541 = vmul.u32 %v3536, 58254
      %v3542 = vshll.u32 %v3539, 16
      %v3543 = vshrl.u32 %v3539, 16
      %v3544 = vshll.u32 %v3540, 16
      %v3545 = vshrl.u32 %v3540, 16
      %vm3546 = vc.u32 %v3538, %v3542
      %v3547 = vsel %vm3546, 1, 0
      %v3548 = vadd.s32 %v3538, %v3542
      %v3549 = vadd.s32 %v3541, %v3547
      %vm3550 = vc.u32 %v3548, %v3544
      %v3551 = vsel %vm3550, 1, 0
      %v3552 = vadd.s32 %v3548, %v3544
      %v3553 = vadd.s32 %v3549, %v3551
      %v3554 = vadd.s32 %v3553, %v3543
      %v3555 = vadd.s32 %v3554, %v3545
      %v3556 = vshrl.u32 %v3555, 4
      %v3557 = vmul.u32 %v3556, 18
      %v3558 = vsub.s32 %v3534, %v3557
      %v3559 = vsub.s32 0, %v3558
      %v3560 = vsel %vm3532, %v3559, %v3558
      %vm3561 = vcmp.lt.s32.totalorder %v2624, 0
      %v3562 = vsub.s32 0, %v2624
      %v3563 = vsel %vm3561, %v3562, %v2624
      %v3564 = vand.u32 %v3563, 65535
      %v3565 = vshrl.u32 %v3563, 16
      %v3567 = vmul.u32 %v3564, 14564
      %v3568 = vmul.u32 %v3564, 58254
      %v3569 = vmul.u32 %v3565, 14564
      %v3570 = vmul.u32 %v3565, 58254
      %v3571 = vshll.u32 %v3568, 16
      %v3572 = vshrl.u32 %v3568, 16
      %v3573 = vshll.u32 %v3569, 16
      %v3574 = vshrl.u32 %v3569, 16
      %vm3575 = vc.u32 %v3567, %v3571
      %v3576 = vsel %vm3575, 1, 0
      %v3577 = vadd.s32 %v3567, %v3571
      %v3578 = vadd.s32 %v3570, %v3576
      %vm3579 = vc.u32 %v3577, %v3573
      %v3580 = vsel %vm3579, 1, 0
      %v3581 = vadd.s32 %v3577, %v3573
      %v3582 = vadd.s32 %v3578, %v3580
      %v3583 = vadd.s32 %v3582, %v3572
      %v3584 = vadd.s32 %v3583, %v3574
      %v3585 = vshrl.u32 %v3584, 4
      %v3586 = vmul.u32 %v3585, 18
      %v3587 = vsub.s32 %v3563, %v3586
      %v3588 = vsub.s32 0, %v3587
      %v3589 = vsel %vm3561, %v3588, %v3587
      %vm3590 = vcmp.lt.s32.totalorder %v2625, 0
      %v3591 = vsub.s32 0, %v2625
      %v3592 = vsel %vm3590, %v3591, %v2625
      %v3593 = vand.u32 %v3592, 65535
      %v3594 = vshrl.u32 %v3592, 16
      %v3596 = vmul.u32 %v3593, 14564
      %v3597 = vmul.u32 %v3593, 58254
      %v3598 = vmul.u32 %v3594, 14564
      %v3599 = vmul.u32 %v3594, 58254
      %v3600 = vshll.u32 %v3597, 16
      %v3601 = vshrl.u32 %v3597, 16
      %v3602 = vshll.u32 %v3598, 16
      %v3603 = vshrl.u32 %v3598, 16
      %vm3604 = vc.u32 %v3596, %v3600
      %v3605 = vsel %vm3604, 1, 0
      %v3606 = vadd.s32 %v3596, %v3600
      %v3607 = vadd.s32 %v3599, %v3605
      %vm3608 = vc.u32 %v3606, %v3602
      %v3609 = vsel %vm3608, 1, 0
      %v3610 = vadd.s32 %v3606, %v3602
      %v3611 = vadd.s32 %v3607, %v3609
      %v3612 = vadd.s32 %v3611, %v3601
      %v3613 = vadd.s32 %v3612, %v3603
      %v3614 = vshrl.u32 %v3613, 4
      %v3615 = vmul.u32 %v3614, 18
      %v3616 = vsub.s32 %v3592, %v3615
      %v3617 = vsub.s32 0, %v3616
      %v3618 = vsel %vm3590, %v3617, %v3616
      %vm3619 = vcmp.lt.s32.totalorder %v2626, 0
      %v3620 = vsub.s32 0, %v2626
      %v3621 = vsel %vm3619, %v3620, %v2626
      %v3622 = vand.u32 %v3621, 65535
      %v3623 = vshrl.u32 %v3621, 16
      %v3625 = vmul.u32 %v3622, 14564
      %v3626 = vmul.u32 %v3622, 58254
      %v3627 = vmul.u32 %v3623, 14564
      %v3628 = vmul.u32 %v3623, 58254
      %v3629 = vshll.u32 %v3626, 16
      %v3630 = vshrl.u32 %v3626, 16
      %v3631 = vshll.u32 %v3627, 16
      %v3632 = vshrl.u32 %v3627, 16
      %vm3633 = vc.u32 %v3625, %v3629
      %v3634 = vsel %vm3633, 1, 0
      %v3635 = vadd.s32 %v3625, %v3629
      %v3636 = vadd.s32 %v3628, %v3634
      %vm3637 = vc.u32 %v3635, %v3631
      %v3638 = vsel %vm3637, 1, 0
      %v3639 = vadd.s32 %v3635, %v3631
      %v3640 = vadd.s32 %v3636, %v3638
      %v3641 = vadd.s32 %v3640, %v3630
      %v3642 = vadd.s32 %v3641, %v3632
      %v3643 = vshrl.u32 %v3642, 4
      %v3644 = vmul.u32 %v3643, 18
      %v3645 = vsub.s32 %v3621, %v3644
      %v3646 = vsub.s32 0, %v3645
      %v3647 = vsel %vm3619, %v3646, %v3645
      %vm3648 = vcmp.lt.s32.totalorder %v2627, 0
      %v3649 = vsub.s32 0, %v2627
      %v3650 = vsel %vm3648, %v3649, %v2627
      %v3651 = vand.u32 %v3650, 65535
      %v3652 = vshrl.u32 %v3650, 16
      %v3654 = vmul.u32 %v3651, 14564
      %v3655 = vmul.u32 %v3651, 58254
      %v3656 = vmul.u32 %v3652, 14564
      %v3657 = vmul.u32 %v3652, 58254
      %v3658 = vshll.u32 %v3655, 16
      %v3659 = vshrl.u32 %v3655, 16
      %v3660 = vshll.u32 %v3656, 16
      %v3661 = vshrl.u32 %v3656, 16
      %vm3662 = vc.u32 %v3654, %v3658
      %v3663 = vsel %vm3662, 1, 0
      %v3664 = vadd.s32 %v3654, %v3658
      %v3665 = vadd.s32 %v3657, %v3663
      %vm3666 = vc.u32 %v3664, %v3660
      %v3667 = vsel %vm3666, 1, 0
      %v3668 = vadd.s32 %v3664, %v3660
      %v3669 = vadd.s32 %v3665, %v3667
      %v3670 = vadd.s32 %v3669, %v3659
      %v3671 = vadd.s32 %v3670, %v3661
      %v3672 = vshrl.u32 %v3671, 4
      %v3673 = vmul.u32 %v3672, 18
      %v3674 = vsub.s32 %v3650, %v3673
      %v3675 = vsub.s32 0, %v3674
      %v3676 = vsel %vm3648, %v3675, %v3674
      %vm3677 = vcmp.lt.s32.totalorder %v2628, 0
      %v3678 = vsub.s32 0, %v2628
      %v3679 = vsel %vm3677, %v3678, %v2628
      %v3680 = vand.u32 %v3679, 65535
      %v3681 = vshrl.u32 %v3679, 16
      %v3683 = vmul.u32 %v3680, 14564
      %v3684 = vmul.u32 %v3680, 58254
      %v3685 = vmul.u32 %v3681, 14564
      %v3686 = vmul.u32 %v3681, 58254
      %v3687 = vshll.u32 %v3684, 16
      %v3688 = vshrl.u32 %v3684, 16
      %v3689 = vshll.u32 %v3685, 16
      %v3690 = vshrl.u32 %v3685, 16
      %vm3691 = vc.u32 %v3683, %v3687
      %v3692 = vsel %vm3691, 1, 0
      %v3693 = vadd.s32 %v3683, %v3687
      %v3694 = vadd.s32 %v3686, %v3692
      %vm3695 = vc.u32 %v3693, %v3689
      %v3696 = vsel %vm3695, 1, 0
      %v3697 = vadd.s32 %v3693, %v3689
      %v3698 = vadd.s32 %v3694, %v3696
      %v3699 = vadd.s32 %v3698, %v3688
      %v3700 = vadd.s32 %v3699, %v3690
      %v3701 = vshrl.u32 %v3700, 4
      %v3702 = vmul.u32 %v3701, 18
      %v3703 = vsub.s32 %v3679, %v3702
      %v3704 = vsub.s32 0, %v3703
      %v3705 = vsel %vm3677, %v3704, %v3703
      %vm3706 = vcmp.lt.s32.totalorder %v2629, 0
      %v3707 = vsub.s32 0, %v2629
      %v3708 = vsel %vm3706, %v3707, %v2629
      %v3709 = vand.u32 %v3708, 65535
      %v3710 = vshrl.u32 %v3708, 16
      %v3712 = vmul.u32 %v3709, 14564
      %v3713 = vmul.u32 %v3709, 58254
      %v3714 = vmul.u32 %v3710, 14564
      %v3715 = vmul.u32 %v3710, 58254
      %v3716 = vshll.u32 %v3713, 16
      %v3717 = vshrl.u32 %v3713, 16
      %v3718 = vshll.u32 %v3714, 16
      %v3719 = vshrl.u32 %v3714, 16
      %vm3720 = vc.u32 %v3712, %v3716
      %v3721 = vsel %vm3720, 1, 0
      %v3722 = vadd.s32 %v3712, %v3716
      %v3723 = vadd.s32 %v3715, %v3721
      %vm3724 = vc.u32 %v3722, %v3718
      %v3725 = vsel %vm3724, 1, 0
      %v3726 = vadd.s32 %v3722, %v3718
      %v3727 = vadd.s32 %v3723, %v3725
      %v3728 = vadd.s32 %v3727, %v3717
      %v3729 = vadd.s32 %v3728, %v3719
      %v3730 = vshrl.u32 %v3729, 4
      %v3731 = vmul.u32 %v3730, 18
      %v3732 = vsub.s32 %v3708, %v3731
      %v3733 = vsub.s32 0, %v3732
      %v3734 = vsel %vm3706, %v3733, %v3732
      %vm3735 = vcmp.lt.s32.totalorder %v2630, 0
      %v3736 = vsub.s32 0, %v2630
      %v3737 = vsel %vm3735, %v3736, %v2630
      %v3738 = vand.u32 %v3737, 65535
      %v3739 = vshrl.u32 %v3737, 16
      %v3741 = vmul.u32 %v3738, 14564
      %v3742 = vmul.u32 %v3738, 58254
      %v3743 = vmul.u32 %v3739, 14564
      %v3744 = vmul.u32 %v3739, 58254
      %v3745 = vshll.u32 %v3742, 16
      %v3746 = vshrl.u32 %v3742, 16
      %v3747 = vshll.u32 %v3743, 16
      %v3748 = vshrl.u32 %v3743, 16
      %vm3749 = vc.u32 %v3741, %v3745
      %v3750 = vsel %vm3749, 1, 0
      %v3751 = vadd.s32 %v3741, %v3745
      %v3752 = vadd.s32 %v3744, %v3750
      %vm3753 = vc.u32 %v3751, %v3747
      %v3754 = vsel %vm3753, 1, 0
      %v3755 = vadd.s32 %v3751, %v3747
      %v3756 = vadd.s32 %v3752, %v3754
      %v3757 = vadd.s32 %v3756, %v3746
      %v3758 = vadd.s32 %v3757, %v3748
      %v3759 = vshrl.u32 %v3758, 4
      %v3760 = vmul.u32 %v3759, 18
      %v3761 = vsub.s32 %v3737, %v3760
      %v3762 = vsub.s32 0, %v3761
      %v3763 = vsel %vm3735, %v3762, %v3761
      %vm3764 = vcmp.lt.s32.totalorder %v2631, 0
      %v3765 = vsub.s32 0, %v2631
      %v3766 = vsel %vm3764, %v3765, %v2631
      %v3767 = vand.u32 %v3766, 65535
      %v3768 = vshrl.u32 %v3766, 16
      %v3770 = vmul.u32 %v3767, 14564
      %v3771 = vmul.u32 %v3767, 58254
      %v3772 = vmul.u32 %v3768, 14564
      %v3773 = vmul.u32 %v3768, 58254
      %v3774 = vshll.u32 %v3771, 16
      %v3775 = vshrl.u32 %v3771, 16
      %v3776 = vshll.u32 %v3772, 16
      %v3777 = vshrl.u32 %v3772, 16
      %vm3778 = vc.u32 %v3770, %v3774
      %v3779 = vsel %vm3778, 1, 0
      %v3780 = vadd.s32 %v3770, %v3774
      %v3781 = vadd.s32 %v3773, %v3779
      %vm3782 = vc.u32 %v3780, %v3776
      %v3783 = vsel %vm3782, 1, 0
      %v3784 = vadd.s32 %v3780, %v3776
      %v3785 = vadd.s32 %v3781, %v3783
      %v3786 = vadd.s32 %v3785, %v3775
      %v3787 = vadd.s32 %v3786, %v3777
      %v3788 = vshrl.u32 %v3787, 4
      %v3789 = vmul.u32 %v3788, 18
      %v3790 = vsub.s32 %v3766, %v3789
      %v3791 = vsub.s32 0, %v3790
      %v3792 = vsel %vm3764, %v3791, %v3790
      %vm3793 = vcmp.lt.s32.totalorder %v2632, 0
      %v3794 = vsub.s32 0, %v2632
      %v3795 = vsel %vm3793, %v3794, %v2632
      %v3796 = vand.u32 %v3795, 65535
      %v3797 = vshrl.u32 %v3795, 16
      %v3799 = vmul.u32 %v3796, 14564
      %v3800 = vmul.u32 %v3796, 58254
      %v3801 = vmul.u32 %v3797, 14564
      %v3802 = vmul.u32 %v3797, 58254
      %v3803 = vshll.u32 %v3800, 16
      %v3804 = vshrl.u32 %v3800, 16
      %v3805 = vshll.u32 %v3801, 16
      %v3806 = vshrl.u32 %v3801, 16
      %vm3807 = vc.u32 %v3799, %v3803
      %v3808 = vsel %vm3807, 1, 0
      %v3809 = vadd.s32 %v3799, %v3803
      %v3810 = vadd.s32 %v3802, %v3808
      %vm3811 = vc.u32 %v3809, %v3805
      %v3812 = vsel %vm3811, 1, 0
      %v3813 = vadd.s32 %v3809, %v3805
      %v3814 = vadd.s32 %v3810, %v3812
      %v3815 = vadd.s32 %v3814, %v3804
      %v3816 = vadd.s32 %v3815, %v3806
      %v3817 = vshrl.u32 %v3816, 4
      %v3818 = vmul.u32 %v3817, 18
      %v3819 = vsub.s32 %v3795, %v3818
      %v3820 = vsub.s32 0, %v3819
      %v3821 = vsel %vm3793, %v3820, %v3819
      %vm3822 = vcmp.ne.s32.totalorder %v2661, 0
      %vm3823 = vcmp.ne.s32.totalorder %v2690, 0
      %vm3824 = vcmp.ne.s32.totalorder %v2719, 0
      %vm3825 = vcmp.ne.s32.totalorder %v2748, 0
      %vm3826 = vcmp.ne.s32.totalorder %v2777, 0
      %vm3827 = vcmp.ne.s32.totalorder %v2806, 0
      %vm3828 = vcmp.ne.s32.totalorder %v2835, 0
      %vm3829 = vcmp.ne.s32.totalorder %v2864, 0
      %vm3830 = vcmp.ne.s32.totalorder %v2893, 0
      %vm3831 = vcmp.ne.s32.totalorder %v2922, 0
      %vm3832 = vcmp.ne.s32.totalorder %v2951, 0
      %vm3833 = vcmp.ne.s32.totalorder %v2980, 0
      %vm3834 = vcmp.ne.s32.totalorder %v3009, 0
      %vm3835 = vcmp.ne.s32.totalorder %v3038, 0
      %vm3836 = vcmp.ne.s32.totalorder %v3067, 0
      %vm3837 = vcmp.ne.s32.totalorder %v3096, 0
      %vm3838 = vcmp.ne.s32.totalorder %v3125, 0
      %vm3839 = vcmp.ne.s32.totalorder %v3154, 0
      %vm3840 = vcmp.ne.s32.totalorder %v3183, 0
      %vm3841 = vcmp.ne.s32.totalorder %v3212, 0
      %vm3842 = vcmp.ne.s32.totalorder %v3241, 0
      %vm3843 = vcmp.ne.s32.totalorder %v3270, 0
      %vm3844 = vcmp.ne.s32.totalorder %v3299, 0
      %vm3845 = vcmp.ne.s32.totalorder %v3328, 0
      %vm3846 = vcmp.ne.s32.totalorder %v3357, 0
      %vm3847 = vcmp.ne.s32.totalorder %v3386, 0
      %vm3848 = vcmp.ne.s32.totalorder %v3415, 0
      %vm3849 = vcmp.ne.s32.totalorder %v3444, 0
      %vm3850 = vcmp.ne.s32.totalorder %v3473, 0
      %vm3851 = vcmp.ne.s32.totalorder %v3502, 0
      %vm3852 = vcmp.ne.s32.totalorder %v3531, 0
      %vm3853 = vcmp.ne.s32.totalorder %v3560, 0
      %vm3854 = vcmp.ne.s32.totalorder %v3589, 0
      %vm3855 = vcmp.ne.s32.totalorder %v3618, 0
      %vm3856 = vcmp.ne.s32.totalorder %v3647, 0
      %vm3857 = vcmp.ne.s32.totalorder %v3676, 0
      %vm3858 = vcmp.ne.s32.totalorder %v3705, 0
      %vm3859 = vcmp.ne.s32.totalorder %v3734, 0
      %vm3860 = vcmp.ne.s32.totalorder %v3763, 0
      %vm3861 = vcmp.ne.s32.totalorder %v3792, 0
      %vm3862 = vcmp.ne.s32.totalorder %v3821, 0
      %vm3863 = vcmp.lt.s32.totalorder %v2661, 0
      %vm3864 = vcmp.lt.s32.totalorder %v2690, 0
      %vm3865 = vcmp.lt.s32.totalorder %v2719, 0
      %vm3866 = vcmp.lt.s32.totalorder %v2748, 0
      %vm3867 = vcmp.lt.s32.totalorder %v2777, 0
      %vm3868 = vcmp.lt.s32.totalorder %v2806, 0
      %vm3869 = vcmp.lt.s32.totalorder %v2835, 0
      %vm3870 = vcmp.lt.s32.totalorder %v2864, 0
      %vm3871 = vcmp.lt.s32.totalorder %v2893, 0
      %vm3872 = vcmp.lt.s32.totalorder %v2922, 0
      %vm3873 = vcmp.lt.s32.totalorder %v2951, 0
      %vm3874 = vcmp.lt.s32.totalorder %v2980, 0
      %vm3875 = vcmp.lt.s32.totalorder %v3009, 0
      %vm3876 = vcmp.lt.s32.totalorder %v3038, 0
      %vm3877 = vcmp.lt.s32.totalorder %v3067, 0
      %vm3878 = vcmp.lt.s32.totalorder %v3096, 0
      %vm3879 = vcmp.lt.s32.totalorder %v3125, 0
      %vm3880 = vcmp.lt.s32.totalorder %v3154, 0
      %vm3881 = vcmp.lt.s32.totalorder %v3183, 0
      %vm3882 = vcmp.lt.s32.totalorder %v3212, 0
      %vm3883 = vcmp.lt.s32.totalorder %v3241, 0
      %vm3884 = vcmp.lt.s32.totalorder %v3270, 0
      %vm3885 = vcmp.lt.s32.totalorder %v3299, 0
      %vm3886 = vcmp.lt.s32.totalorder %v3328, 0
      %vm3887 = vcmp.lt.s32.totalorder %v3357, 0
      %vm3888 = vcmp.lt.s32.totalorder %v3386, 0
      %vm3889 = vcmp.lt.s32.totalorder %v3415, 0
      %vm3890 = vcmp.lt.s32.totalorder %v3444, 0
      %vm3891 = vcmp.lt.s32.totalorder %v3473, 0
      %vm3892 = vcmp.lt.s32.totalorder %v3502, 0
      %vm3893 = vcmp.lt.s32.totalorder %v3531, 0
      %vm3894 = vcmp.lt.s32.totalorder %v3560, 0
      %vm3895 = vcmp.lt.s32.totalorder %v3589, 0
      %vm3896 = vcmp.lt.s32.totalorder %v3618, 0
      %vm3897 = vcmp.lt.s32.totalorder %v3647, 0
      %vm3898 = vcmp.lt.s32.totalorder %v3676, 0
      %vm3899 = vcmp.lt.s32.totalorder %v3705, 0
      %vm3900 = vcmp.lt.s32.totalorder %v3734, 0
      %vm3901 = vcmp.lt.s32.totalorder %v3763, 0
      %vm3902 = vcmp.lt.s32.totalorder %v3792, 0
      %vm3903 = vcmp.lt.s32.totalorder %v3821, 0
      %vm3904 = vmand %vm3863, %vm3822
      %vm3905 = vmand %vm3864, %vm3823
      %vm3906 = vmand %vm3865, %vm3824
      %vm3907 = vmand %vm3866, %vm3825
      %vm3908 = vmand %vm3867, %vm3826
      %vm3909 = vmand %vm3868, %vm3827
      %vm3910 = vmand %vm3869, %vm3828
      %vm3911 = vmand %vm3870, %vm3829
      %vm3912 = vmand %vm3871, %vm3830
      %vm3913 = vmand %vm3872, %vm3831
      %vm3914 = vmand %vm3873, %vm3832
      %vm3915 = vmand %vm3874, %vm3833
      %vm3916 = vmand %vm3875, %vm3834
      %vm3917 = vmand %vm3876, %vm3835
      %vm3918 = vmand %vm3877, %vm3836
      %vm3919 = vmand %vm3878, %vm3837
      %vm3920 = vmand %vm3879, %vm3838
      %vm3921 = vmand %vm3880, %vm3839
      %vm3922 = vmand %vm3881, %vm3840
      %vm3923 = vmand %vm3882, %vm3841
      %vm3924 = vmand %vm3883, %vm3842
      %vm3925 = vmand %vm3884, %vm3843
      %vm3926 = vmand %vm3885, %vm3844
      %vm3927 = vmand %vm3886, %vm3845
      %vm3928 = vmand %vm3887, %vm3846
      %vm3929 = vmand %vm3888, %vm3847
      %vm3930 = vmand %vm3889, %vm3848
      %vm3931 = vmand %vm3890, %vm3849
      %vm3932 = vmand %vm3891, %vm3850
      %vm3933 = vmand %vm3892, %vm3851
      %vm3934 = vmand %vm3893, %vm3852
      %vm3935 = vmand %vm3894, %vm3853
      %vm3936 = vmand %vm3895, %vm3854
      %vm3937 = vmand %vm3896, %vm3855
      %vm3938 = vmand %vm3897, %vm3856
      %vm3939 = vmand %vm3898, %vm3857
      %vm3940 = vmand %vm3899, %vm3858
      %vm3941 = vmand %vm3900, %vm3859
      %vm3942 = vmand %vm3901, %vm3860
      %vm3943 = vmand %vm3902, %vm3861
      %vm3944 = vmand %vm3903, %vm3862
      %v3945 = vadd.s32 %v2661, 18
      %v3946 = vadd.s32 %v2690, 18
      %v3947 = vadd.s32 %v2719, 18
      %v3948 = vadd.s32 %v2748, 18
      %v3949 = vadd.s32 %v2777, 18
      %v3950 = vadd.s32 %v2806, 18
      %v3951 = vadd.s32 %v2835, 18
      %v3952 = vadd.s32 %v2864, 18
      %v3953 = vadd.s32 %v2893, 18
      %v3954 = vadd.s32 %v2922, 18
      %v3955 = vadd.s32 %v2951, 18
      %v3956 = vadd.s32 %v2980, 18
      %v3957 = vadd.s32 %v3009, 18
      %v3958 = vadd.s32 %v3038, 18
      %v3959 = vadd.s32 %v3067, 18
      %v3960 = vadd.s32 %v3096, 18
      %v3961 = vadd.s32 %v3125, 18
      %v3962 = vadd.s32 %v3154, 18
      %v3963 = vadd.s32 %v3183, 18
      %v3964 = vadd.s32 %v3212, 18
      %v3965 = vadd.s32 %v3241, 18
      %v3966 = vadd.s32 %v3270, 18
      %v3967 = vadd.s32 %v3299, 18
      %v3968 = vadd.s32 %v3328, 18
      %v3969 = vadd.s32 %v3357, 18
      %v3970 = vadd.s32 %v3386, 18
      %v3971 = vadd.s32 %v3415, 18
      %v3972 = vadd.s32 %v3444, 18
      %v3973 = vadd.s32 %v3473, 18
      %v3974 = vadd.s32 %v3502, 18
      %v3975 = vadd.s32 %v3531, 18
      %v3976 = vadd.s32 %v3560, 18
      %v3977 = vadd.s32 %v3589, 18
      %v3978 = vadd.s32 %v3618, 18
      %v3979 = vadd.s32 %v3647, 18
      %v3980 = vadd.s32 %v3676, 18
      %v3981 = vadd.s32 %v3705, 18
      %v3982 = vadd.s32 %v3734, 18
      %v3983 = vadd.s32 %v3763, 18
      %v3984 = vadd.s32 %v3792, 18
      %v3985 = vadd.s32 %v3821, 18
      %v3986 = vsel %vm3904, %v3945, %v2661
      %v3987 = vsel %vm3905, %v3946, %v2690
      %v3988 = vsel %vm3906, %v3947, %v2719
      %v3989 = vsel %vm3907, %v3948, %v2748
      %v3990 = vsel %vm3908, %v3949, %v2777
      %v3991 = vsel %vm3909, %v3950, %v2806
      %v3992 = vsel %vm3910, %v3951, %v2835
      %v3993 = vsel %vm3911, %v3952, %v2864
      %v3994 = vsel %vm3912, %v3953, %v2893
      %v3995 = vsel %vm3913, %v3954, %v2922
      %v3996 = vsel %vm3914, %v3955, %v2951
      %v3997 = vsel %vm3915, %v3956, %v2980
      %v3998 = vsel %vm3916, %v3957, %v3009
      %v3999 = vsel %vm3917, %v3958, %v3038
      %v4000 = vsel %vm3918, %v3959, %v3067
      %v4001 = vsel %vm3919, %v3960, %v3096
      %v4002 = vsel %vm3920, %v3961, %v3125
      %v4003 = vsel %vm3921, %v3962, %v3154
      %v4004 = vsel %vm3922, %v3963, %v3183
      %v4005 = vsel %vm3923, %v3964, %v3212
      %v4006 = vsel %vm3924, %v3965, %v3241
      %v4007 = vsel %vm3925, %v3966, %v3270
      %v4008 = vsel %vm3926, %v3967, %v3299
      %v4009 = vsel %vm3927, %v3968, %v3328
      %v4010 = vsel %vm3928, %v3969, %v3357
      %v4011 = vsel %vm3929, %v3970, %v3386
      %v4012 = vsel %vm3930, %v3971, %v3415
      %v4013 = vsel %vm3931, %v3972, %v3444
      %v4014 = vsel %vm3932, %v3973, %v3473
      %v4015 = vsel %vm3933, %v3974, %v3502
      %v4016 = vsel %vm3934, %v3975, %v3531
      %v4017 = vsel %vm3935, %v3976, %v3560
      %v4018 = vsel %vm3936, %v3977, %v3589
      %v4019 = vsel %vm3937, %v3978, %v3618
      %v4020 = vsel %vm3938, %v3979, %v3647
      %v4021 = vsel %vm3939, %v3980, %v3676
      %v4022 = vsel %vm3940, %v3981, %v3705
      %v4023 = vsel %vm3941, %v3982, %v3734
      %v4024 = vsel %vm3942, %v3983, %v3763
      %v4025 = vsel %vm3943, %v3984, %v3792
      %v4026 = vsel %vm3944, %v3985, %v3821
      %vm4027 = vcmp.ge.s32.totalorder %v3986, 1
      %vm4028 = vcmp.ge.s32.totalorder %v3987, 1
      %vm4029 = vcmp.ge.s32.totalorder %v3988, 1
      %vm4030 = vcmp.ge.s32.totalorder %v3989, 1
      %vm4031 = vcmp.ge.s32.totalorder %v3990, 1
      %vm4032 = vcmp.ge.s32.totalorder %v3991, 1
      %vm4033 = vcmp.ge.s32.totalorder %v3992, 1
      %vm4034 = vcmp.ge.s32.totalorder %v3993, 1
      %vm4035 = vcmp.ge.s32.totalorder %v3994, 1
      %vm4036 = vcmp.ge.s32.totalorder %v3995, 1
      %vm4037 = vcmp.ge.s32.totalorder %v3996, 1
      %vm4038 = vcmp.ge.s32.totalorder %v3997, 1
      %vm4039 = vcmp.ge.s32.totalorder %v3998, 1
      %vm4040 = vcmp.ge.s32.totalorder %v3999, 1
      %vm4041 = vcmp.ge.s32.totalorder %v4000, 1
      %vm4042 = vcmp.ge.s32.totalorder %v4001, 1
      %vm4043 = vcmp.ge.s32.totalorder %v4002, 1
      %vm4044 = vcmp.ge.s32.totalorder %v4003, 1
      %vm4045 = vcmp.ge.s32.totalorder %v4004, 1
      %vm4046 = vcmp.ge.s32.totalorder %v4005, 1
      %vm4047 = vcmp.ge.s32.totalorder %v4006, 1
      %vm4048 = vcmp.ge.s32.totalorder %v4007, 1
      %vm4049 = vcmp.ge.s32.totalorder %v4008, 1
      %vm4050 = vcmp.ge.s32.totalorder %v4009, 1
      %vm4051 = vcmp.ge.s32.totalorder %v4010, 1
      %vm4052 = vcmp.ge.s32.totalorder %v4011, 1
      %vm4053 = vcmp.ge.s32.totalorder %v4012, 1
      %vm4054 = vcmp.ge.s32.totalorder %v4013, 1
      %vm4055 = vcmp.ge.s32.totalorder %v4014, 1
      %vm4056 = vcmp.ge.s32.totalorder %v4015, 1
      %vm4057 = vcmp.ge.s32.totalorder %v4016, 1
      %vm4058 = vcmp.ge.s32.totalorder %v4017, 1
      %vm4059 = vcmp.ge.s32.totalorder %v4018, 1
      %vm4060 = vcmp.ge.s32.totalorder %v4019, 1
      %vm4061 = vcmp.ge.s32.totalorder %v4020, 1
      %vm4062 = vcmp.ge.s32.totalorder %v4021, 1
      %vm4063 = vcmp.ge.s32.totalorder %v4022, 1
      %vm4064 = vcmp.ge.s32.totalorder %v4023, 1
      %vm4065 = vcmp.ge.s32.totalorder %v4024, 1
      %vm4066 = vcmp.ge.s32.totalorder %v4025, 1
      %vm4067 = vcmp.ge.s32.totalorder %v4026, 1
      %vm4068 = vcmp.le.s32.totalorder %v3986, 16
      %vm4069 = vcmp.le.s32.totalorder %v3987, 16
      %vm4070 = vcmp.le.s32.totalorder %v3988, 16
      %vm4071 = vcmp.le.s32.totalorder %v3989, 16
      %vm4072 = vcmp.le.s32.totalorder %v3990, 16
      %vm4073 = vcmp.le.s32.totalorder %v3991, 16
      %vm4074 = vcmp.le.s32.totalorder %v3992, 16
      %vm4075 = vcmp.le.s32.totalorder %v3993, 16
      %vm4076 = vcmp.le.s32.totalorder %v3994, 16
      %vm4077 = vcmp.le.s32.totalorder %v3995, 16
      %vm4078 = vcmp.le.s32.totalorder %v3996, 16
      %vm4079 = vcmp.le.s32.totalorder %v3997, 16
      %vm4080 = vcmp.le.s32.totalorder %v3998, 16
      %vm4081 = vcmp.le.s32.totalorder %v3999, 16
      %vm4082 = vcmp.le.s32.totalorder %v4000, 16
      %vm4083 = vcmp.le.s32.totalorder %v4001, 16
      %vm4084 = vcmp.le.s32.totalorder %v4002, 16
      %vm4085 = vcmp.le.s32.totalorder %v4003, 16
      %vm4086 = vcmp.le.s32.totalorder %v4004, 16
      %vm4087 = vcmp.le.s32.totalorder %v4005, 16
      %vm4088 = vcmp.le.s32.totalorder %v4006, 16
      %vm4089 = vcmp.le.s32.totalorder %v4007, 16
      %vm4090 = vcmp.le.s32.totalorder %v4008, 16
      %vm4091 = vcmp.le.s32.totalorder %v4009, 16
      %vm4092 = vcmp.le.s32.totalorder %v4010, 16
      %vm4093 = vcmp.le.s32.totalorder %v4011, 16
      %vm4094 = vcmp.le.s32.totalorder %v4012, 16
      %vm4095 = vcmp.le.s32.totalorder %v4013, 16
      %vm4096 = vcmp.le.s32.totalorder %v4014, 16
      %vm4097 = vcmp.le.s32.totalorder %v4015, 16
      %vm4098 = vcmp.le.s32.totalorder %v4016, 16
      %vm4099 = vcmp.le.s32.totalorder %v4017, 16
      %vm4100 = vcmp.le.s32.totalorder %v4018, 16
      %vm4101 = vcmp.le.s32.totalorder %v4019, 16
      %vm4102 = vcmp.le.s32.totalorder %v4020, 16
      %vm4103 = vcmp.le.s32.totalorder %v4021, 16
      %vm4104 = vcmp.le.s32.totalorder %v4022, 16
      %vm4105 = vcmp.le.s32.totalorder %v4023, 16
      %vm4106 = vcmp.le.s32.totalorder %v4024, 16
      %vm4107 = vcmp.le.s32.totalorder %v4025, 16
      %vm4108 = vcmp.le.s32.totalorder %v4026, 16
      %vm4109 = vmand %vm4027, %vm4068
      %vm4110 = vmand %vm4028, %vm4069
      %vm4111 = vmand %vm4029, %vm4070
      %vm4112 = vmand %vm4030, %vm4071
      %vm4113 = vmand %vm4031, %vm4072
      %vm4114 = vmand %vm4032, %vm4073
      %vm4115 = vmand %vm4033, %vm4074
      %vm4116 = vmand %vm4034, %vm4075
      %vm4117 = vmand %vm4035, %vm4076
      %vm4118 = vmand %vm4036, %vm4077
      %vm4119 = vmand %vm4037, %vm4078
      %vm4120 = vmand %vm4038, %vm4079
      %vm4121 = vmand %vm4039, %vm4080
      %vm4122 = vmand %vm4040, %vm4081
      %vm4123 = vmand %vm4041, %vm4082
      %vm4124 = vmand %vm4042, %vm4083
      %vm4125 = vmand %vm4043, %vm4084
      %vm4126 = vmand %vm4044, %vm4085
      %vm4127 = vmand %vm4045, %vm4086
      %vm4128 = vmand %vm4046, %vm4087
      %vm4129 = vmand %vm4047, %vm4088
      %vm4130 = vmand %vm4048, %vm4089
      %vm4131 = vmand %vm4049, %vm4090
      %vm4132 = vmand %vm4050, %vm4091
      %vm4133 = vmand %vm4051, %vm4092
      %vm4134 = vmand %vm4052, %vm4093
      %vm4135 = vmand %vm4053, %vm4094
      %vm4136 = vmand %vm4054, %vm4095
      %vm4137 = vmand %vm4055, %vm4096
      %vm4138 = vmand %vm4056, %vm4097
      %vm4139 = vmand %vm4057, %vm4098
      %vm4140 = vmand %vm4058, %vm4099
      %vm4141 = vmand %vm4059, %vm4100
      %vm4142 = vmand %vm4060, %vm4101
      %vm4143 = vmand %vm4061, %vm4102
      %vm4144 = vmand %vm4062, %vm4103
      %vm4145 = vmand %vm4063, %vm4104
      %vm4146 = vmand %vm4064, %vm4105
      %vm4147 = vmand %vm4065, %vm4106
      %vm4148 = vmand %vm4066, %vm4107
      %vm4149 = vmand %vm4067, %vm4108
      %v4150 = vsel %vm4109, 1, 0
      %v4151 = vsel %vm4110, 1, 0
      %v4152 = vsel %vm4111, 1, 0
      %v4153 = vsel %vm4112, 1, 0
      %v4154 = vsel %vm4113, 1, 0
      %v4155 = vsel %vm4114, 1, 0
      %v4156 = vsel %vm4115, 1, 0
      %v4157 = vsel %vm4116, 1, 0
      %v4158 = vsel %vm4117, 1, 0
      %v4159 = vsel %vm4118, 1, 0
      %v4160 = vsel %vm4119, 1, 0
      %v4161 = vsel %vm4120, 1, 0
      %v4162 = vsel %vm4121, 1, 0
      %v4163 = vsel %vm4122, 1, 0
      %v4164 = vsel %vm4123, 1, 0
      %v4165 = vsel %vm4124, 1, 0
      %v4166 = vsel %vm4125, 1, 0
      %v4167 = vsel %vm4126, 1, 0
      %v4168 = vsel %vm4127, 1, 0
      %v4169 = vsel %vm4128, 1, 0
      %v4170 = vsel %vm4129, 1, 0
      %v4171 = vsel %vm4130, 1, 0
      %v4172 = vsel %vm4131, 1, 0
      %v4173 = vsel %vm4132, 1, 0
      %v4174 = vsel %vm4133, 1, 0
      %v4175 = vsel %vm4134, 1, 0
      %v4176 = vsel %vm4135, 1, 0
      %v4177 = vsel %vm4136, 1, 0
      %v4178 = vsel %vm4137, 1, 0
      %v4179 = vsel %vm4138, 1, 0
      %v4180 = vsel %vm4139, 1, 0
      %v4181 = vsel %vm4140, 1, 0
      %v4182 = vsel %vm4141, 1, 0
      %v4183 = vsel %vm4142, 1, 0
      %v4184 = vsel %vm4143, 1, 0
      %v4185 = vsel %vm4144, 1, 0
      %v4186 = vsel %vm4145, 1, 0
      %v4187 = vsel %vm4146, 1, 0
      %v4188 = vsel %vm4147, 1, 0
      %v4189 = vsel %vm4148, 1, 0
      %v4190 = vsel %vm4149, 1, 0
      %vm4191 = vcmp.eq.s32.totalorder %v4150, 1
      %vm4192 = vcmp.eq.s32.totalorder %v4151, 1
      %vm4193 = vcmp.eq.s32.totalorder %v4152, 1
      %vm4194 = vcmp.eq.s32.totalorder %v4153, 1
      %vm4195 = vcmp.eq.s32.totalorder %v4154, 1
      %vm4196 = vcmp.eq.s32.totalorder %v4155, 1
      %vm4197 = vcmp.eq.s32.totalorder %v4156, 1
      %vm4198 = vcmp.eq.s32.totalorder %v4157, 1
      %vm4199 = vcmp.eq.s32.totalorder %v4158, 1
      %vm4200 = vcmp.eq.s32.totalorder %v4159, 1
      %vm4201 = vcmp.eq.s32.totalorder %v4160, 1
      %vm4202 = vcmp.eq.s32.totalorder %v4161, 1
      %vm4203 = vcmp.eq.s32.totalorder %v4162, 1
      %vm4204 = vcmp.eq.s32.totalorder %v4163, 1
      %vm4205 = vcmp.eq.s32.totalorder %v4164, 1
      %vm4206 = vcmp.eq.s32.totalorder %v4165, 1
      %vm4207 = vcmp.eq.s32.totalorder %v4166, 1
      %vm4208 = vcmp.eq.s32.totalorder %v4167, 1
      %vm4209 = vcmp.eq.s32.totalorder %v4168, 1
      %vm4210 = vcmp.eq.s32.totalorder %v4169, 1
      %vm4211 = vcmp.eq.s32.totalorder %v4170, 1
      %vm4212 = vcmp.eq.s32.totalorder %v4171, 1
      %vm4213 = vcmp.eq.s32.totalorder %v4172, 1
      %vm4214 = vcmp.eq.s32.totalorder %v4173, 1
      %vm4215 = vcmp.eq.s32.totalorder %v4174, 1
      %vm4216 = vcmp.eq.s32.totalorder %v4175, 1
      %vm4217 = vcmp.eq.s32.totalorder %v4176, 1
      %vm4218 = vcmp.eq.s32.totalorder %v4177, 1
      %vm4219 = vcmp.eq.s32.totalorder %v4178, 1
      %vm4220 = vcmp.eq.s32.totalorder %v4179, 1
      %vm4221 = vcmp.eq.s32.totalorder %v4180, 1
      %vm4222 = vcmp.eq.s32.totalorder %v4181, 1
      %vm4223 = vcmp.eq.s32.totalorder %v4182, 1
      %vm4224 = vcmp.eq.s32.totalorder %v4183, 1
      %vm4225 = vcmp.eq.s32.totalorder %v4184, 1
      %vm4226 = vcmp.eq.s32.totalorder %v4185, 1
      %vm4227 = vcmp.eq.s32.totalorder %v4186, 1
      %vm4228 = vcmp.eq.s32.totalorder %v4187, 1
      %vm4229 = vcmp.eq.s32.totalorder %v4188, 1
      %vm4230 = vcmp.eq.s32.totalorder %v4189, 1
      %vm4231 = vcmp.eq.s32.totalorder %v4190, 1
      %v4232 = vsel %vm4191, %v2550, 0.0
      %v4233 = vsel %vm4192, %v2551, 0.0
      %v4234 = vsel %vm4193, %v2552, 0.0
      %v4235 = vsel %vm4194, %v2553, 0.0
      %v4236 = vsel %vm4195, %v2554, 0.0
      %v4237 = vsel %vm4196, %v2555, 0.0
      %v4238 = vsel %vm4197, %v2556, 0.0
      %v4239 = vsel %vm4198, %v2557, 0.0
      %v4240 = vsel %vm4199, %v2558, 0.0
      %v4241 = vsel %vm4200, %v2559, 0.0
      %v4242 = vsel %vm4201, %v2560, 0.0
      %v4243 = vsel %vm4202, %v2561, 0.0
      %v4244 = vsel %vm4203, %v2562, 0.0
      %v4245 = vsel %vm4204, %v2563, 0.0
      %v4246 = vsel %vm4205, %v2564, 0.0
      %v4247 = vsel %vm4206, %v2565, 0.0
      %v4248 = vsel %vm4207, %v2566, 0.0
      %v4249 = vsel %vm4208, %v2567, 0.0
      %v4250 = vsel %vm4209, %v2568, 0.0
      %v4251 = vsel %vm4210, %v2569, 0.0
      %v4252 = vsel %vm4211, %v2570, 0.0
      %v4253 = vsel %vm4212, %v2571, 0.0
      %v4254 = vsel %vm4213, %v2572, 0.0
      %v4255 = vsel %vm4214, %v2573, 0.0
      %v4256 = vsel %vm4215, %v2574, 0.0
      %v4257 = vsel %vm4216, %v2575, 0.0
      %v4258 = vsel %vm4217, %v2576, 0.0
      %v4259 = vsel %vm4218, %v2577, 0.0
      %v4260 = vsel %vm4219, %v2578, 0.0
      %v4261 = vsel %vm4220, %v2579, 0.0
      %v4262 = vsel %vm4221, %v2580, 0.0
      %v4263 = vsel %vm4222, %v2581, 0.0
      %v4264 = vsel %vm4223, %v2582, 0.0
      %v4265 = vsel %vm4224, %v2583, 0.0
      %v4266 = vsel %vm4225, %v2584, 0.0
      %v4267 = vsel %vm4226, %v2585, 0.0
      %v4268 = vsel %vm4227, %v2586, 0.0
      %v4269 = vsel %vm4228, %v2587, 0.0
      %v4270 = vsel %vm4229, %v2588, 0.0
      %v4271 = vsel %vm4230, %v2589, 0.0
      %v4272 = vsel %vm4231, %v2590, 0.0
      %4273 = vst [vmem:[#allocation3 + $0x12] sm:$0xff] %v4232
      %4274 = vst [vmem:[#allocation3 + $0x1a] sm:$0xff] %v4233
      %4275 = vst [vmem:[#allocation3 + $0x22] sm:$0xff] %v4234
      %4276 = vst [vmem:[#allocation3 + $0x2a] sm:$0xff] %v4235
      %4277 = vst [vmem:[#allocation3 + $0x32] sm:$0xff] %v4236
      %4278 = vst [vmem:[#allocation3 + $0x3a] sm:$0xff] %v4237
      %4279 = vst [vmem:[#allocation3 + $0x42] sm:$0xff] %v4238
      %4280 = vst [vmem:[#allocation3 + $0x4a] sm:$0xff] %v4239
      %4281 = vst [vmem:[#allocation3 + $0x52] sm:$0xff] %v4240
      %4282 = vst [vmem:[#allocation3 + $0x5a] sm:$0xff] %v4241
      %4283 = vst [vmem:[#allocation3 + $0x62] sm:$0xff] %v4242
      %4284 = vst [vmem:[#allocation3 + $0x6a] sm:$0xff] %v4243
      %4285 = vst [vmem:[#allocation3 + $0x72] sm:$0xff] %v4244
      %4286 = vst [vmem:[#allocation3 + $0x7a] sm:$0xff] %v4245
      %4287 = vst [vmem:[#allocation3 + $0x82] sm:$0xff] %v4246
      %4288 = vst [vmem:[#allocation3 + $0x8a] sm:$0xff] %v4247
      %4289 = vst [vmem:[#allocation3 + $0x92] sm:$0xff] %v4248
      %4290 = vst [vmem:[#allocation3 + $0x9a] sm:$0xff] %v4249
      %4291 = vst [vmem:[#allocation3 + $0xa2] sm:$0xff] %v4250
      %4292 = vst [vmem:[#allocation3 + $0xaa] sm:$0xff] %v4251
      %4293 = vst [vmem:[#allocation3 + $0xb2] sm:$0xff] %v4252
      %4294 = vst [vmem:[#allocation3 + $0xba] sm:$0xff] %v4253
      %4295 = vst [vmem:[#allocation3 + $0xc2] sm:$0xff] %v4254
      %4296 = vst [vmem:[#allocation3 + $0xca] sm:$0xff] %v4255
      %4297 = vst [vmem:[#allocation3 + $0xd2] sm:$0xff] %v4256
      %4298 = vst [vmem:[#allocation3 + $0xda] sm:$0xff] %v4257
      %4299 = vst [vmem:[#allocation3 + $0xe2] sm:$0xff] %v4258
      %4300 = vst [vmem:[#allocation3 + $0xea] sm:$0xff] %v4259
      %4301 = vst [vmem:[#allocation3 + $0xf2] sm:$0xff] %v4260
      %4302 = vst [vmem:[#allocation3 + $0xfa] sm:$0xff] %v4261
      %4303 = vst [vmem:[#allocation3 + $0x102] sm:$0xff] %v4262
      %4304 = vst [vmem:[#allocation3 + $0x10a] sm:$0xff] %v4263
      %4305 = vst [vmem:[#allocation3 + $0x112] sm:$0xff] %v4264
      %4306 = vst [vmem:[#allocation3 + $0x11a] sm:$0xff] %v4265
      %4307 = vst [vmem:[#allocation3 + $0x122] sm:$0xff] %v4266
      %4308 = vst [vmem:[#allocation3 + $0x12a] sm:$0xff] %v4267
      %4309 = vst [vmem:[#allocation3 + $0x132] sm:$0xff] %v4268
      %4310 = vst [vmem:[#allocation3 + $0x13a] sm:$0xff] %v4269
      %4311 = vst [vmem:[#allocation3 + $0x142] sm:$0xff] %v4270
      %4312 = vst [vmem:[#allocation3 + $0x14a] sm:$0xff] %v4271
      %4313 = vst [vmem:[#allocation3 + $0x152] sm:$0xf] %v4272
      %4314 = vst [vmem:[#allocation3] sm:$0xff] 0.0
      %4315 = vst [vmem:[#allocation3 + $0x8] sm:$0xff] 0.0
      %4316 = vst [vmem:[#allocation3 + $0x10] sm:$0x3] 0.0
      %4317 = vst [vmem:[#allocation3 + $0x156] sm:$0xff] 0.0
      %4318 = vst [vmem:[#allocation3 + $0x15e] sm:$0xff] 0.0
      %4319 = vst [vmem:[#allocation3 + $0x166] sm:$0x3] 0.0
      // Predicated region
      $region91: #{conv_block.1} parent=43 // pred_check
        %p4320 = pneg %p268
      $region92: #{conv_block.1} parent=43 // pred_check_branch
        %4322 = sbr.rel (%p4320) target = $region94
      $region93: #{conv_block.1} parent=43 // pred_region
        %4323 = vst [vmem:[#allocation3 + $0x12] sm:$0xff] 0.0
        %4324 = vst [vmem:[#allocation3 + $0x1a] sm:$0xff] 0.0
        %4325 = vst [vmem:[#allocation3 + $0x22] sm:$0x3] 0.0
        %4326 = vst [vmem:[#allocation3 + $0x144] sm:$0xff] 0.0
        %4327 = vst [vmem:[#allocation3 + $0x14c] sm:$0xff] 0.0
        %4328 = vst [vmem:[#allocation3 + $0x154] sm:$0x3] 0.0
      $region94: #{conv_block.1} parent=43 // pred_fallthru
        _
      %v4329 = vld [vmem:[#allocation3 + $0x11] sm:$0xff]
      %v4330 = vld [vmem:[#allocation3 + $0x19] sm:$0xff]
      %v4331 = vld [vmem:[#allocation3 + $0x21] sm:$0xff]
      %v4332 = vld [vmem:[#allocation3 + $0x29] sm:$0xff]
      %v4333 = vld [vmem:[#allocation3 + $0x31] sm:$0xff]
      %v4334 = vld [vmem:[#allocation3 + $0x39] sm:$0xff]
      %v4335 = vld [vmem:[#allocation3 + $0x41] sm:$0xff]
      %v4336 = vld [vmem:[#allocation3 + $0x49] sm:$0xff]
      %v4337 = vld [vmem:[#allocation3 + $0x51] sm:$0xff]
      %v4338 = vld [vmem:[#allocation3 + $0x59] sm:$0xff]
      %v4339 = vld [vmem:[#allocation3 + $0x61] sm:$0xff]
      %v4340 = vld [vmem:[#allocation3 + $0x69] sm:$0xff]
      %v4341 = vld [vmem:[#allocation3 + $0x71] sm:$0xff]
      %v4342 = vld [vmem:[#allocation3 + $0x79] sm:$0xff]
      %v4343 = vld [vmem:[#allocation3 + $0x81] sm:$0xff]
      %v4344 = vld [vmem:[#allocation3 + $0x89] sm:$0xff]
      %v4345 = vld [vmem:[#allocation3 + $0x91] sm:$0xff]
      %v4346 = vld [vmem:[#allocation3 + $0x99] sm:$0xff]
      %v4347 = vld [vmem:[#allocation3 + $0xa1] sm:$0xff]
      %v4348 = vld [vmem:[#allocation3 + $0xa9] sm:$0xff]
      %v4349 = vld [vmem:[#allocation3 + $0xb1] sm:$0xff]
      %v4350 = vld [vmem:[#allocation3 + $0xb9] sm:$0xff]
      %v4351 = vld [vmem:[#allocation3 + $0xc1] sm:$0xff]
      %v4352 = vld [vmem:[#allocation3 + $0xc9] sm:$0xff]
      %v4353 = vld [vmem:[#allocation3 + $0xd1] sm:$0xff]
      %v4354 = vld [vmem:[#allocation3 + $0xd9] sm:$0xff]
      %v4355 = vld [vmem:[#allocation3 + $0xe1] sm:$0xff]
      %v4356 = vld [vmem:[#allocation3 + $0xe9] sm:$0xff]
      %v4357 = vld [vmem:[#allocation3 + $0xf1] sm:$0xff]
      %v4358 = vld [vmem:[#allocation3 + $0xf9] sm:$0xff]
      %v4359 = vld [vmem:[#allocation3 + $0x101] sm:$0xff]
      %v4360 = vld [vmem:[#allocation3 + $0x109] sm:$0xff]
      %v4361 = vld [vmem:[#allocation3 + $0x111] sm:$0xff]
      %v4362 = vld [vmem:[#allocation3 + $0x119] sm:$0xff]
      %v4363 = vld [vmem:[#allocation3 + $0x121] sm:$0xff]
      %v4364 = vld [vmem:[#allocation3 + $0x129] sm:$0xff]
      %v4365 = vld [vmem:[#allocation3 + $0x12] sm:$0xff]
      %v4366 = vld [vmem:[#allocation3 + $0x1a] sm:$0xff]
      %v4367 = vld [vmem:[#allocation3 + $0x22] sm:$0xff]
      %v4368 = vld [vmem:[#allocation3 + $0x2a] sm:$0xff]
      %v4369 = vld [vmem:[#allocation3 + $0x32] sm:$0xff]
      %v4370 = vld [vmem:[#allocation3 + $0x3a] sm:$0xff]
      %v4371 = vld [vmem:[#allocation3 + $0x42] sm:$0xff]
      %v4372 = vld [vmem:[#allocation3 + $0x4a] sm:$0xff]
      %v4373 = vld [vmem:[#allocation3 + $0x52] sm:$0xff]
      %v4374 = vld [vmem:[#allocation3 + $0x5a] sm:$0xff]
      %v4375 = vld [vmem:[#allocation3 + $0x62] sm:$0xff]
      %v4376 = vld [vmem:[#allocation3 + $0x6a] sm:$0xff]
      %v4377 = vld [vmem:[#allocation3 + $0x72] sm:$0xff]
      %v4378 = vld [vmem:[#allocation3 + $0x7a] sm:$0xff]
      %v4379 = vld [vmem:[#allocation3 + $0x82] sm:$0xff]
      %v4380 = vld [vmem:[#allocation3 + $0x8a] sm:$0xff]
      %v4381 = vld [vmem:[#allocation3 + $0x92] sm:$0xff]
      %v4382 = vld [vmem:[#allocation3 + $0x9a] sm:$0xff]
      %v4383 = vld [vmem:[#allocation3 + $0xa2] sm:$0xff]
      %v4384 = vld [vmem:[#allocation3 + $0xaa] sm:$0xff]
      %v4385 = vld [vmem:[#allocation3 + $0xb2] sm:$0xff]
      %v4386 = vld [vmem:[#allocation3 + $0xba] sm:$0xff]
      %v4387 = vld [vmem:[#allocation3 + $0xc2] sm:$0xff]
      %v4388 = vld [vmem:[#allocation3 + $0xca] sm:$0xff]
      %v4389 = vld [vmem:[#allocation3 + $0xd2] sm:$0xff]
      %v4390 = vld [vmem:[#allocation3 + $0xda] sm:$0xff]
      %v4391 = vld [vmem:[#allocation3 + $0xe2] sm:$0xff]
      %v4392 = vld [vmem:[#allocation3 + $0xea] sm:$0xff]
      %v4393 = vld [vmem:[#allocation3 + $0xf2] sm:$0xff]
      %v4394 = vld [vmem:[#allocation3 + $0xfa] sm:$0xff]
      %v4395 = vld [vmem:[#allocation3 + $0x102] sm:$0xff]
      %v4396 = vld [vmem:[#allocation3 + $0x10a] sm:$0xff]
      %v4397 = vld [vmem:[#allocation3 + $0x112] sm:$0xff]
      %v4398 = vld [vmem:[#allocation3 + $0x11a] sm:$0xff]
      %v4399 = vld [vmem:[#allocation3 + $0x122] sm:$0xff]
      %v4400 = vld [vmem:[#allocation3 + $0x12a] sm:$0xff]
      %v4401 = vld [vmem:[%s2] sm:$0xff]
      %v4402 = vld [vmem:[%s2 + $0x8] sm:$0xff]
      %v4403 = vld [vmem:[%s2 + $0x10] sm:$0xff]
      %v4404 = vld [vmem:[%s2 + $0x18] sm:$0xff]
      %v4405 = vld [vmem:[%s2 + $0x20] sm:$0xff]
      %v4406 = vld [vmem:[%s2 + $0x28] sm:$0xff]
      %v4407 = vld [vmem:[%s2 + $0x30] sm:$0xff]
      %v4408 = vld [vmem:[%s2 + $0x38] sm:$0xff]
      %v4409 = vld [vmem:[%s2 + $0x40] sm:$0xff]
      %v4410 = vld [vmem:[%s2 + $0x48] sm:$0xff]
      %v4411 = vld [vmem:[%s2 + $0x50] sm:$0xff]
      %v4412 = vld [vmem:[%s2 + $0x58] sm:$0xff]
      %v4413 = vld [vmem:[%s2 + $0x60] sm:$0xff]
      %v4414 = vld [vmem:[%s2 + $0x68] sm:$0xff]
      %v4415 = vld [vmem:[%s2 + $0x70] sm:$0xff]
      %v4416 = vld [vmem:[%s2 + $0x78] sm:$0xff]
      %v4417 = vld [vmem:[%s2 + $0x80] sm:$0xff]
      %v4418 = vld [vmem:[%s2 + $0x88] sm:$0xff]
      %v4419 = vld [vmem:[%s2 + $0x90] sm:$0xff]
      %v4420 = vld [vmem:[%s2 + $0x98] sm:$0xff]
      %v4421 = vld [vmem:[%s2 + $0xa0] sm:$0xff]
      %v4422 = vld [vmem:[%s2 + $0xa8] sm:$0xff]
      %v4423 = vld [vmem:[%s2 + $0xb0] sm:$0xff]
      %v4424 = vld [vmem:[%s2 + $0xb8] sm:$0xff]
      %v4425 = vld [vmem:[%s2 + $0xc0] sm:$0xff]
      %v4426 = vld [vmem:[%s2 + $0xc8] sm:$0xff]
      %v4427 = vld [vmem:[%s2 + $0xd0] sm:$0xff]
      %v4428 = vld [vmem:[%s2 + $0xd8] sm:$0xff]
      %v4429 = vld [vmem:[%s2 + $0xe0] sm:$0xff]
      %v4430 = vld [vmem:[%s2 + $0xe8] sm:$0xff]
      %v4431 = vld [vmem:[%s2 + $0xf0] sm:$0xff]
      %v4432 = vld [vmem:[%s2 + $0xf8] sm:$0xff]
      %v4433 = vld [vmem:[#allocation3 + $0x13] sm:$0xff]
      %v4434 = vld [vmem:[#allocation3 + $0x1b] sm:$0xff]
      %v4435 = vld [vmem:[#allocation3 + $0x23] sm:$0xff]
      %v4436 = vld [vmem:[#allocation3 + $0x2b] sm:$0xff]
      %v4437 = vld [vmem:[#allocation3 + $0x33] sm:$0xff]
      %v4438 = vld [vmem:[#allocation3 + $0x3b] sm:$0xff]
      %v4439 = vld [vmem:[#allocation3 + $0x43] sm:$0xff]
      %v4440 = vld [vmem:[#allocation3 + $0x4b] sm:$0xff]
      %v4441 = vld [vmem:[#allocation3 + $0x53] sm:$0xff]
      %v4442 = vld [vmem:[#allocation3 + $0x5b] sm:$0xff]
      %v4443 = vld [vmem:[#allocation3 + $0x63] sm:$0xff]
      %v4444 = vld [vmem:[#allocation3 + $0x6b] sm:$0xff]
      %v4445 = vld [vmem:[#allocation3 + $0x73] sm:$0xff]
      %v4446 = vld [vmem:[#allocation3 + $0x7b] sm:$0xff]
      %v4447 = vld [vmem:[#allocation3 + $0x83] sm:$0xff]
      %v4448 = vld [vmem:[#allocation3 + $0x8b] sm:$0xff]
      %v4449 = vld [vmem:[#allocation3 + $0x93] sm:$0xff]
      %v4450 = vld [vmem:[#allocation3 + $0x9b] sm:$0xff]
      %v4451 = vld [vmem:[#allocation3 + $0xa3] sm:$0xff]
      %v4452 = vld [vmem:[#allocation3 + $0xab] sm:$0xff]
      %v4453 = vld [vmem:[#allocation3 + $0xb3] sm:$0xff]
      %v4454 = vld [vmem:[#allocation3 + $0xbb] sm:$0xff]
      %v4455 = vld [vmem:[#allocation3 + $0xc3] sm:$0xff]
      %v4456 = vld [vmem:[#allocation3 + $0xcb] sm:$0xff]
      %v4457 = vld [vmem:[#allocation3 + $0xd3] sm:$0xff]
      %v4458 = vld [vmem:[#allocation3 + $0xdb] sm:$0xff]
      %v4459 = vld [vmem:[#allocation3 + $0xe3] sm:$0xff]
      %v4460 = vld [vmem:[#allocation3 + $0xeb] sm:$0xff]
      %v4461 = vld [vmem:[#allocation3 + $0xf3] sm:$0xff]
      %v4462 = vld [vmem:[#allocation3 + $0xfb] sm:$0xff]
      %v4463 = vld [vmem:[#allocation3 + $0x103] sm:$0xff]
      %v4464 = vld [vmem:[#allocation3 + $0x10b] sm:$0xff]
      %v4465 = vld [vmem:[#allocation3 + $0x113] sm:$0xff]
      %v4466 = vld [vmem:[#allocation3 + $0x11b] sm:$0xff]
      %v4467 = vld [vmem:[#allocation3 + $0x123] sm:$0xff]
      %v4468 = vld [vmem:[#allocation3 + $0x12b] sm:$0xff]
      %v4469 = vld [vmem:[#allocation3 + $0x133] sm:$0xff]
      %v4470 = vld [vmem:[#allocation3 + $0x13b] sm:$0xff]
      %v4471 = vld [vmem:[%s2 + $0x100] sm:$0xff]
      %v4472 = vld [vmem:[%s2 + $0x108] sm:$0xff]
      %v4473 = vld [vmem:[%s2 + $0x110] sm:$0xff]
      %v4474 = vld [vmem:[%s2 + $0x118] sm:$0xff]
      %v4475 = vld [vmem:[%s2 + $0x120] sm:$0xff]
      %v4476 = vld [vmem:[%s2 + $0x128] sm:$0xff]
      %v4477 = vld [vmem:[%s2 + $0x130] sm:$0xff]
      %v4478 = vld [vmem:[%s2 + $0x138] sm:$0xff]
      %v4479 = vld [vmem:[%s2 + $0x140] sm:$0xff]
      %v4480 = vld [vmem:[%s2 + $0x148] sm:$0xff]
      %v4481 = vld [vmem:[%s2 + $0x150] sm:$0xff]
      %v4482 = vld [vmem:[%s2 + $0x158] sm:$0xff]
      %v4483 = vld [vmem:[%s2 + $0x160] sm:$0xff]
      %v4484 = vld [vmem:[%s2 + $0x168] sm:$0xff]
      %v4485 = vld [vmem:[%s2 + $0x170] sm:$0xff]
      %v4486 = vld [vmem:[%s2 + $0x178] sm:$0xff]
      %v4487 = vld [vmem:[%s2 + $0x180] sm:$0xff]
      %v4488 = vld [vmem:[%s2 + $0x188] sm:$0xff]
      %v4489 = vld [vmem:[%s2 + $0x190] sm:$0xff]
      %v4490 = vld [vmem:[%s2 + $0x198] sm:$0xff]
      %v4491 = vld [vmem:[%s2 + $0x1a0] sm:$0xff]
      %v4492 = vld [vmem:[%s2 + $0x1a8] sm:$0xff]
      %v4493 = vld [vmem:[%s2 + $0x1b0] sm:$0xff]
      %v4494 = vld [vmem:[%s2 + $0x1b8] sm:$0xff]
      %v4495 = vld [vmem:[%s2 + $0x1c0] sm:$0xff]
      %v4496 = vld [vmem:[%s2 + $0x1c8] sm:$0xff]
      %v4497 = vld [vmem:[%s2 + $0x1d0] sm:$0xff]
      %v4498 = vld [vmem:[%s2 + $0x1d8] sm:$0xff]
      %v4499 = vld [vmem:[%s2 + $0x1e0] sm:$0xff]
      %v4500 = vld [vmem:[%s2 + $0x1e8] sm:$0xff]
      %v4501 = vld [vmem:[%s2 + $0x1f0] sm:$0xff]
      %v4502 = vld [vmem:[%s2 + $0x1f8] sm:$0xff]
      %4503 = vmatpush.msra.mxu0 %v4486
      %4504 = vmatpush.msra.mxu0 %v4485
      %4505 = vmatpush.msra.mxu0 %v4484
      %4506 = vmatpush.msra.mxu0 %v4483
      %4507 = vmatpush.msra.mxu0 %v4482
      %4508 = vmatpush.msra.mxu0 %v4481
      %4509 = vmatpush.msra.mxu0 %v4480
      %4510 = vmatpush.msra.mxu0 %v4479
      %4511 = vmatpush.msra.mxu0 %v4478
      %4512 = vmatpush.msra.mxu0 %v4477
      %4513 = vmatpush.msra.mxu0 %v4476
      %4514 = vmatpush.msra.mxu0 %v4475
      %4515 = vmatpush.msra.mxu0 %v4474
      %4516 = vmatpush.msra.mxu0 %v4473
      %4517 = vmatpush.msra.mxu0 %v4472
      %4518 = vmatpush.msra.mxu0 %v4471
      %4519 = vmatmul.f32.gmra.mxu0 %v4433
      %v4520 = vpop.f32.mrf.mxu0
      %v4521 = vadd.f32 0.0, %v4520
      %4522 = vmatmul.f32.gmra.mxu0 %v4434
      %v4523 = vpop.f32.mrf.mxu0
      %v4524 = vadd.f32 0.0, %v4523
      %4525 = vmatmul.f32.gmra.mxu0 %v4435
      %v4526 = vpop.f32.mrf.mxu0
      %v4527 = vadd.f32 0.0, %v4526
      %4528 = vmatmul.f32.gmra.mxu0 %v4436
      %v4529 = vpop.f32.mrf.mxu0
      %v4530 = vadd.f32 0.0, %v4529
      %4531 = vmatmul.f32.gmra.mxu0 %v4437
      %v4532 = vpop.f32.mrf.mxu0
      %v4533 = vadd.f32 0.0, %v4532
      %4534 = vmatmul.f32.gmra.mxu0 %v4438
      %v4535 = vpop.f32.mrf.mxu0
      %v4536 = vadd.f32 0.0, %v4535
      %4537 = vmatmul.f32.gmra.mxu0 %v4439
      %v4538 = vpop.f32.mrf.mxu0
      %v4539 = vadd.f32 0.0, %v4538
      %4540 = vmatmul.f32.gmra.mxu0 %v4440
      %v4541 = vpop.f32.mrf.mxu0
      %v4542 = vadd.f32 0.0, %v4541
      %4543 = vmatmul.f32.gmra.mxu0 %v4441
      %v4544 = vpop.f32.mrf.mxu0
      %v4545 = vadd.f32 0.0, %v4544
      %4546 = vmatmul.f32.gmra.mxu0 %v4442
      %v4547 = vpop.f32.mrf.mxu0
      %v4548 = vadd.f32 0.0, %v4547
      %4549 = vmatmul.f32.gmra.mxu0 %v4443
      %v4550 = vpop.f32.mrf.mxu0
      %v4551 = vadd.f32 0.0, %v4550
      %4552 = vmatmul.f32.gmra.mxu0 %v4444
      %v4553 = vpop.f32.mrf.mxu0
      %v4554 = vadd.f32 0.0, %v4553
      %4555 = vmatmul.f32.gmra.mxu0 %v4445
      %v4556 = vpop.f32.mrf.mxu0
      %v4557 = vadd.f32 0.0, %v4556
      %4558 = vmatmul.f32.gmra.mxu0 %v4446
      %v4559 = vpop.f32.mrf.mxu0
      %v4560 = vadd.f32 0.0, %v4559
      %4561 = vmatmul.f32.gmra.mxu0 %v4447
      %v4562 = vpop.f32.mrf.mxu0
      %v4563 = vadd.f32 0.0, %v4562
      %4564 = vmatmul.f32.gmra.mxu0 %v4448
      %v4565 = vpop.f32.mrf.mxu0
      %v4566 = vadd.f32 0.0, %v4565
      %4567 = vmatmul.f32.gmra.mxu0 %v4449
      %v4568 = vpop.f32.mrf.mxu0
      %v4569 = vadd.f32 0.0, %v4568
      %4570 = vmatmul.f32.gmra.mxu0 %v4450
      %v4571 = vpop.f32.mrf.mxu0
      %v4572 = vadd.f32 0.0, %v4571
      %4573 = vmatmul.f32.gmra.mxu0 %v4451
      %v4574 = vpop.f32.mrf.mxu0
      %v4575 = vadd.f32 0.0, %v4574
      %4576 = vmatmul.f32.gmra.mxu0 %v4452
      %v4577 = vpop.f32.mrf.mxu0
      %v4578 = vadd.f32 0.0, %v4577
      %4579 = vmatmul.f32.gmra.mxu0 %v4453
      %v4580 = vpop.f32.mrf.mxu0
      %v4581 = vadd.f32 0.0, %v4580
      %4582 = vmatmul.f32.gmra.mxu0 %v4454
      %v4583 = vpop.f32.mrf.mxu0
      %v4584 = vadd.f32 0.0, %v4583
      %4585 = vmatmul.f32.gmra.mxu0 %v4455
      %v4586 = vpop.f32.mrf.mxu0
      %v4587 = vadd.f32 0.0, %v4586
      %4588 = vmatmul.f32.gmra.mxu0 %v4456
      %v4589 = vpop.f32.mrf.mxu0
      %v4590 = vadd.f32 0.0, %v4589
      %4591 = vmatmul.f32.gmra.mxu0 %v4457
      %v4592 = vpop.f32.mrf.mxu0
      %v4593 = vadd.f32 0.0, %v4592
      %4594 = vmatmul.f32.gmra.mxu0 %v4458
      %v4595 = vpop.f32.mrf.mxu0
      %v4596 = vadd.f32 0.0, %v4595
      %4597 = vmatmul.f32.gmra.mxu0 %v4459
      %v4598 = vpop.f32.mrf.mxu0
      %v4599 = vadd.f32 0.0, %v4598
      %4600 = vmatmul.f32.gmra.mxu0 %v4460
      %v4601 = vpop.f32.mrf.mxu0
      %v4602 = vadd.f32 0.0, %v4601
      %4603 = vmatmul.f32.gmra.mxu0 %v4461
      %v4604 = vpop.f32.mrf.mxu0
      %v4605 = vadd.f32 0.0, %v4604
      %4606 = vmatmul.f32.gmra.mxu0 %v4462
      %v4607 = vpop.f32.mrf.mxu0
      %v4608 = vadd.f32 0.0, %v4607
      %4609 = vmatmul.f32.gmra.mxu0 %v4463
      %v4610 = vpop.f32.mrf.mxu0
      %v4611 = vadd.f32 0.0, %v4610
      %4612 = vmatmul.f32.gmra.mxu0 %v4464
      %v4613 = vpop.f32.mrf.mxu0
      %v4614 = vadd.f32 0.0, %v4613
      %4615 = vmatmul.f32.gmra.mxu0 %v4465
      %v4616 = vpop.f32.mrf.mxu0
      %v4617 = vadd.f32 0.0, %v4616
      %4618 = vmatmul.f32.gmra.mxu0 %v4466
      %v4619 = vpop.f32.mrf.mxu0
      %v4620 = vadd.f32 0.0, %v4619
      %4621 = vmatmul.f32.gmra.mxu0 %v4467
      %v4622 = vpop.f32.mrf.mxu0
      %v4623 = vadd.f32 0.0, %v4622
      %4624 = vmatmul.f32.gmra.mxu0 %v4468
      %v4625 = vpop.f32.mrf.mxu0
      %v4626 = vadd.f32 0.0, %v4625
      %4627 = vdwg.mxu0
      %4628 = vmatpush.msra.mxu0 %v4502
      %4629 = vmatpush.msra.mxu0 %v4501
      %4630 = vmatpush.msra.mxu0 %v4500
      %4631 = vmatpush.msra.mxu0 %v4499
      %4632 = vmatpush.msra.mxu0 %v4498
      %4633 = vmatpush.msra.mxu0 %v4497
      %4634 = vmatpush.msra.mxu0 %v4496
      %4635 = vmatpush.msra.mxu0 %v4495
      %4636 = vmatpush.msra.mxu0 %v4494
      %4637 = vmatpush.msra.mxu0 %v4493
      %4638 = vmatpush.msra.mxu0 %v4492
      %4639 = vmatpush.msra.mxu0 %v4491
      %4640 = vmatpush.msra.mxu0 %v4490
      %4641 = vmatpush.msra.mxu0 %v4489
      %4642 = vmatpush.msra.mxu0 %v4488
      %4643 = vmatpush.msra.mxu0 %v4487
      %4644 = vmatmul.f32.gmra.mxu0 %v4435
      %v4645 = vpop.f32.mrf.mxu0
      %v4646 = vadd.f32 %v4521, %v4645
      %4647 = vmatmul.f32.gmra.mxu0 %v4436
      %v4648 = vpop.f32.mrf.mxu0
      %v4649 = vadd.f32 %v4524, %v4648
      %4650 = vmatmul.f32.gmra.mxu0 %v4437
      %v4651 = vpop.f32.mrf.mxu0
      %v4652 = vadd.f32 %v4527, %v4651
      %4653 = vmatmul.f32.gmra.mxu0 %v4438
      %v4654 = vpop.f32.mrf.mxu0
      %v4655 = vadd.f32 %v4530, %v4654
      %4656 = vmatmul.f32.gmra.mxu0 %v4439
      %v4657 = vpop.f32.mrf.mxu0
      %v4658 = vadd.f32 %v4533, %v4657
      %4659 = vmatmul.f32.gmra.mxu0 %v4440
      %v4660 = vpop.f32.mrf.mxu0
      %v4661 = vadd.f32 %v4536, %v4660
      %4662 = vmatmul.f32.gmra.mxu0 %v4441
      %v4663 = vpop.f32.mrf.mxu0
      %v4664 = vadd.f32 %v4539, %v4663
      %4665 = vmatmul.f32.gmra.mxu0 %v4442
      %v4666 = vpop.f32.mrf.mxu0
      %v4667 = vadd.f32 %v4542, %v4666
      %4668 = vmatmul.f32.gmra.mxu0 %v4443
      %v4669 = vpop.f32.mrf.mxu0
      %v4670 = vadd.f32 %v4545, %v4669
      %4671 = vmatmul.f32.gmra.mxu0 %v4444
      %v4672 = vpop.f32.mrf.mxu0
      %v4673 = vadd.f32 %v4548, %v4672
      %4674 = vmatmul.f32.gmra.mxu0 %v4445
      %v4675 = vpop.f32.mrf.mxu0
      %v4676 = vadd.f32 %v4551, %v4675
      %4677 = vmatmul.f32.gmra.mxu0 %v4446
      %v4678 = vpop.f32.mrf.mxu0
      %v4679 = vadd.f32 %v4554, %v4678
      %4680 = vmatmul.f32.gmra.mxu0 %v4447
      %v4681 = vpop.f32.mrf.mxu0
      %v4682 = vadd.f32 %v4557, %v4681
      %4683 = vmatmul.f32.gmra.mxu0 %v4448
      %v4684 = vpop.f32.mrf.mxu0
      %v4685 = vadd.f32 %v4560, %v4684
      %4686 = vmatmul.f32.gmra.mxu0 %v4449
      %v4687 = vpop.f32.mrf.mxu0
      %v4688 = vadd.f32 %v4563, %v4687
      %4689 = vmatmul.f32.gmra.mxu0 %v4450
      %v4690 = vpop.f32.mrf.mxu0
      %v4691 = vadd.f32 %v4566, %v4690
      %4692 = vmatmul.f32.gmra.mxu0 %v4451
      %v4693 = vpop.f32.mrf.mxu0
      %v4694 = vadd.f32 %v4569, %v4693
      %4695 = vmatmul.f32.gmra.mxu0 %v4452
      %v4696 = vpop.f32.mrf.mxu0
      %v4697 = vadd.f32 %v4572, %v4696
      %4698 = vmatmul.f32.gmra.mxu0 %v4453
      %v4699 = vpop.f32.mrf.mxu0
      %v4700 = vadd.f32 %v4575, %v4699
      %4701 = vmatmul.f32.gmra.mxu0 %v4454
      %v4702 = vpop.f32.mrf.mxu0
      %v4703 = vadd.f32 %v4578, %v4702
      %4704 = vmatmul.f32.gmra.mxu0 %v4455
      %v4705 = vpop.f32.mrf.mxu0
      %v4706 = vadd.f32 %v4581, %v4705
      %4707 = vmatmul.f32.gmra.mxu0 %v4456
      %v4708 = vpop.f32.mrf.mxu0
      %v4709 = vadd.f32 %v4584, %v4708
      %4710 = vmatmul.f32.gmra.mxu0 %v4457
      %v4711 = vpop.f32.mrf.mxu0
      %v4712 = vadd.f32 %v4587, %v4711
      %4713 = vmatmul.f32.gmra.mxu0 %v4458
      %v4714 = vpop.f32.mrf.mxu0
      %v4715 = vadd.f32 %v4590, %v4714
      %4716 = vmatmul.f32.gmra.mxu0 %v4459
      %v4717 = vpop.f32.mrf.mxu0
      %v4718 = vadd.f32 %v4593, %v4717
      %4719 = vmatmul.f32.gmra.mxu0 %v4460
      %v4720 = vpop.f32.mrf.mxu0
      %v4721 = vadd.f32 %v4596, %v4720
      %4722 = vmatmul.f32.gmra.mxu0 %v4461
      %v4723 = vpop.f32.mrf.mxu0
      %v4724 = vadd.f32 %v4599, %v4723
      %4725 = vmatmul.f32.gmra.mxu0 %v4462
      %v4726 = vpop.f32.mrf.mxu0
      %v4727 = vadd.f32 %v4602, %v4726
      %4728 = vmatmul.f32.gmra.mxu0 %v4463
      %v4729 = vpop.f32.mrf.mxu0
      %v4730 = vadd.f32 %v4605, %v4729
      %4731 = vmatmul.f32.gmra.mxu0 %v4464
      %v4732 = vpop.f32.mrf.mxu0
      %v4733 = vadd.f32 %v4608, %v4732
      %4734 = vmatmul.f32.gmra.mxu0 %v4465
      %v4735 = vpop.f32.mrf.mxu0
      %v4736 = vadd.f32 %v4611, %v4735
      %4737 = vmatmul.f32.gmra.mxu0 %v4466
      %v4738 = vpop.f32.mrf.mxu0
      %v4739 = vadd.f32 %v4614, %v4738
      %4740 = vmatmul.f32.gmra.mxu0 %v4467
      %v4741 = vpop.f32.mrf.mxu0
      %v4742 = vadd.f32 %v4617, %v4741
      %4743 = vmatmul.f32.gmra.mxu0 %v4468
      %v4744 = vpop.f32.mrf.mxu0
      %v4745 = vadd.f32 %v4620, %v4744
      %4746 = vmatmul.f32.gmra.mxu0 %v4469
      %v4747 = vpop.f32.mrf.mxu0
      %v4748 = vadd.f32 %v4623, %v4747
      %4749 = vmatmul.f32.gmra.mxu0 %v4470
      %v4750 = vpop.f32.mrf.mxu0
      %v4751 = vadd.f32 %v4626, %v4750
      %4752 = vdwg.mxu0
      %4753 = vmatpush.msra.mxu0 %v4416
      %4754 = vmatpush.msra.mxu0 %v4415
      %4755 = vmatpush.msra.mxu0 %v4414
      %4756 = vmatpush.msra.mxu0 %v4413
      %4757 = vmatpush.msra.mxu0 %v4412
      %4758 = vmatpush.msra.mxu0 %v4411
      %4759 = vmatpush.msra.mxu0 %v4410
      %4760 = vmatpush.msra.mxu0 %v4409
      %4761 = vmatpush.msra.mxu0 %v4408
      %4762 = vmatpush.msra.mxu0 %v4407
      %4763 = vmatpush.msra.mxu0 %v4406
      %4764 = vmatpush.msra.mxu0 %v4405
      %4765 = vmatpush.msra.mxu0 %v4404
      %4766 = vmatpush.msra.mxu0 %v4403
      %4767 = vmatpush.msra.mxu0 %v4402
      %4768 = vmatpush.msra.mxu0 %v4401
      %4769 = vmatmul.f32.gmra.mxu0 %v4329
      %v4770 = vpop.f32.mrf.mxu0
      %v4771 = vadd.f32 %v4646, %v4770
      %4772 = vmatmul.f32.gmra.mxu0 %v4330
      %v4773 = vpop.f32.mrf.mxu0
      %v4774 = vadd.f32 %v4649, %v4773
      %4775 = vmatmul.f32.gmra.mxu0 %v4331
      %v4776 = vpop.f32.mrf.mxu0
      %v4777 = vadd.f32 %v4652, %v4776
      %4778 = vmatmul.f32.gmra.mxu0 %v4332
      %v4779 = vpop.f32.mrf.mxu0
      %v4780 = vadd.f32 %v4655, %v4779
      %4781 = vmatmul.f32.gmra.mxu0 %v4333
      %v4782 = vpop.f32.mrf.mxu0
      %v4783 = vadd.f32 %v4658, %v4782
      %4784 = vmatmul.f32.gmra.mxu0 %v4334
      %v4785 = vpop.f32.mrf.mxu0
      %v4786 = vadd.f32 %v4661, %v4785
      %4787 = vmatmul.f32.gmra.mxu0 %v4335
      %v4788 = vpop.f32.mrf.mxu0
      %v4789 = vadd.f32 %v4664, %v4788
      %4790 = vmatmul.f32.gmra.mxu0 %v4336
      %v4791 = vpop.f32.mrf.mxu0
      %v4792 = vadd.f32 %v4667, %v4791
      %4793 = vmatmul.f32.gmra.mxu0 %v4337
      %v4794 = vpop.f32.mrf.mxu0
      %v4795 = vadd.f32 %v4670, %v4794
      %4796 = vmatmul.f32.gmra.mxu0 %v4338
      %v4797 = vpop.f32.mrf.mxu0
      %v4798 = vadd.f32 %v4673, %v4797
      %4799 = vmatmul.f32.gmra.mxu0 %v4339
      %v4800 = vpop.f32.mrf.mxu0
      %v4801 = vadd.f32 %v4676, %v4800
      %4802 = vmatmul.f32.gmra.mxu0 %v4340
      %v4803 = vpop.f32.mrf.mxu0
      %v4804 = vadd.f32 %v4679, %v4803
      %4805 = vmatmul.f32.gmra.mxu0 %v4341
      %v4806 = vpop.f32.mrf.mxu0
      %v4807 = vadd.f32 %v4682, %v4806
      %4808 = vmatmul.f32.gmra.mxu0 %v4342
      %v4809 = vpop.f32.mrf.mxu0
      %v4810 = vadd.f32 %v4685, %v4809
      %4811 = vmatmul.f32.gmra.mxu0 %v4343
      %v4812 = vpop.f32.mrf.mxu0
      %v4813 = vadd.f32 %v4688, %v4812
      %4814 = vmatmul.f32.gmra.mxu0 %v4344
      %v4815 = vpop.f32.mrf.mxu0
      %v4816 = vadd.f32 %v4691, %v4815
      %4817 = vmatmul.f32.gmra.mxu0 %v4345
      %v4818 = vpop.f32.mrf.mxu0
      %v4819 = vadd.f32 %v4694, %v4818
      %4820 = vmatmul.f32.gmra.mxu0 %v4346
      %v4821 = vpop.f32.mrf.mxu0
      %v4822 = vadd.f32 %v4697, %v4821
      %4823 = vmatmul.f32.gmra.mxu0 %v4347
      %v4824 = vpop.f32.mrf.mxu0
      %v4825 = vadd.f32 %v4700, %v4824
      %4826 = vmatmul.f32.gmra.mxu0 %v4348
      %v4827 = vpop.f32.mrf.mxu0
      %v4828 = vadd.f32 %v4703, %v4827
      %4829 = vmatmul.f32.gmra.mxu0 %v4349
      %v4830 = vpop.f32.mrf.mxu0
      %v4831 = vadd.f32 %v4706, %v4830
      %4832 = vmatmul.f32.gmra.mxu0 %v4350
      %v4833 = vpop.f32.mrf.mxu0
      %v4834 = vadd.f32 %v4709, %v4833
      %4835 = vmatmul.f32.gmra.mxu0 %v4351
      %v4836 = vpop.f32.mrf.mxu0
      %v4837 = vadd.f32 %v4712, %v4836
      %4838 = vmatmul.f32.gmra.mxu0 %v4352
      %v4839 = vpop.f32.mrf.mxu0
      %v4840 = vadd.f32 %v4715, %v4839
      %4841 = vmatmul.f32.gmra.mxu0 %v4353
      %v4842 = vpop.f32.mrf.mxu0
      %v4843 = vadd.f32 %v4718, %v4842
      %4844 = vmatmul.f32.gmra.mxu0 %v4354
      %v4845 = vpop.f32.mrf.mxu0
      %v4846 = vadd.f32 %v4721, %v4845
      %4847 = vmatmul.f32.gmra.mxu0 %v4355
      %v4848 = vpop.f32.mrf.mxu0
      %v4849 = vadd.f32 %v4724, %v4848
      %4850 = vmatmul.f32.gmra.mxu0 %v4356
      %v4851 = vpop.f32.mrf.mxu0
      %v4852 = vadd.f32 %v4727, %v4851
      %4853 = vmatmul.f32.gmra.mxu0 %v4357
      %v4854 = vpop.f32.mrf.mxu0
      %v4855 = vadd.f32 %v4730, %v4854
      %4856 = vmatmul.f32.gmra.mxu0 %v4358
      %v4857 = vpop.f32.mrf.mxu0
      %v4858 = vadd.f32 %v4733, %v4857
      %4859 = vmatmul.f32.gmra.mxu0 %v4359
      %v4860 = vpop.f32.mrf.mxu0
      %v4861 = vadd.f32 %v4736, %v4860
      %4862 = vmatmul.f32.gmra.mxu0 %v4360
      %v4863 = vpop.f32.mrf.mxu0
      %v4864 = vadd.f32 %v4739, %v4863
      %4865 = vmatmul.f32.gmra.mxu0 %v4361
      %v4866 = vpop.f32.mrf.mxu0
      %v4867 = vadd.f32 %v4742, %v4866
      %4868 = vmatmul.f32.gmra.mxu0 %v4362
      %v4869 = vpop.f32.mrf.mxu0
      %v4870 = vadd.f32 %v4745, %v4869
      %4871 = vmatmul.f32.gmra.mxu0 %v4363
      %v4872 = vpop.f32.mrf.mxu0
      %v4873 = vadd.f32 %v4748, %v4872
      %4874 = vmatmul.f32.gmra.mxu0 %v4364
      %v4875 = vpop.f32.mrf.mxu0
      %v4876 = vadd.f32 %v4751, %v4875
      %4877 = vdwg.mxu0
      %4878 = vmatpush.msra.mxu0 %v4432
      %4879 = vmatpush.msra.mxu0 %v4431
      %4880 = vmatpush.msra.mxu0 %v4430
      %4881 = vmatpush.msra.mxu0 %v4429
      %4882 = vmatpush.msra.mxu0 %v4428
      %4883 = vmatpush.msra.mxu0 %v4427
      %4884 = vmatpush.msra.mxu0 %v4426
      %4885 = vmatpush.msra.mxu0 %v4425
      %4886 = vmatpush.msra.mxu0 %v4424
      %4887 = vmatpush.msra.mxu0 %v4423
      %4888 = vmatpush.msra.mxu0 %v4422
      %4889 = vmatpush.msra.mxu0 %v4421
      %4890 = vmatpush.msra.mxu0 %v4420
      %4891 = vmatpush.msra.mxu0 %v4419
      %4892 = vmatpush.msra.mxu0 %v4418
      %4893 = vmatpush.msra.mxu0 %v4417
      %4894 = vmatmul.f32.gmra.mxu0 %v4365
      %v4895 = vpop.f32.mrf.mxu0
      %v4896 = vadd.f32 %v4771, %v4895
      %4897 = vmatmul.f32.gmra.mxu0 %v4366
      %v4898 = vpop.f32.mrf.mxu0
      %v4899 = vadd.f32 %v4774, %v4898
      %4900 = vmatmul.f32.gmra.mxu0 %v4367
      %v4901 = vpop.f32.mrf.mxu0
      %v4902 = vadd.f32 %v4777, %v4901
      %4903 = vmatmul.f32.gmra.mxu0 %v4368
      %v4904 = vpop.f32.mrf.mxu0
      %v4905 = vadd.f32 %v4780, %v4904
      %4906 = vmatmul.f32.gmra.mxu0 %v4369
      %v4907 = vpop.f32.mrf.mxu0
      %v4908 = vadd.f32 %v4783, %v4907
      %4909 = vmatmul.f32.gmra.mxu0 %v4370
      %v4910 = vpop.f32.mrf.mxu0
      %v4911 = vadd.f32 %v4786, %v4910
      %4912 = vmatmul.f32.gmra.mxu0 %v4371
      %v4913 = vpop.f32.mrf.mxu0
      %v4914 = vadd.f32 %v4789, %v4913
      %4915 = vmatmul.f32.gmra.mxu0 %v4372
      %v4916 = vpop.f32.mrf.mxu0
      %v4917 = vadd.f32 %v4792, %v4916
      %4918 = vmatmul.f32.gmra.mxu0 %v4373
      %v4919 = vpop.f32.mrf.mxu0
      %v4920 = vadd.f32 %v4795, %v4919
      %4921 = vmatmul.f32.gmra.mxu0 %v4374
      %v4922 = vpop.f32.mrf.mxu0
      %v4923 = vadd.f32 %v4798, %v4922
      %4924 = vmatmul.f32.gmra.mxu0 %v4375
      %v4925 = vpop.f32.mrf.mxu0
      %v4926 = vadd.f32 %v4801, %v4925
      %4927 = vmatmul.f32.gmra.mxu0 %v4376
      %v4928 = vpop.f32.mrf.mxu0
      %v4929 = vadd.f32 %v4804, %v4928
      %4930 = vmatmul.f32.gmra.mxu0 %v4377
      %v4931 = vpop.f32.mrf.mxu0
      %v4932 = vadd.f32 %v4807, %v4931
      %4933 = vmatmul.f32.gmra.mxu0 %v4378
      %v4934 = vpop.f32.mrf.mxu0
      %v4935 = vadd.f32 %v4810, %v4934
      %4936 = vmatmul.f32.gmra.mxu0 %v4379
      %v4937 = vpop.f32.mrf.mxu0
      %v4938 = vadd.f32 %v4813, %v4937
      %4939 = vmatmul.f32.gmra.mxu0 %v4380
      %v4940 = vpop.f32.mrf.mxu0
      %v4941 = vadd.f32 %v4816, %v4940
      %4942 = vmatmul.f32.gmra.mxu0 %v4381
      %v4943 = vpop.f32.mrf.mxu0
      %v4944 = vadd.f32 %v4819, %v4943
      %4945 = vmatmul.f32.gmra.mxu0 %v4382
      %v4946 = vpop.f32.mrf.mxu0
      %v4947 = vadd.f32 %v4822, %v4946
      %4948 = vmatmul.f32.gmra.mxu0 %v4383
      %v4949 = vpop.f32.mrf.mxu0
      %v4950 = vadd.f32 %v4825, %v4949
      %4951 = vmatmul.f32.gmra.mxu0 %v4384
      %v4952 = vpop.f32.mrf.mxu0
      %v4953 = vadd.f32 %v4828, %v4952
      %4954 = vmatmul.f32.gmra.mxu0 %v4385
      %v4955 = vpop.f32.mrf.mxu0
      %v4956 = vadd.f32 %v4831, %v4955
      %4957 = vmatmul.f32.gmra.mxu0 %v4386
      %v4958 = vpop.f32.mrf.mxu0
      %v4959 = vadd.f32 %v4834, %v4958
      %4960 = vmatmul.f32.gmra.mxu0 %v4387
      %v4961 = vpop.f32.mrf.mxu0
      %v4962 = vadd.f32 %v4837, %v4961
      %4963 = vmatmul.f32.gmra.mxu0 %v4388
      %v4964 = vpop.f32.mrf.mxu0
      %v4965 = vadd.f32 %v4840, %v4964
      %4966 = vmatmul.f32.gmra.mxu0 %v4389
      %v4967 = vpop.f32.mrf.mxu0
      %v4968 = vadd.f32 %v4843, %v4967
      %4969 = vmatmul.f32.gmra.mxu0 %v4390
      %v4970 = vpop.f32.mrf.mxu0
      %v4971 = vadd.f32 %v4846, %v4970
      %4972 = vmatmul.f32.gmra.mxu0 %v4391
      %v4973 = vpop.f32.mrf.mxu0
      %v4974 = vadd.f32 %v4849, %v4973
      %4975 = vmatmul.f32.gmra.mxu0 %v4392
      %v4976 = vpop.f32.mrf.mxu0
      %v4977 = vadd.f32 %v4852, %v4976
      %4978 = vmatmul.f32.gmra.mxu0 %v4393
      %v4979 = vpop.f32.mrf.mxu0
      %v4980 = vadd.f32 %v4855, %v4979
      %4981 = vmatmul.f32.gmra.mxu0 %v4394
      %v4982 = vpop.f32.mrf.mxu0
      %v4983 = vadd.f32 %v4858, %v4982
      %4984 = vmatmul.f32.gmra.mxu0 %v4395
      %v4985 = vpop.f32.mrf.mxu0
      %v4986 = vadd.f32 %v4861, %v4985
      %4987 = vmatmul.f32.gmra.mxu0 %v4396
      %v4988 = vpop.f32.mrf.mxu0
      %v4989 = vadd.f32 %v4864, %v4988
      %4990 = vmatmul.f32.gmra.mxu0 %v4397
      %v4991 = vpop.f32.mrf.mxu0
      %v4992 = vadd.f32 %v4867, %v4991
      %4993 = vmatmul.f32.gmra.mxu0 %v4398
      %v4994 = vpop.f32.mrf.mxu0
      %v4995 = vadd.f32 %v4870, %v4994
      %4996 = vmatmul.f32.gmra.mxu0 %v4399
      %v4997 = vpop.f32.mrf.mxu0
      %v4998 = vadd.f32 %v4873, %v4997
      %4999 = vmatmul.f32.gmra.mxu0 %v4400
      %v5000 = vpop.f32.mrf.mxu0
      %v5001 = vadd.f32 %v4876, %v5000
      %5002 = vdwg.mxu0
      %v5003 = vld [vmem:[#allocation3 + $0x24] sm:$0xff]
      %v5004 = vld [vmem:[#allocation3 + $0x2c] sm:$0xff]
      %v5005 = vld [vmem:[#allocation3 + $0x34] sm:$0xff]
      %v5006 = vld [vmem:[#allocation3 + $0x3c] sm:$0xff]
      %v5007 = vld [vmem:[#allocation3 + $0x44] sm:$0xff]
      %v5008 = vld [vmem:[#allocation3 + $0x4c] sm:$0xff]
      %v5009 = vld [vmem:[#allocation3 + $0x54] sm:$0xff]
      %v5010 = vld [vmem:[#allocation3 + $0x5c] sm:$0xff]
      %v5011 = vld [vmem:[#allocation3 + $0x64] sm:$0xff]
      %v5012 = vld [vmem:[#allocation3 + $0x6c] sm:$0xff]
      %v5013 = vld [vmem:[#allocation3 + $0x74] sm:$0xff]
      %v5014 = vld [vmem:[#allocation3 + $0x7c] sm:$0xff]
      %v5015 = vld [vmem:[#allocation3 + $0x84] sm:$0xff]
      %v5016 = vld [vmem:[#allocation3 + $0x8c] sm:$0xff]
      %v5017 = vld [vmem:[#allocation3 + $0x94] sm:$0xff]
      %v5018 = vld [vmem:[#allocation3 + $0x9c] sm:$0xff]
      %v5019 = vld [vmem:[#allocation3 + $0xa4] sm:$0xff]
      %v5020 = vld [vmem:[#allocation3 + $0xac] sm:$0xff]
      %v5021 = vld [vmem:[#allocation3 + $0xb4] sm:$0xff]
      %v5022 = vld [vmem:[#allocation3 + $0xbc] sm:$0xff]
      %v5023 = vld [vmem:[#allocation3 + $0xc4] sm:$0xff]
      %v5024 = vld [vmem:[#allocation3 + $0xcc] sm:$0xff]
      %v5025 = vld [vmem:[#allocation3 + $0xd4] sm:$0xff]
      %v5026 = vld [vmem:[#allocation3 + $0xdc] sm:$0xff]
      %v5027 = vld [vmem:[#allocation3 + $0xe4] sm:$0xff]
      %v5028 = vld [vmem:[#allocation3 + $0xec] sm:$0xff]
      %v5029 = vld [vmem:[#allocation3 + $0xf4] sm:$0xff]
      %v5030 = vld [vmem:[#allocation3 + $0xfc] sm:$0xff]
      %v5031 = vld [vmem:[#allocation3 + $0x104] sm:$0xff]
      %v5032 = vld [vmem:[#allocation3 + $0x10c] sm:$0xff]
      %v5033 = vld [vmem:[#allocation3 + $0x114] sm:$0xff]
      %v5034 = vld [vmem:[#allocation3 + $0x11c] sm:$0xff]
      %v5035 = vld [vmem:[#allocation3 + $0x124] sm:$0xff]
      %v5036 = vld [vmem:[#allocation3 + $0x12c] sm:$0xff]
      %v5037 = vld [vmem:[#allocation3 + $0x134] sm:$0xff]
      %v5038 = vld [vmem:[#allocation3 + $0x13c] sm:$0xff]
      %v5039 = vld [vmem:[#allocation3 + $0x25] sm:$0xff]
      %v5040 = vld [vmem:[#allocation3 + $0x2d] sm:$0xff]
      %v5041 = vld [vmem:[#allocation3 + $0x35] sm:$0xff]
      %v5042 = vld [vmem:[#allocation3 + $0x3d] sm:$0xff]
      %v5043 = vld [vmem:[#allocation3 + $0x45] sm:$0xff]
      %v5044 = vld [vmem:[#allocation3 + $0x4d] sm:$0xff]
      %v5045 = vld [vmem:[#allocation3 + $0x55] sm:$0xff]
      %v5046 = vld [vmem:[#allocation3 + $0x5d] sm:$0xff]
      %v5047 = vld [vmem:[#allocation3 + $0x65] sm:$0xff]
      %v5048 = vld [vmem:[#allocation3 + $0x6d] sm:$0xff]
      %v5049 = vld [vmem:[#allocation3 + $0x75] sm:$0xff]
      %v5050 = vld [vmem:[#allocation3 + $0x7d] sm:$0xff]
      %v5051 = vld [vmem:[#allocation3 + $0x85] sm:$0xff]
      %v5052 = vld [vmem:[#allocation3 + $0x8d] sm:$0xff]
      %v5053 = vld [vmem:[#allocation3 + $0x95] sm:$0xff]
      %v5054 = vld [vmem:[#allocation3 + $0x9d] sm:$0xff]
      %v5055 = vld [vmem:[#allocation3 + $0xa5] sm:$0xff]
      %v5056 = vld [vmem:[#allocation3 + $0xad] sm:$0xff]
      %v5057 = vld [vmem:[#allocation3 + $0xb5] sm:$0xff]
      %v5058 = vld [vmem:[#allocation3 + $0xbd] sm:$0xff]
      %v5059 = vld [vmem:[#allocation3 + $0xc5] sm:$0xff]
      %v5060 = vld [vmem:[#allocation3 + $0xcd] sm:$0xff]
      %v5061 = vld [vmem:[#allocation3 + $0xd5] sm:$0xff]
      %v5062 = vld [vmem:[#allocation3 + $0xdd] sm:$0xff]
      %v5063 = vld [vmem:[#allocation3 + $0xe5] sm:$0xff]
      %v5064 = vld [vmem:[#allocation3 + $0xed] sm:$0xff]
      %v5065 = vld [vmem:[#allocation3 + $0xf5] sm:$0xff]
      %v5066 = vld [vmem:[#allocation3 + $0xfd] sm:$0xff]
      %v5067 = vld [vmem:[#allocation3 + $0x105] sm:$0xff]
      %v5068 = vld [vmem:[#allocation3 + $0x10d] sm:$0xff]
      %v5069 = vld [vmem:[#allocation3 + $0x115] sm:$0xff]
      %v5070 = vld [vmem:[#allocation3 + $0x11d] sm:$0xff]
      %v5071 = vld [vmem:[#allocation3 + $0x125] sm:$0xff]
      %v5072 = vld [vmem:[#allocation3 + $0x12d] sm:$0xff]
      %v5073 = vld [vmem:[#allocation3 + $0x135] sm:$0xff]
      %v5074 = vld [vmem:[#allocation3 + $0x13d] sm:$0xff]
      %v5075 = vld [vmem:[%s2 + $0x200] sm:$0xff]
      %v5076 = vld [vmem:[%s2 + $0x208] sm:$0xff]
      %v5077 = vld [vmem:[%s2 + $0x210] sm:$0xff]
      %v5078 = vld [vmem:[%s2 + $0x218] sm:$0xff]
      %v5079 = vld [vmem:[%s2 + $0x220] sm:$0xff]
      %v5080 = vld [vmem:[%s2 + $0x228] sm:$0xff]
      %v5081 = vld [vmem:[%s2 + $0x230] sm:$0xff]
      %v5082 = vld [vmem:[%s2 + $0x238] sm:$0xff]
      %v5083 = vld [vmem:[%s2 + $0x240] sm:$0xff]
      %v5084 = vld [vmem:[%s2 + $0x248] sm:$0xff]
      %v5085 = vld [vmem:[%s2 + $0x250] sm:$0xff]
      %v5086 = vld [vmem:[%s2 + $0x258] sm:$0xff]
      %v5087 = vld [vmem:[%s2 + $0x260] sm:$0xff]
      %v5088 = vld [vmem:[%s2 + $0x268] sm:$0xff]
      %v5089 = vld [vmem:[%s2 + $0x270] sm:$0xff]
      %v5090 = vld [vmem:[%s2 + $0x278] sm:$0xff]
      %v5091 = vld [vmem:[%s2 + $0x280] sm:$0xff]
      %v5092 = vld [vmem:[%s2 + $0x288] sm:$0xff]
      %v5093 = vld [vmem:[%s2 + $0x290] sm:$0xff]
      %v5094 = vld [vmem:[%s2 + $0x298] sm:$0xff]
      %v5095 = vld [vmem:[%s2 + $0x2a0] sm:$0xff]
      %v5096 = vld [vmem:[%s2 + $0x2a8] sm:$0xff]
      %v5097 = vld [vmem:[%s2 + $0x2b0] sm:$0xff]
      %v5098 = vld [vmem:[%s2 + $0x2b8] sm:$0xff]
      %v5099 = vld [vmem:[%s2 + $0x2c0] sm:$0xff]
      %v5100 = vld [vmem:[%s2 + $0x2c8] sm:$0xff]
      %v5101 = vld [vmem:[%s2 + $0x2d0] sm:$0xff]
      %v5102 = vld [vmem:[%s2 + $0x2d8] sm:$0xff]
      %v5103 = vld [vmem:[%s2 + $0x2e0] sm:$0xff]
      %v5104 = vld [vmem:[%s2 + $0x2e8] sm:$0xff]
      %v5105 = vld [vmem:[%s2 + $0x2f0] sm:$0xff]
      %v5106 = vld [vmem:[%s2 + $0x2f8] sm:$0xff]
      %5107 = vmatpush.msra.mxu0 %v5090
      %5108 = vmatpush.msra.mxu0 %v5089
      %5109 = vmatpush.msra.mxu0 %v5088
      %5110 = vmatpush.msra.mxu0 %v5087
      %5111 = vmatpush.msra.mxu0 %v5086
      %5112 = vmatpush.msra.mxu0 %v5085
      %5113 = vmatpush.msra.mxu0 %v5084
      %5114 = vmatpush.msra.mxu0 %v5083
      %5115 = vmatpush.msra.mxu0 %v5082
      %5116 = vmatpush.msra.mxu0 %v5081
      %5117 = vmatpush.msra.mxu0 %v5080
      %5118 = vmatpush.msra.mxu0 %v5079
      %5119 = vmatpush.msra.mxu0 %v5078
      %5120 = vmatpush.msra.mxu0 %v5077
      %5121 = vmatpush.msra.mxu0 %v5076
      %5122 = vmatpush.msra.mxu0 %v5075
      %5123 = vmatmul.f32.gmra.mxu0 %v5003
      %v5124 = vpop.f32.mrf.mxu0
      %v5125 = vadd.f32 0.0, %v5124
      %5126 = vmatmul.f32.gmra.mxu0 %v5004
      %v5127 = vpop.f32.mrf.mxu0
      %v5128 = vadd.f32 0.0, %v5127
      %5129 = vmatmul.f32.gmra.mxu0 %v5005
      %v5130 = vpop.f32.mrf.mxu0
      %v5131 = vadd.f32 0.0, %v5130
      %5132 = vmatmul.f32.gmra.mxu0 %v5006
      %v5133 = vpop.f32.mrf.mxu0
      %v5134 = vadd.f32 0.0, %v5133
      %5135 = vmatmul.f32.gmra.mxu0 %v5007
      %v5136 = vpop.f32.mrf.mxu0
      %v5137 = vadd.f32 0.0, %v5136
      %5138 = vmatmul.f32.gmra.mxu0 %v5008
      %v5139 = vpop.f32.mrf.mxu0
      %v5140 = vadd.f32 0.0, %v5139
      %5141 = vmatmul.f32.gmra.mxu0 %v5009
      %v5142 = vpop.f32.mrf.mxu0
      %v5143 = vadd.f32 0.0, %v5142
      %5144 = vmatmul.f32.gmra.mxu0 %v5010
      %v5145 = vpop.f32.mrf.mxu0
      %v5146 = vadd.f32 0.0, %v5145
      %5147 = vmatmul.f32.gmra.mxu0 %v5011
      %v5148 = vpop.f32.mrf.mxu0
      %v5149 = vadd.f32 0.0, %v5148
      %5150 = vmatmul.f32.gmra.mxu0 %v5012
      %v5151 = vpop.f32.mrf.mxu0
      %v5152 = vadd.f32 0.0, %v5151
      %5153 = vmatmul.f32.gmra.mxu0 %v5013
      %v5154 = vpop.f32.mrf.mxu0
      %v5155 = vadd.f32 0.0, %v5154
      %5156 = vmatmul.f32.gmra.mxu0 %v5014
      %v5157 = vpop.f32.mrf.mxu0
      %v5158 = vadd.f32 0.0, %v5157
      %5159 = vmatmul.f32.gmra.mxu0 %v5015
      %v5160 = vpop.f32.mrf.mxu0
      %v5161 = vadd.f32 0.0, %v5160
      %5162 = vmatmul.f32.gmra.mxu0 %v5016
      %v5163 = vpop.f32.mrf.mxu0
      %v5164 = vadd.f32 0.0, %v5163
      %5165 = vmatmul.f32.gmra.mxu0 %v5017
      %v5166 = vpop.f32.mrf.mxu0
      %v5167 = vadd.f32 0.0, %v5166
      %5168 = vmatmul.f32.gmra.mxu0 %v5018
      %v5169 = vpop.f32.mrf.mxu0
      %v5170 = vadd.f32 0.0, %v5169
      %5171 = vmatmul.f32.gmra.mxu0 %v5019
      %v5172 = vpop.f32.mrf.mxu0
      %v5173 = vadd.f32 0.0, %v5172
      %5174 = vmatmul.f32.gmra.mxu0 %v5020
      %v5175 = vpop.f32.mrf.mxu0
      %v5176 = vadd.f32 0.0, %v5175
      %5177 = vmatmul.f32.gmra.mxu0 %v5021
      %v5178 = vpop.f32.mrf.mxu0
      %v5179 = vadd.f32 0.0, %v5178
      %5180 = vmatmul.f32.gmra.mxu0 %v5022
      %v5181 = vpop.f32.mrf.mxu0
      %v5182 = vadd.f32 0.0, %v5181
      %5183 = vmatmul.f32.gmra.mxu0 %v5023
      %v5184 = vpop.f32.mrf.mxu0
      %v5185 = vadd.f32 0.0, %v5184
      %5186 = vmatmul.f32.gmra.mxu0 %v5024
      %v5187 = vpop.f32.mrf.mxu0
      %v5188 = vadd.f32 0.0, %v5187
      %5189 = vmatmul.f32.gmra.mxu0 %v5025
      %v5190 = vpop.f32.mrf.mxu0
      %v5191 = vadd.f32 0.0, %v5190
      %5192 = vmatmul.f32.gmra.mxu0 %v5026
      %v5193 = vpop.f32.mrf.mxu0
      %v5194 = vadd.f32 0.0, %v5193
      %5195 = vmatmul.f32.gmra.mxu0 %v5027
      %v5196 = vpop.f32.mrf.mxu0
      %v5197 = vadd.f32 0.0, %v5196
      %5198 = vmatmul.f32.gmra.mxu0 %v5028
      %v5199 = vpop.f32.mrf.mxu0
      %v5200 = vadd.f32 0.0, %v5199
      %5201 = vmatmul.f32.gmra.mxu0 %v5029
      %v5202 = vpop.f32.mrf.mxu0
      %v5203 = vadd.f32 0.0, %v5202
      %5204 = vmatmul.f32.gmra.mxu0 %v5030
      %v5205 = vpop.f32.mrf.mxu0
      %v5206 = vadd.f32 0.0, %v5205
      %5207 = vmatmul.f32.gmra.mxu0 %v5031
      %v5208 = vpop.f32.mrf.mxu0
      %v5209 = vadd.f32 0.0, %v5208
      %5210 = vmatmul.f32.gmra.mxu0 %v5032
      %v5211 = vpop.f32.mrf.mxu0
      %v5212 = vadd.f32 0.0, %v5211
      %5213 = vmatmul.f32.gmra.mxu0 %v5033
      %v5214 = vpop.f32.mrf.mxu0
      %v5215 = vadd.f32 0.0, %v5214
      %5216 = vmatmul.f32.gmra.mxu0 %v5034
      %v5217 = vpop.f32.mrf.mxu0
      %v5218 = vadd.f32 0.0, %v5217
      %5219 = vmatmul.f32.gmra.mxu0 %v5035
      %v5220 = vpop.f32.mrf.mxu0
      %v5221 = vadd.f32 0.0, %v5220
      %5222 = vmatmul.f32.gmra.mxu0 %v5036
      %v5223 = vpop.f32.mrf.mxu0
      %v5224 = vadd.f32 0.0, %v5223
      %5225 = vmatmul.f32.gmra.mxu0 %v5037
      %v5226 = vpop.f32.mrf.mxu0
      %v5227 = vadd.f32 0.0, %v5226
      %5228 = vmatmul.f32.gmra.mxu0 %v5038
      %v5229 = vpop.f32.mrf.mxu0
      %v5230 = vadd.f32 0.0, %v5229
      %5231 = vdwg.mxu0
      %5232 = vmatpush.msra.mxu0 %v5106
      %5233 = vmatpush.msra.mxu0 %v5105
      %5234 = vmatpush.msra.mxu0 %v5104
      %5235 = vmatpush.msra.mxu0 %v5103
      %5236 = vmatpush.msra.mxu0 %v5102
      %5237 = vmatpush.msra.mxu0 %v5101
      %5238 = vmatpush.msra.mxu0 %v5100
      %5239 = vmatpush.msra.mxu0 %v5099
      %5240 = vmatpush.msra.mxu0 %v5098
      %5241 = vmatpush.msra.mxu0 %v5097
      %5242 = vmatpush.msra.mxu0 %v5096
      %5243 = vmatpush.msra.mxu0 %v5095
      %5244 = vmatpush.msra.mxu0 %v5094
      %5245 = vmatpush.msra.mxu0 %v5093
      %5246 = vmatpush.msra.mxu0 %v5092
      %5247 = vmatpush.msra.mxu0 %v5091
      %5248 = vmatmul.f32.gmra.mxu0 %v5039
      %v5249 = vpop.f32.mrf.mxu0
      %v5250 = vadd.f32 %v5125, %v5249
      %5251 = vmatmul.f32.gmra.mxu0 %v5040
      %v5252 = vpop.f32.mrf.mxu0
      %v5253 = vadd.f32 %v5128, %v5252
      %5254 = vmatmul.f32.gmra.mxu0 %v5041
      %v5255 = vpop.f32.mrf.mxu0
      %v5256 = vadd.f32 %v5131, %v5255
      %5257 = vmatmul.f32.gmra.mxu0 %v5042
      %v5258 = vpop.f32.mrf.mxu0
      %v5259 = vadd.f32 %v5134, %v5258
      %5260 = vmatmul.f32.gmra.mxu0 %v5043
      %v5261 = vpop.f32.mrf.mxu0
      %v5262 = vadd.f32 %v5137, %v5261
      %5263 = vmatmul.f32.gmra.mxu0 %v5044
      %v5264 = vpop.f32.mrf.mxu0
      %v5265 = vadd.f32 %v5140, %v5264
      %5266 = vmatmul.f32.gmra.mxu0 %v5045
      %v5267 = vpop.f32.mrf.mxu0
      %v5268 = vadd.f32 %v5143, %v5267
      %5269 = vmatmul.f32.gmra.mxu0 %v5046
      %v5270 = vpop.f32.mrf.mxu0
      %v5271 = vadd.f32 %v5146, %v5270
      %5272 = vmatmul.f32.gmra.mxu0 %v5047
      %v5273 = vpop.f32.mrf.mxu0
      %v5274 = vadd.f32 %v5149, %v5273
      %5275 = vmatmul.f32.gmra.mxu0 %v5048
      %v5276 = vpop.f32.mrf.mxu0
      %v5277 = vadd.f32 %v5152, %v5276
      %5278 = vmatmul.f32.gmra.mxu0 %v5049
      %v5279 = vpop.f32.mrf.mxu0
      %v5280 = vadd.f32 %v5155, %v5279
      %5281 = vmatmul.f32.gmra.mxu0 %v5050
      %v5282 = vpop.f32.mrf.mxu0
      %v5283 = vadd.f32 %v5158, %v5282
      %5284 = vmatmul.f32.gmra.mxu0 %v5051
      %v5285 = vpop.f32.mrf.mxu0
      %v5286 = vadd.f32 %v5161, %v5285
      %5287 = vmatmul.f32.gmra.mxu0 %v5052
      %v5288 = vpop.f32.mrf.mxu0
      %v5289 = vadd.f32 %v5164, %v5288
      %5290 = vmatmul.f32.gmra.mxu0 %v5053
      %v5291 = vpop.f32.mrf.mxu0
      %v5292 = vadd.f32 %v5167, %v5291
      %5293 = vmatmul.f32.gmra.mxu0 %v5054
      %v5294 = vpop.f32.mrf.mxu0
      %v5295 = vadd.f32 %v5170, %v5294
      %5296 = vmatmul.f32.gmra.mxu0 %v5055
      %v5297 = vpop.f32.mrf.mxu0
      %v5298 = vadd.f32 %v5173, %v5297
      %5299 = vmatmul.f32.gmra.mxu0 %v5056
      %v5300 = vpop.f32.mrf.mxu0
      %v5301 = vadd.f32 %v5176, %v5300
      %5302 = vmatmul.f32.gmra.mxu0 %v5057
      %v5303 = vpop.f32.mrf.mxu0
      %v5304 = vadd.f32 %v5179, %v5303
      %5305 = vmatmul.f32.gmra.mxu0 %v5058
      %v5306 = vpop.f32.mrf.mxu0
      %v5307 = vadd.f32 %v5182, %v5306
      %5308 = vmatmul.f32.gmra.mxu0 %v5059
      %v5309 = vpop.f32.mrf.mxu0
      %v5310 = vadd.f32 %v5185, %v5309
      %5311 = vmatmul.f32.gmra.mxu0 %v5060
      %v5312 = vpop.f32.mrf.mxu0
      %v5313 = vadd.f32 %v5188, %v5312
      %5314 = vmatmul.f32.gmra.mxu0 %v5061
      %v5315 = vpop.f32.mrf.mxu0
      %v5316 = vadd.f32 %v5191, %v5315
      %5317 = vmatmul.f32.gmra.mxu0 %v5062
      %v5318 = vpop.f32.mrf.mxu0
      %v5319 = vadd.f32 %v5194, %v5318
      %5320 = vmatmul.f32.gmra.mxu0 %v5063
      %v5321 = vpop.f32.mrf.mxu0
      %v5322 = vadd.f32 %v5197, %v5321
      %5323 = vmatmul.f32.gmra.mxu0 %v5064
      %v5324 = vpop.f32.mrf.mxu0
      %v5325 = vadd.f32 %v5200, %v5324
      %5326 = vmatmul.f32.gmra.mxu0 %v5065
      %v5327 = vpop.f32.mrf.mxu0
      %v5328 = vadd.f32 %v5203, %v5327
      %5329 = vmatmul.f32.gmra.mxu0 %v5066
      %v5330 = vpop.f32.mrf.mxu0
      %v5331 = vadd.f32 %v5206, %v5330
      %5332 = vmatmul.f32.gmra.mxu0 %v5067
      %v5333 = vpop.f32.mrf.mxu0
      %v5334 = vadd.f32 %v5209, %v5333
      %5335 = vmatmul.f32.gmra.mxu0 %v5068
      %v5336 = vpop.f32.mrf.mxu0
      %v5337 = vadd.f32 %v5212, %v5336
      %5338 = vmatmul.f32.gmra.mxu0 %v5069
      %v5339 = vpop.f32.mrf.mxu0
      %v5340 = vadd.f32 %v5215, %v5339
      %5341 = vmatmul.f32.gmra.mxu0 %v5070
      %v5342 = vpop.f32.mrf.mxu0
      %v5343 = vadd.f32 %v5218, %v5342
      %5344 = vmatmul.f32.gmra.mxu0 %v5071
      %v5345 = vpop.f32.mrf.mxu0
      %v5346 = vadd.f32 %v5221, %v5345
      %5347 = vmatmul.f32.gmra.mxu0 %v5072
      %v5348 = vpop.f32.mrf.mxu0
      %v5349 = vadd.f32 %v5224, %v5348
      %5350 = vmatmul.f32.gmra.mxu0 %v5073
      %v5351 = vpop.f32.mrf.mxu0
      %v5352 = vadd.f32 %v5227, %v5351
      %5353 = vmatmul.f32.gmra.mxu0 %v5074
      %v5354 = vpop.f32.mrf.mxu0
      %v5355 = vadd.f32 %v5230, %v5354
      %5356 = vdwg.mxu0
      %v5357 = vadd.f32 %v4896, %v5250
      %v5358 = vadd.f32 %v4899, %v5253
      %v5359 = vadd.f32 %v4902, %v5256
      %v5360 = vadd.f32 %v4905, %v5259
      %v5361 = vadd.f32 %v4908, %v5262
      %v5362 = vadd.f32 %v4911, %v5265
      %v5363 = vadd.f32 %v4914, %v5268
      %v5364 = vadd.f32 %v4917, %v5271
      %v5365 = vadd.f32 %v4920, %v5274
      %v5366 = vadd.f32 %v4923, %v5277
      %v5367 = vadd.f32 %v4926, %v5280
      %v5368 = vadd.f32 %v4929, %v5283
      %v5369 = vadd.f32 %v4932, %v5286
      %v5370 = vadd.f32 %v4935, %v5289
      %v5371 = vadd.f32 %v4938, %v5292
      %v5372 = vadd.f32 %v4941, %v5295
      %v5373 = vadd.f32 %v4944, %v5298
      %v5374 = vadd.f32 %v4947, %v5301
      %v5375 = vadd.f32 %v4950, %v5304
      %v5376 = vadd.f32 %v4953, %v5307
      %v5377 = vadd.f32 %v4956, %v5310
      %v5378 = vadd.f32 %v4959, %v5313
      %v5379 = vadd.f32 %v4962, %v5316
      %v5380 = vadd.f32 %v4965, %v5319
      %v5381 = vadd.f32 %v4968, %v5322
      %v5382 = vadd.f32 %v4971, %v5325
      %v5383 = vadd.f32 %v4974, %v5328
      %v5384 = vadd.f32 %v4977, %v5331
      %v5385 = vadd.f32 %v4980, %v5334
      %v5386 = vadd.f32 %v4983, %v5337
      %v5387 = vadd.f32 %v4986, %v5340
      %v5388 = vadd.f32 %v4989, %v5343
      %v5389 = vadd.f32 %v4992, %v5346
      %v5390 = vadd.f32 %v4995, %v5349
      %v5391 = vadd.f32 %v4998, %v5352
      %v5392 = vadd.f32 %v5001, %v5355
      %v5393 = vld [vmem:[#allocation3 + $0x35] sm:$0xff]
      %v5394 = vld [vmem:[#allocation3 + $0x3d] sm:$0xff]
      %v5395 = vld [vmem:[#allocation3 + $0x45] sm:$0xff]
      %v5396 = vld [vmem:[#allocation3 + $0x4d] sm:$0xff]
      %v5397 = vld [vmem:[#allocation3 + $0x55] sm:$0xff]
      %v5398 = vld [vmem:[#allocation3 + $0x5d] sm:$0xff]
      %v5399 = vld [vmem:[#allocation3 + $0x65] sm:$0xff]
      %v5400 = vld [vmem:[#allocation3 + $0x6d] sm:$0xff]
      %v5401 = vld [vmem:[#allocation3 + $0x75] sm:$0xff]
      %v5402 = vld [vmem:[#allocation3 + $0x7d] sm:$0xff]
      %v5403 = vld [vmem:[#allocation3 + $0x85] sm:$0xff]
      %v5404 = vld [vmem:[#allocation3 + $0x8d] sm:$0xff]
      %v5405 = vld [vmem:[#allocation3 + $0x95] sm:$0xff]
      %v5406 = vld [vmem:[#allocation3 + $0x9d] sm:$0xff]
      %v5407 = vld [vmem:[#allocation3 + $0xa5] sm:$0xff]
      %v5408 = vld [vmem:[#allocation3 + $0xad] sm:$0xff]
      %v5409 = vld [vmem:[#allocation3 + $0xb5] sm:$0xff]
      %v5410 = vld [vmem:[#allocation3 + $0xbd] sm:$0xff]
      %v5411 = vld [vmem:[#allocation3 + $0xc5] sm:$0xff]
      %v5412 = vld [vmem:[#allocation3 + $0xcd] sm:$0xff]
      %v5413 = vld [vmem:[#allocation3 + $0xd5] sm:$0xff]
      %v5414 = vld [vmem:[#allocation3 + $0xdd] sm:$0xff]
      %v5415 = vld [vmem:[#allocation3 + $0xe5] sm:$0xff]
      %v5416 = vld [vmem:[#allocation3 + $0xed] sm:$0xff]
      %v5417 = vld [vmem:[#allocation3 + $0xf5] sm:$0xff]
      %v5418 = vld [vmem:[#allocation3 + $0xfd] sm:$0xff]
      %v5419 = vld [vmem:[#allocation3 + $0x105] sm:$0xff]
      %v5420 = vld [vmem:[#allocation3 + $0x10d] sm:$0xff]
      %v5421 = vld [vmem:[#allocation3 + $0x115] sm:$0xff]
      %v5422 = vld [vmem:[#allocation3 + $0x11d] sm:$0xff]
      %v5423 = vld [vmem:[#allocation3 + $0x125] sm:$0xff]
      %v5424 = vld [vmem:[#allocation3 + $0x12d] sm:$0xff]
      %v5425 = vld [vmem:[#allocation3 + $0x135] sm:$0xff]
      %v5426 = vld [vmem:[#allocation3 + $0x13d] sm:$0xff]
      %v5427 = vld [vmem:[#allocation3 + $0x145] sm:$0xff]
      %v5428 = vld [vmem:[#allocation3 + $0x14d] sm:$0xff]
      %v5429 = vld [vmem:[#allocation3 + $0x36] sm:$0xff]
      %v5430 = vld [vmem:[#allocation3 + $0x3e] sm:$0xff]
      %v5431 = vld [vmem:[#allocation3 + $0x46] sm:$0xff]
      %v5432 = vld [vmem:[#allocation3 + $0x4e] sm:$0xff]
      %v5433 = vld [vmem:[#allocation3 + $0x56] sm:$0xff]
      %v5434 = vld [vmem:[#allocation3 + $0x5e] sm:$0xff]
      %v5435 = vld [vmem:[#allocation3 + $0x66] sm:$0xff]
      %v5436 = vld [vmem:[#allocation3 + $0x6e] sm:$0xff]
      %v5437 = vld [vmem:[#allocation3 + $0x76] sm:$0xff]
      %v5438 = vld [vmem:[#allocation3 + $0x7e] sm:$0xff]
      %v5439 = vld [vmem:[#allocation3 + $0x86] sm:$0xff]
      %v5440 = vld [vmem:[#allocation3 + $0x8e] sm:$0xff]
      %v5441 = vld [vmem:[#allocation3 + $0x96] sm:$0xff]
      %v5442 = vld [vmem:[#allocation3 + $0x9e] sm:$0xff]
      %v5443 = vld [vmem:[#allocation3 + $0xa6] sm:$0xff]
      %v5444 = vld [vmem:[#allocation3 + $0xae] sm:$0xff]
      %v5445 = vld [vmem:[#allocation3 + $0xb6] sm:$0xff]
      %v5446 = vld [vmem:[#allocation3 + $0xbe] sm:$0xff]
      %v5447 = vld [vmem:[#allocation3 + $0xc6] sm:$0xff]
      %v5448 = vld [vmem:[#allocation3 + $0xce] sm:$0xff]
      %v5449 = vld [vmem:[#allocation3 + $0xd6] sm:$0xff]
      %v5450 = vld [vmem:[#allocation3 + $0xde] sm:$0xff]
      %v5451 = vld [vmem:[#allocation3 + $0xe6] sm:$0xff]
      %v5452 = vld [vmem:[#allocation3 + $0xee] sm:$0xff]
      %v5453 = vld [vmem:[#allocation3 + $0xf6] sm:$0xff]
      %v5454 = vld [vmem:[#allocation3 + $0xfe] sm:$0xff]
      %v5455 = vld [vmem:[#allocation3 + $0x106] sm:$0xff]
      %v5456 = vld [vmem:[#allocation3 + $0x10e] sm:$0xff]
      %v5457 = vld [vmem:[#allocation3 + $0x116] sm:$0xff]
      %v5458 = vld [vmem:[#allocation3 + $0x11e] sm:$0xff]
      %v5459 = vld [vmem:[#allocation3 + $0x126] sm:$0xff]
      %v5460 = vld [vmem:[#allocation3 + $0x12e] sm:$0xff]
      %v5461 = vld [vmem:[#allocation3 + $0x136] sm:$0xff]
      %v5462 = vld [vmem:[#allocation3 + $0x13e] sm:$0xff]
      %v5463 = vld [vmem:[#allocation3 + $0x146] sm:$0xff]
      %v5464 = vld [vmem:[#allocation3 + $0x14e] sm:$0xff]
      %v5465 = vld [vmem:[%s2 + $0x300] sm:$0xff]
      %v5466 = vld [vmem:[%s2 + $0x308] sm:$0xff]
      %v5467 = vld [vmem:[%s2 + $0x310] sm:$0xff]
      %v5468 = vld [vmem:[%s2 + $0x318] sm:$0xff]
      %v5469 = vld [vmem:[%s2 + $0x320] sm:$0xff]
      %v5470 = vld [vmem:[%s2 + $0x328] sm:$0xff]
      %v5471 = vld [vmem:[%s2 + $0x330] sm:$0xff]
      %v5472 = vld [vmem:[%s2 + $0x338] sm:$0xff]
      %v5473 = vld [vmem:[%s2 + $0x340] sm:$0xff]
      %v5474 = vld [vmem:[%s2 + $0x348] sm:$0xff]
      %v5475 = vld [vmem:[%s2 + $0x350] sm:$0xff]
      %v5476 = vld [vmem:[%s2 + $0x358] sm:$0xff]
      %v5477 = vld [vmem:[%s2 + $0x360] sm:$0xff]
      %v5478 = vld [vmem:[%s2 + $0x368] sm:$0xff]
      %v5479 = vld [vmem:[%s2 + $0x370] sm:$0xff]
      %v5480 = vld [vmem:[%s2 + $0x378] sm:$0xff]
      %v5481 = vld [vmem:[%s2 + $0x380] sm:$0xff]
      %v5482 = vld [vmem:[%s2 + $0x388] sm:$0xff]
      %v5483 = vld [vmem:[%s2 + $0x390] sm:$0xff]
      %v5484 = vld [vmem:[%s2 + $0x398] sm:$0xff]
      %v5485 = vld [vmem:[%s2 + $0x3a0] sm:$0xff]
      %v5486 = vld [vmem:[%s2 + $0x3a8] sm:$0xff]
      %v5487 = vld [vmem:[%s2 + $0x3b0] sm:$0xff]
      %v5488 = vld [vmem:[%s2 + $0x3b8] sm:$0xff]
      %v5489 = vld [vmem:[%s2 + $0x3c0] sm:$0xff]
      %v5490 = vld [vmem:[%s2 + $0x3c8] sm:$0xff]
      %v5491 = vld [vmem:[%s2 + $0x3d0] sm:$0xff]
      %v5492 = vld [vmem:[%s2 + $0x3d8] sm:$0xff]
      %v5493 = vld [vmem:[%s2 + $0x3e0] sm:$0xff]
      %v5494 = vld [vmem:[%s2 + $0x3e8] sm:$0xff]
      %v5495 = vld [vmem:[%s2 + $0x3f0] sm:$0xff]
      %v5496 = vld [vmem:[%s2 + $0x3f8] sm:$0xff]
      %5497 = vmatpush.msra.mxu0 %v5480
      %5498 = vmatpush.msra.mxu0 %v5479
      %5499 = vmatpush.msra.mxu0 %v5478
      %5500 = vmatpush.msra.mxu0 %v5477
      %5501 = vmatpush.msra.mxu0 %v5476
      %5502 = vmatpush.msra.mxu0 %v5475
      %5503 = vmatpush.msra.mxu0 %v5474
      %5504 = vmatpush.msra.mxu0 %v5473
      %5505 = vmatpush.msra.mxu0 %v5472
      %5506 = vmatpush.msra.mxu0 %v5471
      %5507 = vmatpush.msra.mxu0 %v5470
      %5508 = vmatpush.msra.mxu0 %v5469
      %5509 = vmatpush.msra.mxu0 %v5468
      %5510 = vmatpush.msra.mxu0 %v5467
      %5511 = vmatpush.msra.mxu0 %v5466
      %5512 = vmatpush.msra.mxu0 %v5465
      %5513 = vmatmul.f32.gmra.mxu0 %v5393
      %v5514 = vpop.f32.mrf.mxu0
      %v5515 = vadd.f32 0.0, %v5514
      %5516 = vmatmul.f32.gmra.mxu0 %v5394
      %v5517 = vpop.f32.mrf.mxu0
      %v5518 = vadd.f32 0.0, %v5517
      %5519 = vmatmul.f32.gmra.mxu0 %v5395
      %v5520 = vpop.f32.mrf.mxu0
      %v5521 = vadd.f32 0.0, %v5520
      %5522 = vmatmul.f32.gmra.mxu0 %v5396
      %v5523 = vpop.f32.mrf.mxu0
      %v5524 = vadd.f32 0.0, %v5523
      %5525 = vmatmul.f32.gmra.mxu0 %v5397
      %v5526 = vpop.f32.mrf.mxu0
      %v5527 = vadd.f32 0.0, %v5526
      %5528 = vmatmul.f32.gmra.mxu0 %v5398
      %v5529 = vpop.f32.mrf.mxu0
      %v5530 = vadd.f32 0.0, %v5529
      %5531 = vmatmul.f32.gmra.mxu0 %v5399
      %v5532 = vpop.f32.mrf.mxu0
      %v5533 = vadd.f32 0.0, %v5532
      %5534 = vmatmul.f32.gmra.mxu0 %v5400
      %v5535 = vpop.f32.mrf.mxu0
      %v5536 = vadd.f32 0.0, %v5535
      %5537 = vmatmul.f32.gmra.mxu0 %v5401
      %v5538 = vpop.f32.mrf.mxu0
      %v5539 = vadd.f32 0.0, %v5538
      %5540 = vmatmul.f32.gmra.mxu0 %v5402
      %v5541 = vpop.f32.mrf.mxu0
      %v5542 = vadd.f32 0.0, %v5541
      %5543 = vmatmul.f32.gmra.mxu0 %v5403
      %v5544 = vpop.f32.mrf.mxu0
      %v5545 = vadd.f32 0.0, %v5544
      %5546 = vmatmul.f32.gmra.mxu0 %v5404
      %v5547 = vpop.f32.mrf.mxu0
      %v5548 = vadd.f32 0.0, %v5547
      %5549 = vmatmul.f32.gmra.mxu0 %v5405
      %v5550 = vpop.f32.mrf.mxu0
      %v5551 = vadd.f32 0.0, %v5550
      %5552 = vmatmul.f32.gmra.mxu0 %v5406
      %v5553 = vpop.f32.mrf.mxu0
      %v5554 = vadd.f32 0.0, %v5553
      %5555 = vmatmul.f32.gmra.mxu0 %v5407
      %v5556 = vpop.f32.mrf.mxu0
      %v5557 = vadd.f32 0.0, %v5556
      %5558 = vmatmul.f32.gmra.mxu0 %v5408
      %v5559 = vpop.f32.mrf.mxu0
      %v5560 = vadd.f32 0.0, %v5559
      %5561 = vmatmul.f32.gmra.mxu0 %v5409
      %v5562 = vpop.f32.mrf.mxu0
      %v5563 = vadd.f32 0.0, %v5562
      %5564 = vmatmul.f32.gmra.mxu0 %v5410
      %v5565 = vpop.f32.mrf.mxu0
      %v5566 = vadd.f32 0.0, %v5565
      %5567 = vmatmul.f32.gmra.mxu0 %v5411
      %v5568 = vpop.f32.mrf.mxu0
      %v5569 = vadd.f32 0.0, %v5568
      %5570 = vmatmul.f32.gmra.mxu0 %v5412
      %v5571 = vpop.f32.mrf.mxu0
      %v5572 = vadd.f32 0.0, %v5571
      %5573 = vmatmul.f32.gmra.mxu0 %v5413
      %v5574 = vpop.f32.mrf.mxu0
      %v5575 = vadd.f32 0.0, %v5574
      %5576 = vmatmul.f32.gmra.mxu0 %v5414
      %v5577 = vpop.f32.mrf.mxu0
      %v5578 = vadd.f32 0.0, %v5577
      %5579 = vmatmul.f32.gmra.mxu0 %v5415
      %v5580 = vpop.f32.mrf.mxu0
      %v5581 = vadd.f32 0.0, %v5580
      %5582 = vmatmul.f32.gmra.mxu0 %v5416
      %v5583 = vpop.f32.mrf.mxu0
      %v5584 = vadd.f32 0.0, %v5583
      %5585 = vmatmul.f32.gmra.mxu0 %v5417
      %v5586 = vpop.f32.mrf.mxu0
      %v5587 = vadd.f32 0.0, %v5586
      %5588 = vmatmul.f32.gmra.mxu0 %v5418
      %v5589 = vpop.f32.mrf.mxu0
      %v5590 = vadd.f32 0.0, %v5589
      %5591 = vmatmul.f32.gmra.mxu0 %v5419
      %v5592 = vpop.f32.mrf.mxu0
      %v5593 = vadd.f32 0.0, %v5592
      %5594 = vmatmul.f32.gmra.mxu0 %v5420
      %v5595 = vpop.f32.mrf.mxu0
      %v5596 = vadd.f32 0.0, %v5595
      %5597 = vmatmul.f32.gmra.mxu0 %v5421
      %v5598 = vpop.f32.mrf.mxu0
      %v5599 = vadd.f32 0.0, %v5598
      %5600 = vmatmul.f32.gmra.mxu0 %v5422
      %v5601 = vpop.f32.mrf.mxu0
      %v5602 = vadd.f32 0.0, %v5601
      %5603 = vmatmul.f32.gmra.mxu0 %v5423
      %v5604 = vpop.f32.mrf.mxu0
      %v5605 = vadd.f32 0.0, %v5604
      %5606 = vmatmul.f32.gmra.mxu0 %v5424
      %v5607 = vpop.f32.mrf.mxu0
      %v5608 = vadd.f32 0.0, %v5607
      %5609 = vmatmul.f32.gmra.mxu0 %v5425
      %v5610 = vpop.f32.mrf.mxu0
      %v5611 = vadd.f32 0.0, %v5610
      %5612 = vmatmul.f32.gmra.mxu0 %v5426
      %v5613 = vpop.f32.mrf.mxu0
      %v5614 = vadd.f32 0.0, %v5613
      %5615 = vmatmul.f32.gmra.mxu0 %v5427
      %v5616 = vpop.f32.mrf.mxu0
      %v5617 = vadd.f32 0.0, %v5616
      %5618 = vmatmul.f32.gmra.mxu0 %v5428
      %v5619 = vpop.f32.mrf.mxu0
      %v5620 = vadd.f32 0.0, %v5619
      %5621 = vdwg.mxu0
      %5622 = vmatpush.msra.mxu0 %v5496
      %5623 = vmatpush.msra.mxu0 %v5495
      %5624 = vmatpush.msra.mxu0 %v5494
      %5625 = vmatpush.msra.mxu0 %v5493
      %5626 = vmatpush.msra.mxu0 %v5492
      %5627 = vmatpush.msra.mxu0 %v5491
      %5628 = vmatpush.msra.mxu0 %v5490
      %5629 = vmatpush.msra.mxu0 %v5489
      %5630 = vmatpush.msra.mxu0 %v5488
      %5631 = vmatpush.msra.mxu0 %v5487
      %5632 = vmatpush.msra.mxu0 %v5486
      %5633 = vmatpush.msra.mxu0 %v5485
      %5634 = vmatpush.msra.mxu0 %v5484
      %5635 = vmatpush.msra.mxu0 %v5483
      %5636 = vmatpush.msra.mxu0 %v5482
      %5637 = vmatpush.msra.mxu0 %v5481
      %5638 = vmatmul.f32.gmra.mxu0 %v5429
      %v5639 = vpop.f32.mrf.mxu0
      %v5640 = vadd.f32 %v5515, %v5639
      %5641 = vmatmul.f32.gmra.mxu0 %v5430
      %v5642 = vpop.f32.mrf.mxu0
      %v5643 = vadd.f32 %v5518, %v5642
      %5644 = vmatmul.f32.gmra.mxu0 %v5431
      %v5645 = vpop.f32.mrf.mxu0
      %v5646 = vadd.f32 %v5521, %v5645
      %5647 = vmatmul.f32.gmra.mxu0 %v5432
      %v5648 = vpop.f32.mrf.mxu0
      %v5649 = vadd.f32 %v5524, %v5648
      %5650 = vmatmul.f32.gmra.mxu0 %v5433
      %v5651 = vpop.f32.mrf.mxu0
      %v5652 = vadd.f32 %v5527, %v5651
      %5653 = vmatmul.f32.gmra.mxu0 %v5434
      %v5654 = vpop.f32.mrf.mxu0
      %v5655 = vadd.f32 %v5530, %v5654
      %5656 = vmatmul.f32.gmra.mxu0 %v5435
      %v5657 = vpop.f32.mrf.mxu0
      %v5658 = vadd.f32 %v5533, %v5657
      %5659 = vmatmul.f32.gmra.mxu0 %v5436
      %v5660 = vpop.f32.mrf.mxu0
      %v5661 = vadd.f32 %v5536, %v5660
      %5662 = vmatmul.f32.gmra.mxu0 %v5437
      %v5663 = vpop.f32.mrf.mxu0
      %v5664 = vadd.f32 %v5539, %v5663
      %5665 = vmatmul.f32.gmra.mxu0 %v5438
      %v5666 = vpop.f32.mrf.mxu0
      %v5667 = vadd.f32 %v5542, %v5666
      %5668 = vmatmul.f32.gmra.mxu0 %v5439
      %v5669 = vpop.f32.mrf.mxu0
      %v5670 = vadd.f32 %v5545, %v5669
      %5671 = vmatmul.f32.gmra.mxu0 %v5440
      %v5672 = vpop.f32.mrf.mxu0
      %v5673 = vadd.f32 %v5548, %v5672
      %5674 = vmatmul.f32.gmra.mxu0 %v5441
      %v5675 = vpop.f32.mrf.mxu0
      %v5676 = vadd.f32 %v5551, %v5675
      %5677 = vmatmul.f32.gmra.mxu0 %v5442
      %v5678 = vpop.f32.mrf.mxu0
      %v5679 = vadd.f32 %v5554, %v5678
      %5680 = vmatmul.f32.gmra.mxu0 %v5443
      %v5681 = vpop.f32.mrf.mxu0
      %v5682 = vadd.f32 %v5557, %v5681
      %5683 = vmatmul.f32.gmra.mxu0 %v5444
      %v5684 = vpop.f32.mrf.mxu0
      %v5685 = vadd.f32 %v5560, %v5684
      %5686 = vmatmul.f32.gmra.mxu0 %v5445
      %v5687 = vpop.f32.mrf.mxu0
      %v5688 = vadd.f32 %v5563, %v5687
      %5689 = vmatmul.f32.gmra.mxu0 %v5446
      %v5690 = vpop.f32.mrf.mxu0
      %v5691 = vadd.f32 %v5566, %v5690
      %5692 = vmatmul.f32.gmra.mxu0 %v5447
      %v5693 = vpop.f32.mrf.mxu0
      %v5694 = vadd.f32 %v5569, %v5693
      %5695 = vmatmul.f32.gmra.mxu0 %v5448
      %v5696 = vpop.f32.mrf.mxu0
      %v5697 = vadd.f32 %v5572, %v5696
      %5698 = vmatmul.f32.gmra.mxu0 %v5449
      %v5699 = vpop.f32.mrf.mxu0
      %v5700 = vadd.f32 %v5575, %v5699
      %5701 = vmatmul.f32.gmra.mxu0 %v5450
      %v5702 = vpop.f32.mrf.mxu0
      %v5703 = vadd.f32 %v5578, %v5702
      %5704 = vmatmul.f32.gmra.mxu0 %v5451
      %v5705 = vpop.f32.mrf.mxu0
      %v5706 = vadd.f32 %v5581, %v5705
      %5707 = vmatmul.f32.gmra.mxu0 %v5452
      %v5708 = vpop.f32.mrf.mxu0
      %v5709 = vadd.f32 %v5584, %v5708
      %5710 = vmatmul.f32.gmra.mxu0 %v5453
      %v5711 = vpop.f32.mrf.mxu0
      %v5712 = vadd.f32 %v5587, %v5711
      %5713 = vmatmul.f32.gmra.mxu0 %v5454
      %v5714 = vpop.f32.mrf.mxu0
      %v5715 = vadd.f32 %v5590, %v5714
      %5716 = vmatmul.f32.gmra.mxu0 %v5455
      %v5717 = vpop.f32.mrf.mxu0
      %v5718 = vadd.f32 %v5593, %v5717
      %5719 = vmatmul.f32.gmra.mxu0 %v5456
      %v5720 = vpop.f32.mrf.mxu0
      %v5721 = vadd.f32 %v5596, %v5720
      %5722 = vmatmul.f32.gmra.mxu0 %v5457
      %v5723 = vpop.f32.mrf.mxu0
      %v5724 = vadd.f32 %v5599, %v5723
      %5725 = vmatmul.f32.gmra.mxu0 %v5458
      %v5726 = vpop.f32.mrf.mxu0
      %v5727 = vadd.f32 %v5602, %v5726
      %5728 = vmatmul.f32.gmra.mxu0 %v5459
      %v5729 = vpop.f32.mrf.mxu0
      %v5730 = vadd.f32 %v5605, %v5729
      %5731 = vmatmul.f32.gmra.mxu0 %v5460
      %v5732 = vpop.f32.mrf.mxu0
      %v5733 = vadd.f32 %v5608, %v5732
      %5734 = vmatmul.f32.gmra.mxu0 %v5461
      %v5735 = vpop.f32.mrf.mxu0
      %v5736 = vadd.f32 %v5611, %v5735
      %5737 = vmatmul.f32.gmra.mxu0 %v5462
      %v5738 = vpop.f32.mrf.mxu0
      %v5739 = vadd.f32 %v5614, %v5738
      %5740 = vmatmul.f32.gmra.mxu0 %v5463
      %v5741 = vpop.f32.mrf.mxu0
      %v5742 = vadd.f32 %v5617, %v5741
      %5743 = vmatmul.f32.gmra.mxu0 %v5464
      %v5744 = vpop.f32.mrf.mxu0
      %v5745 = vadd.f32 %v5620, %v5744
      %5746 = vdwg.mxu0
      %v5747 = vadd.f32 %v5357, %v5640
      %v5748 = vadd.f32 %v5358, %v5643
      %v5749 = vadd.f32 %v5359, %v5646
      %v5750 = vadd.f32 %v5360, %v5649
      %v5751 = vadd.f32 %v5361, %v5652
      %v5752 = vadd.f32 %v5362, %v5655
      %v5753 = vadd.f32 %v5363, %v5658
      %v5754 = vadd.f32 %v5364, %v5661
      %v5755 = vadd.f32 %v5365, %v5664
      %v5756 = vadd.f32 %v5366, %v5667
      %v5757 = vadd.f32 %v5367, %v5670
      %v5758 = vadd.f32 %v5368, %v5673
      %v5759 = vadd.f32 %v5369, %v5676
      %v5760 = vadd.f32 %v5370, %v5679
      %v5761 = vadd.f32 %v5371, %v5682
      %v5762 = vadd.f32 %v5372, %v5685
      %v5763 = vadd.f32 %v5373, %v5688
      %v5764 = vadd.f32 %v5374, %v5691
      %v5765 = vadd.f32 %v5375, %v5694
      %v5766 = vadd.f32 %v5376, %v5697
      %v5767 = vadd.f32 %v5377, %v5700
      %v5768 = vadd.f32 %v5378, %v5703
      %v5769 = vadd.f32 %v5379, %v5706
      %v5770 = vadd.f32 %v5380, %v5709
      %v5771 = vadd.f32 %v5381, %v5712
      %v5772 = vadd.f32 %v5382, %v5715
      %v5773 = vadd.f32 %v5383, %v5718
      %v5774 = vadd.f32 %v5384, %v5721
      %v5775 = vadd.f32 %v5385, %v5724
      %v5776 = vadd.f32 %v5386, %v5727
      %v5777 = vadd.f32 %v5387, %v5730
      %v5778 = vadd.f32 %v5388, %v5733
      %v5779 = vadd.f32 %v5389, %v5736
      %v5780 = vadd.f32 %v5390, %v5739
      %v5781 = vadd.f32 %v5391, %v5742
      %v5782 = vadd.f32 %v5392, %v5745
      %v5783 = vld [vmem:[#allocation3 + $0x37] sm:$0xff]
      %v5784 = vld [vmem:[#allocation3 + $0x3f] sm:$0xff]
      %v5785 = vld [vmem:[#allocation3 + $0x47] sm:$0xff]
      %v5786 = vld [vmem:[#allocation3 + $0x4f] sm:$0xff]
      %v5787 = vld [vmem:[#allocation3 + $0x57] sm:$0xff]
      %v5788 = vld [vmem:[#allocation3 + $0x5f] sm:$0xff]
      %v5789 = vld [vmem:[#allocation3 + $0x67] sm:$0xff]
      %v5790 = vld [vmem:[#allocation3 + $0x6f] sm:$0xff]
      %v5791 = vld [vmem:[#allocation3 + $0x77] sm:$0xff]
      %v5792 = vld [vmem:[#allocation3 + $0x7f] sm:$0xff]
      %v5793 = vld [vmem:[#allocation3 + $0x87] sm:$0xff]
      %v5794 = vld [vmem:[#allocation3 + $0x8f] sm:$0xff]
      %v5795 = vld [vmem:[#allocation3 + $0x97] sm:$0xff]
      %v5796 = vld [vmem:[#allocation3 + $0x9f] sm:$0xff]
      %v5797 = vld [vmem:[#allocation3 + $0xa7] sm:$0xff]
      %v5798 = vld [vmem:[#allocation3 + $0xaf] sm:$0xff]
      %v5799 = vld [vmem:[#allocation3 + $0xb7] sm:$0xff]
      %v5800 = vld [vmem:[#allocation3 + $0xbf] sm:$0xff]
      %v5801 = vld [vmem:[#allocation3 + $0xc7] sm:$0xff]
      %v5802 = vld [vmem:[#allocation3 + $0xcf] sm:$0xff]
      %v5803 = vld [vmem:[#allocation3 + $0xd7] sm:$0xff]
      %v5804 = vld [vmem:[#allocation3 + $0xdf] sm:$0xff]
      %v5805 = vld [vmem:[#allocation3 + $0xe7] sm:$0xff]
      %v5806 = vld [vmem:[#allocation3 + $0xef] sm:$0xff]
      %v5807 = vld [vmem:[#allocation3 + $0xf7] sm:$0xff]
      %v5808 = vld [vmem:[#allocation3 + $0xff] sm:$0xff]
      %v5809 = vld [vmem:[#allocation3 + $0x107] sm:$0xff]
      %v5810 = vld [vmem:[#allocation3 + $0x10f] sm:$0xff]
      %v5811 = vld [vmem:[#allocation3 + $0x117] sm:$0xff]
      %v5812 = vld [vmem:[#allocation3 + $0x11f] sm:$0xff]
      %v5813 = vld [vmem:[#allocation3 + $0x127] sm:$0xff]
      %v5814 = vld [vmem:[#allocation3 + $0x12f] sm:$0xff]
      %v5815 = vld [vmem:[#allocation3 + $0x137] sm:$0xff]
      %v5816 = vld [vmem:[#allocation3 + $0x13f] sm:$0xff]
      %v5817 = vld [vmem:[#allocation3 + $0x147] sm:$0xff]
      %v5818 = vld [vmem:[#allocation3 + $0x14f] sm:$0xff]
      %v5819 = vld [vmem:[%s2 + $0x400] sm:$0xff]
      %v5820 = vld [vmem:[%s2 + $0x408] sm:$0xff]
      %v5821 = vld [vmem:[%s2 + $0x410] sm:$0xff]
      %v5822 = vld [vmem:[%s2 + $0x418] sm:$0xff]
      %v5823 = vld [vmem:[%s2 + $0x420] sm:$0xff]
      %v5824 = vld [vmem:[%s2 + $0x428] sm:$0xff]
      %v5825 = vld [vmem:[%s2 + $0x430] sm:$0xff]
      %v5826 = vld [vmem:[%s2 + $0x438] sm:$0xff]
      %v5827 = vld [vmem:[%s2 + $0x440] sm:$0xff]
      %v5828 = vld [vmem:[%s2 + $0x448] sm:$0xff]
      %v5829 = vld [vmem:[%s2 + $0x450] sm:$0xff]
      %v5830 = vld [vmem:[%s2 + $0x458] sm:$0xff]
      %v5831 = vld [vmem:[%s2 + $0x460] sm:$0xff]
      %v5832 = vld [vmem:[%s2 + $0x468] sm:$0xff]
      %v5833 = vld [vmem:[%s2 + $0x470] sm:$0xff]
      %v5834 = vld [vmem:[%s2 + $0x478] sm:$0xff]
      %5835 = vmatpush.msra.mxu0 %v5834
      %5836 = vmatpush.msra.mxu0 %v5833
      %5837 = vmatpush.msra.mxu0 %v5832
      %5838 = vmatpush.msra.mxu0 %v5831
      %5839 = vmatpush.msra.mxu0 %v5830
      %5840 = vmatpush.msra.mxu0 %v5829
      %5841 = vmatpush.msra.mxu0 %v5828
      %5842 = vmatpush.msra.mxu0 %v5827
      %5843 = vmatpush.msra.mxu0 %v5826
      %5844 = vmatpush.msra.mxu0 %v5825
      %5845 = vmatpush.msra.mxu0 %v5824
      %5846 = vmatpush.msra.mxu0 %v5823
      %5847 = vmatpush.msra.mxu0 %v5822
      %5848 = vmatpush.msra.mxu0 %v5821
      %5849 = vmatpush.msra.mxu0 %v5820
      %5850 = vmatpush.msra.mxu0 %v5819
      %5851 = vmatmul.f32.gmra.mxu0 %v5783
      %v5852 = vpop.f32.mrf.mxu0
      %v5853 = vadd.f32 0.0, %v5852
      %5854 = vmatmul.f32.gmra.mxu0 %v5784
      %v5855 = vpop.f32.mrf.mxu0
      %v5856 = vadd.f32 0.0, %v5855
      %5857 = vmatmul.f32.gmra.mxu0 %v5785
      %v5858 = vpop.f32.mrf.mxu0
      %v5859 = vadd.f32 0.0, %v5858
      %5860 = vmatmul.f32.gmra.mxu0 %v5786
      %v5861 = vpop.f32.mrf.mxu0
      %v5862 = vadd.f32 0.0, %v5861
      %5863 = vmatmul.f32.gmra.mxu0 %v5787
      %v5864 = vpop.f32.mrf.mxu0
      %v5865 = vadd.f32 0.0, %v5864
      %5866 = vmatmul.f32.gmra.mxu0 %v5788
      %v5867 = vpop.f32.mrf.mxu0
      %v5868 = vadd.f32 0.0, %v5867
      %5869 = vmatmul.f32.gmra.mxu0 %v5789
      %v5870 = vpop.f32.mrf.mxu0
      %v5871 = vadd.f32 0.0, %v5870
      %5872 = vmatmul.f32.gmra.mxu0 %v5790
      %v5873 = vpop.f32.mrf.mxu0
      %v5874 = vadd.f32 0.0, %v5873
      %5875 = vmatmul.f32.gmra.mxu0 %v5791
      %v5876 = vpop.f32.mrf.mxu0
      %v5877 = vadd.f32 0.0, %v5876
      %5878 = vmatmul.f32.gmra.mxu0 %v5792
      %v5879 = vpop.f32.mrf.mxu0
      %v5880 = vadd.f32 0.0, %v5879
      %5881 = vmatmul.f32.gmra.mxu0 %v5793
      %v5882 = vpop.f32.mrf.mxu0
      %v5883 = vadd.f32 0.0, %v5882
      %5884 = vmatmul.f32.gmra.mxu0 %v5794
      %v5885 = vpop.f32.mrf.mxu0
      %v5886 = vadd.f32 0.0, %v5885
      %5887 = vmatmul.f32.gmra.mxu0 %v5795
      %v5888 = vpop.f32.mrf.mxu0
      %v5889 = vadd.f32 0.0, %v5888
      %5890 = vmatmul.f32.gmra.mxu0 %v5796
      %v5891 = vpop.f32.mrf.mxu0
      %v5892 = vadd.f32 0.0, %v5891
      %5893 = vmatmul.f32.gmra.mxu0 %v5797
      %v5894 = vpop.f32.mrf.mxu0
      %v5895 = vadd.f32 0.0, %v5894
      %5896 = vmatmul.f32.gmra.mxu0 %v5798
      %v5897 = vpop.f32.mrf.mxu0
      %v5898 = vadd.f32 0.0, %v5897
      %5899 = vmatmul.f32.gmra.mxu0 %v5799
      %v5900 = vpop.f32.mrf.mxu0
      %v5901 = vadd.f32 0.0, %v5900
      %5902 = vmatmul.f32.gmra.mxu0 %v5800
      %v5903 = vpop.f32.mrf.mxu0
      %v5904 = vadd.f32 0.0, %v5903
      %5905 = vmatmul.f32.gmra.mxu0 %v5801
      %v5906 = vpop.f32.mrf.mxu0
      %v5907 = vadd.f32 0.0, %v5906
      %5908 = vmatmul.f32.gmra.mxu0 %v5802
      %v5909 = vpop.f32.mrf.mxu0
      %v5910 = vadd.f32 0.0, %v5909
      %5911 = vmatmul.f32.gmra.mxu0 %v5803
      %v5912 = vpop.f32.mrf.mxu0
      %v5913 = vadd.f32 0.0, %v5912
      %5914 = vmatmul.f32.gmra.mxu0 %v5804
      %v5915 = vpop.f32.mrf.mxu0
      %v5916 = vadd.f32 0.0, %v5915
      %5917 = vmatmul.f32.gmra.mxu0 %v5805
      %v5918 = vpop.f32.mrf.mxu0
      %v5919 = vadd.f32 0.0, %v5918
      %5920 = vmatmul.f32.gmra.mxu0 %v5806
      %v5921 = vpop.f32.mrf.mxu0
      %v5922 = vadd.f32 0.0, %v5921
      %5923 = vmatmul.f32.gmra.mxu0 %v5807
      %v5924 = vpop.f32.mrf.mxu0
      %v5925 = vadd.f32 0.0, %v5924
      %5926 = vmatmul.f32.gmra.mxu0 %v5808
      %v5927 = vpop.f32.mrf.mxu0
      %v5928 = vadd.f32 0.0, %v5927
      %5929 = vmatmul.f32.gmra.mxu0 %v5809
      %v5930 = vpop.f32.mrf.mxu0
      %v5931 = vadd.f32 0.0, %v5930
      %5932 = vmatmul.f32.gmra.mxu0 %v5810
      %v5933 = vpop.f32.mrf.mxu0
      %v5934 = vadd.f32 0.0, %v5933
      %5935 = vmatmul.f32.gmra.mxu0 %v5811
      %v5936 = vpop.f32.mrf.mxu0
      %v5937 = vadd.f32 0.0, %v5936
      %5938 = vmatmul.f32.gmra.mxu0 %v5812
      %v5939 = vpop.f32.mrf.mxu0
      %v5940 = vadd.f32 0.0, %v5939
      %5941 = vmatmul.f32.gmra.mxu0 %v5813
      %v5942 = vpop.f32.mrf.mxu0
      %v5943 = vadd.f32 0.0, %v5942
      %5944 = vmatmul.f32.gmra.mxu0 %v5814
      %v5945 = vpop.f32.mrf.mxu0
      %v5946 = vadd.f32 0.0, %v5945
      %5947 = vmatmul.f32.gmra.mxu0 %v5815
      %v5948 = vpop.f32.mrf.mxu0
      %v5949 = vadd.f32 0.0, %v5948
      %5950 = vmatmul.f32.gmra.mxu0 %v5816
      %v5951 = vpop.f32.mrf.mxu0
      %v5952 = vadd.f32 0.0, %v5951
      %5953 = vmatmul.f32.gmra.mxu0 %v5817
      %v5954 = vpop.f32.mrf.mxu0
      %v5955 = vadd.f32 0.0, %v5954
      %5956 = vmatmul.f32.gmra.mxu0 %v5818
      %v5957 = vpop.f32.mrf.mxu0
      %v5958 = vadd.f32 0.0, %v5957
      %5959 = vdwg.mxu0
      %v5960 = vadd.f32 %v5747, %v5853
      %v5961 = vadd.f32 %v5748, %v5856
      %v5962 = vadd.f32 %v5749, %v5859
      %v5963 = vadd.f32 %v5750, %v5862
      %v5964 = vadd.f32 %v5751, %v5865
      %v5965 = vadd.f32 %v5752, %v5868
      %v5966 = vadd.f32 %v5753, %v5871
      %v5967 = vadd.f32 %v5754, %v5874
      %v5968 = vadd.f32 %v5755, %v5877
      %v5969 = vadd.f32 %v5756, %v5880
      %v5970 = vadd.f32 %v5757, %v5883
      %v5971 = vadd.f32 %v5758, %v5886
      %v5972 = vadd.f32 %v5759, %v5889
      %v5973 = vadd.f32 %v5760, %v5892
      %v5974 = vadd.f32 %v5761, %v5895
      %v5975 = vadd.f32 %v5762, %v5898
      %v5976 = vadd.f32 %v5763, %v5901
      %v5977 = vadd.f32 %v5764, %v5904
      %v5978 = vadd.f32 %v5765, %v5907
      %v5979 = vadd.f32 %v5766, %v5910
      %v5980 = vadd.f32 %v5767, %v5913
      %v5981 = vadd.f32 %v5768, %v5916
      %v5982 = vadd.f32 %v5769, %v5919
      %v5983 = vadd.f32 %v5770, %v5922
      %v5984 = vadd.f32 %v5771, %v5925
      %v5985 = vadd.f32 %v5772, %v5928
      %v5986 = vadd.f32 %v5773, %v5931
      %v5987 = vadd.f32 %v5774, %v5934
      %v5988 = vadd.f32 %v5775, %v5937
      %v5989 = vadd.f32 %v5776, %v5940
      %v5990 = vadd.f32 %v5777, %v5943
      %v5991 = vadd.f32 %v5778, %v5946
      %v5992 = vadd.f32 %v5779, %v5949
      %v5993 = vadd.f32 %v5780, %v5952
      %v5994 = vadd.f32 %v5781, %v5955
      %v5995 = vadd.f32 %v5782, %v5958
      %v5996 = vld [vmem:[%s5] sm:$0x1]
      %v5998 = vperm.slane %v5996, 0
      %v6000 = vmul.f32 %v5960, %v5998
      %v6001 = vmul.f32 %v5961, %v5998
      %v6002 = vmul.f32 %v5962, %v5998
      %v6003 = vmul.f32 %v5963, %v5998
      %v6004 = vmul.f32 %v5964, %v5998
      %v6005 = vmul.f32 %v5965, %v5998
      %v6006 = vmul.f32 %v5966, %v5998
      %v6007 = vmul.f32 %v5967, %v5998
      %v6008 = vmul.f32 %v5968, %v5998
      %v6009 = vmul.f32 %v5969, %v5998
      %v6010 = vmul.f32 %v5970, %v5998
      %v6011 = vmul.f32 %v5971, %v5998
      %v6012 = vmul.f32 %v5972, %v5998
      %v6013 = vmul.f32 %v5973, %v5998
      %v6014 = vmul.f32 %v5974, %v5998
      %v6015 = vmul.f32 %v5975, %v5998
      %v6016 = vmul.f32 %v5976, %v5998
      %v6017 = vmul.f32 %v5977, %v5998
      %v6018 = vmul.f32 %v5978, %v5998
      %v6019 = vmul.f32 %v5979, %v5998
      %v6020 = vmul.f32 %v5980, %v5998
      %v6021 = vmul.f32 %v5981, %v5998
      %v6022 = vmul.f32 %v5982, %v5998
      %v6023 = vmul.f32 %v5983, %v5998
      %v6024 = vmul.f32 %v5984, %v5998
      %v6025 = vmul.f32 %v5985, %v5998
      %v6026 = vmul.f32 %v5986, %v5998
      %v6027 = vmul.f32 %v5987, %v5998
      %v6028 = vmul.f32 %v5988, %v5998
      %v6029 = vmul.f32 %v5989, %v5998
      %v6030 = vmul.f32 %v5990, %v5998
      %v6031 = vmul.f32 %v5991, %v5998
      %v6032 = vmul.f32 %v5992, %v5998
      %v6033 = vmul.f32 %v5993, %v5998
      %v6034 = vmul.f32 %v5994, %v5998
      %v6035 = vmul.f32 %v5995, %v5998
      %v6036 = vld [vmem:[%s6] sm:$0x1]
      %v6038 = vperm.slane %v6036, 0
      %v6040 = vadd.f32 %v6000, %v6038
      %v6041 = vadd.f32 %v6001, %v6038
      %v6042 = vadd.f32 %v6002, %v6038
      %v6043 = vadd.f32 %v6003, %v6038
      %v6044 = vadd.f32 %v6004, %v6038
      %v6045 = vadd.f32 %v6005, %v6038
      %v6046 = vadd.f32 %v6006, %v6038
      %v6047 = vadd.f32 %v6007, %v6038
      %v6048 = vadd.f32 %v6008, %v6038
      %v6049 = vadd.f32 %v6009, %v6038
      %v6050 = vadd.f32 %v6010, %v6038
      %v6051 = vadd.f32 %v6011, %v6038
      %v6052 = vadd.f32 %v6012, %v6038
      %v6053 = vadd.f32 %v6013, %v6038
      %v6054 = vadd.f32 %v6014, %v6038
      %v6055 = vadd.f32 %v6015, %v6038
      %v6056 = vadd.f32 %v6016, %v6038
      %v6057 = vadd.f32 %v6017, %v6038
      %v6058 = vadd.f32 %v6018, %v6038
      %v6059 = vadd.f32 %v6019, %v6038
      %v6060 = vadd.f32 %v6020, %v6038
      %v6061 = vadd.f32 %v6021, %v6038
      %v6062 = vadd.f32 %v6022, %v6038
      %v6063 = vadd.f32 %v6023, %v6038
      %v6064 = vadd.f32 %v6024, %v6038
      %v6065 = vadd.f32 %v6025, %v6038
      %v6066 = vadd.f32 %v6026, %v6038
      %v6067 = vadd.f32 %v6027, %v6038
      %v6068 = vadd.f32 %v6028, %v6038
      %v6069 = vadd.f32 %v6029, %v6038
      %v6070 = vadd.f32 %v6030, %v6038
      %v6071 = vadd.f32 %v6031, %v6038
      %v6072 = vadd.f32 %v6032, %v6038
      %v6073 = vadd.f32 %v6033, %v6038
      %v6074 = vadd.f32 %v6034, %v6038
      %v6075 = vadd.f32 %v6035, %v6038
      %vm6076 = vcmp.ge.f32.partialorder %v6040, 0.0
      %vm6077 = vcmp.ge.f32.partialorder %v6041, 0.0
      %vm6078 = vcmp.ge.f32.partialorder %v6042, 0.0
      %vm6079 = vcmp.ge.f32.partialorder %v6043, 0.0
      %vm6080 = vcmp.ge.f32.partialorder %v6044, 0.0
      %vm6081 = vcmp.ge.f32.partialorder %v6045, 0.0
      %vm6082 = vcmp.ge.f32.partialorder %v6046, 0.0
      %vm6083 = vcmp.ge.f32.partialorder %v6047, 0.0
      %vm6084 = vcmp.ge.f32.partialorder %v6048, 0.0
      %vm6085 = vcmp.ge.f32.partialorder %v6049, 0.0
      %vm6086 = vcmp.ge.f32.partialorder %v6050, 0.0
      %vm6087 = vcmp.ge.f32.partialorder %v6051, 0.0
      %vm6088 = vcmp.ge.f32.partialorder %v6052, 0.0
      %vm6089 = vcmp.ge.f32.partialorder %v6053, 0.0
      %vm6090 = vcmp.ge.f32.partialorder %v6054, 0.0
      %vm6091 = vcmp.ge.f32.partialorder %v6055, 0.0
      %vm6092 = vcmp.ge.f32.partialorder %v6056, 0.0
      %vm6093 = vcmp.ge.f32.partialorder %v6057, 0.0
      %vm6094 = vcmp.ge.f32.partialorder %v6058, 0.0
      %vm6095 = vcmp.ge.f32.partialorder %v6059, 0.0
      %vm6096 = vcmp.ge.f32.partialorder %v6060, 0.0
      %vm6097 = vcmp.ge.f32.partialorder %v6061, 0.0
      %vm6098 = vcmp.ge.f32.partialorder %v6062, 0.0
      %vm6099 = vcmp.ge.f32.partialorder %v6063, 0.0
      %vm6100 = vcmp.ge.f32.partialorder %v6064, 0.0
      %vm6101 = vcmp.ge.f32.partialorder %v6065, 0.0
      %vm6102 = vcmp.ge.f32.partialorder %v6066, 0.0
      %vm6103 = vcmp.ge.f32.partialorder %v6067, 0.0
      %vm6104 = vcmp.ge.f32.partialorder %v6068, 0.0
      %vm6105 = vcmp.ge.f32.partialorder %v6069, 0.0
      %vm6106 = vcmp.ge.f32.partialorder %v6070, 0.0
      %vm6107 = vcmp.ge.f32.partialorder %v6071, 0.0
      %vm6108 = vcmp.ge.f32.partialorder %v6072, 0.0
      %vm6109 = vcmp.ge.f32.partialorder %v6073, 0.0
      %vm6110 = vcmp.ge.f32.partialorder %v6074, 0.0
      %vm6111 = vcmp.ge.f32.partialorder %v6075, 0.0
      %v6112 = vmul.f32 %v6040, 0.01
      %v6113 = vmul.f32 %v6041, 0.01
      %v6114 = vmul.f32 %v6042, 0.01
      %v6115 = vmul.f32 %v6043, 0.01
      %v6116 = vmul.f32 %v6044, 0.01
      %v6117 = vmul.f32 %v6045, 0.01
      %v6118 = vmul.f32 %v6046, 0.01
      %v6119 = vmul.f32 %v6047, 0.01
      %v6120 = vmul.f32 %v6048, 0.01
      %v6121 = vmul.f32 %v6049, 0.01
      %v6122 = vmul.f32 %v6050, 0.01
      %v6123 = vmul.f32 %v6051, 0.01
      %v6124 = vmul.f32 %v6052, 0.01
      %v6125 = vmul.f32 %v6053, 0.01
      %v6126 = vmul.f32 %v6054, 0.01
      %v6127 = vmul.f32 %v6055, 0.01
      %v6128 = vmul.f32 %v6056, 0.01
      %v6129 = vmul.f32 %v6057, 0.01
      %v6130 = vmul.f32 %v6058, 0.01
      %v6131 = vmul.f32 %v6059, 0.01
      %v6132 = vmul.f32 %v6060, 0.01
      %v6133 = vmul.f32 %v6061, 0.01
      %v6134 = vmul.f32 %v6062, 0.01
      %v6135 = vmul.f32 %v6063, 0.01
      %v6136 = vmul.f32 %v6064, 0.01
      %v6137 = vmul.f32 %v6065, 0.01
      %v6138 = vmul.f32 %v6066, 0.01
      %v6139 = vmul.f32 %v6067, 0.01
      %v6140 = vmul.f32 %v6068, 0.01
      %v6141 = vmul.f32 %v6069, 0.01
      %v6142 = vmul.f32 %v6070, 0.01
      %v6143 = vmul.f32 %v6071, 0.01
      %v6144 = vmul.f32 %v6072, 0.01
      %v6145 = vmul.f32 %v6073, 0.01
      %v6146 = vmul.f32 %v6074, 0.01
      %v6147 = vmul.f32 %v6075, 0.01
      %v6148 = vsel %vm6076, %v6040, %v6112
      %v6149 = vsel %vm6077, %v6041, %v6113
      %v6150 = vsel %vm6078, %v6042, %v6114
      %v6151 = vsel %vm6079, %v6043, %v6115
      %v6152 = vsel %vm6080, %v6044, %v6116
      %v6153 = vsel %vm6081, %v6045, %v6117
      %v6154 = vsel %vm6082, %v6046, %v6118
      %v6155 = vsel %vm6083, %v6047, %v6119
      %v6156 = vsel %vm6084, %v6048, %v6120
      %v6157 = vsel %vm6085, %v6049, %v6121
      %v6158 = vsel %vm6086, %v6050, %v6122
      %v6159 = vsel %vm6087, %v6051, %v6123
      %v6160 = vsel %vm6088, %v6052, %v6124
      %v6161 = vsel %vm6089, %v6053, %v6125
      %v6162 = vsel %vm6090, %v6054, %v6126
      %v6163 = vsel %vm6091, %v6055, %v6127
      %v6164 = vsel %vm6092, %v6056, %v6128
      %v6165 = vsel %vm6093, %v6057, %v6129
      %v6166 = vsel %vm6094, %v6058, %v6130
      %v6167 = vsel %vm6095, %v6059, %v6131
      %v6168 = vsel %vm6096, %v6060, %v6132
      %v6169 = vsel %vm6097, %v6061, %v6133
      %v6170 = vsel %vm6098, %v6062, %v6134
      %v6171 = vsel %vm6099, %v6063, %v6135
      %v6172 = vsel %vm6100, %v6064, %v6136
      %v6173 = vsel %vm6101, %v6065, %v6137
      %v6174 = vsel %vm6102, %v6066, %v6138
      %v6175 = vsel %vm6103, %v6067, %v6139
      %v6176 = vsel %vm6104, %v6068, %v6140
      %v6177 = vsel %vm6105, %v6069, %v6141
      %v6178 = vsel %vm6106, %v6070, %v6142
      %v6179 = vsel %vm6107, %v6071, %v6143
      %v6180 = vsel %vm6108, %v6072, %v6144
      %v6181 = vsel %vm6109, %v6073, %v6145
      %v6182 = vsel %vm6110, %v6074, %v6146
      %v6183 = vsel %vm6111, %v6075, %v6147
      %6184 = vst [vmem:[%s254] sm:$0xff] %v6148
      %6185 = vst [vmem:[%s254 + $0x8] sm:$0xff] %v6149
      %6186 = vst [vmem:[%s254 + $0x10] sm:$0xff] %v6150
      %6187 = vst [vmem:[%s254 + $0x18] sm:$0xff] %v6151
      %6188 = vst [vmem:[%s254 + $0x20] sm:$0xff] %v6152
      %6189 = vst [vmem:[%s254 + $0x28] sm:$0xff] %v6153
      %6190 = vst [vmem:[%s254 + $0x30] sm:$0xff] %v6154
      %6191 = vst [vmem:[%s254 + $0x38] sm:$0xff] %v6155
      %6192 = vst [vmem:[%s254 + $0x40] sm:$0xff] %v6156
      %6193 = vst [vmem:[%s254 + $0x48] sm:$0xff] %v6157
      %6194 = vst [vmem:[%s254 + $0x50] sm:$0xff] %v6158
      %6195 = vst [vmem:[%s254 + $0x58] sm:$0xff] %v6159
      %6196 = vst [vmem:[%s254 + $0x60] sm:$0xff] %v6160
      %6197 = vst [vmem:[%s254 + $0x68] sm:$0xff] %v6161
      %6198 = vst [vmem:[%s254 + $0x70] sm:$0xff] %v6162
      %6199 = vst [vmem:[%s254 + $0x78] sm:$0xff] %v6163
      %6200 = vst [vmem:[%s254 + $0x80] sm:$0xff] %v6164
      %6201 = vst [vmem:[%s254 + $0x88] sm:$0xff] %v6165
      %6202 = vst [vmem:[%s254 + $0x90] sm:$0xff] %v6166
      %6203 = vst [vmem:[%s254 + $0x98] sm:$0xff] %v6167
      %6204 = vst [vmem:[%s254 + $0xa0] sm:$0xff] %v6168
      %6205 = vst [vmem:[%s254 + $0xa8] sm:$0xff] %v6169
      %6206 = vst [vmem:[%s254 + $0xb0] sm:$0xff] %v6170
      %6207 = vst [vmem:[%s254 + $0xb8] sm:$0xff] %v6171
      %6208 = vst [vmem:[%s254 + $0xc0] sm:$0xff] %v6172
      %6209 = vst [vmem:[%s254 + $0xc8] sm:$0xff] %v6173
      %6210 = vst [vmem:[%s254 + $0xd0] sm:$0xff] %v6174
      %6211 = vst [vmem:[%s254 + $0xd8] sm:$0xff] %v6175
      %6212 = vst [vmem:[%s254 + $0xe0] sm:$0xff] %v6176
      %6213 = vst [vmem:[%s254 + $0xe8] sm:$0xff] %v6177
      %6214 = vst [vmem:[%s254 + $0xf0] sm:$0xff] %v6178
      %6215 = vst [vmem:[%s254 + $0xf8] sm:$0xff] %v6179
      %6216 = vst [vmem:[%s254 + $0x100] sm:$0xff] %v6180
      %6217 = vst [vmem:[%s254 + $0x108] sm:$0xff] %v6181
      %6218 = vst [vmem:[%s254 + $0x110] sm:$0xff] %v6182
      %6219 = vst [vmem:[%s254 + $0x118] sm:$0xff] %v6183
      %s6220 = smul.u32 36, %s23
      %p6221 = scmp.lt.s32.totalorder %s22, 1
      %s6222 = scalar_select %p6221, %s22, 1
      %p6223 = scmp.lt.s32.totalorder %s6220, 35
      %s6224 = scalar_select %p6223, %s6220, 35
      %s6225 = smul.addr %s6222, 36
      %s6226 = sadd.s32 %s6224, %s6225
      %s6227 = smul.addr %s6226, 8
      %s6228 = scalar_lea.vmem %s7, %s6227
      // Predicated region
      $region95: #{conv_block.1} parent=43 // pred_check
        %p6229 = pneg %p176
      $region96: #{conv_block.1} parent=43 // pred_check_branch
        %6231 = sbr.rel (%p6229) target = $region98
      $region97: #{conv_block.1} parent=43 // pred_region
        %s6232 = smul.u32 36, %s23
      $region98: #{conv_block.1} parent=43 // pred_fallthru
        _
    $region44: #{conv_block.1} parent=5 // pred_fallthru
      _
    %p6233 = scmp.le.s32.totalorder 2, %s13
    // Predicated region
    $region99: #{conv_block.1} parent=5 // pred_check
      %p6234 = pneg %p6233
    $region100: #{conv_block.1} parent=5 // pred_check_branch
      %6236 = sbr.rel (%p6234) target = $region102
    $region101: #{conv_block.1} parent=5 // pred_region
      %s6237 = ssub.s32 %s13, 2
      // Predicated region
      $region103: #{conv_block.1} parent=101 // pred_check
        %p6238 = pneg %p182
      $region104: #{conv_block.1} parent=101 // pred_check_branch
        %6240 = sbr.rel (%p6238) target = $region106
      $region105: #{conv_block.1} parent=101 // pred_region
        %s6241 = smul.u32 36, %s25
        %p6242 = scmp.lt.s32.totalorder %s24, 1
        %s6243 = scalar_select %p6242, %s24, 1
        %p6244 = scmp.lt.s32.totalorder %s6241, 35
        %s6245 = scalar_select %p6244, %s6241, 35
        %s6246 = smul.addr %s6243, 36
        %s6247 = sadd.s32 %s6245, %s6246
        %s6248 = smul.addr %s6247, 8
        %s6249 = scalar_lea.vmem %s7, %s6248
      $region106: #{conv_block.1} parent=101 // pred_fallthru
        _
    $region102: #{conv_block.1} parent=5 // pred_fallthru
      _
  $region6: #{conv_block.1} parent=0 // loop_footer
    %s17 = sadd.s32 1, %s13
  $region7: #{conv_block.1} parent=0 // loop_footer_branch
    %12 = sbr.rel target = $region3
  $region8: #{conv_block.1} parent=0 // loop_exit
    _
  %6250 = vsyncmov [#allocation4]
  %s6251 = vpop.sfrf %6250
  %p6252 = scmp.eq.s32.totalorder %s6251, 0
  %p6253 = pneg %p6252
  %6255 = shalt.err (%p6253)
  %s6256 = scalar_lea.sflag [#allocation4], 1
  %6257 = vsyncmov %s6256
  %s6258 = vpop.sfrf %6257
  %p6259 = scmp.eq.s32.totalorder %s6258, 0
  %p6260 = pneg %p6259
  %6262 = shalt.err (%p6260)

</llo_original>
